<compile_context>
chip_gen: v7x
topology: tpu7x:2x2x1
jax: 0.10.0
libtpu: 0.0.40
codegen_flags: <defaults>
</compile_context>

<pallas_src>
import math
import functools

import jax
import jax.numpy as jnp
from jax.experimental import pallas as pl
from jax.experimental.pallas import tpu as pltpu


_TM = 512  # max rows per matmul tile (tiny shapes here use one tile per image)


def _round_up(x, m):
    return ((x + m - 1) // m) * m


# ----------------------------------------------------------------------------
# Pallas kernels
# ----------------------------------------------------------------------------

def _resblock_kernel(xpad_ref, w1_ref, s1_ref, b1_ref, w2_ref, s2_ref, b2_ref,
                     o_ref, col1_ref, col2_ref, mid_ref, *, H, W, C):
    """Fused ResidualBlock: relu(bn2(conv2(relu(bn1(conv1(x))))) + x).

    xpad_ref : (1, (H+2)*(W+2), C) zero-padded input, flattened spatial
    w*_ref   : (9*C, C)            conv weights, 3x3 taps folded into K
    s*/b*    : (1, C)              folded BatchNorm scale / shift
    o_ref    : (1, H*W, C)
    col*_ref : (H*W, 9*C) VMEM     im2col scratch for conv1 / conv2
    mid_ref  : ((H+2)*(W+2), C)    zero-padded conv1 activation scratch
    """
    Hp, Wp = H + 2, W + 2

    def fill_taps(read_row, col_ref):
        # col[oh*W:(oh+1)*W, k*C:(k+1)*C] = padded[(oh+kh)*Wp + kw :][:W, :]
        for k in range(9):
            kh, kw = k // 3, k % 3
            for oh in range(H):
                src = (oh + kh) * Wp + kw
                col_ref[oh * W:(oh + 1) * W, k * C:(k + 1) * C] = read_row(src)

    # conv1 + bn1 + relu  (single K=9C matmul on the MXU, epilogue on the VPU)
    fill_taps(lambda s: xpad_ref[0, s:s + W, :], col1_ref)
    h = jnp.dot(col1_ref[...], w1_ref[...], preferred_element_type=jnp.float32)
    h = jnp.maximum(h * s1_ref[...] + b1_ref[...], 0.0)

    # stash conv1's activation into a zero-padded VMEM buffer for conv2's taps
    mid_ref[...] = jnp.zeros_like(mid_ref)
    for oh in range(H):
        dst = (oh + 1) * Wp + 1
        mid_ref[dst:dst + W, :] = h[oh * W:(oh + 1) * W, :]

    # conv2 + bn2 + residual add + relu; the residual is the centre tap of col1
    fill_taps(lambda s: mid_ref[s:s + W, :], col2_ref)
    res = col1_ref[:, 4 * C:5 * C]
    out = jnp.dot(col2_ref[...], w2_ref[...], preferred_element_type=jnp.float32)
    o_ref[0] = jnp.maximum(out * s2_ref[...] + b2_ref[...] + res, 0.0)


def _matmul_kernel(x_ref, w_ref, o_ref):
    """o[0] = x[0] @ w.   x: (1, TM, K), w: (K, Cout), o: (1, TM, Cout)."""
    o_ref[0] = jnp.dot(x_ref[0], w_ref[...], preferred_element_type=jnp.float32)


# ----------------------------------------------------------------------------
# Layer wrappers (NHWC)
# ----------------------------------------------------------------------------

def residual_block(x_nhwc, p):
    """One fused-pallas_call ResidualBlock (stride 1, same channels)."""
    N, H, W, C = x_nhwc.shape
    Hp, Wp = H + 2, W + 2
    xpad = jnp.pad(x_nhwc, ((0, 0), (1, 1), (1, 1), (0, 0)))
    xpad = xpad.reshape(N, Hp * Wp, C)
    full2d = lambda n: (0, 0)
    out = pl.pallas_call(
        functools.partial(_resblock_kernel, H=H, W=W, C=C),
        out_shape=jax.ShapeDtypeStruct((N, H * W, C), jnp.float32),
        grid=(N,),
        in_specs=[
            pl.BlockSpec((1, Hp * Wp, C), lambda n: (n, 0, 0)),
            pl.BlockSpec((9 * C, C), full2d),
            pl.BlockSpec((1, C), full2d),
            pl.BlockSpec((1, C), full2d),
            pl.BlockSpec((9 * C, C), full2d),
            pl.BlockSpec((1, C), full2d),
            pl.BlockSpec((1, C), full2d),
        ],
        out_specs=pl.BlockSpec((1, H * W, C), lambda n: (n, 0, 0)),
        scratch_shapes=[
            pltpu.VMEM((H * W, 9 * C), jnp.float32),
            pltpu.VMEM((H * W, 9 * C), jnp.float32),
            pltpu.VMEM((Hp * Wp, C), jnp.float32),
        ],
        compiler_params=pltpu.CompilerParams(
            dimension_semantics=("parallel",)),
    )(xpad,
      p["w1"].reshape(9 * C, C),
      p["bn1_scale"].reshape(1, C), p["bn1_shift"].reshape(1, C),
      p["w2"].reshape(9 * C, C),
      p["bn2_scale"].reshape(1, C), p["bn2_shift"].reshape(1, C))
    return out.reshape(N, H, W, C)


def _im2col_3x3(x_nhwc, stride):
    """(N, OH*OW, 9*C) im2col with the 9 taps folded into the K axis."""
    N, H, W, C = x_nhwc.shape
    OH = (H + 2 - 3) // stride + 1
    OW = (W + 2 - 3) // stride + 1
    xp = jnp.pad(x_nhwc, ((0, 0), (1, 1), (1, 1), (0, 0)))
    cols = []
    for kh in range(3):
        for kw in range(3):
            t = xp[:, kh:kh + stride * (OH - 1) + 1:stride,
                   kw:kw + stride * (OW - 1) + 1:stride, :]
            cols.append(t.reshape(N, OH * OW, C))
    return jnp.concatenate(cols, axis=-1), OH, OW


def _matmul_layer(cols, w, oh, ow):
    """cols: (N, OH*OW, K) @ w: (K, Cout) -> (N, OH, OW, Cout) via Pallas."""
    N, OHW, K = cols.shape
    Cout = w.shape[-1]
    tm = _TM if OHW >= _TM else _round_up(OHW, 8)
    ohw_p = _round_up(OHW, tm)
    if ohw_p != OHW:
        cols = jnp.pad(cols, ((0, 0), (0, ohw_p - OHW), (0, 0)))
    out = pl.pallas_call(
        _matmul_kernel,
        out_shape=jax.ShapeDtypeStruct((N, ohw_p, Cout), jnp.float32),
        grid=(N, ohw_p // tm),
        in_specs=[
            pl.BlockSpec((1, tm, K), lambda n, m: (n, m, 0)),
            pl.BlockSpec((K, Cout), lambda n, m: (0, 0)),
        ],
        out_specs=pl.BlockSpec((1, tm, Cout), lambda n, m: (n, m, 0)),
        compiler_params=pltpu.CompilerParams(
            dimension_semantics=("parallel", "parallel")),
    )(cols, w)
    return out[:, :OHW].reshape(N, oh, ow, Cout)


def conv3x3_s2(x_nhwc, w_hwio):
    """3x3 conv, stride 2, padding 1, no bias (the two stem convs)."""
    cols, oh, ow = _im2col_3x3(x_nhwc, stride=2)
    cin, cout = w_hwio.shape[2], w_hwio.shape[3]
    return _matmul_layer(cols, w_hwio.reshape(9 * cin, cout), oh, ow)


def avgpool3x3_s2(x_nhwc):
    """AvgPool2d(3, stride=2, padding=1), count_include_pad=True (PyTorch
    default) == a 3x3 stride-2 conv with identity/9 weights."""
    C = x_nhwc.shape[-1]
    cols, oh, ow = _im2col_3x3(x_nhwc, stride=2)
    w = jnp.tile(jnp.eye(C, dtype=jnp.float32), (9, 1)) * (1.0 / 9.0)
    return _matmul_layer(cols, w, oh, ow)


# ----------------------------------------------------------------------------
# Module forward (DownSample)
# ----------------------------------------------------------------------------

def downsample_forward_nhwc(x, params, small=False):
    x = conv3x3_s2(x, params["conv1_w"])
    for p in params["res1"]:
        x = residual_block(x, p)
    x = conv3x3_s2(x, params["conv2_w"])
    for p in params["res2"]:
        x = residual_block(x, p)
    x = avgpool3x3_s2(x)
    if not small:
        for p in params["res3"]:
            x = residual_block(x, p)
        x = avgpool3x3_s2(x)
    return x


@functools.partial(jax.jit, static_argnames=("small",))
def downsample_forward(x_nchw, params, small=False):
    # layout: kernel math is NHWC; transpose at the boundary to match NCHW.
    x = jnp.transpose(x_nchw, (0, 2, 3, 1)).astype(jnp.float32)
    y = downsample_forward_nhwc(x, params, small=small)
    return jnp.transpose(y, (0, 3, 1, 2))


# ----------------------------------------------------------------------------
# Deterministic parameter construction
# ----------------------------------------------------------------------------

def _make_conv_w(key, cin, cout):
    std = math.sqrt(2.0 / (cin * 9))
    return (std * jax.random.normal(key, (3, 3, cin, cout))).astype(jnp.float32)


def _make_bn(key, c, eps=1e-5):
    k1, k2, k3, k4 = jax.random.split(key, 4)
    gamma = 1.0 + 0.1 * jax.random.normal(k1, (c,))
    beta = 0.1 * jax.random.normal(k2, (c,))
    mean = 0.1 * jax.random.normal(k3, (c,))
    var = jax.random.uniform(k4, (c,), minval=0.5, maxval=1.5)
    scale = gamma / jnp.sqrt(var + eps)
    shift = beta - mean * scale
    return scale.astype(jnp.float32), shift.astype(jnp.float32)


def _make_resblock(key, c):
    k1, k2, k3, k4 = jax.random.split(key, 4)
    bn1_s, bn1_b = _make_bn(k2, c)
    bn2_s, bn2_b = _make_bn(k4, c)
    return {
        "w1": _make_conv_w(k1, c, c), "bn1_scale": bn1_s, "bn1_shift": bn1_b,
        "w2": _make_conv_w(k3, c, c), "bn2_scale": bn2_s, "bn2_shift": bn2_b,
    }


def init_downsample_params(key, in_channels, out_channels):
    mid = out_channels // 2
    keys = jax.random.split(key, 12)
    return {
        "conv1_w": _make_conv_w(keys[0], in_channels, mid),
        "res1": [_make_resblock(keys[1 + i], mid) for i in range(2)],
        "conv2_w": _make_conv_w(keys[3], mid, out_channels),
        "res2": [_make_resblock(keys[4 + i], out_channels) for i in range(3)],
        "res3": [_make_resblock(keys[7 + i], out_channels) for i in range(3)],
    }


# ----------------------------------------------------------------------------

if __name__ == "__main__":
    key = jax.random.PRNGKey(0)
    k_params, k_x = jax.random.split(key)

    batch, in_channels, out_channels, spatial = 2, 4, 8, 16
    params = init_downsample_params(k_params, in_channels, out_channels)
    x = jax.random.normal(k_x, (batch, in_channels, spatial, spatial),
                          dtype=jnp.float32)  # NCHW, like PyTorch

    y = downsample_forward(x, params, small=False)
    y = jax.block_until_ready(y)

    # 16 -> conv1(s2) 8 -> conv2(s2) 4 -> pool1 2 -> pool2 1
    assert y.shape == (batch, out_channels, 1, 1), y.shape
    assert bool(jnp.all(jnp.isfinite(y)))
    print("KERNEL_OK")
</pallas_src>

<mosaic_0001>
module attributes {stable_mosaic.version = 11 : i64} {
  func.func @_matmul_kernel(%arg0: i32, %arg1: i32, %arg2: memref<1x64x36xf32, #tpu.memory_space<vmem>>, %arg3: memref<36x4xf32, #tpu.memory_space<vmem>>, %arg4: memref<1x64x4xf32, #tpu.memory_space<vmem>>) attributes {dimension_semantics = [#tpu.dimension_semantics<parallel>, #tpu.dimension_semantics<parallel>], iteration_bounds = array<i64: 2, 1>, scalar_prefetch = 0 : i64, scratch_operands = 0 : i64, tpu.core_type = #tpu.core_type<tc>, window_params = [{transform_indices = @transform_0, window_bounds = array<i64: 1, 64, 36>}, {pipeline_mode = #tpu.pipeline_mode<synchronous>, transform_indices = @transform_1, window_bounds = array<i64: 36, 4>}, {transform_indices = @transform_2, window_bounds = array<i64: 1, 64, 4>}]} {
    %c0 = arith.constant 0 : index
    %c0_0 = arith.constant 0 : index
    %c0_1 = arith.constant 0 : index
    %0 = vector.load %arg2[%c0, %c0_0, %c0_1] : memref<1x64x36xf32, #tpu.memory_space<vmem>>, vector<1x64x36xf32>
    %1 = vector.shape_cast %0 : vector<1x64x36xf32> to vector<64x36xf32>
    %c0_2 = arith.constant 0 : index
    %c0_3 = arith.constant 0 : index
    %2 = vector.load %arg3[%c0_2, %c0_3] : memref<36x4xf32, #tpu.memory_space<vmem>>, vector<36x4xf32>
    %cst = arith.constant dense<0.000000e+00> : vector<64x4xf32>
    %3 = tpu.matmul %1, %2, %cst {dimension_numbers = #tpu.dot_dimension_numbers<[1], [0], [0], [1], [0, 0, 1, 1], [], []>} : vector<64x36xf32>, vector<36x4xf32>, vector<64x4xf32> -> vector<64x4xf32>
    %c0_4 = arith.constant 0 : index
    %c0_5 = arith.constant 0 : index
    %c0_6 = arith.constant 0 : index
    %4 = vector.load %arg4[%c0_4, %c0_5, %c0_6] : memref<1x64x4xf32, #tpu.memory_space<vmem>>, vector<1x64x4xf32>
    %5 = vector.shape_cast %4 : vector<1x64x4xf32> to vector<64x4xf32>
    %6 = vector.shape_cast %3 : vector<64x4xf32> to vector<1x64x4xf32>
    tpu.vector_store %arg4[%c0_4, %c0_5, %c0_6], %6 {strides = array<i32>} : memref<1x64x4xf32, #tpu.memory_space<vmem>>, vector<1x64x4xf32>,
    return
  }
  func.func @transform_0(%arg0: i32, %arg1: i32) -> (i32, i32, i32) {
    %c0_i32 = arith.constant 0 : i32
    %c0_i32_0 = arith.constant 0 : i32
    return %arg0, %arg1, %c0_i32 : i32, i32, i32
  }
  func.func @transform_1(%arg0: i32, %arg1: i32) -> (i32, i32) {
    %c0_i32 = arith.constant 0 : i32
    %c0_i32_0 = arith.constant 0 : i32
    %c0_i32_1 = arith.constant 0 : i32
    return %c0_i32, %c0_i32_0 : i32, i32
  }
  func.func @transform_2(%arg0: i32, %arg1: i32) -> (i32, i32, i32) {
    %c0_i32 = arith.constant 0 : i32
    %c0_i32_0 = arith.constant 0 : i32
    return %arg0, %arg1, %c0_i32 : i32, i32, i32
  }
}

module attributes {stable_mosaic.version = 11 : i64} {
  func.func @_resblock_kernel(%arg0: i32, %arg1: memref<1x100x4xf32, #tpu.memory_space<vmem>>, %arg2: memref<36x4xf32, #tpu.memory_space<vmem>>, %arg3: memref<1x4xf32, #tpu.memory_space<vmem>>, %arg4: memref<1x4xf32, #tpu.memory_space<vmem>>, %arg5: memref<36x4xf32, #tpu.memory_space<vmem>>, %arg6: memref<1x4xf32, #tpu.memory_space<vmem>>, %arg7: memref<1x4xf32, #tpu.memory_space<vmem>>, %arg8: memref<1x64x4xf32, #tpu.memory_space<vmem>>, %arg9: memref<64x36xf32, #tpu.memory_space<vmem>>, %arg10: memref<64x36xf32, #tpu.memory_space<vmem>>, %arg11: memref<100x4xf32, #tpu.memory_space<vmem>>) attributes {dimension_semantics = [#tpu.dimension_semantics<parallel>], iteration_bounds = array<i64: 2>, scalar_prefetch = 0 : i64, scratch_operands = 3 : i64, tpu.core_type = #tpu.core_type<tc>, window_params = [{transform_indices = @transform_0, window_bounds = array<i64: 1, 100, 4>}, {pipeline_mode = #tpu.pipeline_mode<synchronous>, transform_indices = @transform_1, window_bounds = array<i64: 36, 4>}, {pipeline_mode = #tpu.pipeline_mode<synchronous>, transform_indices = @transform_2, window_bounds = array<i64: 1, 4>}, {pipeline_mode = #tpu.pipeline_mode<synchronous>, transform_indices = @transform_3, window_bounds = array<i64: 1, 4>}, {pipeline_mode = #tpu.pipeline_mode<synchronous>, transform_indices = @transform_4, window_bounds = array<i64: 36, 4>}, {pipeline_mode = #tpu.pipeline_mode<synchronous>, transform_indices = @transform_5, window_bounds = array<i64: 1, 4>}, {pipeline_mode = #tpu.pipeline_mode<synchronous>, transform_indices = @transform_6, window_bounds = array<i64: 1, 4>}, {transform_indices = @transform_7, window_bounds = array<i64: 1, 64, 4>}]} {
    %c0 = arith.constant 0 : index
    %c0_0 = arith.constant 0 : index
    %c0_1 = arith.constant 0 : index
    %0 = vector.load %arg1[%c0, %c0_0, %c0_1] : memref<1x100x4xf32, #tpu.memory_space<vmem>>, vector<1x8x4xf32>
    %1 = vector.shape_cast %0 : vector<1x8x4xf32> to vector<8x4xf32>
    %c0_2 = arith.constant 0 : index
    %c0_3 = arith.constant 0 : index
    %2 = vector.load %arg9[%c0_2, %c0_3] : memref<64x36xf32, #tpu.memory_space<vmem>>, vector<8x4xf32>
    tpu.vector_store %arg9[%c0_2, %c0_3], %1 {strides = array<i32>} : memref<64x36xf32, #tpu.memory_space<vmem>>, vector<8x4xf32>,
    %c0_4 = arith.constant 0 : index
    %c10 = arith.constant 10 : index
    %c0_5 = arith.constant 0 : index
    %3 = vector.load %arg1[%c0_4, %c10, %c0_5] : memref<1x100x4xf32, #tpu.memory_space<vmem>>, vector<1x8x4xf32>
    %4 = vector.shape_cast %3 : vector<1x8x4xf32> to vector<8x4xf32>
    %c8 = arith.constant 8 : index
    %c0_6 = arith.constant 0 : index
    %5 = vector.load %arg9[%c8, %c0_6] : memref<64x36xf32, #tpu.memory_space<vmem>>, vector<8x4xf32>
    tpu.vector_store %arg9[%c8, %c0_6], %4 {strides = array<i32>} : memref<64x36xf32, #tpu.memory_space<vmem>>, vector<8x4xf32>,
    %c0_7 = arith.constant 0 : index
    %c20 = arith.constant 20 : index
    %c0_8 = arith.constant 0 : index
    %6 = vector.load %arg1[%c0_7, %c20, %c0_8] : memref<1x100x4xf32, #tpu.memory_space<vmem>>, vector<1x8x4xf32>
    %7 = vector.shape_cast %6 : vector<1x8x4xf32> to vector<8x4xf32>
    %c16 = arith.constant 16 : index
    %c0_9 = arith.constant 0 : index
    %8 = vector.load %arg9[%c16, %c0_9] : memref<64x36xf32, #tpu.memory_space<vmem>>, vector<8x4xf32>
    tpu.vector_store %arg9[%c16, %c0_9], %7 {strides = array<i32>} : memref<64x36xf32, #tpu.memory_space<vmem>>, vector<8x4xf32>,
    %c0_10 = arith.constant 0 : index
    %c30 = arith.constant 30 : index
    %c0_11 = arith.constant 0 : index
    %9 = vector.load %arg1[%c0_10, %c30, %c0_11] : memref<1x100x4xf32, #tpu.memory_space<vmem>>, vector<1x8x4xf32>
    %10 = vector.shape_cast %9 : vector<1x8x4xf32> to vector<8x4xf32>
    %c24 = arith.constant 24 : index
    %c0_12 = arith.constant 0 : index
    %11 = vector.load %arg9[%c24, %c0_12] : memref<64x36xf32, #tpu.memory_space<vmem>>, vector<8x4xf32>
    tpu.vector_store %arg9[%c24, %c0_12], %10 {strides = array<i32>} : memref<64x36xf32, #tpu.memory_space<vmem>>, vector<8x4xf32>,
    %c0_13 = arith.constant 0 : index
    %c40 = arith.constant 40 : index
    %c0_14 = arith.constant 0 : index
    %12 = vector.load %arg1[%c0_13, %c40, %c0_14] : memref<1x100x4xf32, #tpu.memory_space<vmem>>, vector<1x8x4xf32>
    %13 = vector.shape_cast %12 : vector<1x8x4xf32> to vector<8x4xf32>
    %c32 = arith.constant 32 : index
    %c0_15 = arith.constant 0 : index
    %14 = vector.load %arg9[%c32, %c0_15] : memref<64x36xf32, #tpu.memory_space<vmem>>, vector<8x4xf32>
    tpu.vector_store %arg9[%c32, %c0_15], %13 {strides = array<i32>} : memref<64x36xf32, #tpu.memory_space<vmem>>, vector<8x4xf32>,
    %c0_16 = arith.constant 0 : index
    %c50 = arith.constant 50 : index
    %c0_17 = arith.constant 0 : index
    %15 = vector.load %arg1[%c0_16, %c50, %c0_17] : memref<1x100x4xf32, #tpu.memory_space<vmem>>, vector<1x8x4xf32>
    %16 = vector.shape_cast %15 : vector<1x8x4xf32> to vector<8x4xf32>
    %c40_18 = arith.constant 40 : index
    %c0_19 = arith.constant 0 : index
    %17 = vector.load %arg9[%c40_18, %c0_19] : memref<64x36xf32, #tpu.memory_space<vmem>>, vector<8x4xf32>
    tpu.vector_store %arg9[%c40_18, %c0_19], %16 {strides = array<i32>} : memref<64x36xf32, #tpu.memory_space<vmem>>, vector<8x4xf32>,
    %c0_20 = arith.constant 0 : index
    %c60 = arith.constant 60 : index
    %c0_21 = arith.constant 0 : index
    %18 = vector.load %arg1[%c0_20, %c60, %c0_21] : memref<1x100x4xf32, #tpu.memory_space<vmem>>, vector<1x8x4xf32>
    %19 = vector.shape_cast %18 : vector<1x8x4xf32> to vector<8x4xf32>
    %c48 = arith.constant 48 : index
    %c0_22 = arith.constant 0 : index
    %20 = vector.load %arg9[%c48, %c0_22] : memref<64x36xf32, #tpu.memory_space<vmem>>, vector<8x4xf32>
    tpu.vector_store %arg9[%c48, %c0_22], %19 {strides = array<i32>} : memref<64x36xf32, #tpu.memory_space<vmem>>, vector<8x4xf32>,
    %c0_23 = arith.constant 0 : index
    %c70 = arith.constant 70 : index
    %c0_24 = arith.constant 0 : index
    %21 = vector.load %arg1[%c0_23, %c70, %c0_24] : memref<1x100x4xf32, #tpu.memory_space<vmem>>, vector<1x8x4xf32>
    %22 = vector.shape_cast %21 : vector<1x8x4xf32> to vector<8x4xf32>
    %c56 = arith.constant 56 : index
    %c0_25 = arith.constant 0 : index
    %23 = vector.load %arg9[%c56, %c0_25] : memref<64x36xf32, #tpu.memory_space<vmem>>, vector<8x4xf32>
    tpu.vector_store %arg9[%c56, %c0_25], %22 {strides = array<i32>} : memref<64x36xf32, #tpu.memory_space<vmem>>, vector<8x4xf32>,
    %c0_26 = arith.constant 0 : index
    %c1 = arith.constant 1 : index
    %c0_27 = arith.constant 0 : index
    %24 = vector.load %arg1[%c0_26, %c1, %c0_27] : memref<1x100x4xf32, #tpu.memory_space<vmem>>, vector<1x8x4xf32>
    %25 = vector.shape_cast %24 : vector<1x8x4xf32> to vector<8x4xf32>
    %c0_28 = arith.constant 0 : index
    %c4 = arith.constant 4 : index
    %26 = vector.load %arg9[%c0_28, %c4] : memref<64x36xf32, #tpu.memory_space<vmem>>, vector<8x4xf32>
    tpu.vector_store %arg9[%c0_28, %c4], %25 {strides = array<i32>} : memref<64x36xf32, #tpu.memory_space<vmem>>, vector<8x4xf32>,
    %c0_29 = arith.constant 0 : index
    %c11 = arith.constant 11 : index
    %c0_30 = arith.constant 0 : index
    %27 = vector.load %arg1[%c0_29, %c11, %c0_30] : memref<1x100x4xf32, #tpu.memory_space<vmem>>, vector<1x8x4xf32>
    %28 = vector.shape_cast %27 : vector<1x8x4xf32> to vector<8x4xf32>
    %c8_31 = arith.constant 8 : index
    %c4_32 = arith.constant 4 : index
    %29 = vector.load %arg9[%c8_31, %c4_32] : memref<64x36xf32, #tpu.memory_space<vmem>>, vector<8x4xf32>
    tpu.vector_store %arg9[%c8_31, %c4_32], %28 {strides = array<i32>} : memref<64x36xf32, #tpu.memory_space<vmem>>, vector<8x4xf32>,
    %c0_33 = arith.constant 0 : index
    %c21 = arith.constant 21 : index
    %c0_34 = arith.constant 0 : index
    %30 = vector.load %arg1[%c0_33, %c21, %c0_34] : memref<1x100x4xf32, #tpu.memory_space<vmem>>, vector<1x8x4xf32>
    %31 = vector.shape_cast %30 : vector<1x8x4xf32> to vector<8x4xf32>
    %c16_35 = arith.constant 16 : index
    %c4_36 = arith.constant 4 : index
    %32 = vector.load %arg9[%c16_35, %c4_36] : memref<64x36xf32, #tpu.memory_space<vmem>>, vector<8x4xf32>
    tpu.vector_store %arg9[%c16_35, %c4_36], %31 {strides = array<i32>} : memref<64x36xf32, #tpu.memory_space<vmem>>, vector<8x4xf32>,
    %c0_37 = arith.constant 0 : index
    %c31 = arith.constant 31 : index
    %c0_38 = arith.constant 0 : index
    %33 = vector.load %arg1[%c0_37, %c31, %c0_38] : memref<1x100x4xf32, #tpu.memory_space<vmem>>, vector<1x8x4xf32>
    %34 = vector.shape_cast %33 : vector<1x8x4xf32> to vector<8x4xf32>
    %c24_39 = arith.constant 24 : index
    %c4_40 = arith.constant 4 : index
    %35 = vector.load %arg9[%c24_39, %c4_40] : memref<64x36xf32, #tpu.memory_space<vmem>>, vector<8x4xf32>
    tpu.vector_store %arg9[%c24_39, %c4_40], %34 {strides = array<i32>} : memref<64x36xf32, #tpu.memory_space<vmem>>, vector<8x4xf32>,
    %c0_41 = arith.constant 0 : index
    %c41 = arith.constant 41 : index
    %c0_42 = arith.constant 0 : index
    %36 = vector.load %arg1[%c0_41, %c41, %c0_42] : memref<1x100x4xf32, #tpu.memory_space<vmem>>, vector<1x8x4xf32>
    %37 = vector.shape_cast %36 : vector<1x8x4xf32> to vector<8x4xf32>
    %c32_43 = arith.constant 32 : index
    %c4_44 = arith.constant 4 : index
    %38 = vector.load %arg9[%c32_43, %c4_44] : memref<64x36xf32, #tpu.memory_space<vmem>>, vector<8x4xf32>
    tpu.vector_store %arg9[%c32_43, %c4_44], %37 {strides = array<i32>} : memref<64x36xf32, #tpu.memory_space<vmem>>, vector<8x4xf32>,
    %c0_45 = arith.constant 0 : index
    %c51 = arith.constant 51 : index
    %c0_46 = arith.constant 0 : index
    %39 = vector.load %arg1[%c0_45, %c51, %c0_46] : memref<1x100x4xf32, #tpu.memory_space<vmem>>, vector<1x8x4xf32>
    %40 = vector.shape_cast %39 : vector<1x8x4xf32> to vector<8x4xf32>
    %c40_47 = arith.constant 40 : index
    %c4_48 = arith.constant 4 : index
    %41 = vector.load %arg9[%c40_47, %c4_48] : memref<64x36xf32, #tpu.memory_space<vmem>>, vector<8x4xf32>
    tpu.vector_store %arg9[%c40_47, %c4_48], %40 {strides = array<i32>} : memref<64x36xf32, #tpu.memory_space<vmem>>, vector<8x4xf32>,
    %c0_49 = arith.constant 0 : index
    %c61 = arith.constant 61 : index
    %c0_50 = arith.constant 0 : index
    %42 = vector.load %arg1[%c0_49, %c61, %c0_50] : memref<1x100x4xf32, #tpu.memory_space<vmem>>, vector<1x8x4xf32>
    %43 = vector.shape_cast %42 : vector<1x8x4xf32> to vector<8x4xf32>
    %c48_51 = arith.constant 48 : index
    %c4_52 = arith.constant 4 : index
    %44 = vector.load %arg9[%c48_51, %c4_52] : memref<64x36xf32, #tpu.memory_space<vmem>>, vector<8x4xf32>
    tpu.vector_store %arg9[%c48_51, %c4_52], %43 {strides = array<i32>} : memref<64x36xf32, #tpu.memory_space<vmem>>, vector<8x4xf32>,
    %c0_53 = arith.constant 0 : index
    %c71 = arith.constant 71 : index
    %c0_54 = arith.constant 0 : index
    %45 = vector.load %arg1[%c0_53, %c71, %c0_54] : memref<1x100x4xf32, #tpu.memory_space<vmem>>, vector<1x8x4xf32>
    %46 = vector.shape_cast %45 : vector<1x8x4xf32> to vector<8x4xf32>
    %c56_55 = arith.constant 56 : index
    %c4_56 = arith.constant 4 : index
    %47 = vector.load %arg9[%c56_55, %c4_56] : memref<64x36xf32, #tpu.memory_space<vmem>>, vector<8x4xf32>
    tpu.vector_store %arg9[%c56_55, %c4_56], %46 {strides = array<i32>} : memref<64x36xf32, #tpu.memory_space<vmem>>, vector<8x4xf32>,
    %c0_57 = arith.constant 0 : index
    %c2 = arith.constant 2 : index
    %c0_58 = arith.constant 0 : index
    %48 = vector.load %arg1[%c0_57, %c2, %c0_58] : memref<1x100x4xf32, #tpu.memory_space<vmem>>, vector<1x8x4xf32>
    %49 = vector.shape_cast %48 : vector<1x8x4xf32> to vector<8x4xf32>
    %c0_59 = arith.constant 0 : index
    %c8_60 = arith.constant 8 : index
    %50 = vector.load %arg9[%c0_59, %c8_60] : memref<64x36xf32, #tpu.memory_space<vmem>>, vector<8x4xf32>
    tpu.vector_store %arg9[%c0_59, %c8_60], %49 {strides = array<i32>} : memref<64x36xf32, #tpu.memory_space<vmem>>, vector<8x4xf32>,
    %c0_61 = arith.constant 0 : index
    %c12 = arith.constant 12 : index
    %c0_62 = arith.constant 0 : index
    %51 = vector.load %arg1[%c0_61, %c12, %c0_62] : memref<1x100x4xf32, #tpu.memory_space<vmem>>, vector<1x8x4xf32>
    %52 = vector.shape_cast %51 : vector<1x8x4xf32> to vector<8x4xf32>
    %c8_63 = arith.constant 8 : index
    %c8_64 = arith.constant 8 : index
    %53 = vector.load %arg9[%c8_63, %c8_64] : memref<64x36xf32, #tpu.memory_space<vmem>>, vector<8x4xf32>
    tpu.vector_store %arg9[%c8_63, %c8_64], %52 {strides = array<i32>} : memref<64x36xf32, #tpu.memory_space<vmem>>, vector<8x4xf32>,
    %c0_65 = arith.constant 0 : index
    %c22 = arith.constant 22 : index
    %c0_66 = arith.constant 0 : index
    %54 = vector.load %arg1[%c0_65, %c22, %c0_66] : memref<1x100x4xf32, #tpu.memory_space<vmem>>, vector<1x8x4xf32>
    %55 = vector.shape_cast %54 : vector<1x8x4xf32> to vector<8x4xf32>
    %c16_67 = arith.constant 16 : index
    %c8_68 = arith.constant 8 : index
    %56 = vector.load %arg9[%c16_67, %c8_68] : memref<64x36xf32, #tpu.memory_space<vmem>>, vector<8x4xf32>
    tpu.vector_store %arg9[%c16_67, %c8_68], %55 {strides = array<i32>} : memref<64x36xf32, #tpu.memory_space<vmem>>, vector<8x4xf32>,
    %c0_69 = arith.constant 0 : index
    %c32_70 = arith.constant 32 : index
    %c0_71 = arith.constant 0 : index
    %57 = vector.load %arg1[%c0_69, %c32_70, %c0_71] : memref<1x100x4xf32, #tpu.memory_space<vmem>>, vector<1x8x4xf32>
    %58 = vector.shape_cast %57 : vector<1x8x4xf32> to vector<8x4xf32>
    %c24_72 = arith.constant 24 : index
    %c8_73 = arith.constant 8 : index
    %59 = vector.load %arg9[%c24_72, %c8_73] : memref<64x36xf32, #tpu.memory_space<vmem>>, vector<8x4xf32>
    tpu.vector_store %arg9[%c24_72, %c8_73], %58 {strides = array<i32>} : memref<64x36xf32, #tpu.memory_space<vmem>>, vector<8x4xf32>,
    %c0_74 = arith.constant 0 : index
    %c42 = arith.constant 42 : index
    %c0_75 = arith.constant 0 : index
    %60 = vector.load %arg1[%c0_74, %c42, %c0_75] : memref<1x100x4xf32, #tpu.memory_space<vmem>>, vector<1x8x4xf32>
    %61 = vector.shape_cast %60 : vector<1x8x4xf32> to vector<8x4xf32>
    %c32_76 = arith.constant 32 : index
    %c8_77 = arith.constant 8 : index
    %62 = vector.load %arg9[%c32_76, %c8_77] : memref<64x36xf32, #tpu.memory_space<vmem>>, vector<8x4xf32>
    tpu.vector_store %arg9[%c32_76, %c8_77], %61 {strides = array<i32>} : memref<64x36xf32, #tpu.memory_space<vmem>>, vector<8x4xf32>,
    %c0_78 = arith.constant 0 : index
    %c52 = arith.constant 52 : index
    %c0_79 = arith.constant 0 : index
    %63 = vector.load %arg1[%c0_78, %c52, %c0_79] : memref<1x100x4xf32, #tpu.memory_space<vmem>>, vector<1x8x4xf32>
    %64 = vector.shape_cast %63 : vector<1x8x4xf32> to vector<8x4xf32>
    %c40_80 = arith.constant 40 : index
    %c8_81 = arith.constant 8 : index
    %65 = vector.load %arg9[%c40_80, %c8_81] : memref<64x36xf32, #tpu.memory_space<vmem>>, vector<8x4xf32>
    tpu.vector_store %arg9[%c40_80, %c8_81], %64 {strides = array<i32>} : memref<64x36xf32, #tpu.memory_space<vmem>>, vector<8x4xf32>,
    %c0_82 = arith.constant 0 : index
    %c62 = arith.constant 62 : index
    %c0_83 = arith.constant 0 : index
    %66 = vector.load %arg1[%c0_82, %c62, %c0_83] : memref<1x100x4xf32, #tpu.memory_space<vmem>>, vector<1x8x4xf32>
    %67 = vector.shape_cast %66 : vector<1x8x4xf32> to vector<8x4xf32>
    %c48_84 = arith.constant 48 : index
    %c8_85 = arith.constant 8 : index
    %68 = vector.load %arg9[%c48_84, %c8_85] : memref<64x36xf32, #tpu.memory_space<vmem>>, vector<8x4xf32>
    tpu.vector_store %arg9[%c48_84, %c8_85], %67 {strides = array<i32>} : memref<64x36xf32, #tpu.memory_space<vmem>>, vector<8x4xf32>,
    %c0_86 = arith.constant 0 : index
    %c72 = arith.constant 72 : index
    %c0_87 = arith.constant 0 : index
    %69 = vector.load %arg1[%c0_86, %c72, %c0_87] : memref<1x100x4xf32, #tpu.memory_space<vmem>>, vector<1x8x4xf32>
    %70 = vector.shape_cast %69 : vector<1x8x4xf32> to vector<8x4xf32>
    %c56_88 = arith.constant 56 : index
    %c8_89 = arith.constant 8 : index
    %71 = vector.load %arg9[%c56_88, %c8_89] : memref<64x36xf32, #tpu.memory_space<vmem>>, vector<8x4xf32>
    tpu.vector_store %arg9[%c56_88, %c8_89], %70 {strides = array<i32>} : memref<64x36xf32, #tpu.memory_space<vmem>>, vector<8x4xf32>,
    %c0_90 = arith.constant 0 : index
    %c10_91 = arith.constant 10 : index
    %c0_92 = arith.constant 0 : index
    %72 = vector.load %arg1[%c0_90, %c10_91, %c0_92] : memref<1x100x4xf32, #tpu.memory_space<vmem>>, vector<1x8x4xf32>
    %73 = vector.shape_cast %72 : vector<1x8x4xf32> to vector<8x4xf32>
    %c0_93 = arith.constant 0 : index
    %c12_94 = arith.constant 12 : index
    %74 = vector.load %arg9[%c0_93, %c12_94] : memref<64x36xf32, #tpu.memory_space<vmem>>, vector<8x4xf32>
    tpu.vector_store %arg9[%c0_93, %c12_94], %73 {strides = array<i32>} : memref<64x36xf32, #tpu.memory_space<vmem>>, vector<8x4xf32>,
    %c0_95 = arith.constant 0 : index
    %c20_96 = arith.constant 20 : index
    %c0_97 = arith.constant 0 : index
    %75 = vector.load %arg1[%c0_95, %c20_96, %c0_97] : memref<1x100x4xf32, #tpu.memory_space<vmem>>, vector<1x8x4xf32>
    %76 = vector.shape_cast %75 : vector<1x8x4xf32> to vector<8x4xf32>
    %c8_98 = arith.constant 8 : index
    %c12_99 = arith.constant 12 : index
    %77 = vector.load %arg9[%c8_98, %c12_99] : memref<64x36xf32, #tpu.memory_space<vmem>>, vector<8x4xf32>
    tpu.vector_store %arg9[%c8_98, %c12_99], %76 {strides = array<i32>} : memref<64x36xf32, #tpu.memory_space<vmem>>, vector<8x4xf32>,
    %c0_100 = arith.constant 0 : index
    %c30_101 = arith.constant 30 : index
    %c0_102 = arith.constant 0 : index
    %78 = vector.load %arg1[%c0_100, %c30_101, %c0_102] : memref<1x100x4xf32, #tpu.memory_space<vmem>>, vector<1x8x4xf32>
    %79 = vector.shape_cast %78 : vector<1x8x4xf32> to vector<8x4xf32>
    %c16_103 = arith.constant 16 : index
    %c12_104 = arith.constant 12 : index
    %80 = vector.load %arg9[%c16_103, %c12_104] : memref<64x36xf32, #tpu.memory_space<vmem>>, vector<8x4xf32>
    tpu.vector_store %arg9[%c16_103, %c12_104], %79 {strides = array<i32>} : memref<64x36xf32, #tpu.memory_space<vmem>>, vector<8x4xf32>,
    %c0_105 = arith.constant 0 : index
    %c40_106 = arith.constant 40 : index
    %c0_107 = arith.constant 0 : index
    %81 = vector.load %arg1[%c0_105, %c40_106, %c0_107] : memref<1x100x4xf32, #tpu.memory_space<vmem>>, vector<1x8x4xf32>
    %82 = vector.shape_cast %81 : vector<1x8x4xf32> to vector<8x4xf32>
    %c24_108 = arith.constant 24 : index
    %c12_109 = arith.constant 12 : index
    %83 = vector.load %arg9[%c24_108, %c12_109] : memref<64x36xf32, #tpu.memory_space<vmem>>, vector<8x4xf32>
    tpu.vector_store %arg9[%c24_108, %c12_109], %82 {strides = array<i32>} : memref<64x36xf32, #tpu.memory_space<vmem>>, vector<8x4xf32>,
    %c0_110 = arith.constant 0 : index
    %c50_111 = arith.constant 50 : index
    %c0_112 = arith.constant 0 : index
    %84 = vector.load %arg1[%c0_110, %c50_111, %c0_112] : memref<1x100x4xf32, #tpu.memory_space<vmem>>, vector<1x8x4xf32>
    %85 = vector.shape_cast %84 : vector<1x8x4xf32> to vector<8x4xf32>
    %c32_113 = arith.constant 32 : index
    %c12_114 = arith.constant 12 : index
    %86 = vector.load %arg9[%c32_113, %c12_114] : memref<64x36xf32, #tpu.memory_space<vmem>>, vector<8x4xf32>
    tpu.vector_store %arg9[%c32_113, %c12_114], %85 {strides = array<i32>} : memref<64x36xf32, #tpu.memory_space<vmem>>, vector<8x4xf32>,
    %c0_115 = arith.constant 0 : index
    %c60_116 = arith.constant 60 : index
    %c0_117 = arith.constant 0 : index
    %87 = vector.load %arg1[%c0_115, %c60_116, %c0_117] : memref<1x100x4xf32, #tpu.memory_space<vmem>>, vector<1x8x4xf32>
    %88 = vector.shape_cast %87 : vector<1x8x4xf32> to vector<8x4xf32>
    %c40_118 = arith.constant 40 : index
    %c12_119 = arith.constant 12 : index
    %89 = vector.load %arg9[%c40_118, %c12_119] : memref<64x36xf32, #tpu.memory_space<vmem>>, vector<8x4xf32>
    tpu.vector_store %arg9[%c40_118, %c12_119], %88 {strides = array<i32>} : memref<64x36xf32, #tpu.memory_space<vmem>>, vector<8x4xf32>,
    %c0_120 = arith.constant 0 : index
    %c70_121 = arith.constant 70 : index
    %c0_122 = arith.constant 0 : index
    %90 = vector.load %arg1[%c0_120, %c70_121, %c0_122] : memref<1x100x4xf32, #tpu.memory_space<vmem>>, vector<1x8x4xf32>
    %91 = vector.shape_cast %90 : vector<1x8x4xf32> to vector<8x4xf32>
    %c48_123 = arith.constant 48 : index
    %c12_124 = arith.constant 12 : index
    %92 = vector.load %arg9[%c48_123, %c12_124] : memref<64x36xf32, #tpu.memory_space<vmem>>, vector<8x4xf32>
    tpu.vector_store %arg9[%c48_123, %c12_124], %91 {strides = array<i32>} : memref<64x36xf32, #tpu.memory_space<vmem>>, vector<8x4xf32>,
    %c0_125 = arith.constant 0 : index
    %c80 = arith.constant 80 : index
    %c0_126 = arith.constant 0 : index
    %93 = vector.load %arg1[%c0_125, %c80, %c0_126] : memref<1x100x4xf32, #tpu.memory_space<vmem>>, vector<1x8x4xf32>
    %94 = vector.shape_cast %93 : vector<1x8x4xf32> to vector<8x4xf32>
    %c56_127 = arith.constant 56 : index
    %c12_128 = arith.constant 12 : index
    %95 = vector.load %arg9[%c56_127, %c12_128] : memref<64x36xf32, #tpu.memory_space<vmem>>, vector<8x4xf32>
    tpu.vector_store %arg9[%c56_127, %c12_128], %94 {strides = array<i32>} : memref<64x36xf32, #tpu.memory_space<vmem>>, vector<8x4xf32>,
    %c0_129 = arith.constant 0 : index
    %c11_130 = arith.constant 11 : index
    %c0_131 = arith.constant 0 : index
    %96 = vector.load %arg1[%c0_129, %c11_130, %c0_131] : memref<1x100x4xf32, #tpu.memory_space<vmem>>, vector<1x8x4xf32>
    %97 = vector.shape_cast %96 : vector<1x8x4xf32> to vector<8x4xf32>
    %c0_132 = arith.constant 0 : index
    %c16_133 = arith.constant 16 : index
    %98 = vector.load %arg9[%c0_132, %c16_133] : memref<64x36xf32, #tpu.memory_space<vmem>>, vector<8x4xf32>
    tpu.vector_store %arg9[%c0_132, %c16_133], %97 {strides = array<i32>} : memref<64x36xf32, #tpu.memory_space<vmem>>, vector<8x4xf32>,
    %c0_134 = arith.constant 0 : index
    %c21_135 = arith.constant 21 : index
    %c0_136 = arith.constant 0 : index
    %99 = vector.load %arg1[%c0_134, %c21_135, %c0_136] : memref<1x100x4xf32, #tpu.memory_space<vmem>>, vector<1x8x4xf32>
    %100 = vector.shape_cast %99 : vector<1x8x4xf32> to vector<8x4xf32>
    %c8_137 = arith.constant 8 : index
    %c16_138 = arith.constant 16 : index
    %101 = vector.load %arg9[%c8_137, %c16_138] : memref<64x36xf32, #tpu.memory_space<vmem>>, vector<8x4xf32>
    tpu.vector_store %arg9[%c8_137, %c16_138], %100 {strides = array<i32>} : memref<64x36xf32, #tpu.memory_space<vmem>>, vector<8x4xf32>,
    %c0_139 = arith.constant 0 : index
    %c31_140 = arith.constant 31 : index
    %c0_141 = arith.constant 0 : index
    %102 = vector.load %arg1[%c0_139, %c31_140, %c0_141] : memref<1x100x4xf32, #tpu.memory_space<vmem>>, vector<1x8x4xf32>
    %103 = vector.shape_cast %102 : vector<1x8x4xf32> to vector<8x4xf32>
    %c16_142 = arith.constant 16 : index
    %c16_143 = arith.constant 16 : index
    %104 = vector.load %arg9[%c16_142, %c16_143] : memref<64x36xf32, #tpu.memory_space<vmem>>, vector<8x4xf32>
    tpu.vector_store %arg9[%c16_142, %c16_143], %103 {strides = array<i32>} : memref<64x36xf32, #tpu.memory_space<vmem>>, vector<8x4xf32>,
    %c0_144 = arith.constant 0 : index
    %c41_145 = arith.constant 41 : index
    %c0_146 = arith.constant 0 : index
    %105 = vector.load %arg1[%c0_144, %c41_145, %c0_146] : memref<1x100x4xf32, #tpu.memory_space<vmem>>, vector<1x8x4xf32>
    %106 = vector.shape_cast %105 : vector<1x8x4xf32> to vector<8x4xf32>
    %c24_147 = arith.constant 24 : index
    %c16_148 = arith.constant 16 : index
    %107 = vector.load %arg9[%c24_147, %c16_148] : memref<64x36xf32, #tpu.memory_space<vmem>>, vector<8x4xf32>
    tpu.vector_store %arg9[%c24_147, %c16_148], %106 {strides = array<i32>} : memref<64x36xf32, #tpu.memory_space<vmem>>, vector<8x4xf32>,
    %c0_149 = arith.constant 0 : index
    %c51_150 = arith.constant 51 : index
    %c0_151 = arith.constant 0 : index
    %108 = vector.load %arg1[%c0_149, %c51_150, %c0_151] : memref<1x100x4xf32, #tpu.memory_space<vmem>>, vector<1x8x4xf32>
    %109 = vector.shape_cast %108 : vector<1x8x4xf32> to vector<8x4xf32>
    %c32_152 = arith.constant 32 : index
    %c16_153 = arith.constant 16 : index
    %110 = vector.load %arg9[%c32_152, %c16_153] : memref<64x36xf32, #tpu.memory_space<vmem>>, vector<8x4xf32>
    tpu.vector_store %arg9[%c32_152, %c16_153], %109 {strides = array<i32>} : memref<64x36xf32, #tpu.memory_space<vmem>>, vector<8x4xf32>,
    %c0_154 = arith.constant 0 : index
    %c61_155 = arith.constant 61 : index
    %c0_156 = arith.constant 0 : index
    %111 = vector.load %arg1[%c0_154, %c61_155, %c0_156] : memref<1x100x4xf32, #tpu.memory_space<vmem>>, vector<1x8x4xf32>
    %112 = vector.shape_cast %111 : vector<1x8x4xf32> to vector<8x4xf32>
    %c40_157 = arith.constant 40 : index
    %c16_158 = arith.constant 16 : index
    %113 = vector.load %arg9[%c40_157, %c16_158] : memref<64x36xf32, #tpu.memory_space<vmem>>, vector<8x4xf32>
    tpu.vector_store %arg9[%c40_157, %c16_158], %112 {strides = array<i32>} : memref<64x36xf32, #tpu.memory_space<vmem>>, vector<8x4xf32>,
    %c0_159 = arith.constant 0 : index
    %c71_160 = arith.constant 71 : index
    %c0_161 = arith.constant 0 : index
    %114 = vector.load %arg1[%c0_159, %c71_160, %c0_161] : memref<1x100x4xf32, #tpu.memory_space<vmem>>, vector<1x8x4xf32>
    %115 = vector.shape_cast %114 : vector<1x8x4xf32> to vector<8x4xf32>
    %c48_162 = arith.constant 48 : index
    %c16_163 = arith.constant 16 : index
    %116 = vector.load %arg9[%c48_162, %c16_163] : memref<64x36xf32, #tpu.memory_space<vmem>>, vector<8x4xf32>
    tpu.vector_store %arg9[%c48_162, %c16_163], %115 {strides = array<i32>} : memref<64x36xf32, #tpu.memory_space<vmem>>, vector<8x4xf32>,
    %c0_164 = arith.constant 0 : index
    %c81 = arith.constant 81 : index
    %c0_165 = arith.constant 0 : index
    %117 = vector.load %arg1[%c0_164, %c81, %c0_165] : memref<1x100x4xf32, #tpu.memory_space<vmem>>, vector<1x8x4xf32>
    %118 = vector.shape_cast %117 : vector<1x8x4xf32> to vector<8x4xf32>
    %c56_166 = arith.constant 56 : index
    %c16_167 = arith.constant 16 : index
    %119 = vector.load %arg9[%c56_166, %c16_167] : memref<64x36xf32, #tpu.memory_space<vmem>>, vector<8x4xf32>
    tpu.vector_store %arg9[%c56_166, %c16_167], %118 {strides = array<i32>} : memref<64x36xf32, #tpu.memory_space<vmem>>, vector<8x4xf32>,
    %c0_168 = arith.constant 0 : index
    %c12_169 = arith.constant 12 : index
    %c0_170 = arith.constant 0 : index
    %120 = vector.load %arg1[%c0_168, %c12_169, %c0_170] : memref<1x100x4xf32, #tpu.memory_space<vmem>>, vector<1x8x4xf32>
    %121 = vector.shape_cast %120 : vector<1x8x4xf32> to vector<8x4xf32>
    %c0_171 = arith.constant 0 : index
    %c20_172 = arith.constant 20 : index
    %122 = vector.load %arg9[%c0_171, %c20_172] : memref<64x36xf32, #tpu.memory_space<vmem>>, vector<8x4xf32>
    tpu.vector_store %arg9[%c0_171, %c20_172], %121 {strides = array<i32>} : memref<64x36xf32, #tpu.memory_space<vmem>>, vector<8x4xf32>,
    %c0_173 = arith.constant 0 : index
    %c22_174 = arith.constant 22 : index
    %c0_175 = arith.constant 0 : index
    %123 = vector.load %arg1[%c0_173, %c22_174, %c0_175] : memref<1x100x4xf32, #tpu.memory_space<vmem>>, vector<1x8x4xf32>
    %124 = vector.shape_cast %123 : vector<1x8x4xf32> to vector<8x4xf32>
    %c8_176 = arith.constant 8 : index
    %c20_177 = arith.constant 20 : index
    %125 = vector.load %arg9[%c8_176, %c20_177] : memref<64x36xf32, #tpu.memory_space<vmem>>, vector<8x4xf32>
    tpu.vector_store %arg9[%c8_176, %c20_177], %124 {strides = array<i32>} : memref<64x36xf32, #tpu.memory_space<vmem>>, vector<8x4xf32>,
    %c0_178 = arith.constant 0 : index
    %c32_179 = arith.constant 32 : index
    %c0_180 = arith.constant 0 : index
    %126 = vector.load %arg1[%c0_178, %c32_179, %c0_180] : memref<1x100x4xf32, #tpu.memory_space<vmem>>, vector<1x8x4xf32>
    %127 = vector.shape_cast %126 : vector<1x8x4xf32> to vector<8x4xf32>
    %c16_181 = arith.constant 16 : index
    %c20_182 = arith.constant 20 : index
    %128 = vector.load %arg9[%c16_181, %c20_182] : memref<64x36xf32, #tpu.memory_space<vmem>>, vector<8x4xf32>
    tpu.vector_store %arg9[%c16_181, %c20_182], %127 {strides = array<i32>} : memref<64x36xf32, #tpu.memory_space<vmem>>, vector<8x4xf32>,
    %c0_183 = arith.constant 0 : index
    %c42_184 = arith.constant 42 : index
    %c0_185 = arith.constant 0 : index
    %129 = vector.load %arg1[%c0_183, %c42_184, %c0_185] : memref<1x100x4xf32, #tpu.memory_space<vmem>>, vector<1x8x4xf32>
    %130 = vector.shape_cast %129 : vector<1x8x4xf32> to vector<8x4xf32>
    %c24_186 = arith.constant 24 : index
    %c20_187 = arith.constant 20 : index
    %131 = vector.load %arg9[%c24_186, %c20_187] : memref<64x36xf32, #tpu.memory_space<vmem>>, vector<8x4xf32>
    tpu.vector_store %arg9[%c24_186, %c20_187], %130 {strides = array<i32>} : memref<64x36xf32, #tpu.memory_space<vmem>>, vector<8x4xf32>,
    %c0_188 = arith.constant 0 : index
    %c52_189 = arith.constant 52 : index
    %c0_190 = arith.constant 0 : index
    %132 = vector.load %arg1[%c0_188, %c52_189, %c0_190] : memref<1x100x4xf32, #tpu.memory_space<vmem>>, vector<1x8x4xf32>
    %133 = vector.shape_cast %132 : vector<1x8x4xf32> to vector<8x4xf32>
    %c32_191 = arith.constant 32 : index
    %c20_192 = arith.constant 20 : index
    %134 = vector.load %arg9[%c32_191, %c20_192] : memref<64x36xf32, #tpu.memory_space<vmem>>, vector<8x4xf32>
    tpu.vector_store %arg9[%c32_191, %c20_192], %133 {strides = array<i32>} : memref<64x36xf32, #tpu.memory_space<vmem>>, vector<8x4xf32>,
    %c0_193 = arith.constant 0 : index
    %c62_194 = arith.constant 62 : index
    %c0_195 = arith.constant 0 : index
    %135 = vector.load %arg1[%c0_193, %c62_194, %c0_195] : memref<1x100x4xf32, #tpu.memory_space<vmem>>, vector<1x8x4xf32>
    %136 = vector.shape_cast %135 : vector<1x8x4xf32> to vector<8x4xf32>
    %c40_196 = arith.constant 40 : index
    %c20_197 = arith.constant 20 : index
    %137 = vector.load %arg9[%c40_196, %c20_197] : memref<64x36xf32, #tpu.memory_space<vmem>>, vector<8x4xf32>
    tpu.vector_store %arg9[%c40_196, %c20_197], %136 {strides = array<i32>} : memref<64x36xf32, #tpu.memory_space<vmem>>, vector<8x4xf32>,
    %c0_198 = arith.constant 0 : index
    %c72_199 = arith.constant 72 : index
    %c0_200 = arith.constant 0 : index
    %138 = vector.load %arg1[%c0_198, %c72_199, %c0_200] : memref<1x100x4xf32, #tpu.memory_space<vmem>>, vector<1x8x4xf32>
    %139 = vector.shape_cast %138 : vector<1x8x4xf32> to vector<8x4xf32>
    %c48_201 = arith.constant 48 : index
    %c20_202 = arith.constant 20 : index
    %140 = vector.load %arg9[%c48_201, %c20_202] : memref<64x36xf32, #tpu.memory_space<vmem>>, vector<8x4xf32>
    tpu.vector_store %arg9[%c48_201, %c20_202], %139 {strides = array<i32>} : memref<64x36xf32, #tpu.memory_space<vmem>>, vector<8x4xf32>,
    %c0_203 = arith.constant 0 : index
    %c82 = arith.constant 82 : index
    %c0_204 = arith.constant 0 : index
    %141 = vector.load %arg1[%c0_203, %c82, %c0_204] : memref<1x100x4xf32, #tpu.memory_space<vmem>>, vector<1x8x4xf32>
    %142 = vector.shape_cast %141 : vector<1x8x4xf32> to vector<8x4xf32>
    %c56_205 = arith.constant 56 : index
    %c20_206 = arith.constant 20 : index
    %143 = vector.load %arg9[%c56_205, %c20_206] : memref<64x36xf32, #tpu.memory_space<vmem>>, vector<8x4xf32>
    tpu.vector_store %arg9[%c56_205, %c20_206], %142 {strides = array<i32>} : memref<64x36xf32, #tpu.memory_space<vmem>>, vector<8x4xf32>,
    %c0_207 = arith.constant 0 : index
    %c20_208 = arith.constant 20 : index
    %c0_209 = arith.constant 0 : index
    %144 = vector.load %arg1[%c0_207, %c20_208, %c0_209] : memref<1x100x4xf32, #tpu.memory_space<vmem>>, vector<1x8x4xf32>
    %145 = vector.shape_cast %144 : vector<1x8x4xf32> to vector<8x4xf32>
    %c0_210 = arith.constant 0 : index
    %c24_211 = arith.constant 24 : index
    %146 = vector.load %arg9[%c0_210, %c24_211] : memref<64x36xf32, #tpu.memory_space<vmem>>, vector<8x4xf32>
    tpu.vector_store %arg9[%c0_210, %c24_211], %145 {strides = array<i32>} : memref<64x36xf32, #tpu.memory_space<vmem>>, vector<8x4xf32>,
    %c0_212 = arith.constant 0 : index
    %c30_213 = arith.constant 30 : index
    %c0_214 = arith.constant 0 : index
    %147 = vector.load %arg1[%c0_212, %c30_213, %c0_214] : memref<1x100x4xf32, #tpu.memory_space<vmem>>, vector<1x8x4xf32>
    %148 = vector.shape_cast %147 : vector<1x8x4xf32> to vector<8x4xf32>
    %c8_215 = arith.constant 8 : index
    %c24_216 = arith.constant 24 : index
    %149 = vector.load %arg9[%c8_215, %c24_216] : memref<64x36xf32, #tpu.memory_space<vmem>>, vector<8x4xf32>
    tpu.vector_store %arg9[%c8_215, %c24_216], %148 {strides = array<i32>} : memref<64x36xf32, #tpu.memory_space<vmem>>, vector<8x4xf32>,
    %c0_217 = arith.constant 0 : index
    %c40_218 = arith.constant 40 : index
    %c0_219 = arith.constant 0 : index
    %150 = vector.load %arg1[%c0_217, %c40_218, %c0_219] : memref<1x100x4xf32, #tpu.memory_space<vmem>>, vector<1x8x4xf32>
    %151 = vector.shape_cast %150 : vector<1x8x4xf32> to vector<8x4xf32>
    %c16_220 = arith.constant 16 : index
    %c24_221 = arith.constant 24 : index
    %152 = vector.load %arg9[%c16_220, %c24_221] : memref<64x36xf32, #tpu.memory_space<vmem>>, vector<8x4xf32>
    tpu.vector_store %arg9[%c16_220, %c24_221], %151 {strides = array<i32>} : memref<64x36xf32, #tpu.memory_space<vmem>>, vector<8x4xf32>,
    %c0_222 = arith.constant 0 : index
    %c50_223 = arith.constant 50 : index
    %c0_224 = arith.constant 0 : index
    %153 = vector.load %arg1[%c0_222, %c50_223, %c0_224] : memref<1x100x4xf32, #tpu.memory_space<vmem>>, vector<1x8x4xf32>
    %154 = vector.shape_cast %153 : vector<1x8x4xf32> to vector<8x4xf32>
    %c24_225 = arith.constant 24 : index
    %c24_226 = arith.constant 24 : index
    %155 = vector.load %arg9[%c24_225, %c24_226] : memref<64x36xf32, #tpu.memory_space<vmem>>, vector<8x4xf32>
    tpu.vector_store %arg9[%c24_225, %c24_226], %154 {strides = array<i32>} : memref<64x36xf32, #tpu.memory_space<vmem>>, vector<8x4xf32>,
    %c0_227 = arith.constant 0 : index
    %c60_228 = arith.constant 60 : index
    %c0_229 = arith.constant 0 : index
    %156 = vector.load %arg1[%c0_227, %c60_228, %c0_229] : memref<1x100x4xf32, #tpu.memory_space<vmem>>, vector<1x8x4xf32>
    %157 = vector.shape_cast %156 : vector<1x8x4xf32> to vector<8x4xf32>
    %c32_230 = arith.constant 32 : index
    %c24_231 = arith.constant 24 : index
    %158 = vector.load %arg9[%c32_230, %c24_231] : memref<64x36xf32, #tpu.memory_space<vmem>>, vector<8x4xf32>
    tpu.vector_store %arg9[%c32_230, %c24_231], %157 {strides = array<i32>} : memref<64x36xf32, #tpu.memory_space<vmem>>, vector<8x4xf32>,
    %c0_232 = arith.constant 0 : index
    %c70_233 = arith.constant 70 : index
    %c0_234 = arith.constant 0 : index
    %159 = vector.load %arg1[%c0_232, %c70_233, %c0_234] : memref<1x100x4xf32, #tpu.memory_space<vmem>>, vector<1x8x4xf32>
    %160 = vector.shape_cast %159 : vector<1x8x4xf32> to vector<8x4xf32>
    %c40_235 = arith.constant 40 : index
    %c24_236 = arith.constant 24 : index
    %161 = vector.load %arg9[%c40_235, %c24_236] : memref<64x36xf32, #tpu.memory_space<vmem>>, vector<8x4xf32>
    tpu.vector_store %arg9[%c40_235, %c24_236], %160 {strides = array<i32>} : memref<64x36xf32, #tpu.memory_space<vmem>>, vector<8x4xf32>,
    %c0_237 = arith.constant 0 : index
    %c80_238 = arith.constant 80 : index
    %c0_239 = arith.constant 0 : index
    %162 = vector.load %arg1[%c0_237, %c80_238, %c0_239] : memref<1x100x4xf32, #tpu.memory_space<vmem>>, vector<1x8x4xf32>
    %163 = vector.shape_cast %162 : vector<1x8x4xf32> to vector<8x4xf32>
    %c48_240 = arith.constant 48 : index
    %c24_241 = arith.constant 24 : index
    %164 = vector.load %arg9[%c48_240, %c24_241] : memref<64x36xf32, #tpu.memory_space<vmem>>, vector<8x4xf32>
    tpu.vector_store %arg9[%c48_240, %c24_241], %163 {strides = array<i32>} : memref<64x36xf32, #tpu.memory_space<vmem>>, vector<8x4xf32>,
    %c0_242 = arith.constant 0 : index
    %c90 = arith.constant 90 : index
    %c0_243 = arith.constant 0 : index
    %165 = vector.load %arg1[%c0_242, %c90, %c0_243] : memref<1x100x4xf32, #tpu.memory_space<vmem>>, vector<1x8x4xf32>
    %166 = vector.shape_cast %165 : vector<1x8x4xf32> to vector<8x4xf32>
    %c56_244 = arith.constant 56 : index
    %c24_245 = arith.constant 24 : index
    %167 = vector.load %arg9[%c56_244, %c24_245] : memref<64x36xf32, #tpu.memory_space<vmem>>, vector<8x4xf32>
    tpu.vector_store %arg9[%c56_244, %c24_245], %166 {strides = array<i32>} : memref<64x36xf32, #tpu.memory_space<vmem>>, vector<8x4xf32>,
    %c0_246 = arith.constant 0 : index
    %c21_247 = arith.constant 21 : index
    %c0_248 = arith.constant 0 : index
    %168 = vector.load %arg1[%c0_246, %c21_247, %c0_248] : memref<1x100x4xf32, #tpu.memory_space<vmem>>, vector<1x8x4xf32>
    %169 = vector.shape_cast %168 : vector<1x8x4xf32> to vector<8x4xf32>
    %c0_249 = arith.constant 0 : index
    %c28 = arith.constant 28 : index
    %170 = vector.load %arg9[%c0_249, %c28] : memref<64x36xf32, #tpu.memory_space<vmem>>, vector<8x4xf32>
    tpu.vector_store %arg9[%c0_249, %c28], %169 {strides = array<i32>} : memref<64x36xf32, #tpu.memory_space<vmem>>, vector<8x4xf32>,
    %c0_250 = arith.constant 0 : index
    %c31_251 = arith.constant 31 : index
    %c0_252 = arith.constant 0 : index
    %171 = vector.load %arg1[%c0_250, %c31_251, %c0_252] : memref<1x100x4xf32, #tpu.memory_space<vmem>>, vector<1x8x4xf32>
    %172 = vector.shape_cast %171 : vector<1x8x4xf32> to vector<8x4xf32>
    %c8_253 = arith.constant 8 : index
    %c28_254 = arith.constant 28 : index
    %173 = vector.load %arg9[%c8_253, %c28_254] : memref<64x36xf32, #tpu.memory_space<vmem>>, vector<8x4xf32>
    tpu.vector_store %arg9[%c8_253, %c28_254], %172 {strides = array<i32>} : memref<64x36xf32, #tpu.memory_space<vmem>>, vector<8x4xf32>,
    %c0_255 = arith.constant 0 : index
    %c41_256 = arith.constant 41 : index
    %c0_257 = arith.constant 0 : index
    %174 = vector.load %arg1[%c0_255, %c41_256, %c0_257] : memref<1x100x4xf32, #tpu.memory_space<vmem>>, vector<1x8x4xf32>
    %175 = vector.shape_cast %174 : vector<1x8x4xf32> to vector<8x4xf32>
    %c16_258 = arith.constant 16 : index
    %c28_259 = arith.constant 28 : index
    %176 = vector.load %arg9[%c16_258, %c28_259] : memref<64x36xf32, #tpu.memory_space<vmem>>, vector<8x4xf32>
    tpu.vector_store %arg9[%c16_258, %c28_259], %175 {strides = array<i32>} : memref<64x36xf32, #tpu.memory_space<vmem>>, vector<8x4xf32>,
    %c0_260 = arith.constant 0 : index
    %c51_261 = arith.constant 51 : index
    %c0_262 = arith.constant 0 : index
    %177 = vector.load %arg1[%c0_260, %c51_261, %c0_262] : memref<1x100x4xf32, #tpu.memory_space<vmem>>, vector<1x8x4xf32>
    %178 = vector.shape_cast %177 : vector<1x8x4xf32> to vector<8x4xf32>
    %c24_263 = arith.constant 24 : index
    %c28_264 = arith.constant 28 : index
    %179 = vector.load %arg9[%c24_263, %c28_264] : memref<64x36xf32, #tpu.memory_space<vmem>>, vector<8x4xf32>
    tpu.vector_store %arg9[%c24_263, %c28_264], %178 {strides = array<i32>} : memref<64x36xf32, #tpu.memory_space<vmem>>, vector<8x4xf32>,
    %c0_265 = arith.constant 0 : index
    %c61_266 = arith.constant 61 : index
    %c0_267 = arith.constant 0 : index
    %180 = vector.load %arg1[%c0_265, %c61_266, %c0_267] : memref<1x100x4xf32, #tpu.memory_space<vmem>>, vector<1x8x4xf32>
    %181 = vector.shape_cast %180 : vector<1x8x4xf32> to vector<8x4xf32>
    %c32_268 = arith.constant 32 : index
    %c28_269 = arith.constant 28 : index
    %182 = vector.load %arg9[%c32_268, %c28_269] : memref<64x36xf32, #tpu.memory_space<vmem>>, vector<8x4xf32>
    tpu.vector_store %arg9[%c32_268, %c28_269], %181 {strides = array<i32>} : memref<64x36xf32, #tpu.memory_space<vmem>>, vector<8x4xf32>,
    %c0_270 = arith.constant 0 : index
    %c71_271 = arith.constant 71 : index
    %c0_272 = arith.constant 0 : index
    %183 = vector.load %arg1[%c0_270, %c71_271, %c0_272] : memref<1x100x4xf32, #tpu.memory_space<vmem>>, vector<1x8x4xf32>
    %184 = vector.shape_cast %183 : vector<1x8x4xf32> to vector<8x4xf32>
    %c40_273 = arith.constant 40 : index
    %c28_274 = arith.constant 28 : index
    %185 = vector.load %arg9[%c40_273, %c28_274] : memref<64x36xf32, #tpu.memory_space<vmem>>, vector<8x4xf32>
    tpu.vector_store %arg9[%c40_273, %c28_274], %184 {strides = array<i32>} : memref<64x36xf32, #tpu.memory_space<vmem>>, vector<8x4xf32>,
    %c0_275 = arith.constant 0 : index
    %c81_276 = arith.constant 81 : index
    %c0_277 = arith.constant 0 : index
    %186 = vector.load %arg1[%c0_275, %c81_276, %c0_277] : memref<1x100x4xf32, #tpu.memory_space<vmem>>, vector<1x8x4xf32>
    %187 = vector.shape_cast %186 : vector<1x8x4xf32> to vector<8x4xf32>
    %c48_278 = arith.constant 48 : index
    %c28_279 = arith.constant 28 : index
    %188 = vector.load %arg9[%c48_278, %c28_279] : memref<64x36xf32, #tpu.memory_space<vmem>>, vector<8x4xf32>
    tpu.vector_store %arg9[%c48_278, %c28_279], %187 {strides = array<i32>} : memref<64x36xf32, #tpu.memory_space<vmem>>, vector<8x4xf32>,
    %c0_280 = arith.constant 0 : index
    %c91 = arith.constant 91 : index
    %c0_281 = arith.constant 0 : index
    %189 = vector.load %arg1[%c0_280, %c91, %c0_281] : memref<1x100x4xf32, #tpu.memory_space<vmem>>, vector<1x8x4xf32>
    %190 = vector.shape_cast %189 : vector<1x8x4xf32> to vector<8x4xf32>
    %c56_282 = arith.constant 56 : index
    %c28_283 = arith.constant 28 : index
    %191 = vector.load %arg9[%c56_282, %c28_283] : memref<64x36xf32, #tpu.memory_space<vmem>>, vector<8x4xf32>
    tpu.vector_store %arg9[%c56_282, %c28_283], %190 {strides = array<i32>} : memref<64x36xf32, #tpu.memory_space<vmem>>, vector<8x4xf32>,
    %c0_284 = arith.constant 0 : index
    %c22_285 = arith.constant 22 : index
    %c0_286 = arith.constant 0 : index
    %192 = vector.load %arg1[%c0_284, %c22_285, %c0_286] : memref<1x100x4xf32, #tpu.memory_space<vmem>>, vector<1x8x4xf32>
    %193 = vector.shape_cast %192 : vector<1x8x4xf32> to vector<8x4xf32>
    %c0_287 = arith.constant 0 : index
    %c32_288 = arith.constant 32 : index
    %194 = vector.load %arg9[%c0_287, %c32_288] : memref<64x36xf32, #tpu.memory_space<vmem>>, vector<8x4xf32>
    tpu.vector_store %arg9[%c0_287, %c32_288], %193 {strides = array<i32>} : memref<64x36xf32, #tpu.memory_space<vmem>>, vector<8x4xf32>,
    %c0_289 = arith.constant 0 : index
    %c32_290 = arith.constant 32 : index
    %c0_291 = arith.constant 0 : index
    %195 = vector.load %arg1[%c0_289, %c32_290, %c0_291] : memref<1x100x4xf32, #tpu.memory_space<vmem>>, vector<1x8x4xf32>
    %196 = vector.shape_cast %195 : vector<1x8x4xf32> to vector<8x4xf32>
    %c8_292 = arith.constant 8 : index
    %c32_293 = arith.constant 32 : index
    %197 = vector.load %arg9[%c8_292, %c32_293] : memref<64x36xf32, #tpu.memory_space<vmem>>, vector<8x4xf32>
    tpu.vector_store %arg9[%c8_292, %c32_293], %196 {strides = array<i32>} : memref<64x36xf32, #tpu.memory_space<vmem>>, vector<8x4xf32>,
    %c0_294 = arith.constant 0 : index
    %c42_295 = arith.constant 42 : index
    %c0_296 = arith.constant 0 : index
    %198 = vector.load %arg1[%c0_294, %c42_295, %c0_296] : memref<1x100x4xf32, #tpu.memory_space<vmem>>, vector<1x8x4xf32>
    %199 = vector.shape_cast %198 : vector<1x8x4xf32> to vector<8x4xf32>
    %c16_297 = arith.constant 16 : index
    %c32_298 = arith.constant 32 : index
    %200 = vector.load %arg9[%c16_297, %c32_298] : memref<64x36xf32, #tpu.memory_space<vmem>>, vector<8x4xf32>
    tpu.vector_store %arg9[%c16_297, %c32_298], %199 {strides = array<i32>} : memref<64x36xf32, #tpu.memory_space<vmem>>, vector<8x4xf32>,
    %c0_299 = arith.constant 0 : index
    %c52_300 = arith.constant 52 : index
    %c0_301 = arith.constant 0 : index
    %201 = vector.load %arg1[%c0_299, %c52_300, %c0_301] : memref<1x100x4xf32, #tpu.memory_space<vmem>>, vector<1x8x4xf32>
    %202 = vector.shape_cast %201 : vector<1x8x4xf32> to vector<8x4xf32>
    %c24_302 = arith.constant 24 : index
    %c32_303 = arith.constant 32 : index
    %203 = vector.load %arg9[%c24_302, %c32_303] : memref<64x36xf32, #tpu.memory_space<vmem>>, vector<8x4xf32>
    tpu.vector_store %arg9[%c24_302, %c32_303], %202 {strides = array<i32>} : memref<64x36xf32, #tpu.memory_space<vmem>>, vector<8x4xf32>,
    %c0_304 = arith.constant 0 : index
    %c62_305 = arith.constant 62 : index
    %c0_306 = arith.constant 0 : index
    %204 = vector.load %arg1[%c0_304, %c62_305, %c0_306] : memref<1x100x4xf32, #tpu.memory_space<vmem>>, vector<1x8x4xf32>
    %205 = vector.shape_cast %204 : vector<1x8x4xf32> to vector<8x4xf32>
    %c32_307 = arith.constant 32 : index
    %c32_308 = arith.constant 32 : index
    %206 = vector.load %arg9[%c32_307, %c32_308] : memref<64x36xf32, #tpu.memory_space<vmem>>, vector<8x4xf32>
    tpu.vector_store %arg9[%c32_307, %c32_308], %205 {strides = array<i32>} : memref<64x36xf32, #tpu.memory_space<vmem>>, vector<8x4xf32>,
    %c0_309 = arith.constant 0 : index
    %c72_310 = arith.constant 72 : index
    %c0_311 = arith.constant 0 : index
    %207 = vector.load %arg1[%c0_309, %c72_310, %c0_311] : memref<1x100x4xf32, #tpu.memory_space<vmem>>, vector<1x8x4xf32>
    %208 = vector.shape_cast %207 : vector<1x8x4xf32> to vector<8x4xf32>
    %c40_312 = arith.constant 40 : index
    %c32_313 = arith.constant 32 : index
    %209 = vector.load %arg9[%c40_312, %c32_313] : memref<64x36xf32, #tpu.memory_space<vmem>>, vector<8x4xf32>
    tpu.vector_store %arg9[%c40_312, %c32_313], %208 {strides = array<i32>} : memref<64x36xf32, #tpu.memory_space<vmem>>, vector<8x4xf32>,
    %c0_314 = arith.constant 0 : index
    %c82_315 = arith.constant 82 : index
    %c0_316 = arith.constant 0 : index
    %210 = vector.load %arg1[%c0_314, %c82_315, %c0_316] : memref<1x100x4xf32, #tpu.memory_space<vmem>>, vector<1x8x4xf32>
    %211 = vector.shape_cast %210 : vector<1x8x4xf32> to vector<8x4xf32>
    %c48_317 = arith.constant 48 : index
    %c32_318 = arith.constant 32 : index
    %212 = vector.load %arg9[%c48_317, %c32_318] : memref<64x36xf32, #tpu.memory_space<vmem>>, vector<8x4xf32>
    tpu.vector_store %arg9[%c48_317, %c32_318], %211 {strides = array<i32>} : memref<64x36xf32, #tpu.memory_space<vmem>>, vector<8x4xf32>,
    %c0_319 = arith.constant 0 : index
    %c92 = arith.constant 92 : index
    %c0_320 = arith.constant 0 : index
    %213 = vector.load %arg1[%c0_319, %c92, %c0_320] : memref<1x100x4xf32, #tpu.memory_space<vmem>>, vector<1x8x4xf32>
    %214 = vector.shape_cast %213 : vector<1x8x4xf32> to vector<8x4xf32>
    %c56_321 = arith.constant 56 : index
    %c32_322 = arith.constant 32 : index
    %215 = vector.load %arg9[%c56_321, %c32_322] : memref<64x36xf32, #tpu.memory_space<vmem>>, vector<8x4xf32>
    tpu.vector_store %arg9[%c56_321, %c32_322], %214 {strides = array<i32>} : memref<64x36xf32, #tpu.memory_space<vmem>>, vector<8x4xf32>,
    %c0_323 = arith.constant 0 : index
    %c0_324 = arith.constant 0 : index
    %216 = vector.load %arg9[%c0_323, %c0_324] : memref<64x36xf32, #tpu.memory_space<vmem>>, vector<64x36xf32>
    %c0_325 = arith.constant 0 : index
    %c0_326 = arith.constant 0 : index
    %217 = vector.load %arg2[%c0_325, %c0_326] : memref<36x4xf32, #tpu.memory_space<vmem>>, vector<36x4xf32>
    %cst = arith.constant dense<0.000000e+00> : vector<64x4xf32>
    %218 = tpu.matmul %216, %217, %cst {dimension_numbers = #tpu.dot_dimension_numbers<[1], [0], [0], [1], [0, 0, 1, 1], [], []>} : vector<64x36xf32>, vector<36x4xf32>, vector<64x4xf32> -> vector<64x4xf32>
    %c0_327 = arith.constant 0 : index
    %c0_328 = arith.constant 0 : index
    %219 = vector.load %arg3[%c0_327, %c0_328] : memref<1x4xf32, #tpu.memory_space<vmem>>, vector<1x4xf32>
    %220 = vector.broadcast %219 : vector<1x4xf32> to vector<64x4xf32>
    %221 = arith.mulf %218, %220 : vector<64x4xf32>
    %c0_329 = arith.constant 0 : index
    %c0_330 = arith.constant 0 : index
    %222 = vector.load %arg4[%c0_329, %c0_330] : memref<1x4xf32, #tpu.memory_space<vmem>>, vector<1x4xf32>
    %223 = vector.broadcast %222 : vector<1x4xf32> to vector<64x4xf32>
    %224 = arith.addf %221, %223 : vector<64x4xf32>
    %cst_331 = arith.constant 0.000000e+00 : f32
    %225 = vector.broadcast %cst_331 : f32 to vector<64x4xf32>
    %226 = arith.maximumf %224, %225 : vector<64x4xf32>
    %cst_332 = arith.constant 0.000000e+00 : f32
    %227 = vector.broadcast %cst_332 : f32 to vector<100x4xf32>
    %c0_333 = arith.constant 0 : index
    %c0_334 = arith.constant 0 : index
    %228 = vector.load %arg11[%c0_333, %c0_334] : memref<100x4xf32, #tpu.memory_space<vmem>>, vector<100x4xf32>
    tpu.vector_store %arg11[%c0_333, %c0_334], %227 {strides = array<i32>} : memref<100x4xf32, #tpu.memory_space<vmem>>, vector<100x4xf32>,
    %229 = vector.extract_strided_slice %226 {offsets = [0, 0], sizes = [8, 4], strides = [1, 1]} : vector<64x4xf32> to vector<8x4xf32>
    %c11_335 = arith.constant 11 : index
    %c0_336 = arith.constant 0 : index
    %230 = vector.load %arg11[%c11_335, %c0_336] : memref<100x4xf32, #tpu.memory_space<vmem>>, vector<8x4xf32>
    tpu.vector_store %arg11[%c11_335, %c0_336], %229 {strides = array<i32>} : memref<100x4xf32, #tpu.memory_space<vmem>>, vector<8x4xf32>,
    %231 = vector.extract_strided_slice %226 {offsets = [8, 0], sizes = [8, 4], strides = [1, 1]} : vector<64x4xf32> to vector<8x4xf32>
    %c21_337 = arith.constant 21 : index
    %c0_338 = arith.constant 0 : index
    %232 = vector.load %arg11[%c21_337, %c0_338] : memref<100x4xf32, #tpu.memory_space<vmem>>, vector<8x4xf32>
    tpu.vector_store %arg11[%c21_337, %c0_338], %231 {strides = array<i32>} : memref<100x4xf32, #tpu.memory_space<vmem>>, vector<8x4xf32>,
    %233 = vector.extract_strided_slice %226 {offsets = [16, 0], sizes = [8, 4], strides = [1, 1]} : vector<64x4xf32> to vector<8x4xf32>
    %c31_339 = arith.constant 31 : index
    %c0_340 = arith.constant 0 : index
    %234 = vector.load %arg11[%c31_339, %c0_340] : memref<100x4xf32, #tpu.memory_space<vmem>>, vector<8x4xf32>
    tpu.vector_store %arg11[%c31_339, %c0_340], %233 {strides = array<i32>} : memref<100x4xf32, #tpu.memory_space<vmem>>, vector<8x4xf32>,
    %235 = vector.extract_strided_slice %226 {offsets = [24, 0], sizes = [8, 4], strides = [1, 1]} : vector<64x4xf32> to vector<8x4xf32>
    %c41_341 = arith.constant 41 : index
    %c0_342 = arith.constant 0 : index
    %236 = vector.load %arg11[%c41_341, %c0_342] : memref<100x4xf32, #tpu.memory_space<vmem>>, vector<8x4xf32>
    tpu.vector_store %arg11[%c41_341, %c0_342], %235 {strides = array<i32>} : memref<100x4xf32, #tpu.memory_space<vmem>>, vector<8x4xf32>,
    %237 = vector.extract_strided_slice %226 {offsets = [32, 0], sizes = [8, 4], strides = [1, 1]} : vector<64x4xf32> to vector<8x4xf32>
    %c51_343 = arith.constant 51 : index
    %c0_344 = arith.constant 0 : index
    %238 = vector.load %arg11[%c51_343, %c0_344] : memref<100x4xf32, #tpu.memory_space<vmem>>, vector<8x4xf32>
    tpu.vector_store %arg11[%c51_343, %c0_344], %237 {strides = array<i32>} : memref<100x4xf32, #tpu.memory_space<vmem>>, vector<8x4xf32>,
    %239 = vector.extract_strided_slice %226 {offsets = [40, 0], sizes = [8, 4], strides = [1, 1]} : vector<64x4xf32> to vector<8x4xf32>
    %c61_345 = arith.constant 61 : index
    %c0_346 = arith.constant 0 : index
    %240 = vector.load %arg11[%c61_345, %c0_346] : memref<100x4xf32, #tpu.memory_space<vmem>>, vector<8x4xf32>
    tpu.vector_store %arg11[%c61_345, %c0_346], %239 {strides = array<i32>} : memref<100x4xf32, #tpu.memory_space<vmem>>, vector<8x4xf32>,
    %241 = vector.extract_strided_slice %226 {offsets = [48, 0], sizes = [8, 4], strides = [1, 1]} : vector<64x4xf32> to vector<8x4xf32>
    %c71_347 = arith.constant 71 : index
    %c0_348 = arith.constant 0 : index
    %242 = vector.load %arg11[%c71_347, %c0_348] : memref<100x4xf32, #tpu.memory_space<vmem>>, vector<8x4xf32>
    tpu.vector_store %arg11[%c71_347, %c0_348], %241 {strides = array<i32>} : memref<100x4xf32, #tpu.memory_space<vmem>>, vector<8x4xf32>,
    %243 = vector.extract_strided_slice %226 {offsets = [56, 0], sizes = [8, 4], strides = [1, 1]} : vector<64x4xf32> to vector<8x4xf32>
    %c81_349 = arith.constant 81 : index
    %c0_350 = arith.constant 0 : index
    %244 = vector.load %arg11[%c81_349, %c0_350] : memref<100x4xf32, #tpu.memory_space<vmem>>, vector<8x4xf32>
    tpu.vector_store %arg11[%c81_349, %c0_350], %243 {strides = array<i32>} : memref<100x4xf32, #tpu.memory_space<vmem>>, vector<8x4xf32>,
    %c0_351 = arith.constant 0 : index
    %c0_352 = arith.constant 0 : index
    %245 = vector.load %arg11[%c0_351, %c0_352] : memref<100x4xf32, #tpu.memory_space<vmem>>, vector<8x4xf32>
    %c0_353 = arith.constant 0 : index
    %c0_354 = arith.constant 0 : index
    %246 = vector.load %arg10[%c0_353, %c0_354] : memref<64x36xf32, #tpu.memory_space<vmem>>, vector<8x4xf32>
    tpu.vector_store %arg10[%c0_353, %c0_354], %245 {strides = array<i32>} : memref<64x36xf32, #tpu.memory_space<vmem>>, vector<8x4xf32>,
    %c10_355 = arith.constant 10 : index
    %c0_356 = arith.constant 0 : index
    %247 = vector.load %arg11[%c10_355, %c0_356] : memref<100x4xf32, #tpu.memory_space<vmem>>, vector<8x4xf32>
    %c8_357 = arith.constant 8 : index
    %c0_358 = arith.constant 0 : index
    %248 = vector.load %arg10[%c8_357, %c0_358] : memref<64x36xf32, #tpu.memory_space<vmem>>, vector<8x4xf32>
    tpu.vector_store %arg10[%c8_357, %c0_358], %247 {strides = array<i32>} : memref<64x36xf32, #tpu.memory_space<vmem>>, vector<8x4xf32>,
    %c20_359 = arith.constant 20 : index
    %c0_360 = arith.constant 0 : index
    %249 = vector.load %arg11[%c20_359, %c0_360] : memref<100x4xf32, #tpu.memory_space<vmem>>, vector<8x4xf32>
    %c16_361 = arith.constant 16 : index
    %c0_362 = arith.constant 0 : index
    %250 = vector.load %arg10[%c16_361, %c0_362] : memref<64x36xf32, #tpu.memory_space<vmem>>, vector<8x4xf32>
    tpu.vector_store %arg10[%c16_361, %c0_362], %249 {strides = array<i32>} : memref<64x36xf32, #tpu.memory_space<vmem>>, vector<8x4xf32>,
    %c30_363 = arith.constant 30 : index
    %c0_364 = arith.constant 0 : index
    %251 = vector.load %arg11[%c30_363, %c0_364] : memref<100x4xf32, #tpu.memory_space<vmem>>, vector<8x4xf32>
    %c24_365 = arith.constant 24 : index
    %c0_366 = arith.constant 0 : index
    %252 = vector.load %arg10[%c24_365, %c0_366] : memref<64x36xf32, #tpu.memory_space<vmem>>, vector<8x4xf32>
    tpu.vector_store %arg10[%c24_365, %c0_366], %251 {strides = array<i32>} : memref<64x36xf32, #tpu.memory_space<vmem>>, vector<8x4xf32>,
    %c40_367 = arith.constant 40 : index
    %c0_368 = arith.constant 0 : index
    %253 = vector.load %arg11[%c40_367, %c0_368] : memref<100x4xf32, #tpu.memory_space<vmem>>, vector<8x4xf32>
    %c32_369 = arith.constant 32 : index
    %c0_370 = arith.constant 0 : index
    %254 = vector.load %arg10[%c32_369, %c0_370] : memref<64x36xf32, #tpu.memory_space<vmem>>, vector<8x4xf32>
    tpu.vector_store %arg10[%c32_369, %c0_370], %253 {strides = array<i32>} : memref<64x36xf32, #tpu.memory_space<vmem>>, vector<8x4xf32>,
    %c50_371 = arith.constant 50 : index
    %c0_372 = arith.constant 0 : index
    %255 = vector.load %arg11[%c50_371, %c0_372] : memref<100x4xf32, #tpu.memory_space<vmem>>, vector<8x4xf32>
    %c40_373 = arith.constant 40 : index
    %c0_374 = arith.constant 0 : index
    %256 = vector.load %arg10[%c40_373, %c0_374] : memref<64x36xf32, #tpu.memory_space<vmem>>, vector<8x4xf32>
    tpu.vector_store %arg10[%c40_373, %c0_374], %255 {strides = array<i32>} : memref<64x36xf32, #tpu.memory_space<vmem>>, vector<8x4xf32>,
    %c60_375 = arith.constant 60 : index
    %c0_376 = arith.constant 0 : index
    %257 = vector.load %arg11[%c60_375, %c0_376] : memref<100x4xf32, #tpu.memory_space<vmem>>, vector<8x4xf32>
    %c48_377 = arith.constant 48 : index
    %c0_378 = arith.constant 0 : index
    %258 = vector.load %arg10[%c48_377, %c0_378] : memref<64x36xf32, #tpu.memory_space<vmem>>, vector<8x4xf32>
    tpu.vector_store %arg10[%c48_377, %c0_378], %257 {strides = array<i32>} : memref<64x36xf32, #tpu.memory_space<vmem>>, vector<8x4xf32>,
    %c70_379 = arith.constant 70 : index
    %c0_380 = arith.constant 0 : index
    %259 = vector.load %arg11[%c70_379, %c0_380] : memref<100x4xf32, #tpu.memory_space<vmem>>, vector<8x4xf32>
    %c56_381 = arith.constant 56 : index
    %c0_382 = arith.constant 0 : index
    %260 = vector.load %arg10[%c56_381, %c0_382] : memref<64x36xf32, #tpu.memory_space<vmem>>, vector<8x4xf32>
    tpu.vector_store %arg10[%c56_381, %c0_382], %259 {strides = array<i32>} : memref<64x36xf32, #tpu.memory_space<vmem>>, vector<8x4xf32>,
    %c1_383 = arith.constant 1 : index
    %c0_384 = arith.constant 0 : index
    %261 = vector.load %arg11[%c1_383, %c0_384] : memref<100x4xf32, #tpu.memory_space<vmem>>, vector<8x4xf32>
    %c0_385 = arith.constant 0 : index
    %c4_386 = arith.constant 4 : index
    %262 = vector.load %arg10[%c0_385, %c4_386] : memref<64x36xf32, #tpu.memory_space<vmem>>, vector<8x4xf32>
    tpu.vector_store %arg10[%c0_385, %c4_386], %261 {strides = array<i32>} : memref<64x36xf32, #tpu.memory_space<vmem>>, vector<8x4xf32>,
    %c11_387 = arith.constant 11 : index
    %c0_388 = arith.constant 0 : index
    %263 = vector.load %arg11[%c11_387, %c0_388] : memref<100x4xf32, #tpu.memory_space<vmem>>, vector<8x4xf32>
    %c8_389 = arith.constant 8 : index
    %c4_390 = arith.constant 4 : index
    %264 = vector.load %arg10[%c8_389, %c4_390] : memref<64x36xf32, #tpu.memory_space<vmem>>, vector<8x4xf32>
    tpu.vector_store %arg10[%c8_389, %c4_390], %263 {strides = array<i32>} : memref<64x36xf32, #tpu.memory_space<vmem>>, vector<8x4xf32>,
    %c21_391 = arith.constant 21 : index
    %c0_392 = arith.constant 0 : index
    %265 = vector.load %arg11[%c21_391, %c0_392] : memref<100x4xf32, #tpu.memory_space<vmem>>, vector<8x4xf32>
    %c16_393 = arith.constant 16 : index
    %c4_394 = arith.constant 4 : index
    %266 = vector.load %arg10[%c16_393, %c4_394] : memref<64x36xf32, #tpu.memory_space<vmem>>, vector<8x4xf32>
    tpu.vector_store %arg10[%c16_393, %c4_394], %265 {strides = array<i32>} : memref<64x36xf32, #tpu.memory_space<vmem>>, vector<8x4xf32>,
    %c31_395 = arith.constant 31 : index
    %c0_396 = arith.constant 0 : index
    %267 = vector.load %arg11[%c31_395, %c0_396] : memref<100x4xf32, #tpu.memory_space<vmem>>, vector<8x4xf32>
    %c24_397 = arith.constant 24 : index
    %c4_398 = arith.constant 4 : index
    %268 = vector.load %arg10[%c24_397, %c4_398] : memref<64x36xf32, #tpu.memory_space<vmem>>, vector<8x4xf32>
    tpu.vector_store %arg10[%c24_397, %c4_398], %267 {strides = array<i32>} : memref<64x36xf32, #tpu.memory_space<vmem>>, vector<8x4xf32>,
    %c41_399 = arith.constant 41 : index
    %c0_400 = arith.constant 0 : index
    %269 = vector.load %arg11[%c41_399, %c0_400] : memref<100x4xf32, #tpu.memory_space<vmem>>, vector<8x4xf32>
    %c32_401 = arith.constant 32 : index
    %c4_402 = arith.constant 4 : index
    %270 = vector.load %arg10[%c32_401, %c4_402] : memref<64x36xf32, #tpu.memory_space<vmem>>, vector<8x4xf32>
    tpu.vector_store %arg10[%c32_401, %c4_402], %269 {strides = array<i32>} : memref<64x36xf32, #tpu.memory_space<vmem>>, vector<8x4xf32>,
    %c51_403 = arith.constant 51 : index
    %c0_404 = arith.constant 0 : index
    %271 = vector.load %arg11[%c51_403, %c0_404] : memref<100x4xf32, #tpu.memory_space<vmem>>, vector<8x4xf32>
    %c40_405 = arith.constant 40 : index
    %c4_406 = arith.constant 4 : index
    %272 = vector.load %arg10[%c40_405, %c4_406] : memref<64x36xf32, #tpu.memory_space<vmem>>, vector<8x4xf32>
    tpu.vector_store %arg10[%c40_405, %c4_406], %271 {strides = array<i32>} : memref<64x36xf32, #tpu.memory_space<vmem>>, vector<8x4xf32>,
    %c61_407 = arith.constant 61 : index
    %c0_408 = arith.constant 0 : index
    %273 = vector.load %arg11[%c61_407, %c0_408] : memref<100x4xf32, #tpu.memory_space<vmem>>, vector<8x4xf32>
    %c48_409 = arith.constant 48 : index
    %c4_410 = arith.constant 4 : index
    %274 = vector.load %arg10[%c48_409, %c4_410] : memref<64x36xf32, #tpu.memory_space<vmem>>, vector<8x4xf32>
    tpu.vector_store %arg10[%c48_409, %c4_410], %273 {strides = array<i32>} : memref<64x36xf32, #tpu.memory_space<vmem>>, vector<8x4xf32>,
    %c71_411 = arith.constant 71 : index
    %c0_412 = arith.constant 0 : index
    %275 = vector.load %arg11[%c71_411, %c0_412] : memref<100x4xf32, #tpu.memory_space<vmem>>, vector<8x4xf32>
    %c56_413 = arith.constant 56 : index
    %c4_414 = arith.constant 4 : index
    %276 = vector.load %arg10[%c56_413, %c4_414] : memref<64x36xf32, #tpu.memory_space<vmem>>, vector<8x4xf32>
    tpu.vector_store %arg10[%c56_413, %c4_414], %275 {strides = array<i32>} : memref<64x36xf32, #tpu.memory_space<vmem>>, vector<8x4xf32>,
    %c2_415 = arith.constant 2 : index
    %c0_416 = arith.constant 0 : index
    %277 = vector.load %arg11[%c2_415, %c0_416] : memref<100x4xf32, #tpu.memory_space<vmem>>, vector<8x4xf32>
    %c0_417 = arith.constant 0 : index
    %c8_418 = arith.constant 8 : index
    %278 = vector.load %arg10[%c0_417, %c8_418] : memref<64x36xf32, #tpu.memory_space<vmem>>, vector<8x4xf32>
    tpu.vector_store %arg10[%c0_417, %c8_418], %277 {strides = array<i32>} : memref<64x36xf32, #tpu.memory_space<vmem>>, vector<8x4xf32>,
    %c12_419 = arith.constant 12 : index
    %c0_420 = arith.constant 0 : index
    %279 = vector.load %arg11[%c12_419, %c0_420] : memref<100x4xf32, #tpu.memory_space<vmem>>, vector<8x4xf32>
    %c8_421 = arith.constant 8 : index
    %c8_422 = arith.constant 8 : index
    %280 = vector.load %arg10[%c8_421, %c8_422] : memref<64x36xf32, #tpu.memory_space<vmem>>, vector<8x4xf32>
    tpu.vector_store %arg10[%c8_421, %c8_422], %279 {strides = array<i32>} : memref<64x36xf32, #tpu.memory_space<vmem>>, vector<8x4xf32>,
    %c22_423 = arith.constant 22 : index
    %c0_424 = arith.constant 0 : index
    %281 = vector.load %arg11[%c22_423, %c0_424] : memref<100x4xf32, #tpu.memory_space<vmem>>, vector<8x4xf32>
    %c16_425 = arith.constant 16 : index
    %c8_426 = arith.constant 8 : index
    %282 = vector.load %arg10[%c16_425, %c8_426] : memref<64x36xf32, #tpu.memory_space<vmem>>, vector<8x4xf32>
    tpu.vector_store %arg10[%c16_425, %c8_426], %281 {strides = array<i32>} : memref<64x36xf32, #tpu.memory_space<vmem>>, vector<8x4xf32>,
    %c32_427 = arith.constant 32 : index
    %c0_428 = arith.constant 0 : index
    %283 = vector.load %arg11[%c32_427, %c0_428] : memref<100x4xf32, #tpu.memory_space<vmem>>, vector<8x4xf32>
    %c24_429 = arith.constant 24 : index
    %c8_430 = arith.constant 8 : index
    %284 = vector.load %arg10[%c24_429, %c8_430] : memref<64x36xf32, #tpu.memory_space<vmem>>, vector<8x4xf32>
    tpu.vector_store %arg10[%c24_429, %c8_430], %283 {strides = array<i32>} : memref<64x36xf32, #tpu.memory_space<vmem>>, vector<8x4xf32>,
    %c42_431 = arith.constant 42 : index
    %c0_432 = arith.constant 0 : index
    %285 = vector.load %arg11[%c42_431, %c0_432] : memref<100x4xf32, #tpu.memory_space<vmem>>, vector<8x4xf32>
    %c32_433 = arith.constant 32 : index
    %c8_434 = arith.constant 8 : index
    %286 = vector.load %arg10[%c32_433, %c8_434] : memref<64x36xf32, #tpu.memory_space<vmem>>, vector<8x4xf32>
    tpu.vector_store %arg10[%c32_433, %c8_434], %285 {strides = array<i32>} : memref<64x36xf32, #tpu.memory_space<vmem>>, vector<8x4xf32>,
    %c52_435 = arith.constant 52 : index
    %c0_436 = arith.constant 0 : index
    %287 = vector.load %arg11[%c52_435, %c0_436] : memref<100x4xf32, #tpu.memory_space<vmem>>, vector<8x4xf32>
    %c40_437 = arith.constant 40 : index
    %c8_438 = arith.constant 8 : index
    %288 = vector.load %arg10[%c40_437, %c8_438] : memref<64x36xf32, #tpu.memory_space<vmem>>, vector<8x4xf32>
    tpu.vector_store %arg10[%c40_437, %c8_438], %287 {strides = array<i32>} : memref<64x36xf32, #tpu.memory_space<vmem>>, vector<8x4xf32>,
    %c62_439 = arith.constant 62 : index
    %c0_440 = arith.constant 0 : index
    %289 = vector.load %arg11[%c62_439, %c0_440] : memref<100x4xf32, #tpu.memory_space<vmem>>, vector<8x4xf32>
    %c48_441 = arith.constant 48 : index
    %c8_442 = arith.constant 8 : index
    %290 = vector.load %arg10[%c48_441, %c8_442] : memref<64x36xf32, #tpu.memory_space<vmem>>, vector<8x4xf32>
    tpu.vector_store %arg10[%c48_441, %c8_442], %289 {strides = array<i32>} : memref<64x36xf32, #tpu.memory_space<vmem>>, vector<8x4xf32>,
    %c72_443 = arith.constant 72 : index
    %c0_444 = arith.constant 0 : index
    %291 = vector.load %arg11[%c72_443, %c0_444] : memref<100x4xf32, #tpu.memory_space<vmem>>, vector<8x4xf32>
    %c56_445 = arith.constant 56 : index
    %c8_446 = arith.constant 8 : index
    %292 = vector.load %arg10[%c56_445, %c8_446] : memref<64x36xf32, #tpu.memory_space<vmem>>, vector<8x4xf32>
    tpu.vector_store %arg10[%c56_445, %c8_446], %291 {strides = array<i32>} : memref<64x36xf32, #tpu.memory_space<vmem>>, vector<8x4xf32>,
    %c10_447 = arith.constant 10 : index
    %c0_448 = arith.constant 0 : index
    %293 = vector.load %arg11[%c10_447, %c0_448] : memref<100x4xf32, #tpu.memory_space<vmem>>, vector<8x4xf32>
    %c0_449 = arith.constant 0 : index
    %c12_450 = arith.constant 12 : index
    %294 = vector.load %arg10[%c0_449, %c12_450] : memref<64x36xf32, #tpu.memory_space<vmem>>, vector<8x4xf32>
    tpu.vector_store %arg10[%c0_449, %c12_450], %293 {strides = array<i32>} : memref<64x36xf32, #tpu.memory_space<vmem>>, vector<8x4xf32>,
    %c20_451 = arith.constant 20 : index
    %c0_452 = arith.constant 0 : index
    %295 = vector.load %arg11[%c20_451, %c0_452] : memref<100x4xf32, #tpu.memory_space<vmem>>, vector<8x4xf32>
    %c8_453 = arith.constant 8 : index
    %c12_454 = arith.constant 12 : index
    %296 = vector.load %arg10[%c8_453, %c12_454] : memref<64x36xf32, #tpu.memory_space<vmem>>, vector<8x4xf32>
    tpu.vector_store %arg10[%c8_453, %c12_454], %295 {strides = array<i32>} : memref<64x36xf32, #tpu.memory_space<vmem>>, vector<8x4xf32>,
    %c30_455 = arith.constant 30 : index
    %c0_456 = arith.constant 0 : index
    %297 = vector.load %arg11[%c30_455, %c0_456] : memref<100x4xf32, #tpu.memory_space<vmem>>, vector<8x4xf32>
    %c16_457 = arith.constant 16 : index
    %c12_458 = arith.constant 12 : index
    %298 = vector.load %arg10[%c16_457, %c12_458] : memref<64x36xf32, #tpu.memory_space<vmem>>, vector<8x4xf32>
    tpu.vector_store %arg10[%c16_457, %c12_458], %297 {strides = array<i32>} : memref<64x36xf32, #tpu.memory_space<vmem>>, vector<8x4xf32>,
    %c40_459 = arith.constant 40 : index
    %c0_460 = arith.constant 0 : index
    %299 = vector.load %arg11[%c40_459, %c0_460] : memref<100x4xf32, #tpu.memory_space<vmem>>, vector<8x4xf32>
    %c24_461 = arith.constant 24 : index
    %c12_462 = arith.constant 12 : index
    %300 = vector.load %arg10[%c24_461, %c12_462] : memref<64x36xf32, #tpu.memory_space<vmem>>, vector<8x4xf32>
    tpu.vector_store %arg10[%c24_461, %c12_462], %299 {strides = array<i32>} : memref<64x36xf32, #tpu.memory_space<vmem>>, vector<8x4xf32>,
    %c50_463 = arith.constant 50 : index
    %c0_464 = arith.constant 0 : index
    %301 = vector.load %arg11[%c50_463, %c0_464] : memref<100x4xf32, #tpu.memory_space<vmem>>, vector<8x4xf32>
    %c32_465 = arith.constant 32 : index
    %c12_466 = arith.constant 12 : index
    %302 = vector.load %arg10[%c32_465, %c12_466] : memref<64x36xf32, #tpu.memory_space<vmem>>, vector<8x4xf32>
    tpu.vector_store %arg10[%c32_465, %c12_466], %301 {strides = array<i32>} : memref<64x36xf32, #tpu.memory_space<vmem>>, vector<8x4xf32>,
    %c60_467 = arith.constant 60 : index
    %c0_468 = arith.constant 0 : index
    %303 = vector.load %arg11[%c60_467, %c0_468] : memref<100x4xf32, #tpu.memory_space<vmem>>, vector<8x4xf32>
    %c40_469 = arith.constant 40 : index
    %c12_470 = arith.constant 12 : index
    %304 = vector.load %arg10[%c40_469, %c12_470] : memref<64x36xf32, #tpu.memory_space<vmem>>, vector<8x4xf32>
    tpu.vector_store %arg10[%c40_469, %c12_470], %303 {strides = array<i32>} : memref<64x36xf32, #tpu.memory_space<vmem>>, vector<8x4xf32>,
    %c70_471 = arith.constant 70 : index
    %c0_472 = arith.constant 0 : index
    %305 = vector.load %arg11[%c70_471, %c0_472] : memref<100x4xf32, #tpu.memory_space<vmem>>, vector<8x4xf32>
    %c48_473 = arith.constant 48 : index
    %c12_474 = arith.constant 12 : index
    %306 = vector.load %arg10[%c48_473, %c12_474] : memref<64x36xf32, #tpu.memory_space<vmem>>, vector<8x4xf32>
    tpu.vector_store %arg10[%c48_473, %c12_474], %305 {strides = array<i32>} : memref<64x36xf32, #tpu.memory_space<vmem>>, vector<8x4xf32>,
    %c80_475 = arith.constant 80 : index
    %c0_476 = arith.constant 0 : index
    %307 = vector.load %arg11[%c80_475, %c0_476] : memref<100x4xf32, #tpu.memory_space<vmem>>, vector<8x4xf32>
    %c56_477 = arith.constant 56 : index
    %c12_478 = arith.constant 12 : index
    %308 = vector.load %arg10[%c56_477, %c12_478] : memref<64x36xf32, #tpu.memory_space<vmem>>, vector<8x4xf32>
    tpu.vector_store %arg10[%c56_477, %c12_478], %307 {strides = array<i32>} : memref<64x36xf32, #tpu.memory_space<vmem>>, vector<8x4xf32>,
    %c11_479 = arith.constant 11 : index
    %c0_480 = arith.constant 0 : index
    %309 = vector.load %arg11[%c11_479, %c0_480] : memref<100x4xf32, #tpu.memory_space<vmem>>, vector<8x4xf32>
    %c0_481 = arith.constant 0 : index
    %c16_482 = arith.constant 16 : index
    %310 = vector.load %arg10[%c0_481, %c16_482] : memref<64x36xf32, #tpu.memory_space<vmem>>, vector<8x4xf32>
    tpu.vector_store %arg10[%c0_481, %c16_482], %309 {strides = array<i32>} : memref<64x36xf32, #tpu.memory_space<vmem>>, vector<8x4xf32>,
    %c21_483 = arith.constant 21 : index
    %c0_484 = arith.constant 0 : index
    %311 = vector.load %arg11[%c21_483, %c0_484] : memref<100x4xf32, #tpu.memory_space<vmem>>, vector<8x4xf32>
    %c8_485 = arith.constant 8 : index
    %c16_486 = arith.constant 16 : index
    %312 = vector.load %arg10[%c8_485, %c16_486] : memref<64x36xf32, #tpu.memory_space<vmem>>, vector<8x4xf32>
    tpu.vector_store %arg10[%c8_485, %c16_486], %311 {strides = array<i32>} : memref<64x36xf32, #tpu.memory_space<vmem>>, vector<8x4xf32>,
    %c31_487 = arith.constant 31 : index
    %c0_488 = arith.constant 0 : index
    %313 = vector.load %arg11[%c31_487, %c0_488] : memref<100x4xf32, #tpu.memory_space<vmem>>, vector<8x4xf32>
    %c16_489 = arith.constant 16 : index
    %c16_490 = arith.constant 16 : index
    %314 = vector.load %arg10[%c16_489, %c16_490] : memref<64x36xf32, #tpu.memory_space<vmem>>, vector<8x4xf32>
    tpu.vector_store %arg10[%c16_489, %c16_490], %313 {strides = array<i32>} : memref<64x36xf32, #tpu.memory_space<vmem>>, vector<8x4xf32>,
    %c41_491 = arith.constant 41 : index
    %c0_492 = arith.constant 0 : index
    %315 = vector.load %arg11[%c41_491, %c0_492] : memref<100x4xf32, #tpu.memory_space<vmem>>, vector<8x4xf32>
    %c24_493 = arith.constant 24 : index
    %c16_494 = arith.constant 16 : index
    %316 = vector.load %arg10[%c24_493, %c16_494] : memref<64x36xf32, #tpu.memory_space<vmem>>, vector<8x4xf32>
    tpu.vector_store %arg10[%c24_493, %c16_494], %315 {strides = array<i32>} : memref<64x36xf32, #tpu.memory_space<vmem>>, vector<8x4xf32>,
    %c51_495 = arith.constant 51 : index
    %c0_496 = arith.constant 0 : index
    %317 = vector.load %arg11[%c51_495, %c0_496] : memref<100x4xf32, #tpu.memory_space<vmem>>, vector<8x4xf32>
    %c32_497 = arith.constant 32 : index
    %c16_498 = arith.constant 16 : index
    %318 = vector.load %arg10[%c32_497, %c16_498] : memref<64x36xf32, #tpu.memory_space<vmem>>, vector<8x4xf32>
    tpu.vector_store %arg10[%c32_497, %c16_498], %317 {strides = array<i32>} : memref<64x36xf32, #tpu.memory_space<vmem>>, vector<8x4xf32>,
    %c61_499 = arith.constant 61 : index
    %c0_500 = arith.constant 0 : index
    %319 = vector.load %arg11[%c61_499, %c0_500] : memref<100x4xf32, #tpu.memory_space<vmem>>, vector<8x4xf32>
    %c40_501 = arith.constant 40 : index
    %c16_502 = arith.constant 16 : index
    %320 = vector.load %arg10[%c40_501, %c16_502] : memref<64x36xf32, #tpu.memory_space<vmem>>, vector<8x4xf32>
    tpu.vector_store %arg10[%c40_501, %c16_502], %319 {strides = array<i32>} : memref<64x36xf32, #tpu.memory_space<vmem>>, vector<8x4xf32>,
    %c71_503 = arith.constant 71 : index
    %c0_504 = arith.constant 0 : index
    %321 = vector.load %arg11[%c71_503, %c0_504] : memref<100x4xf32, #tpu.memory_space<vmem>>, vector<8x4xf32>
    %c48_505 = arith.constant 48 : index
    %c16_506 = arith.constant 16 : index
    %322 = vector.load %arg10[%c48_505, %c16_506] : memref<64x36xf32, #tpu.memory_space<vmem>>, vector<8x4xf32>
    tpu.vector_store %arg10[%c48_505, %c16_506], %321 {strides = array<i32>} : memref<64x36xf32, #tpu.memory_space<vmem>>, vector<8x4xf32>,
    %c81_507 = arith.constant 81 : index
    %c0_508 = arith.constant 0 : index
    %323 = vector.load %arg11[%c81_507, %c0_508] : memref<100x4xf32, #tpu.memory_space<vmem>>, vector<8x4xf32>
    %c56_509 = arith.constant 56 : index
    %c16_510 = arith.constant 16 : index
    %324 = vector.load %arg10[%c56_509, %c16_510] : memref<64x36xf32, #tpu.memory_space<vmem>>, vector<8x4xf32>
    tpu.vector_store %arg10[%c56_509, %c16_510], %323 {strides = array<i32>} : memref<64x36xf32, #tpu.memory_space<vmem>>, vector<8x4xf32>,
    %c12_511 = arith.constant 12 : index
    %c0_512 = arith.constant 0 : index
    %325 = vector.load %arg11[%c12_511, %c0_512] : memref<100x4xf32, #tpu.memory_space<vmem>>, vector<8x4xf32>
    %c0_513 = arith.constant 0 : index
    %c20_514 = arith.constant 20 : index
    %326 = vector.load %arg10[%c0_513, %c20_514] : memref<64x36xf32, #tpu.memory_space<vmem>>, vector<8x4xf32>
    tpu.vector_store %arg10[%c0_513, %c20_514], %325 {strides = array<i32>} : memref<64x36xf32, #tpu.memory_space<vmem>>, vector<8x4xf32>,
    %c22_515 = arith.constant 22 : index
    %c0_516 = arith.constant 0 : index
    %327 = vector.load %arg11[%c22_515, %c0_516] : memref<100x4xf32, #tpu.memory_space<vmem>>, vector<8x4xf32>
    %c8_517 = arith.constant 8 : index
    %c20_518 = arith.constant 20 : index
    %328 = vector.load %arg10[%c8_517, %c20_518] : memref<64x36xf32, #tpu.memory_space<vmem>>, vector<8x4xf32>
    tpu.vector_store %arg10[%c8_517, %c20_518], %327 {strides = array<i32>} : memref<64x36xf32, #tpu.memory_space<vmem>>, vector<8x4xf32>,
    %c32_519 = arith.constant 32 : index
    %c0_520 = arith.constant 0 : index
    %329 = vector.load %arg11[%c32_519, %c0_520] : memref<100x4xf32, #tpu.memory_space<vmem>>, vector<8x4xf32>
    %c16_521 = arith.constant 16 : index
    %c20_522 = arith.constant 20 : index
    %330 = vector.load %arg10[%c16_521, %c20_522] : memref<64x36xf32, #tpu.memory_space<vmem>>, vector<8x4xf32>
    tpu.vector_store %arg10[%c16_521, %c20_522], %329 {strides = array<i32>} : memref<64x36xf32, #tpu.memory_space<vmem>>, vector<8x4xf32>,
    %c42_523 = arith.constant 42 : index
    %c0_524 = arith.constant 0 : index
    %331 = vector.load %arg11[%c42_523, %c0_524] : memref<100x4xf32, #tpu.memory_space<vmem>>, vector<8x4xf32>
    %c24_525 = arith.constant 24 : index
    %c20_526 = arith.constant 20 : index
    %332 = vector.load %arg10[%c24_525, %c20_526] : memref<64x36xf32, #tpu.memory_space<vmem>>, vector<8x4xf32>
    tpu.vector_store %arg10[%c24_525, %c20_526], %331 {strides = array<i32>} : memref<64x36xf32, #tpu.memory_space<vmem>>, vector<8x4xf32>,
    %c52_527 = arith.constant 52 : index
    %c0_528 = arith.constant 0 : index
    %333 = vector.load %arg11[%c52_527, %c0_528] : memref<100x4xf32, #tpu.memory_space<vmem>>, vector<8x4xf32>
    %c32_529 = arith.constant 32 : index
    %c20_530 = arith.constant 20 : index
    %334 = vector.load %arg10[%c32_529, %c20_530] : memref<64x36xf32, #tpu.memory_space<vmem>>, vector<8x4xf32>
    tpu.vector_store %arg10[%c32_529, %c20_530], %333 {strides = array<i32>} : memref<64x36xf32, #tpu.memory_space<vmem>>, vector<8x4xf32>,
    %c62_531 = arith.constant 62 : index
    %c0_532 = arith.constant 0 : index
    %335 = vector.load %arg11[%c62_531, %c0_532] : memref<100x4xf32, #tpu.memory_space<vmem>>, vector<8x4xf32>
    %c40_533 = arith.constant 40 : index
    %c20_534 = arith.constant 20 : index
    %336 = vector.load %arg10[%c40_533, %c20_534] : memref<64x36xf32, #tpu.memory_space<vmem>>, vector<8x4xf32>
    tpu.vector_store %arg10[%c40_533, %c20_534], %335 {strides = array<i32>} : memref<64x36xf32, #tpu.memory_space<vmem>>, vector<8x4xf32>,
    %c72_535 = arith.constant 72 : index
    %c0_536 = arith.constant 0 : index
    %337 = vector.load %arg11[%c72_535, %c0_536] : memref<100x4xf32, #tpu.memory_space<vmem>>, vector<8x4xf32>
    %c48_537 = arith.constant 48 : index
    %c20_538 = arith.constant 20 : index
    %338 = vector.load %arg10[%c48_537, %c20_538] : memref<64x36xf32, #tpu.memory_space<vmem>>, vector<8x4xf32>
    tpu.vector_store %arg10[%c48_537, %c20_538], %337 {strides = array<i32>} : memref<64x36xf32, #tpu.memory_space<vmem>>, vector<8x4xf32>,
    %c82_539 = arith.constant 82 : index
    %c0_540 = arith.constant 0 : index
    %339 = vector.load %arg11[%c82_539, %c0_540] : memref<100x4xf32, #tpu.memory_space<vmem>>, vector<8x4xf32>
    %c56_541 = arith.constant 56 : index
    %c20_542 = arith.constant 20 : index
    %340 = vector.load %arg10[%c56_541, %c20_542] : memref<64x36xf32, #tpu.memory_space<vmem>>, vector<8x4xf32>
    tpu.vector_store %arg10[%c56_541, %c20_542], %339 {strides = array<i32>} : memref<64x36xf32, #tpu.memory_space<vmem>>, vector<8x4xf32>,
    %c20_543 = arith.constant 20 : index
    %c0_544 = arith.constant 0 : index
    %341 = vector.load %arg11[%c20_543, %c0_544] : memref<100x4xf32, #tpu.memory_space<vmem>>, vector<8x4xf32>
    %c0_545 = arith.constant 0 : index
    %c24_546 = arith.constant 24 : index
    %342 = vector.load %arg10[%c0_545, %c24_546] : memref<64x36xf32, #tpu.memory_space<vmem>>, vector<8x4xf32>
    tpu.vector_store %arg10[%c0_545, %c24_546], %341 {strides = array<i32>} : memref<64x36xf32, #tpu.memory_space<vmem>>, vector<8x4xf32>,
    %c30_547 = arith.constant 30 : index
    %c0_548 = arith.constant 0 : index
    %343 = vector.load %arg11[%c30_547, %c0_548] : memref<100x4xf32, #tpu.memory_space<vmem>>, vector<8x4xf32>
    %c8_549 = arith.constant 8 : index
    %c24_550 = arith.constant 24 : index
    %344 = vector.load %arg10[%c8_549, %c24_550] : memref<64x36xf32, #tpu.memory_space<vmem>>, vector<8x4xf32>
    tpu.vector_store %arg10[%c8_549, %c24_550], %343 {strides = array<i32>} : memref<64x36xf32, #tpu.memory_space<vmem>>, vector<8x4xf32>,
    %c40_551 = arith.constant 40 : index
    %c0_552 = arith.constant 0 : index
    %345 = vector.load %arg11[%c40_551, %c0_552] : memref<100x4xf32, #tpu.memory_space<vmem>>, vector<8x4xf32>
    %c16_553 = arith.constant 16 : index
    %c24_554 = arith.constant 24 : index
    %346 = vector.load %arg10[%c16_553, %c24_554] : memref<64x36xf32, #tpu.memory_space<vmem>>, vector<8x4xf32>
    tpu.vector_store %arg10[%c16_553, %c24_554], %345 {strides = array<i32>} : memref<64x36xf32, #tpu.memory_space<vmem>>, vector<8x4xf32>,
    %c50_555 = arith.constant 50 : index
    %c0_556 = arith.constant 0 : index
    %347 = vector.load %arg11[%c50_555, %c0_556] : memref<100x4xf32, #tpu.memory_space<vmem>>, vector<8x4xf32>
    %c24_557 = arith.constant 24 : index
    %c24_558 = arith.constant 24 : index
    %348 = vector.load %arg10[%c24_557, %c24_558] : memref<64x36xf32, #tpu.memory_space<vmem>>, vector<8x4xf32>
    tpu.vector_store %arg10[%c24_557, %c24_558], %347 {strides = array<i32>} : memref<64x36xf32, #tpu.memory_space<vmem>>, vector<8x4xf32>,
    %c60_559 = arith.constant 60 : index
    %c0_560 = arith.constant 0 : index
    %349 = vector.load %arg11[%c60_559, %c0_560] : memref<100x4xf32, #tpu.memory_space<vmem>>, vector<8x4xf32>
    %c32_561 = arith.constant 32 : index
    %c24_562 = arith.constant 24 : index
    %350 = vector.load %arg10[%c32_561, %c24_562] : memref<64x36xf32, #tpu.memory_space<vmem>>, vector<8x4xf32>
    tpu.vector_store %arg10[%c32_561, %c24_562], %349 {strides = array<i32>} : memref<64x36xf32, #tpu.memory_space<vmem>>, vector<8x4xf32>,
    %c70_563 = arith.constant 70 : index
    %c0_564 = arith.constant 0 : index
    %351 = vector.load %arg11[%c70_563, %c0_564] : memref<100x4xf32, #tpu.memory_space<vmem>>, vector<8x4xf32>
    %c40_565 = arith.constant 40 : index
    %c24_566 = arith.constant 24 : index
    %352 = vector.load %arg10[%c40_565, %c24_566] : memref<64x36xf32, #tpu.memory_space<vmem>>, vector<8x4xf32>
    tpu.vector_store %arg10[%c40_565, %c24_566], %351 {strides = array<i32>} : memref<64x36xf32, #tpu.memory_space<vmem>>, vector<8x4xf32>,
    %c80_567 = arith.constant 80 : index
    %c0_568 = arith.constant 0 : index
    %353 = vector.load %arg11[%c80_567, %c0_568] : memref<100x4xf32, #tpu.memory_space<vmem>>, vector<8x4xf32>
    %c48_569 = arith.constant 48 : index
    %c24_570 = arith.constant 24 : index
    %354 = vector.load %arg10[%c48_569, %c24_570] : memref<64x36xf32, #tpu.memory_space<vmem>>, vector<8x4xf32>
    tpu.vector_store %arg10[%c48_569, %c24_570], %353 {strides = array<i32>} : memref<64x36xf32, #tpu.memory_space<vmem>>, vector<8x4xf32>,
    %c90_571 = arith.constant 90 : index
    %c0_572 = arith.constant 0 : index
    %355 = vector.load %arg11[%c90_571, %c0_572] : memref<100x4xf32, #tpu.memory_space<vmem>>, vector<8x4xf32>
    %c56_573 = arith.constant 56 : index
    %c24_574 = arith.constant 24 : index
    %356 = vector.load %arg10[%c56_573, %c24_574] : memref<64x36xf32, #tpu.memory_space<vmem>>, vector<8x4xf32>
    tpu.vector_store %arg10[%c56_573, %c24_574], %355 {strides = array<i32>} : memref<64x36xf32, #tpu.memory_space<vmem>>, vector<8x4xf32>,
    %c21_575 = arith.constant 21 : index
    %c0_576 = arith.constant 0 : index
    %357 = vector.load %arg11[%c21_575, %c0_576] : memref<100x4xf32, #tpu.memory_space<vmem>>, vector<8x4xf32>
    %c0_577 = arith.constant 0 : index
    %c28_578 = arith.constant 28 : index
    %358 = vector.load %arg10[%c0_577, %c28_578] : memref<64x36xf32, #tpu.memory_space<vmem>>, vector<8x4xf32>
    tpu.vector_store %arg10[%c0_577, %c28_578], %357 {strides = array<i32>} : memref<64x36xf32, #tpu.memory_space<vmem>>, vector<8x4xf32>,
    %c31_579 = arith.constant 31 : index
    %c0_580 = arith.constant 0 : index
    %359 = vector.load %arg11[%c31_579, %c0_580] : memref<100x4xf32, #tpu.memory_space<vmem>>, vector<8x4xf32>
    %c8_581 = arith.constant 8 : index
    %c28_582 = arith.constant 28 : index
    %360 = vector.load %arg10[%c8_581, %c28_582] : memref<64x36xf32, #tpu.memory_space<vmem>>, vector<8x4xf32>
    tpu.vector_store %arg10[%c8_581, %c28_582], %359 {strides = array<i32>} : memref<64x36xf32, #tpu.memory_space<vmem>>, vector<8x4xf32>,
    %c41_583 = arith.constant 41 : index
    %c0_584 = arith.constant 0 : index
    %361 = vector.load %arg11[%c41_583, %c0_584] : memref<100x4xf32, #tpu.memory_space<vmem>>, vector<8x4xf32>
    %c16_585 = arith.constant 16 : index
    %c28_586 = arith.constant 28 : index
    %362 = vector.load %arg10[%c16_585, %c28_586] : memref<64x36xf32, #tpu.memory_space<vmem>>, vector<8x4xf32>
    tpu.vector_store %arg10[%c16_585, %c28_586], %361 {strides = array<i32>} : memref<64x36xf32, #tpu.memory_space<vmem>>, vector<8x4xf32>,
    %c51_587 = arith.constant 51 : index
    %c0_588 = arith.constant 0 : index
    %363 = vector.load %arg11[%c51_587, %c0_588] : memref<100x4xf32, #tpu.memory_space<vmem>>, vector<8x4xf32>
    %c24_589 = arith.constant 24 : index
    %c28_590 = arith.constant 28 : index
    %364 = vector.load %arg10[%c24_589, %c28_590] : memref<64x36xf32, #tpu.memory_space<vmem>>, vector<8x4xf32>
    tpu.vector_store %arg10[%c24_589, %c28_590], %363 {strides = array<i32>} : memref<64x36xf32, #tpu.memory_space<vmem>>, vector<8x4xf32>,
    %c61_591 = arith.constant 61 : index
    %c0_592 = arith.constant 0 : index
    %365 = vector.load %arg11[%c61_591, %c0_592] : memref<100x4xf32, #tpu.memory_space<vmem>>, vector<8x4xf32>
    %c32_593 = arith.constant 32 : index
    %c28_594 = arith.constant 28 : index
    %366 = vector.load %arg10[%c32_593, %c28_594] : memref<64x36xf32, #tpu.memory_space<vmem>>, vector<8x4xf32>
    tpu.vector_store %arg10[%c32_593, %c28_594], %365 {strides = array<i32>} : memref<64x36xf32, #tpu.memory_space<vmem>>, vector<8x4xf32>,
    %c71_595 = arith.constant 71 : index
    %c0_596 = arith.constant 0 : index
    %367 = vector.load %arg11[%c71_595, %c0_596] : memref<100x4xf32, #tpu.memory_space<vmem>>, vector<8x4xf32>
    %c40_597 = arith.constant 40 : index
    %c28_598 = arith.constant 28 : index
    %368 = vector.load %arg10[%c40_597, %c28_598] : memref<64x36xf32, #tpu.memory_space<vmem>>, vector<8x4xf32>
    tpu.vector_store %arg10[%c40_597, %c28_598], %367 {strides = array<i32>} : memref<64x36xf32, #tpu.memory_space<vmem>>, vector<8x4xf32>,
    %c81_599 = arith.constant 81 : index
    %c0_600 = arith.constant 0 : index
    %369 = vector.load %arg11[%c81_599, %c0_600] : memref<100x4xf32, #tpu.memory_space<vmem>>, vector<8x4xf32>
    %c48_601 = arith.constant 48 : index
    %c28_602 = arith.constant 28 : index
    %370 = vector.load %arg10[%c48_601, %c28_602] : memref<64x36xf32, #tpu.memory_space<vmem>>, vector<8x4xf32>
    tpu.vector_store %arg10[%c48_601, %c28_602], %369 {strides = array<i32>} : memref<64x36xf32, #tpu.memory_space<vmem>>, vector<8x4xf32>,
    %c91_603 = arith.constant 91 : index
    %c0_604 = arith.constant 0 : index
    %371 = vector.load %arg11[%c91_603, %c0_604] : memref<100x4xf32, #tpu.memory_space<vmem>>, vector<8x4xf32>
    %c56_605 = arith.constant 56 : index
    %c28_606 = arith.constant 28 : index
    %372 = vector.load %arg10[%c56_605, %c28_606] : memref<64x36xf32, #tpu.memory_space<vmem>>, vector<8x4xf32>
    tpu.vector_store %arg10[%c56_605, %c28_606], %371 {strides = array<i32>} : memref<64x36xf32, #tpu.memory_space<vmem>>, vector<8x4xf32>,
    %c22_607 = arith.constant 22 : index
    %c0_608 = arith.constant 0 : index
    %373 = vector.load %arg11[%c22_607, %c0_608] : memref<100x4xf32, #tpu.memory_space<vmem>>, vector<8x4xf32>
    %c0_609 = arith.constant 0 : index
    %c32_610 = arith.constant 32 : index
    %374 = vector.load %arg10[%c0_609, %c32_610] : memref<64x36xf32, #tpu.memory_space<vmem>>, vector<8x4xf32>
    tpu.vector_store %arg10[%c0_609, %c32_610], %373 {strides = array<i32>} : memref<64x36xf32, #tpu.memory_space<vmem>>, vector<8x4xf32>,
    %c32_611 = arith.constant 32 : index
    %c0_612 = arith.constant 0 : index
    %375 = vector.load %arg11[%c32_611, %c0_612] : memref<100x4xf32, #tpu.memory_space<vmem>>, vector<8x4xf32>
    %c8_613 = arith.constant 8 : index
    %c32_614 = arith.constant 32 : index
    %376 = vector.load %arg10[%c8_613, %c32_614] : memref<64x36xf32, #tpu.memory_space<vmem>>, vector<8x4xf32>
    tpu.vector_store %arg10[%c8_613, %c32_614], %375 {strides = array<i32>} : memref<64x36xf32, #tpu.memory_space<vmem>>, vector<8x4xf32>,
    %c42_615 = arith.constant 42 : index
    %c0_616 = arith.constant 0 : index
    %377 = vector.load %arg11[%c42_615, %c0_616] : memref<100x4xf32, #tpu.memory_space<vmem>>, vector<8x4xf32>
    %c16_617 = arith.constant 16 : index
    %c32_618 = arith.constant 32 : index
    %378 = vector.load %arg10[%c16_617, %c32_618] : memref<64x36xf32, #tpu.memory_space<vmem>>, vector<8x4xf32>
    tpu.vector_store %arg10[%c16_617, %c32_618], %377 {strides = array<i32>} : memref<64x36xf32, #tpu.memory_space<vmem>>, vector<8x4xf32>,
    %c52_619 = arith.constant 52 : index
    %c0_620 = arith.constant 0 : index
    %379 = vector.load %arg11[%c52_619, %c0_620] : memref<100x4xf32, #tpu.memory_space<vmem>>, vector<8x4xf32>
    %c24_621 = arith.constant 24 : index
    %c32_622 = arith.constant 32 : index
    %380 = vector.load %arg10[%c24_621, %c32_622] : memref<64x36xf32, #tpu.memory_space<vmem>>, vector<8x4xf32>
    tpu.vector_store %arg10[%c24_621, %c32_622], %379 {strides = array<i32>} : memref<64x36xf32, #tpu.memory_space<vmem>>, vector<8x4xf32>,
    %c62_623 = arith.constant 62 : index
    %c0_624 = arith.constant 0 : index
    %381 = vector.load %arg11[%c62_623, %c0_624] : memref<100x4xf32, #tpu.memory_space<vmem>>, vector<8x4xf32>
    %c32_625 = arith.constant 32 : index
    %c32_626 = arith.constant 32 : index
    %382 = vector.load %arg10[%c32_625, %c32_626] : memref<64x36xf32, #tpu.memory_space<vmem>>, vector<8x4xf32>
    tpu.vector_store %arg10[%c32_625, %c32_626], %381 {strides = array<i32>} : memref<64x36xf32, #tpu.memory_space<vmem>>, vector<8x4xf32>,
    %c72_627 = arith.constant 72 : index
    %c0_628 = arith.constant 0 : index
    %383 = vector.load %arg11[%c72_627, %c0_628] : memref<100x4xf32, #tpu.memory_space<vmem>>, vector<8x4xf32>
    %c40_629 = arith.constant 40 : index
    %c32_630 = arith.constant 32 : index
    %384 = vector.load %arg10[%c40_629, %c32_630] : memref<64x36xf32, #tpu.memory_space<vmem>>, vector<8x4xf32>
    tpu.vector_store %arg10[%c40_629, %c32_630], %383 {strides = array<i32>} : memref<64x36xf32, #tpu.memory_space<vmem>>, vector<8x4xf32>,
    %c82_631 = arith.constant 82 : index
    %c0_632 = arith.constant 0 : index
    %385 = vector.load %arg11[%c82_631, %c0_632] : memref<100x4xf32, #tpu.memory_space<vmem>>, vector<8x4xf32>
    %c48_633 = arith.constant 48 : index
    %c32_634 = arith.constant 32 : index
    %386 = vector.load %arg10[%c48_633, %c32_634] : memref<64x36xf32, #tpu.memory_space<vmem>>, vector<8x4xf32>
    tpu.vector_store %arg10[%c48_633, %c32_634], %385 {strides = array<i32>} : memref<64x36xf32, #tpu.memory_space<vmem>>, vector<8x4xf32>,
    %c92_635 = arith.constant 92 : index
    %c0_636 = arith.constant 0 : index
    %387 = vector.load %arg11[%c92_635, %c0_636] : memref<100x4xf32, #tpu.memory_space<vmem>>, vector<8x4xf32>
    %c56_637 = arith.constant 56 : index
    %c32_638 = arith.constant 32 : index
    %388 = vector.load %arg10[%c56_637, %c32_638] : memref<64x36xf32, #tpu.memory_space<vmem>>, vector<8x4xf32>
    tpu.vector_store %arg10[%c56_637, %c32_638], %387 {strides = array<i32>} : memref<64x36xf32, #tpu.memory_space<vmem>>, vector<8x4xf32>,
    %c0_639 = arith.constant 0 : index
    %c16_640 = arith.constant 16 : index
    %389 = vector.load %arg9[%c0_639, %c16_640] : memref<64x36xf32, #tpu.memory_space<vmem>>, vector<64x4xf32>
    %c0_641 = arith.constant 0 : index
    %c0_642 = arith.constant 0 : index
    %390 = vector.load %arg10[%c0_641, %c0_642] : memref<64x36xf32, #tpu.memory_space<vmem>>, vector<64x36xf32>
    %c0_643 = arith.constant 0 : index
    %c0_644 = arith.constant 0 : index
    %391 = vector.load %arg5[%c0_643, %c0_644] : memref<36x4xf32, #tpu.memory_space<vmem>>, vector<36x4xf32>
    %cst_645 = arith.constant dense<0.000000e+00> : vector<64x4xf32>
    %392 = tpu.matmul %390, %391, %cst_645 {dimension_numbers = #tpu.dot_dimension_numbers<[1], [0], [0], [1], [0, 0, 1, 1], [], []>} : vector<64x36xf32>, vector<36x4xf32>, vector<64x4xf32> -> vector<64x4xf32>
    %c0_646 = arith.constant 0 : index
    %c0_647 = arith.constant 0 : index
    %393 = vector.load %arg6[%c0_646, %c0_647] : memref<1x4xf32, #tpu.memory_space<vmem>>, vector<1x4xf32>
    %394 = vector.broadcast %393 : vector<1x4xf32> to vector<64x4xf32>
    %395 = arith.mulf %392, %394 : vector<64x4xf32>
    %c0_648 = arith.constant 0 : index
    %c0_649 = arith.constant 0 : index
    %396 = vector.load %arg7[%c0_648, %c0_649] : memref<1x4xf32, #tpu.memory_space<vmem>>, vector<1x4xf32>
    %397 = vector.broadcast %396 : vector<1x4xf32> to vector<64x4xf32>
    %398 = arith.addf %395, %397 : vector<64x4xf32>
    %399 = arith.addf %398, %389 : vector<64x4xf32>
    %cst_650 = arith.constant 0.000000e+00 : f32
    %400 = vector.broadcast %cst_650 : f32 to vector<64x4xf32>
    %401 = arith.maximumf %399, %400 : vector<64x4xf32>
    %c0_651 = arith.constant 0 : index
    %c0_652 = arith.constant 0 : index
    %c0_653 = arith.constant 0 : index
    %402 = vector.load %arg8[%c0_651, %c0_652, %c0_653] : memref<1x64x4xf32, #tpu.memory_space<vmem>>, vector<1x64x4xf32>
    %403 = vector.shape_cast %402 : vector<1x64x4xf32> to vector<64x4xf32>
    %404 = vector.shape_cast %401 : vector<64x4xf32> to vector<1x64x4xf32>
    tpu.vector_store %arg8[%c0_651, %c0_652, %c0_653], %404 {strides = array<i32>} : memref<1x64x4xf32, #tpu.memory_space<vmem>>, vector<1x64x4xf32>,
    return
  }
  func.func @transform_0(%arg0: i32) -> (i32, i32, i32) {
    %c0_i32 = arith.constant 0 : i32
    %c0_i32_0 = arith.constant 0 : i32
    %c0_i32_1 = arith.constant 0 : i32
    return %arg0, %c0_i32, %c0_i32_0 : i32, i32, i32
  }
  func.func @transform_1(%arg0: i32) -> (i32, i32) {
    %c0_i32 = arith.constant 0 : i32
    %c0_i32_0 = arith.constant 0 : i32
    %c0_i32_1 = arith.constant 0 : i32
    return %c0_i32, %c0_i32_0 : i32, i32
  }
  func.func @transform_2(%arg0: i32) -> (i32, i32) {
    %c0_i32 = arith.constant 0 : i32
    %c0_i32_0 = arith.constant 0 : i32
    %c0_i32_1 = arith.constant 0 : i32
    return %c0_i32, %c0_i32_0 : i32, i32
  }
  func.func @transform_3(%arg0: i32) -> (i32, i32) {
    %c0_i32 = arith.constant 0 : i32
    %c0_i32_0 = arith.constant 0 : i32
    %c0_i32_1 = arith.constant 0 : i32
    return %c0_i32, %c0_i32_0 : i32, i32
  }
  func.func @transform_4(%arg0: i32) -> (i32, i32) {
    %c0_i32 = arith.constant 0 : i32
    %c0_i32_0 = arith.constant 0 : i32
    %c0_i32_1 = arith.constant 0 : i32
    return %c0_i32, %c0_i32_0 : i32, i32
  }
  func.func @transform_5(%arg0: i32) -> (i32, i32) {
    %c0_i32 = arith.constant 0 : i32
    %c0_i32_0 = arith.constant 0 : i32
    %c0_i32_1 = arith.constant 0 : i32
    return %c0_i32, %c0_i32_0 : i32, i32
  }
  func.func @transform_6(%arg0: i32) -> (i32, i32) {
    %c0_i32 = arith.constant 0 : i32
    %c0_i32_0 = arith.constant 0 : i32
    %c0_i32_1 = arith.constant 0 : i32
    return %c0_i32, %c0_i32_0 : i32, i32
  }
  func.func @transform_7(%arg0: i32) -> (i32, i32, i32) {
    %c0_i32 = arith.constant 0 : i32
    %c0_i32_0 = arith.constant 0 : i32
    %c0_i32_1 = arith.constant 0 : i32
    return %arg0, %c0_i32, %c0_i32_0 : i32, i32, i32
  }
}

module attributes {stable_mosaic.version = 11 : i64} {
  func.func @_matmul_kernel(%arg0: i32, %arg1: i32, %arg2: memref<1x16x36xf32, #tpu.memory_space<vmem>>, %arg3: memref<36x8xf32, #tpu.memory_space<vmem>>, %arg4: memref<1x16x8xf32, #tpu.memory_space<vmem>>) attributes {dimension_semantics = [#tpu.dimension_semantics<parallel>, #tpu.dimension_semantics<parallel>], iteration_bounds = array<i64: 2, 1>, scalar_prefetch = 0 : i64, scratch_operands = 0 : i64, tpu.core_type = #tpu.core_type<tc>, window_params = [{transform_indices = @transform_0, window_bounds = array<i64: 1, 16, 36>}, {pipeline_mode = #tpu.pipeline_mode<synchronous>, transform_indices = @transform_1, window_bounds = array<i64: 36, 8>}, {transform_indices = @transform_2, window_bounds = array<i64: 1, 16, 8>}]} {
    %c0 = arith.constant 0 : index
    %c0_0 = arith.constant 0 : index
    %c0_1 = arith.constant 0 : index
    %0 = vector.load %arg2[%c0, %c0_0, %c0_1] : memref<1x16x36xf32, #tpu.memory_space<vmem>>, vector<1x16x36xf32>
    %1 = vector.shape_cast %0 : vector<1x16x36xf32> to vector<16x36xf32>
    %c0_2 = arith.constant 0 : index
    %c0_3 = arith.constant 0 : index
    %2 = vector.load %arg3[%c0_2, %c0_3] : memref<36x8xf32, #tpu.memory_space<vmem>>, vector<36x8xf32>
    %cst = arith.constant dense<0.000000e+00> : vector<16x8xf32>
    %3 = tpu.matmul %1, %2, %cst {dimension_numbers = #tpu.dot_dimension_numbers<[1], [0], [0], [1], [0, 0, 1, 1], [], []>} : vector<16x36xf32>, vector<36x8xf32>, vector<16x8xf32> -> vector<16x8xf32>
    %c0_4 = arith.constant 0 : index
    %c0_5 = arith.constant 0 : index
    %c0_6 = arith.constant 0 : index
    %4 = vector.load %arg4[%c0_4, %c0_5, %c0_6] : memref<1x16x8xf32, #tpu.memory_space<vmem>>, vector<1x16x8xf32>
    %5 = vector.shape_cast %4 : vector<1x16x8xf32> to vector<16x8xf32>
    %6 = vector.shape_cast %3 : vector<16x8xf32> to vector<1x16x8xf32>
    tpu.vector_store %arg4[%c0_4, %c0_5, %c0_6], %6 {strides = array<i32>} : memref<1x16x8xf32, #tpu.memory_space<vmem>>, vector<1x16x8xf32>,
    return
  }
  func.func @transform_0(%arg0: i32, %arg1: i32) -> (i32, i32, i32) {
    %c0_i32 = arith.constant 0 : i32
    %c0_i32_0 = arith.constant 0 : i32
    return %arg0, %arg1, %c0_i32 : i32, i32, i32
  }
  func.func @transform_1(%arg0: i32, %arg1: i32) -> (i32, i32) {
    %c0_i32 = arith.constant 0 : i32
    %c0_i32_0 = arith.constant 0 : i32
    %c0_i32_1 = arith.constant 0 : i32
    return %c0_i32, %c0_i32_0 : i32, i32
  }
  func.func @transform_2(%arg0: i32, %arg1: i32) -> (i32, i32, i32) {
    %c0_i32 = arith.constant 0 : i32
    %c0_i32_0 = arith.constant 0 : i32
    return %arg0, %arg1, %c0_i32 : i32, i32, i32
  }
}

module attributes {stable_mosaic.version = 11 : i64} {
  func.func @_resblock_kernel(%arg0: i32, %arg1: memref<1x36x8xf32, #tpu.memory_space<vmem>>, %arg2: memref<72x8xf32, #tpu.memory_space<vmem>>, %arg3: memref<1x8xf32, #tpu.memory_space<vmem>>, %arg4: memref<1x8xf32, #tpu.memory_space<vmem>>, %arg5: memref<72x8xf32, #tpu.memory_space<vmem>>, %arg6: memref<1x8xf32, #tpu.memory_space<vmem>>, %arg7: memref<1x8xf32, #tpu.memory_space<vmem>>, %arg8: memref<1x16x8xf32, #tpu.memory_space<vmem>>, %arg9: memref<16x72xf32, #tpu.memory_space<vmem>>, %arg10: memref<16x72xf32, #tpu.memory_space<vmem>>, %arg11: memref<36x8xf32, #tpu.memory_space<vmem>>) attributes {dimension_semantics = [#tpu.dimension_semantics<parallel>], iteration_bounds = array<i64: 2>, scalar_prefetch = 0 : i64, scratch_operands = 3 : i64, tpu.core_type = #tpu.core_type<tc>, window_params = [{transform_indices = @transform_0, window_bounds = array<i64: 1, 36, 8>}, {pipeline_mode = #tpu.pipeline_mode<synchronous>, transform_indices = @transform_1, window_bounds = array<i64: 72, 8>}, {pipeline_mode = #tpu.pipeline_mode<synchronous>, transform_indices = @transform_2, window_bounds = array<i64: 1, 8>}, {pipeline_mode = #tpu.pipeline_mode<synchronous>, transform_indices = @transform_3, window_bounds = array<i64: 1, 8>}, {pipeline_mode = #tpu.pipeline_mode<synchronous>, transform_indices = @transform_4, window_bounds = array<i64: 72, 8>}, {pipeline_mode = #tpu.pipeline_mode<synchronous>, transform_indices = @transform_5, window_bounds = array<i64: 1, 8>}, {pipeline_mode = #tpu.pipeline_mode<synchronous>, transform_indices = @transform_6, window_bounds = array<i64: 1, 8>}, {transform_indices = @transform_7, window_bounds = array<i64: 1, 16, 8>}]} {
    %c0 = arith.constant 0 : index
    %c0_0 = arith.constant 0 : index
    %c0_1 = arith.constant 0 : index
    %0 = vector.load %arg1[%c0, %c0_0, %c0_1] : memref<1x36x8xf32, #tpu.memory_space<vmem>>, vector<1x4x8xf32>
    %1 = vector.shape_cast %0 : vector<1x4x8xf32> to vector<4x8xf32>
    %c0_2 = arith.constant 0 : index
    %c0_3 = arith.constant 0 : index
    %2 = vector.load %arg9[%c0_2, %c0_3] : memref<16x72xf32, #tpu.memory_space<vmem>>, vector<4x8xf32>
    tpu.vector_store %arg9[%c0_2, %c0_3], %1 {strides = array<i32>} : memref<16x72xf32, #tpu.memory_space<vmem>>, vector<4x8xf32>,
    %c0_4 = arith.constant 0 : index
    %c6 = arith.constant 6 : index
    %c0_5 = arith.constant 0 : index
    %3 = vector.load %arg1[%c0_4, %c6, %c0_5] : memref<1x36x8xf32, #tpu.memory_space<vmem>>, vector<1x4x8xf32>
    %4 = vector.shape_cast %3 : vector<1x4x8xf32> to vector<4x8xf32>
    %c4 = arith.constant 4 : index
    %c0_6 = arith.constant 0 : index
    %5 = vector.load %arg9[%c4, %c0_6] : memref<16x72xf32, #tpu.memory_space<vmem>>, vector<4x8xf32>
    tpu.vector_store %arg9[%c4, %c0_6], %4 {strides = array<i32>} : memref<16x72xf32, #tpu.memory_space<vmem>>, vector<4x8xf32>,
    %c0_7 = arith.constant 0 : index
    %c12 = arith.constant 12 : index
    %c0_8 = arith.constant 0 : index
    %6 = vector.load %arg1[%c0_7, %c12, %c0_8] : memref<1x36x8xf32, #tpu.memory_space<vmem>>, vector<1x4x8xf32>
    %7 = vector.shape_cast %6 : vector<1x4x8xf32> to vector<4x8xf32>
    %c8 = arith.constant 8 : index
    %c0_9 = arith.constant 0 : index
    %8 = vector.load %arg9[%c8, %c0_9] : memref<16x72xf32, #tpu.memory_space<vmem>>, vector<4x8xf32>
    tpu.vector_store %arg9[%c8, %c0_9], %7 {strides = array<i32>} : memref<16x72xf32, #tpu.memory_space<vmem>>, vector<4x8xf32>,
    %c0_10 = arith.constant 0 : index
    %c18 = arith.constant 18 : index
    %c0_11 = arith.constant 0 : index
    %9 = vector.load %arg1[%c0_10, %c18, %c0_11] : memref<1x36x8xf32, #tpu.memory_space<vmem>>, vector<1x4x8xf32>
    %10 = vector.shape_cast %9 : vector<1x4x8xf32> to vector<4x8xf32>
    %c12_12 = arith.constant 12 : index
    %c0_13 = arith.constant 0 : index
    %11 = vector.load %arg9[%c12_12, %c0_13] : memref<16x72xf32, #tpu.memory_space<vmem>>, vector<4x8xf32>
    tpu.vector_store %arg9[%c12_12, %c0_13], %10 {strides = array<i32>} : memref<16x72xf32, #tpu.memory_space<vmem>>, vector<4x8xf32>,
    %c0_14 = arith.constant 0 : index
    %c1 = arith.constant 1 : index
    %c0_15 = arith.constant 0 : index
    %12 = vector.load %arg1[%c0_14, %c1, %c0_15] : memref<1x36x8xf32, #tpu.memory_space<vmem>>, vector<1x4x8xf32>
    %13 = vector.shape_cast %12 : vector<1x4x8xf32> to vector<4x8xf32>
    %c0_16 = arith.constant 0 : index
    %c8_17 = arith.constant 8 : index
    %14 = vector.load %arg9[%c0_16, %c8_17] : memref<16x72xf32, #tpu.memory_space<vmem>>, vector<4x8xf32>
    tpu.vector_store %arg9[%c0_16, %c8_17], %13 {strides = array<i32>} : memref<16x72xf32, #tpu.memory_space<vmem>>, vector<4x8xf32>,
    %c0_18 = arith.constant 0 : index
    %c7 = arith.constant 7 : index
    %c0_19 = arith.constant 0 : index
    %15 = vector.load %arg1[%c0_18, %c7, %c0_19] : memref<1x36x8xf32, #tpu.memory_space<vmem>>, vector<1x4x8xf32>
    %16 = vector.shape_cast %15 : vector<1x4x8xf32> to vector<4x8xf32>
    %c4_20 = arith.constant 4 : index
    %c8_21 = arith.constant 8 : index
    %17 = vector.load %arg9[%c4_20, %c8_21] : memref<16x72xf32, #tpu.memory_space<vmem>>, vector<4x8xf32>
    tpu.vector_store %arg9[%c4_20, %c8_21], %16 {strides = array<i32>} : memref<16x72xf32, #tpu.memory_space<vmem>>, vector<4x8xf32>,
    %c0_22 = arith.constant 0 : index
    %c13 = arith.constant 13 : index
    %c0_23 = arith.constant 0 : index
    %18 = vector.load %arg1[%c0_22, %c13, %c0_23] : memref<1x36x8xf32, #tpu.memory_space<vmem>>, vector<1x4x8xf32>
    %19 = vector.shape_cast %18 : vector<1x4x8xf32> to vector<4x8xf32>
    %c8_24 = arith.constant 8 : index
    %c8_25 = arith.constant 8 : index
    %20 = vector.load %arg9[%c8_24, %c8_25] : memref<16x72xf32, #tpu.memory_space<vmem>>, vector<4x8xf32>
    tpu.vector_store %arg9[%c8_24, %c8_25], %19 {strides = array<i32>} : memref<16x72xf32, #tpu.memory_space<vmem>>, vector<4x8xf32>,
    %c0_26 = arith.constant 0 : index
    %c19 = arith.constant 19 : index
    %c0_27 = arith.constant 0 : index
    %21 = vector.load %arg1[%c0_26, %c19, %c0_27] : memref<1x36x8xf32, #tpu.memory_space<vmem>>, vector<1x4x8xf32>
    %22 = vector.shape_cast %21 : vector<1x4x8xf32> to vector<4x8xf32>
    %c12_28 = arith.constant 12 : index
    %c8_29 = arith.constant 8 : index
    %23 = vector.load %arg9[%c12_28, %c8_29] : memref<16x72xf32, #tpu.memory_space<vmem>>, vector<4x8xf32>
    tpu.vector_store %arg9[%c12_28, %c8_29], %22 {strides = array<i32>} : memref<16x72xf32, #tpu.memory_space<vmem>>, vector<4x8xf32>,
    %c0_30 = arith.constant 0 : index
    %c2 = arith.constant 2 : index
    %c0_31 = arith.constant 0 : index
    %24 = vector.load %arg1[%c0_30, %c2, %c0_31] : memref<1x36x8xf32, #tpu.memory_space<vmem>>, vector<1x4x8xf32>
    %25 = vector.shape_cast %24 : vector<1x4x8xf32> to vector<4x8xf32>
    %c0_32 = arith.constant 0 : index
    %c16 = arith.constant 16 : index
    %26 = vector.load %arg9[%c0_32, %c16] : memref<16x72xf32, #tpu.memory_space<vmem>>, vector<4x8xf32>
    tpu.vector_store %arg9[%c0_32, %c16], %25 {strides = array<i32>} : memref<16x72xf32, #tpu.memory_space<vmem>>, vector<4x8xf32>,
    %c0_33 = arith.constant 0 : index
    %c8_34 = arith.constant 8 : index
    %c0_35 = arith.constant 0 : index
    %27 = vector.load %arg1[%c0_33, %c8_34, %c0_35] : memref<1x36x8xf32, #tpu.memory_space<vmem>>, vector<1x4x8xf32>
    %28 = vector.shape_cast %27 : vector<1x4x8xf32> to vector<4x8xf32>
    %c4_36 = arith.constant 4 : index
    %c16_37 = arith.constant 16 : index
    %29 = vector.load %arg9[%c4_36, %c16_37] : memref<16x72xf32, #tpu.memory_space<vmem>>, vector<4x8xf32>
    tpu.vector_store %arg9[%c4_36, %c16_37], %28 {strides = array<i32>} : memref<16x72xf32, #tpu.memory_space<vmem>>, vector<4x8xf32>,
    %c0_38 = arith.constant 0 : index
    %c14 = arith.constant 14 : index
    %c0_39 = arith.constant 0 : index
    %30 = vector.load %arg1[%c0_38, %c14, %c0_39] : memref<1x36x8xf32, #tpu.memory_space<vmem>>, vector<1x4x8xf32>
    %31 = vector.shape_cast %30 : vector<1x4x8xf32> to vector<4x8xf32>
    %c8_40 = arith.constant 8 : index
    %c16_41 = arith.constant 16 : index
    %32 = vector.load %arg9[%c8_40, %c16_41] : memref<16x72xf32, #tpu.memory_space<vmem>>, vector<4x8xf32>
    tpu.vector_store %arg9[%c8_40, %c16_41], %31 {strides = array<i32>} : memref<16x72xf32, #tpu.memory_space<vmem>>, vector<4x8xf32>,
    %c0_42 = arith.constant 0 : index
    %c20 = arith.constant 20 : index
    %c0_43 = arith.constant 0 : index
    %33 = vector.load %arg1[%c0_42, %c20, %c0_43] : memref<1x36x8xf32, #tpu.memory_space<vmem>>, vector<1x4x8xf32>
    %34 = vector.shape_cast %33 : vector<1x4x8xf32> to vector<4x8xf32>
    %c12_44 = arith.constant 12 : index
    %c16_45 = arith.constant 16 : index
    %35 = vector.load %arg9[%c12_44, %c16_45] : memref<16x72xf32, #tpu.memory_space<vmem>>, vector<4x8xf32>
    tpu.vector_store %arg9[%c12_44, %c16_45], %34 {strides = array<i32>} : memref<16x72xf32, #tpu.memory_space<vmem>>, vector<4x8xf32>,
    %c0_46 = arith.constant 0 : index
    %c6_47 = arith.constant 6 : index
    %c0_48 = arith.constant 0 : index
    %36 = vector.load %arg1[%c0_46, %c6_47, %c0_48] : memref<1x36x8xf32, #tpu.memory_space<vmem>>, vector<1x4x8xf32>
    %37 = vector.shape_cast %36 : vector<1x4x8xf32> to vector<4x8xf32>
    %c0_49 = arith.constant 0 : index
    %c24 = arith.constant 24 : index
    %38 = vector.load %arg9[%c0_49, %c24] : memref<16x72xf32, #tpu.memory_space<vmem>>, vector<4x8xf32>
    tpu.vector_store %arg9[%c0_49, %c24], %37 {strides = array<i32>} : memref<16x72xf32, #tpu.memory_space<vmem>>, vector<4x8xf32>,
    %c0_50 = arith.constant 0 : index
    %c12_51 = arith.constant 12 : index
    %c0_52 = arith.constant 0 : index
    %39 = vector.load %arg1[%c0_50, %c12_51, %c0_52] : memref<1x36x8xf32, #tpu.memory_space<vmem>>, vector<1x4x8xf32>
    %40 = vector.shape_cast %39 : vector<1x4x8xf32> to vector<4x8xf32>
    %c4_53 = arith.constant 4 : index
    %c24_54 = arith.constant 24 : index
    %41 = vector.load %arg9[%c4_53, %c24_54] : memref<16x72xf32, #tpu.memory_space<vmem>>, vector<4x8xf32>
    tpu.vector_store %arg9[%c4_53, %c24_54], %40 {strides = array<i32>} : memref<16x72xf32, #tpu.memory_space<vmem>>, vector<4x8xf32>,
    %c0_55 = arith.constant 0 : index
    %c18_56 = arith.constant 18 : index
    %c0_57 = arith.constant 0 : index
    %42 = vector.load %arg1[%c0_55, %c18_56, %c0_57] : memref<1x36x8xf32, #tpu.memory_space<vmem>>, vector<1x4x8xf32>
    %43 = vector.shape_cast %42 : vector<1x4x8xf32> to vector<4x8xf32>
    %c8_58 = arith.constant 8 : index
    %c24_59 = arith.constant 24 : index
    %44 = vector.load %arg9[%c8_58, %c24_59] : memref<16x72xf32, #tpu.memory_space<vmem>>, vector<4x8xf32>
    tpu.vector_store %arg9[%c8_58, %c24_59], %43 {strides = array<i32>} : memref<16x72xf32, #tpu.memory_space<vmem>>, vector<4x8xf32>,
    %c0_60 = arith.constant 0 : index
    %c24_61 = arith.constant 24 : index
    %c0_62 = arith.constant 0 : index
    %45 = vector.load %arg1[%c0_60, %c24_61, %c0_62] : memref<1x36x8xf32, #tpu.memory_space<vmem>>, vector<1x4x8xf32>
    %46 = vector.shape_cast %45 : vector<1x4x8xf32> to vector<4x8xf32>
    %c12_63 = arith.constant 12 : index
    %c24_64 = arith.constant 24 : index
    %47 = vector.load %arg9[%c12_63, %c24_64] : memref<16x72xf32, #tpu.memory_space<vmem>>, vector<4x8xf32>
    tpu.vector_store %arg9[%c12_63, %c24_64], %46 {strides = array<i32>} : memref<16x72xf32, #tpu.memory_space<vmem>>, vector<4x8xf32>,
    %c0_65 = arith.constant 0 : index
    %c7_66 = arith.constant 7 : index
    %c0_67 = arith.constant 0 : index
    %48 = vector.load %arg1[%c0_65, %c7_66, %c0_67] : memref<1x36x8xf32, #tpu.memory_space<vmem>>, vector<1x4x8xf32>
    %49 = vector.shape_cast %48 : vector<1x4x8xf32> to vector<4x8xf32>
    %c0_68 = arith.constant 0 : index
    %c32 = arith.constant 32 : index
    %50 = vector.load %arg9[%c0_68, %c32] : memref<16x72xf32, #tpu.memory_space<vmem>>, vector<4x8xf32>
    tpu.vector_store %arg9[%c0_68, %c32], %49 {strides = array<i32>} : memref<16x72xf32, #tpu.memory_space<vmem>>, vector<4x8xf32>,
    %c0_69 = arith.constant 0 : index
    %c13_70 = arith.constant 13 : index
    %c0_71 = arith.constant 0 : index
    %51 = vector.load %arg1[%c0_69, %c13_70, %c0_71] : memref<1x36x8xf32, #tpu.memory_space<vmem>>, vector<1x4x8xf32>
    %52 = vector.shape_cast %51 : vector<1x4x8xf32> to vector<4x8xf32>
    %c4_72 = arith.constant 4 : index
    %c32_73 = arith.constant 32 : index
    %53 = vector.load %arg9[%c4_72, %c32_73] : memref<16x72xf32, #tpu.memory_space<vmem>>, vector<4x8xf32>
    tpu.vector_store %arg9[%c4_72, %c32_73], %52 {strides = array<i32>} : memref<16x72xf32, #tpu.memory_space<vmem>>, vector<4x8xf32>,
    %c0_74 = arith.constant 0 : index
    %c19_75 = arith.constant 19 : index
    %c0_76 = arith.constant 0 : index
    %54 = vector.load %arg1[%c0_74, %c19_75, %c0_76] : memref<1x36x8xf32, #tpu.memory_space<vmem>>, vector<1x4x8xf32>
    %55 = vector.shape_cast %54 : vector<1x4x8xf32> to vector<4x8xf32>
    %c8_77 = arith.constant 8 : index
    %c32_78 = arith.constant 32 : index
    %56 = vector.load %arg9[%c8_77, %c32_78] : memref<16x72xf32, #tpu.memory_space<vmem>>, vector<4x8xf32>
    tpu.vector_store %arg9[%c8_77, %c32_78], %55 {strides = array<i32>} : memref<16x72xf32, #tpu.memory_space<vmem>>, vector<4x8xf32>,
    %c0_79 = arith.constant 0 : index
    %c25 = arith.constant 25 : index
    %c0_80 = arith.constant 0 : index
    %57 = vector.load %arg1[%c0_79, %c25, %c0_80] : memref<1x36x8xf32, #tpu.memory_space<vmem>>, vector<1x4x8xf32>
    %58 = vector.shape_cast %57 : vector<1x4x8xf32> to vector<4x8xf32>
    %c12_81 = arith.constant 12 : index
    %c32_82 = arith.constant 32 : index
    %59 = vector.load %arg9[%c12_81, %c32_82] : memref<16x72xf32, #tpu.memory_space<vmem>>, vector<4x8xf32>
    tpu.vector_store %arg9[%c12_81, %c32_82], %58 {strides = array<i32>} : memref<16x72xf32, #tpu.memory_space<vmem>>, vector<4x8xf32>,
    %c0_83 = arith.constant 0 : index
    %c8_84 = arith.constant 8 : index
    %c0_85 = arith.constant 0 : index
    %60 = vector.load %arg1[%c0_83, %c8_84, %c0_85] : memref<1x36x8xf32, #tpu.memory_space<vmem>>, vector<1x4x8xf32>
    %61 = vector.shape_cast %60 : vector<1x4x8xf32> to vector<4x8xf32>
    %c0_86 = arith.constant 0 : index
    %c40 = arith.constant 40 : index
    %62 = vector.load %arg9[%c0_86, %c40] : memref<16x72xf32, #tpu.memory_space<vmem>>, vector<4x8xf32>
    tpu.vector_store %arg9[%c0_86, %c40], %61 {strides = array<i32>} : memref<16x72xf32, #tpu.memory_space<vmem>>, vector<4x8xf32>,
    %c0_87 = arith.constant 0 : index
    %c14_88 = arith.constant 14 : index
    %c0_89 = arith.constant 0 : index
    %63 = vector.load %arg1[%c0_87, %c14_88, %c0_89] : memref<1x36x8xf32, #tpu.memory_space<vmem>>, vector<1x4x8xf32>
    %64 = vector.shape_cast %63 : vector<1x4x8xf32> to vector<4x8xf32>
    %c4_90 = arith.constant 4 : index
    %c40_91 = arith.constant 40 : index
    %65 = vector.load %arg9[%c4_90, %c40_91] : memref<16x72xf32, #tpu.memory_space<vmem>>, vector<4x8xf32>
    tpu.vector_store %arg9[%c4_90, %c40_91], %64 {strides = array<i32>} : memref<16x72xf32, #tpu.memory_space<vmem>>, vector<4x8xf32>,
    %c0_92 = arith.constant 0 : index
    %c20_93 = arith.constant 20 : index
    %c0_94 = arith.constant 0 : index
    %66 = vector.load %arg1[%c0_92, %c20_93, %c0_94] : memref<1x36x8xf32, #tpu.memory_space<vmem>>, vector<1x4x8xf32>
    %67 = vector.shape_cast %66 : vector<1x4x8xf32> to vector<4x8xf32>
    %c8_95 = arith.constant 8 : index
    %c40_96 = arith.constant 40 : index
    %68 = vector.load %arg9[%c8_95, %c40_96] : memref<16x72xf32, #tpu.memory_space<vmem>>, vector<4x8xf32>
    tpu.vector_store %arg9[%c8_95, %c40_96], %67 {strides = array<i32>} : memref<16x72xf32, #tpu.memory_space<vmem>>, vector<4x8xf32>,
    %c0_97 = arith.constant 0 : index
    %c26 = arith.constant 26 : index
    %c0_98 = arith.constant 0 : index
    %69 = vector.load %arg1[%c0_97, %c26, %c0_98] : memref<1x36x8xf32, #tpu.memory_space<vmem>>, vector<1x4x8xf32>
    %70 = vector.shape_cast %69 : vector<1x4x8xf32> to vector<4x8xf32>
    %c12_99 = arith.constant 12 : index
    %c40_100 = arith.constant 40 : index
    %71 = vector.load %arg9[%c12_99, %c40_100] : memref<16x72xf32, #tpu.memory_space<vmem>>, vector<4x8xf32>
    tpu.vector_store %arg9[%c12_99, %c40_100], %70 {strides = array<i32>} : memref<16x72xf32, #tpu.memory_space<vmem>>, vector<4x8xf32>,
    %c0_101 = arith.constant 0 : index
    %c12_102 = arith.constant 12 : index
    %c0_103 = arith.constant 0 : index
    %72 = vector.load %arg1[%c0_101, %c12_102, %c0_103] : memref<1x36x8xf32, #tpu.memory_space<vmem>>, vector<1x4x8xf32>
    %73 = vector.shape_cast %72 : vector<1x4x8xf32> to vector<4x8xf32>
    %c0_104 = arith.constant 0 : index
    %c48 = arith.constant 48 : index
    %74 = vector.load %arg9[%c0_104, %c48] : memref<16x72xf32, #tpu.memory_space<vmem>>, vector<4x8xf32>
    tpu.vector_store %arg9[%c0_104, %c48], %73 {strides = array<i32>} : memref<16x72xf32, #tpu.memory_space<vmem>>, vector<4x8xf32>,
    %c0_105 = arith.constant 0 : index
    %c18_106 = arith.constant 18 : index
    %c0_107 = arith.constant 0 : index
    %75 = vector.load %arg1[%c0_105, %c18_106, %c0_107] : memref<1x36x8xf32, #tpu.memory_space<vmem>>, vector<1x4x8xf32>
    %76 = vector.shape_cast %75 : vector<1x4x8xf32> to vector<4x8xf32>
    %c4_108 = arith.constant 4 : index
    %c48_109 = arith.constant 48 : index
    %77 = vector.load %arg9[%c4_108, %c48_109] : memref<16x72xf32, #tpu.memory_space<vmem>>, vector<4x8xf32>
    tpu.vector_store %arg9[%c4_108, %c48_109], %76 {strides = array<i32>} : memref<16x72xf32, #tpu.memory_space<vmem>>, vector<4x8xf32>,
    %c0_110 = arith.constant 0 : index
    %c24_111 = arith.constant 24 : index
    %c0_112 = arith.constant 0 : index
    %78 = vector.load %arg1[%c0_110, %c24_111, %c0_112] : memref<1x36x8xf32, #tpu.memory_space<vmem>>, vector<1x4x8xf32>
    %79 = vector.shape_cast %78 : vector<1x4x8xf32> to vector<4x8xf32>
    %c8_113 = arith.constant 8 : index
    %c48_114 = arith.constant 48 : index
    %80 = vector.load %arg9[%c8_113, %c48_114] : memref<16x72xf32, #tpu.memory_space<vmem>>, vector<4x8xf32>
    tpu.vector_store %arg9[%c8_113, %c48_114], %79 {strides = array<i32>} : memref<16x72xf32, #tpu.memory_space<vmem>>, vector<4x8xf32>,
    %c0_115 = arith.constant 0 : index
    %c30 = arith.constant 30 : index
    %c0_116 = arith.constant 0 : index
    %81 = vector.load %arg1[%c0_115, %c30, %c0_116] : memref<1x36x8xf32, #tpu.memory_space<vmem>>, vector<1x4x8xf32>
    %82 = vector.shape_cast %81 : vector<1x4x8xf32> to vector<4x8xf32>
    %c12_117 = arith.constant 12 : index
    %c48_118 = arith.constant 48 : index
    %83 = vector.load %arg9[%c12_117, %c48_118] : memref<16x72xf32, #tpu.memory_space<vmem>>, vector<4x8xf32>
    tpu.vector_store %arg9[%c12_117, %c48_118], %82 {strides = array<i32>} : memref<16x72xf32, #tpu.memory_space<vmem>>, vector<4x8xf32>,
    %c0_119 = arith.constant 0 : index
    %c13_120 = arith.constant 13 : index
    %c0_121 = arith.constant 0 : index
    %84 = vector.load %arg1[%c0_119, %c13_120, %c0_121] : memref<1x36x8xf32, #tpu.memory_space<vmem>>, vector<1x4x8xf32>
    %85 = vector.shape_cast %84 : vector<1x4x8xf32> to vector<4x8xf32>
    %c0_122 = arith.constant 0 : index
    %c56 = arith.constant 56 : index
    %86 = vector.load %arg9[%c0_122, %c56] : memref<16x72xf32, #tpu.memory_space<vmem>>, vector<4x8xf32>
    tpu.vector_store %arg9[%c0_122, %c56], %85 {strides = array<i32>} : memref<16x72xf32, #tpu.memory_space<vmem>>, vector<4x8xf32>,
    %c0_123 = arith.constant 0 : index
    %c19_124 = arith.constant 19 : index
    %c0_125 = arith.constant 0 : index
    %87 = vector.load %arg1[%c0_123, %c19_124, %c0_125] : memref<1x36x8xf32, #tpu.memory_space<vmem>>, vector<1x4x8xf32>
    %88 = vector.shape_cast %87 : vector<1x4x8xf32> to vector<4x8xf32>
    %c4_126 = arith.constant 4 : index
    %c56_127 = arith.constant 56 : index
    %89 = vector.load %arg9[%c4_126, %c56_127] : memref<16x72xf32, #tpu.memory_space<vmem>>, vector<4x8xf32>
    tpu.vector_store %arg9[%c4_126, %c56_127], %88 {strides = array<i32>} : memref<16x72xf32, #tpu.memory_space<vmem>>, vector<4x8xf32>,
    %c0_128 = arith.constant 0 : index
    %c25_129 = arith.constant 25 : index
    %c0_130 = arith.constant 0 : index
    %90 = vector.load %arg1[%c0_128, %c25_129, %c0_130] : memref<1x36x8xf32, #tpu.memory_space<vmem>>, vector<1x4x8xf32>
    %91 = vector.shape_cast %90 : vector<1x4x8xf32> to vector<4x8xf32>
    %c8_131 = arith.constant 8 : index
    %c56_132 = arith.constant 56 : index
    %92 = vector.load %arg9[%c8_131, %c56_132] : memref<16x72xf32, #tpu.memory_space<vmem>>, vector<4x8xf32>
    tpu.vector_store %arg9[%c8_131, %c56_132], %91 {strides = array<i32>} : memref<16x72xf32, #tpu.memory_space<vmem>>, vector<4x8xf32>,
    %c0_133 = arith.constant 0 : index
    %c31 = arith.constant 31 : index
    %c0_134 = arith.constant 0 : index
    %93 = vector.load %arg1[%c0_133, %c31, %c0_134] : memref<1x36x8xf32, #tpu.memory_space<vmem>>, vector<1x4x8xf32>
    %94 = vector.shape_cast %93 : vector<1x4x8xf32> to vector<4x8xf32>
    %c12_135 = arith.constant 12 : index
    %c56_136 = arith.constant 56 : index
    %95 = vector.load %arg9[%c12_135, %c56_136] : memref<16x72xf32, #tpu.memory_space<vmem>>, vector<4x8xf32>
    tpu.vector_store %arg9[%c12_135, %c56_136], %94 {strides = array<i32>} : memref<16x72xf32, #tpu.memory_space<vmem>>, vector<4x8xf32>,
    %c0_137 = arith.constant 0 : index
    %c14_138 = arith.constant 14 : index
    %c0_139 = arith.constant 0 : index
    %96 = vector.load %arg1[%c0_137, %c14_138, %c0_139] : memref<1x36x8xf32, #tpu.memory_space<vmem>>, vector<1x4x8xf32>
    %97 = vector.shape_cast %96 : vector<1x4x8xf32> to vector<4x8xf32>
    %c0_140 = arith.constant 0 : index
    %c64 = arith.constant 64 : index
    %98 = vector.load %arg9[%c0_140, %c64] : memref<16x72xf32, #tpu.memory_space<vmem>>, vector<4x8xf32>
    tpu.vector_store %arg9[%c0_140, %c64], %97 {strides = array<i32>} : memref<16x72xf32, #tpu.memory_space<vmem>>, vector<4x8xf32>,
    %c0_141 = arith.constant 0 : index
    %c20_142 = arith.constant 20 : index
    %c0_143 = arith.constant 0 : index
    %99 = vector.load %arg1[%c0_141, %c20_142, %c0_143] : memref<1x36x8xf32, #tpu.memory_space<vmem>>, vector<1x4x8xf32>
    %100 = vector.shape_cast %99 : vector<1x4x8xf32> to vector<4x8xf32>
    %c4_144 = arith.constant 4 : index
    %c64_145 = arith.constant 64 : index
    %101 = vector.load %arg9[%c4_144, %c64_145] : memref<16x72xf32, #tpu.memory_space<vmem>>, vector<4x8xf32>
    tpu.vector_store %arg9[%c4_144, %c64_145], %100 {strides = array<i32>} : memref<16x72xf32, #tpu.memory_space<vmem>>, vector<4x8xf32>,
    %c0_146 = arith.constant 0 : index
    %c26_147 = arith.constant 26 : index
    %c0_148 = arith.constant 0 : index
    %102 = vector.load %arg1[%c0_146, %c26_147, %c0_148] : memref<1x36x8xf32, #tpu.memory_space<vmem>>, vector<1x4x8xf32>
    %103 = vector.shape_cast %102 : vector<1x4x8xf32> to vector<4x8xf32>
    %c8_149 = arith.constant 8 : index
    %c64_150 = arith.constant 64 : index
    %104 = vector.load %arg9[%c8_149, %c64_150] : memref<16x72xf32, #tpu.memory_space<vmem>>, vector<4x8xf32>
    tpu.vector_store %arg9[%c8_149, %c64_150], %103 {strides = array<i32>} : memref<16x72xf32, #tpu.memory_space<vmem>>, vector<4x8xf32>,
    %c0_151 = arith.constant 0 : index
    %c32_152 = arith.constant 32 : index
    %c0_153 = arith.constant 0 : index
    %105 = vector.load %arg1[%c0_151, %c32_152, %c0_153] : memref<1x36x8xf32, #tpu.memory_space<vmem>>, vector<1x4x8xf32>
    %106 = vector.shape_cast %105 : vector<1x4x8xf32> to vector<4x8xf32>
    %c12_154 = arith.constant 12 : index
    %c64_155 = arith.constant 64 : index
    %107 = vector.load %arg9[%c12_154, %c64_155] : memref<16x72xf32, #tpu.memory_space<vmem>>, vector<4x8xf32>
    tpu.vector_store %arg9[%c12_154, %c64_155], %106 {strides = array<i32>} : memref<16x72xf32, #tpu.memory_space<vmem>>, vector<4x8xf32>,
    %c0_156 = arith.constant 0 : index
    %c0_157 = arith.constant 0 : index
    %108 = vector.load %arg9[%c0_156, %c0_157] : memref<16x72xf32, #tpu.memory_space<vmem>>, vector<16x72xf32>
    %c0_158 = arith.constant 0 : index
    %c0_159 = arith.constant 0 : index
    %109 = vector.load %arg2[%c0_158, %c0_159] : memref<72x8xf32, #tpu.memory_space<vmem>>, vector<72x8xf32>
    %cst = arith.constant dense<0.000000e+00> : vector<16x8xf32>
    %110 = tpu.matmul %108, %109, %cst {dimension_numbers = #tpu.dot_dimension_numbers<[1], [0], [0], [1], [0, 0, 1, 1], [], []>} : vector<16x72xf32>, vector<72x8xf32>, vector<16x8xf32> -> vector<16x8xf32>
    %c0_160 = arith.constant 0 : index
    %c0_161 = arith.constant 0 : index
    %111 = vector.load %arg3[%c0_160, %c0_161] : memref<1x8xf32, #tpu.memory_space<vmem>>, vector<1x8xf32>
    %112 = vector.broadcast %111 : vector<1x8xf32> to vector<16x8xf32>
    %113 = arith.mulf %110, %112 : vector<16x8xf32>
    %c0_162 = arith.constant 0 : index
    %c0_163 = arith.constant 0 : index
    %114 = vector.load %arg4[%c0_162, %c0_163] : memref<1x8xf32, #tpu.memory_space<vmem>>, vector<1x8xf32>
    %115 = vector.broadcast %114 : vector<1x8xf32> to vector<16x8xf32>
    %116 = arith.addf %113, %115 : vector<16x8xf32>
    %cst_164 = arith.constant 0.000000e+00 : f32
    %117 = vector.broadcast %cst_164 : f32 to vector<16x8xf32>
    %118 = arith.maximumf %116, %117 : vector<16x8xf32>
    %cst_165 = arith.constant 0.000000e+00 : f32
    %119 = vector.broadcast %cst_165 : f32 to vector<36x8xf32>
    %c0_166 = arith.constant 0 : index
    %c0_167 = arith.constant 0 : index
    %120 = vector.load %arg11[%c0_166, %c0_167] : memref<36x8xf32, #tpu.memory_space<vmem>>, vector<36x8xf32>
    tpu.vector_store %arg11[%c0_166, %c0_167], %119 {strides = array<i32>} : memref<36x8xf32, #tpu.memory_space<vmem>>, vector<36x8xf32>,
    %121 = vector.extract_strided_slice %118 {offsets = [0, 0], sizes = [4, 8], strides = [1, 1]} : vector<16x8xf32> to vector<4x8xf32>
    %c7_168 = arith.constant 7 : index
    %c0_169 = arith.constant 0 : index
    %122 = vector.load %arg11[%c7_168, %c0_169] : memref<36x8xf32, #tpu.memory_space<vmem>>, vector<4x8xf32>
    tpu.vector_store %arg11[%c7_168, %c0_169], %121 {strides = array<i32>} : memref<36x8xf32, #tpu.memory_space<vmem>>, vector<4x8xf32>,
    %123 = vector.extract_strided_slice %118 {offsets = [4, 0], sizes = [4, 8], strides = [1, 1]} : vector<16x8xf32> to vector<4x8xf32>
    %c13_170 = arith.constant 13 : index
    %c0_171 = arith.constant 0 : index
    %124 = vector.load %arg11[%c13_170, %c0_171] : memref<36x8xf32, #tpu.memory_space<vmem>>, vector<4x8xf32>
    tpu.vector_store %arg11[%c13_170, %c0_171], %123 {strides = array<i32>} : memref<36x8xf32, #tpu.memory_space<vmem>>, vector<4x8xf32>,
    %125 = vector.extract_strided_slice %118 {offsets = [8, 0], sizes = [4, 8], strides = [1, 1]} : vector<16x8xf32> to vector<4x8xf32>
    %c19_172 = arith.constant 19 : index
    %c0_173 = arith.constant 0 : index
    %126 = vector.load %arg11[%c19_172, %c0_173] : memref<36x8xf32, #tpu.memory_space<vmem>>, vector<4x8xf32>
    tpu.vector_store %arg11[%c19_172, %c0_173], %125 {strides = array<i32>} : memref<36x8xf32, #tpu.memory_space<vmem>>, vector<4x8xf32>,
    %127 = vector.extract_strided_slice %118 {offsets = [12, 0], sizes = [4, 8], strides = [1, 1]} : vector<16x8xf32> to vector<4x8xf32>
    %c25_174 = arith.constant 25 : index
    %c0_175 = arith.constant 0 : index
    %128 = vector.load %arg11[%c25_174, %c0_175] : memref<36x8xf32, #tpu.memory_space<vmem>>, vector<4x8xf32>
    tpu.vector_store %arg11[%c25_174, %c0_175], %127 {strides = array<i32>} : memref<36x8xf32, #tpu.memory_space<vmem>>, vector<4x8xf32>,
    %c0_176 = arith.constant 0 : index
    %c0_177 = arith.constant 0 : index
    %129 = vector.load %arg11[%c0_176, %c0_177] : memref<36x8xf32, #tpu.memory_space<vmem>>, vector<4x8xf32>
    %c0_178 = arith.constant 0 : index
    %c0_179 = arith.constant 0 : index
    %130 = vector.load %arg10[%c0_178, %c0_179] : memref<16x72xf32, #tpu.memory_space<vmem>>, vector<4x8xf32>
    tpu.vector_store %arg10[%c0_178, %c0_179], %129 {strides = array<i32>} : memref<16x72xf32, #tpu.memory_space<vmem>>, vector<4x8xf32>,
    %c6_180 = arith.constant 6 : index
    %c0_181 = arith.constant 0 : index
    %131 = vector.load %arg11[%c6_180, %c0_181] : memref<36x8xf32, #tpu.memory_space<vmem>>, vector<4x8xf32>
    %c4_182 = arith.constant 4 : index
    %c0_183 = arith.constant 0 : index
    %132 = vector.load %arg10[%c4_182, %c0_183] : memref<16x72xf32, #tpu.memory_space<vmem>>, vector<4x8xf32>
    tpu.vector_store %arg10[%c4_182, %c0_183], %131 {strides = array<i32>} : memref<16x72xf32, #tpu.memory_space<vmem>>, vector<4x8xf32>,
    %c12_184 = arith.constant 12 : index
    %c0_185 = arith.constant 0 : index
    %133 = vector.load %arg11[%c12_184, %c0_185] : memref<36x8xf32, #tpu.memory_space<vmem>>, vector<4x8xf32>
    %c8_186 = arith.constant 8 : index
    %c0_187 = arith.constant 0 : index
    %134 = vector.load %arg10[%c8_186, %c0_187] : memref<16x72xf32, #tpu.memory_space<vmem>>, vector<4x8xf32>
    tpu.vector_store %arg10[%c8_186, %c0_187], %133 {strides = array<i32>} : memref<16x72xf32, #tpu.memory_space<vmem>>, vector<4x8xf32>,
    %c18_188 = arith.constant 18 : index
    %c0_189 = arith.constant 0 : index
    %135 = vector.load %arg11[%c18_188, %c0_189] : memref<36x8xf32, #tpu.memory_space<vmem>>, vector<4x8xf32>
    %c12_190 = arith.constant 12 : index
    %c0_191 = arith.constant 0 : index
    %136 = vector.load %arg10[%c12_190, %c0_191] : memref<16x72xf32, #tpu.memory_space<vmem>>, vector<4x8xf32>
    tpu.vector_store %arg10[%c12_190, %c0_191], %135 {strides = array<i32>} : memref<16x72xf32, #tpu.memory_space<vmem>>, vector<4x8xf32>,
    %c1_192 = arith.constant 1 : index
    %c0_193 = arith.constant 0 : index
    %137 = vector.load %arg11[%c1_192, %c0_193] : memref<36x8xf32, #tpu.memory_space<vmem>>, vector<4x8xf32>
    %c0_194 = arith.constant 0 : index
    %c8_195 = arith.constant 8 : index
    %138 = vector.load %arg10[%c0_194, %c8_195] : memref<16x72xf32, #tpu.memory_space<vmem>>, vector<4x8xf32>
    tpu.vector_store %arg10[%c0_194, %c8_195], %137 {strides = array<i32>} : memref<16x72xf32, #tpu.memory_space<vmem>>, vector<4x8xf32>,
    %c7_196 = arith.constant 7 : index
    %c0_197 = arith.constant 0 : index
    %139 = vector.load %arg11[%c7_196, %c0_197] : memref<36x8xf32, #tpu.memory_space<vmem>>, vector<4x8xf32>
    %c4_198 = arith.constant 4 : index
    %c8_199 = arith.constant 8 : index
    %140 = vector.load %arg10[%c4_198, %c8_199] : memref<16x72xf32, #tpu.memory_space<vmem>>, vector<4x8xf32>
    tpu.vector_store %arg10[%c4_198, %c8_199], %139 {strides = array<i32>} : memref<16x72xf32, #tpu.memory_space<vmem>>, vector<4x8xf32>,
    %c13_200 = arith.constant 13 : index
    %c0_201 = arith.constant 0 : index
    %141 = vector.load %arg11[%c13_200, %c0_201] : memref<36x8xf32, #tpu.memory_space<vmem>>, vector<4x8xf32>
    %c8_202 = arith.constant 8 : index
    %c8_203 = arith.constant 8 : index
    %142 = vector.load %arg10[%c8_202, %c8_203] : memref<16x72xf32, #tpu.memory_space<vmem>>, vector<4x8xf32>
    tpu.vector_store %arg10[%c8_202, %c8_203], %141 {strides = array<i32>} : memref<16x72xf32, #tpu.memory_space<vmem>>, vector<4x8xf32>,
    %c19_204 = arith.constant 19 : index
    %c0_205 = arith.constant 0 : index
    %143 = vector.load %arg11[%c19_204, %c0_205] : memref<36x8xf32, #tpu.memory_space<vmem>>, vector<4x8xf32>
    %c12_206 = arith.constant 12 : index
    %c8_207 = arith.constant 8 : index
    %144 = vector.load %arg10[%c12_206, %c8_207] : memref<16x72xf32, #tpu.memory_space<vmem>>, vector<4x8xf32>
    tpu.vector_store %arg10[%c12_206, %c8_207], %143 {strides = array<i32>} : memref<16x72xf32, #tpu.memory_space<vmem>>, vector<4x8xf32>,
    %c2_208 = arith.constant 2 : index
    %c0_209 = arith.constant 0 : index
    %145 = vector.load %arg11[%c2_208, %c0_209] : memref<36x8xf32, #tpu.memory_space<vmem>>, vector<4x8xf32>
    %c0_210 = arith.constant 0 : index
    %c16_211 = arith.constant 16 : index
    %146 = vector.load %arg10[%c0_210, %c16_211] : memref<16x72xf32, #tpu.memory_space<vmem>>, vector<4x8xf32>
    tpu.vector_store %arg10[%c0_210, %c16_211], %145 {strides = array<i32>} : memref<16x72xf32, #tpu.memory_space<vmem>>, vector<4x8xf32>,
    %c8_212 = arith.constant 8 : index
    %c0_213 = arith.constant 0 : index
    %147 = vector.load %arg11[%c8_212, %c0_213] : memref<36x8xf32, #tpu.memory_space<vmem>>, vector<4x8xf32>
    %c4_214 = arith.constant 4 : index
    %c16_215 = arith.constant 16 : index
    %148 = vector.load %arg10[%c4_214, %c16_215] : memref<16x72xf32, #tpu.memory_space<vmem>>, vector<4x8xf32>
    tpu.vector_store %arg10[%c4_214, %c16_215], %147 {strides = array<i32>} : memref<16x72xf32, #tpu.memory_space<vmem>>, vector<4x8xf32>,
    %c14_216 = arith.constant 14 : index
    %c0_217 = arith.constant 0 : index
    %149 = vector.load %arg11[%c14_216, %c0_217] : memref<36x8xf32, #tpu.memory_space<vmem>>, vector<4x8xf32>
    %c8_218 = arith.constant 8 : index
    %c16_219 = arith.constant 16 : index
    %150 = vector.load %arg10[%c8_218, %c16_219] : memref<16x72xf32, #tpu.memory_space<vmem>>, vector<4x8xf32>
    tpu.vector_store %arg10[%c8_218, %c16_219], %149 {strides = array<i32>} : memref<16x72xf32, #tpu.memory_space<vmem>>, vector<4x8xf32>,
    %c20_220 = arith.constant 20 : index
    %c0_221 = arith.constant 0 : index
    %151 = vector.load %arg11[%c20_220, %c0_221] : memref<36x8xf32, #tpu.memory_space<vmem>>, vector<4x8xf32>
    %c12_222 = arith.constant 12 : index
    %c16_223 = arith.constant 16 : index
    %152 = vector.load %arg10[%c12_222, %c16_223] : memref<16x72xf32, #tpu.memory_space<vmem>>, vector<4x8xf32>
    tpu.vector_store %arg10[%c12_222, %c16_223], %151 {strides = array<i32>} : memref<16x72xf32, #tpu.memory_space<vmem>>, vector<4x8xf32>,
    %c6_224 = arith.constant 6 : index
    %c0_225 = arith.constant 0 : index
    %153 = vector.load %arg11[%c6_224, %c0_225] : memref<36x8xf32, #tpu.memory_space<vmem>>, vector<4x8xf32>
    %c0_226 = arith.constant 0 : index
    %c24_227 = arith.constant 24 : index
    %154 = vector.load %arg10[%c0_226, %c24_227] : memref<16x72xf32, #tpu.memory_space<vmem>>, vector<4x8xf32>
    tpu.vector_store %arg10[%c0_226, %c24_227], %153 {strides = array<i32>} : memref<16x72xf32, #tpu.memory_space<vmem>>, vector<4x8xf32>,
    %c12_228 = arith.constant 12 : index
    %c0_229 = arith.constant 0 : index
    %155 = vector.load %arg11[%c12_228, %c0_229] : memref<36x8xf32, #tpu.memory_space<vmem>>, vector<4x8xf32>
    %c4_230 = arith.constant 4 : index
    %c24_231 = arith.constant 24 : index
    %156 = vector.load %arg10[%c4_230, %c24_231] : memref<16x72xf32, #tpu.memory_space<vmem>>, vector<4x8xf32>
    tpu.vector_store %arg10[%c4_230, %c24_231], %155 {strides = array<i32>} : memref<16x72xf32, #tpu.memory_space<vmem>>, vector<4x8xf32>,
    %c18_232 = arith.constant 18 : index
    %c0_233 = arith.constant 0 : index
    %157 = vector.load %arg11[%c18_232, %c0_233] : memref<36x8xf32, #tpu.memory_space<vmem>>, vector<4x8xf32>
    %c8_234 = arith.constant 8 : index
    %c24_235 = arith.constant 24 : index
    %158 = vector.load %arg10[%c8_234, %c24_235] : memref<16x72xf32, #tpu.memory_space<vmem>>, vector<4x8xf32>
    tpu.vector_store %arg10[%c8_234, %c24_235], %157 {strides = array<i32>} : memref<16x72xf32, #tpu.memory_space<vmem>>, vector<4x8xf32>,
    %c24_236 = arith.constant 24 : index
    %c0_237 = arith.constant 0 : index
    %159 = vector.load %arg11[%c24_236, %c0_237] : memref<36x8xf32, #tpu.memory_space<vmem>>, vector<4x8xf32>
    %c12_238 = arith.constant 12 : index
    %c24_239 = arith.constant 24 : index
    %160 = vector.load %arg10[%c12_238, %c24_239] : memref<16x72xf32, #tpu.memory_space<vmem>>, vector<4x8xf32>
    tpu.vector_store %arg10[%c12_238, %c24_239], %159 {strides = array<i32>} : memref<16x72xf32, #tpu.memory_space<vmem>>, vector<4x8xf32>,
    %c7_240 = arith.constant 7 : index
    %c0_241 = arith.constant 0 : index
    %161 = vector.load %arg11[%c7_240, %c0_241] : memref<36x8xf32, #tpu.memory_space<vmem>>, vector<4x8xf32>
    %c0_242 = arith.constant 0 : index
    %c32_243 = arith.constant 32 : index
    %162 = vector.load %arg10[%c0_242, %c32_243] : memref<16x72xf32, #tpu.memory_space<vmem>>, vector<4x8xf32>
    tpu.vector_store %arg10[%c0_242, %c32_243], %161 {strides = array<i32>} : memref<16x72xf32, #tpu.memory_space<vmem>>, vector<4x8xf32>,
    %c13_244 = arith.constant 13 : index
    %c0_245 = arith.constant 0 : index
    %163 = vector.load %arg11[%c13_244, %c0_245] : memref<36x8xf32, #tpu.memory_space<vmem>>, vector<4x8xf32>
    %c4_246 = arith.constant 4 : index
    %c32_247 = arith.constant 32 : index
    %164 = vector.load %arg10[%c4_246, %c32_247] : memref<16x72xf32, #tpu.memory_space<vmem>>, vector<4x8xf32>
    tpu.vector_store %arg10[%c4_246, %c32_247], %163 {strides = array<i32>} : memref<16x72xf32, #tpu.memory_space<vmem>>, vector<4x8xf32>,
    %c19_248 = arith.constant 19 : index
    %c0_249 = arith.constant 0 : index
    %165 = vector.load %arg11[%c19_248, %c0_249] : memref<36x8xf32, #tpu.memory_space<vmem>>, vector<4x8xf32>
    %c8_250 = arith.constant 8 : index
    %c32_251 = arith.constant 32 : index
    %166 = vector.load %arg10[%c8_250, %c32_251] : memref<16x72xf32, #tpu.memory_space<vmem>>, vector<4x8xf32>
    tpu.vector_store %arg10[%c8_250, %c32_251], %165 {strides = array<i32>} : memref<16x72xf32, #tpu.memory_space<vmem>>, vector<4x8xf32>,
    %c25_252 = arith.constant 25 : index
    %c0_253 = arith.constant 0 : index
    %167 = vector.load %arg11[%c25_252, %c0_253] : memref<36x8xf32, #tpu.memory_space<vmem>>, vector<4x8xf32>
    %c12_254 = arith.constant 12 : index
    %c32_255 = arith.constant 32 : index
    %168 = vector.load %arg10[%c12_254, %c32_255] : memref<16x72xf32, #tpu.memory_space<vmem>>, vector<4x8xf32>
    tpu.vector_store %arg10[%c12_254, %c32_255], %167 {strides = array<i32>} : memref<16x72xf32, #tpu.memory_space<vmem>>, vector<4x8xf32>,
    %c8_256 = arith.constant 8 : index
    %c0_257 = arith.constant 0 : index
    %169 = vector.load %arg11[%c8_256, %c0_257] : memref<36x8xf32, #tpu.memory_space<vmem>>, vector<4x8xf32>
    %c0_258 = arith.constant 0 : index
    %c40_259 = arith.constant 40 : index
    %170 = vector.load %arg10[%c0_258, %c40_259] : memref<16x72xf32, #tpu.memory_space<vmem>>, vector<4x8xf32>
    tpu.vector_store %arg10[%c0_258, %c40_259], %169 {strides = array<i32>} : memref<16x72xf32, #tpu.memory_space<vmem>>, vector<4x8xf32>,
    %c14_260 = arith.constant 14 : index
    %c0_261 = arith.constant 0 : index
    %171 = vector.load %arg11[%c14_260, %c0_261] : memref<36x8xf32, #tpu.memory_space<vmem>>, vector<4x8xf32>
    %c4_262 = arith.constant 4 : index
    %c40_263 = arith.constant 40 : index
    %172 = vector.load %arg10[%c4_262, %c40_263] : memref<16x72xf32, #tpu.memory_space<vmem>>, vector<4x8xf32>
    tpu.vector_store %arg10[%c4_262, %c40_263], %171 {strides = array<i32>} : memref<16x72xf32, #tpu.memory_space<vmem>>, vector<4x8xf32>,
    %c20_264 = arith.constant 20 : index
    %c0_265 = arith.constant 0 : index
    %173 = vector.load %arg11[%c20_264, %c0_265] : memref<36x8xf32, #tpu.memory_space<vmem>>, vector<4x8xf32>
    %c8_266 = arith.constant 8 : index
    %c40_267 = arith.constant 40 : index
    %174 = vector.load %arg10[%c8_266, %c40_267] : memref<16x72xf32, #tpu.memory_space<vmem>>, vector<4x8xf32>
    tpu.vector_store %arg10[%c8_266, %c40_267], %173 {strides = array<i32>} : memref<16x72xf32, #tpu.memory_space<vmem>>, vector<4x8xf32>,
    %c26_268 = arith.constant 26 : index
    %c0_269 = arith.constant 0 : index
    %175 = vector.load %arg11[%c26_268, %c0_269] : memref<36x8xf32, #tpu.memory_space<vmem>>, vector<4x8xf32>
    %c12_270 = arith.constant 12 : index
    %c40_271 = arith.constant 40 : index
    %176 = vector.load %arg10[%c12_270, %c40_271] : memref<16x72xf32, #tpu.memory_space<vmem>>, vector<4x8xf32>
    tpu.vector_store %arg10[%c12_270, %c40_271], %175 {strides = array<i32>} : memref<16x72xf32, #tpu.memory_space<vmem>>, vector<4x8xf32>,
    %c12_272 = arith.constant 12 : index
    %c0_273 = arith.constant 0 : index
    %177 = vector.load %arg11[%c12_272, %c0_273] : memref<36x8xf32, #tpu.memory_space<vmem>>, vector<4x8xf32>
    %c0_274 = arith.constant 0 : index
    %c48_275 = arith.constant 48 : index
    %178 = vector.load %arg10[%c0_274, %c48_275] : memref<16x72xf32, #tpu.memory_space<vmem>>, vector<4x8xf32>
    tpu.vector_store %arg10[%c0_274, %c48_275], %177 {strides = array<i32>} : memref<16x72xf32, #tpu.memory_space<vmem>>, vector<4x8xf32>,
    %c18_276 = arith.constant 18 : index
    %c0_277 = arith.constant 0 : index
    %179 = vector.load %arg11[%c18_276, %c0_277] : memref<36x8xf32, #tpu.memory_space<vmem>>, vector<4x8xf32>
    %c4_278 = arith.constant 4 : index
    %c48_279 = arith.constant 48 : index
    %180 = vector.load %arg10[%c4_278, %c48_279] : memref<16x72xf32, #tpu.memory_space<vmem>>, vector<4x8xf32>
    tpu.vector_store %arg10[%c4_278, %c48_279], %179 {strides = array<i32>} : memref<16x72xf32, #tpu.memory_space<vmem>>, vector<4x8xf32>,
    %c24_280 = arith.constant 24 : index
    %c0_281 = arith.constant 0 : index
    %181 = vector.load %arg11[%c24_280, %c0_281] : memref<36x8xf32, #tpu.memory_space<vmem>>, vector<4x8xf32>
    %c8_282 = arith.constant 8 : index
    %c48_283 = arith.constant 48 : index
    %182 = vector.load %arg10[%c8_282, %c48_283] : memref<16x72xf32, #tpu.memory_space<vmem>>, vector<4x8xf32>
    tpu.vector_store %arg10[%c8_282, %c48_283], %181 {strides = array<i32>} : memref<16x72xf32, #tpu.memory_space<vmem>>, vector<4x8xf32>,
    %c30_284 = arith.constant 30 : index
    %c0_285 = arith.constant 0 : index
    %183 = vector.load %arg11[%c30_284, %c0_285] : memref<36x8xf32, #tpu.memory_space<vmem>>, vector<4x8xf32>
    %c12_286 = arith.constant 12 : index
    %c48_287 = arith.constant 48 : index
    %184 = vector.load %arg10[%c12_286, %c48_287] : memref<16x72xf32, #tpu.memory_space<vmem>>, vector<4x8xf32>
    tpu.vector_store %arg10[%c12_286, %c48_287], %183 {strides = array<i32>} : memref<16x72xf32, #tpu.memory_space<vmem>>, vector<4x8xf32>,
    %c13_288 = arith.constant 13 : index
    %c0_289 = arith.constant 0 : index
    %185 = vector.load %arg11[%c13_288, %c0_289] : memref<36x8xf32, #tpu.memory_space<vmem>>, vector<4x8xf32>
    %c0_290 = arith.constant 0 : index
    %c56_291 = arith.constant 56 : index
    %186 = vector.load %arg10[%c0_290, %c56_291] : memref<16x72xf32, #tpu.memory_space<vmem>>, vector<4x8xf32>
    tpu.vector_store %arg10[%c0_290, %c56_291], %185 {strides = array<i32>} : memref<16x72xf32, #tpu.memory_space<vmem>>, vector<4x8xf32>,
    %c19_292 = arith.constant 19 : index
    %c0_293 = arith.constant 0 : index
    %187 = vector.load %arg11[%c19_292, %c0_293] : memref<36x8xf32, #tpu.memory_space<vmem>>, vector<4x8xf32>
    %c4_294 = arith.constant 4 : index
    %c56_295 = arith.constant 56 : index
    %188 = vector.load %arg10[%c4_294, %c56_295] : memref<16x72xf32, #tpu.memory_space<vmem>>, vector<4x8xf32>
    tpu.vector_store %arg10[%c4_294, %c56_295], %187 {strides = array<i32>} : memref<16x72xf32, #tpu.memory_space<vmem>>, vector<4x8xf32>,
    %c25_296 = arith.constant 25 : index
    %c0_297 = arith.constant 0 : index
    %189 = vector.load %arg11[%c25_296, %c0_297] : memref<36x8xf32, #tpu.memory_space<vmem>>, vector<4x8xf32>
    %c8_298 = arith.constant 8 : index
    %c56_299 = arith.constant 56 : index
    %190 = vector.load %arg10[%c8_298, %c56_299] : memref<16x72xf32, #tpu.memory_space<vmem>>, vector<4x8xf32>
    tpu.vector_store %arg10[%c8_298, %c56_299], %189 {strides = array<i32>} : memref<16x72xf32, #tpu.memory_space<vmem>>, vector<4x8xf32>,
    %c31_300 = arith.constant 31 : index
    %c0_301 = arith.constant 0 : index
    %191 = vector.load %arg11[%c31_300, %c0_301] : memref<36x8xf32, #tpu.memory_space<vmem>>, vector<4x8xf32>
    %c12_302 = arith.constant 12 : index
    %c56_303 = arith.constant 56 : index
    %192 = vector.load %arg10[%c12_302, %c56_303] : memref<16x72xf32, #tpu.memory_space<vmem>>, vector<4x8xf32>
    tpu.vector_store %arg10[%c12_302, %c56_303], %191 {strides = array<i32>} : memref<16x72xf32, #tpu.memory_space<vmem>>, vector<4x8xf32>,
    %c14_304 = arith.constant 14 : index
    %c0_305 = arith.constant 0 : index
    %193 = vector.load %arg11[%c14_304, %c0_305] : memref<36x8xf32, #tpu.memory_space<vmem>>, vector<4x8xf32>
    %c0_306 = arith.constant 0 : index
    %c64_307 = arith.constant 64 : index
    %194 = vector.load %arg10[%c0_306, %c64_307] : memref<16x72xf32, #tpu.memory_space<vmem>>, vector<4x8xf32>
    tpu.vector_store %arg10[%c0_306, %c64_307], %193 {strides = array<i32>} : memref<16x72xf32, #tpu.memory_space<vmem>>, vector<4x8xf32>,
    %c20_308 = arith.constant 20 : index
    %c0_309 = arith.constant 0 : index
    %195 = vector.load %arg11[%c20_308, %c0_309] : memref<36x8xf32, #tpu.memory_space<vmem>>, vector<4x8xf32>
    %c4_310 = arith.constant 4 : index
    %c64_311 = arith.constant 64 : index
    %196 = vector.load %arg10[%c4_310, %c64_311] : memref<16x72xf32, #tpu.memory_space<vmem>>, vector<4x8xf32>
    tpu.vector_store %arg10[%c4_310, %c64_311], %195 {strides = array<i32>} : memref<16x72xf32, #tpu.memory_space<vmem>>, vector<4x8xf32>,
    %c26_312 = arith.constant 26 : index
    %c0_313 = arith.constant 0 : index
    %197 = vector.load %arg11[%c26_312, %c0_313] : memref<36x8xf32, #tpu.memory_space<vmem>>, vector<4x8xf32>
    %c8_314 = arith.constant 8 : index
    %c64_315 = arith.constant 64 : index
    %198 = vector.load %arg10[%c8_314, %c64_315] : memref<16x72xf32, #tpu.memory_space<vmem>>, vector<4x8xf32>
    tpu.vector_store %arg10[%c8_314, %c64_315], %197 {strides = array<i32>} : memref<16x72xf32, #tpu.memory_space<vmem>>, vector<4x8xf32>,
    %c32_316 = arith.constant 32 : index
    %c0_317 = arith.constant 0 : index
    %199 = vector.load %arg11[%c32_316, %c0_317] : memref<36x8xf32, #tpu.memory_space<vmem>>, vector<4x8xf32>
    %c12_318 = arith.constant 12 : index
    %c64_319 = arith.constant 64 : index
    %200 = vector.load %arg10[%c12_318, %c64_319] : memref<16x72xf32, #tpu.memory_space<vmem>>, vector<4x8xf32>
    tpu.vector_store %arg10[%c12_318, %c64_319], %199 {strides = array<i32>} : memref<16x72xf32, #tpu.memory_space<vmem>>, vector<4x8xf32>,
    %c0_320 = arith.constant 0 : index
    %c32_321 = arith.constant 32 : index
    %201 = vector.load %arg9[%c0_320, %c32_321] : memref<16x72xf32, #tpu.memory_space<vmem>>, vector<16x8xf32>
    %c0_322 = arith.constant 0 : index
    %c0_323 = arith.constant 0 : index
    %202 = vector.load %arg10[%c0_322, %c0_323] : memref<16x72xf32, #tpu.memory_space<vmem>>, vector<16x72xf32>
    %c0_324 = arith.constant 0 : index
    %c0_325 = arith.constant 0 : index
    %203 = vector.load %arg5[%c0_324, %c0_325] : memref<72x8xf32, #tpu.memory_space<vmem>>, vector<72x8xf32>
    %cst_326 = arith.constant dense<0.000000e+00> : vector<16x8xf32>
    %204 = tpu.matmul %202, %203, %cst_326 {dimension_numbers = #tpu.dot_dimension_numbers<[1], [0], [0], [1], [0, 0, 1, 1], [], []>} : vector<16x72xf32>, vector<72x8xf32>, vector<16x8xf32> -> vector<16x8xf32>
    %c0_327 = arith.constant 0 : index
    %c0_328 = arith.constant 0 : index
    %205 = vector.load %arg6[%c0_327, %c0_328] : memref<1x8xf32, #tpu.memory_space<vmem>>, vector<1x8xf32>
    %206 = vector.broadcast %205 : vector<1x8xf32> to vector<16x8xf32>
    %207 = arith.mulf %204, %206 : vector<16x8xf32>
    %c0_329 = arith.constant 0 : index
    %c0_330 = arith.constant 0 : index
    %208 = vector.load %arg7[%c0_329, %c0_330] : memref<1x8xf32, #tpu.memory_space<vmem>>, vector<1x8xf32>
    %209 = vector.broadcast %208 : vector<1x8xf32> to vector<16x8xf32>
    %210 = arith.addf %207, %209 : vector<16x8xf32>
    %211 = arith.addf %210, %201 : vector<16x8xf32>
    %cst_331 = arith.constant 0.000000e+00 : f32
    %212 = vector.broadcast %cst_331 : f32 to vector<16x8xf32>
    %213 = arith.maximumf %211, %212 : vector<16x8xf32>
    %c0_332 = arith.constant 0 : index
    %c0_333 = arith.constant 0 : index
    %c0_334 = arith.constant 0 : index
    %214 = vector.load %arg8[%c0_332, %c0_333, %c0_334] : memref<1x16x8xf32, #tpu.memory_space<vmem>>, vector<1x16x8xf32>
    %215 = vector.shape_cast %214 : vector<1x16x8xf32> to vector<16x8xf32>
    %216 = vector.shape_cast %213 : vector<16x8xf32> to vector<1x16x8xf32>
    tpu.vector_store %arg8[%c0_332, %c0_333, %c0_334], %216 {strides = array<i32>} : memref<1x16x8xf32, #tpu.memory_space<vmem>>, vector<1x16x8xf32>,
    return
  }
  func.func @transform_0(%arg0: i32) -> (i32, i32, i32) {
    %c0_i32 = arith.constant 0 : i32
    %c0_i32_0 = arith.constant 0 : i32
    %c0_i32_1 = arith.constant 0 : i32
    return %arg0, %c0_i32, %c0_i32_0 : i32, i32, i32
  }
  func.func @transform_1(%arg0: i32) -> (i32, i32) {
    %c0_i32 = arith.constant 0 : i32
    %c0_i32_0 = arith.constant 0 : i32
    %c0_i32_1 = arith.constant 0 : i32
    return %c0_i32, %c0_i32_0 : i32, i32
  }
  func.func @transform_2(%arg0: i32) -> (i32, i32) {
    %c0_i32 = arith.constant 0 : i32
    %c0_i32_0 = arith.constant 0 : i32
    %c0_i32_1 = arith.constant 0 : i32
    return %c0_i32, %c0_i32_0 : i32, i32
  }
  func.func @transform_3(%arg0: i32) -> (i32, i32) {
    %c0_i32 = arith.constant 0 : i32
    %c0_i32_0 = arith.constant 0 : i32
    %c0_i32_1 = arith.constant 0 : i32
    return %c0_i32, %c0_i32_0 : i32, i32
  }
  func.func @transform_4(%arg0: i32) -> (i32, i32) {
    %c0_i32 = arith.constant 0 : i32
    %c0_i32_0 = arith.constant 0 : i32
    %c0_i32_1 = arith.constant 0 : i32
    return %c0_i32, %c0_i32_0 : i32, i32
  }
  func.func @transform_5(%arg0: i32) -> (i32, i32) {
    %c0_i32 = arith.constant 0 : i32
    %c0_i32_0 = arith.constant 0 : i32
    %c0_i32_1 = arith.constant 0 : i32
    return %c0_i32, %c0_i32_0 : i32, i32
  }
  func.func @transform_6(%arg0: i32) -> (i32, i32) {
    %c0_i32 = arith.constant 0 : i32
    %c0_i32_0 = arith.constant 0 : i32
    %c0_i32_1 = arith.constant 0 : i32
    return %c0_i32, %c0_i32_0 : i32, i32
  }
  func.func @transform_7(%arg0: i32) -> (i32, i32, i32) {
    %c0_i32 = arith.constant 0 : i32
    %c0_i32_0 = arith.constant 0 : i32
    %c0_i32_1 = arith.constant 0 : i32
    return %arg0, %c0_i32, %c0_i32_0 : i32, i32, i32
  }
}

module attributes {stable_mosaic.version = 11 : i64} {
  func.func @_resblock_kernel(%arg0: i32, %arg1: memref<1x16x8xf32, #tpu.memory_space<vmem>>, %arg2: memref<72x8xf32, #tpu.memory_space<vmem>>, %arg3: memref<1x8xf32, #tpu.memory_space<vmem>>, %arg4: memref<1x8xf32, #tpu.memory_space<vmem>>, %arg5: memref<72x8xf32, #tpu.memory_space<vmem>>, %arg6: memref<1x8xf32, #tpu.memory_space<vmem>>, %arg7: memref<1x8xf32, #tpu.memory_space<vmem>>, %arg8: memref<1x4x8xf32, #tpu.memory_space<vmem>>, %arg9: memref<4x72xf32, #tpu.memory_space<vmem>>, %arg10: memref<4x72xf32, #tpu.memory_space<vmem>>, %arg11: memref<16x8xf32, #tpu.memory_space<vmem>>) attributes {dimension_semantics = [#tpu.dimension_semantics<parallel>], iteration_bounds = array<i64: 2>, scalar_prefetch = 0 : i64, scratch_operands = 3 : i64, tpu.core_type = #tpu.core_type<tc>, window_params = [{transform_indices = @transform_0, window_bounds = array<i64: 1, 16, 8>}, {pipeline_mode = #tpu.pipeline_mode<synchronous>, transform_indices = @transform_1, window_bounds = array<i64: 72, 8>}, {pipeline_mode = #tpu.pipeline_mode<synchronous>, transform_indices = @transform_2, window_bounds = array<i64: 1, 8>}, {pipeline_mode = #tpu.pipeline_mode<synchronous>, transform_indices = @transform_3, window_bounds = array<i64: 1, 8>}, {pipeline_mode = #tpu.pipeline_mode<synchronous>, transform_indices = @transform_4, window_bounds = array<i64: 72, 8>}, {pipeline_mode = #tpu.pipeline_mode<synchronous>, transform_indices = @transform_5, window_bounds = array<i64: 1, 8>}, {pipeline_mode = #tpu.pipeline_mode<synchronous>, transform_indices = @transform_6, window_bounds = array<i64: 1, 8>}, {transform_indices = @transform_7, window_bounds = array<i64: 1, 4, 8>}]} {
    %c0 = arith.constant 0 : index
    %c0_0 = arith.constant 0 : index
    %c0_1 = arith.constant 0 : index
    %0 = vector.load %arg1[%c0, %c0_0, %c0_1] : memref<1x16x8xf32, #tpu.memory_space<vmem>>, vector<1x2x8xf32>
    %1 = vector.shape_cast %0 : vector<1x2x8xf32> to vector<2x8xf32>
    %c0_2 = arith.constant 0 : index
    %c0_3 = arith.constant 0 : index
    %2 = vector.load %arg9[%c0_2, %c0_3] : memref<4x72xf32, #tpu.memory_space<vmem>>, vector<2x8xf32>
    tpu.vector_store %arg9[%c0_2, %c0_3], %1 {strides = array<i32>} : memref<4x72xf32, #tpu.memory_space<vmem>>, vector<2x8xf32>,
    %c0_4 = arith.constant 0 : index
    %c4 = arith.constant 4 : index
    %c0_5 = arith.constant 0 : index
    %3 = vector.load %arg1[%c0_4, %c4, %c0_5] : memref<1x16x8xf32, #tpu.memory_space<vmem>>, vector<1x2x8xf32>
    %4 = vector.shape_cast %3 : vector<1x2x8xf32> to vector<2x8xf32>
    %c2 = arith.constant 2 : index
    %c0_6 = arith.constant 0 : index
    %5 = vector.load %arg9[%c2, %c0_6] : memref<4x72xf32, #tpu.memory_space<vmem>>, vector<2x8xf32>
    tpu.vector_store %arg9[%c2, %c0_6], %4 {strides = array<i32>} : memref<4x72xf32, #tpu.memory_space<vmem>>, vector<2x8xf32>,
    %c0_7 = arith.constant 0 : index
    %c1 = arith.constant 1 : index
    %c0_8 = arith.constant 0 : index
    %6 = vector.load %arg1[%c0_7, %c1, %c0_8] : memref<1x16x8xf32, #tpu.memory_space<vmem>>, vector<1x2x8xf32>
    %7 = vector.shape_cast %6 : vector<1x2x8xf32> to vector<2x8xf32>
    %c0_9 = arith.constant 0 : index
    %c8 = arith.constant 8 : index
    %8 = vector.load %arg9[%c0_9, %c8] : memref<4x72xf32, #tpu.memory_space<vmem>>, vector<2x8xf32>
    tpu.vector_store %arg9[%c0_9, %c8], %7 {strides = array<i32>} : memref<4x72xf32, #tpu.memory_space<vmem>>, vector<2x8xf32>,
    %c0_10 = arith.constant 0 : index
    %c5 = arith.constant 5 : index
    %c0_11 = arith.constant 0 : index
    %9 = vector.load %arg1[%c0_10, %c5, %c0_11] : memref<1x16x8xf32, #tpu.memory_space<vmem>>, vector<1x2x8xf32>
    %10 = vector.shape_cast %9 : vector<1x2x8xf32> to vector<2x8xf32>
    %c2_12 = arith.constant 2 : index
    %c8_13 = arith.constant 8 : index
    %11 = vector.load %arg9[%c2_12, %c8_13] : memref<4x72xf32, #tpu.memory_space<vmem>>, vector<2x8xf32>
    tpu.vector_store %arg9[%c2_12, %c8_13], %10 {strides = array<i32>} : memref<4x72xf32, #tpu.memory_space<vmem>>, vector<2x8xf32>,
    %c0_14 = arith.constant 0 : index
    %c2_15 = arith.constant 2 : index
    %c0_16 = arith.constant 0 : index
    %12 = vector.load %arg1[%c0_14, %c2_15, %c0_16] : memref<1x16x8xf32, #tpu.memory_space<vmem>>, vector<1x2x8xf32>
    %13 = vector.shape_cast %12 : vector<1x2x8xf32> to vector<2x8xf32>
    %c0_17 = arith.constant 0 : index
    %c16 = arith.constant 16 : index
    %14 = vector.load %arg9[%c0_17, %c16] : memref<4x72xf32, #tpu.memory_space<vmem>>, vector<2x8xf32>
    tpu.vector_store %arg9[%c0_17, %c16], %13 {strides = array<i32>} : memref<4x72xf32, #tpu.memory_space<vmem>>, vector<2x8xf32>,
    %c0_18 = arith.constant 0 : index
    %c6 = arith.constant 6 : index
    %c0_19 = arith.constant 0 : index
    %15 = vector.load %arg1[%c0_18, %c6, %c0_19] : memref<1x16x8xf32, #tpu.memory_space<vmem>>, vector<1x2x8xf32>
    %16 = vector.shape_cast %15 : vector<1x2x8xf32> to vector<2x8xf32>
    %c2_20 = arith.constant 2 : index
    %c16_21 = arith.constant 16 : index
    %17 = vector.load %arg9[%c2_20, %c16_21] : memref<4x72xf32, #tpu.memory_space<vmem>>, vector<2x8xf32>
    tpu.vector_store %arg9[%c2_20, %c16_21], %16 {strides = array<i32>} : memref<4x72xf32, #tpu.memory_space<vmem>>, vector<2x8xf32>,
    %c0_22 = arith.constant 0 : index
    %c4_23 = arith.constant 4 : index
    %c0_24 = arith.constant 0 : index
    %18 = vector.load %arg1[%c0_22, %c4_23, %c0_24] : memref<1x16x8xf32, #tpu.memory_space<vmem>>, vector<1x2x8xf32>
    %19 = vector.shape_cast %18 : vector<1x2x8xf32> to vector<2x8xf32>
    %c0_25 = arith.constant 0 : index
    %c24 = arith.constant 24 : index
    %20 = vector.load %arg9[%c0_25, %c24] : memref<4x72xf32, #tpu.memory_space<vmem>>, vector<2x8xf32>
    tpu.vector_store %arg9[%c0_25, %c24], %19 {strides = array<i32>} : memref<4x72xf32, #tpu.memory_space<vmem>>, vector<2x8xf32>,
    %c0_26 = arith.constant 0 : index
    %c8_27 = arith.constant 8 : index
    %c0_28 = arith.constant 0 : index
    %21 = vector.load %arg1[%c0_26, %c8_27, %c0_28] : memref<1x16x8xf32, #tpu.memory_space<vmem>>, vector<1x2x8xf32>
    %22 = vector.shape_cast %21 : vector<1x2x8xf32> to vector<2x8xf32>
    %c2_29 = arith.constant 2 : index
    %c24_30 = arith.constant 24 : index
    %23 = vector.load %arg9[%c2_29, %c24_30] : memref<4x72xf32, #tpu.memory_space<vmem>>, vector<2x8xf32>
    tpu.vector_store %arg9[%c2_29, %c24_30], %22 {strides = array<i32>} : memref<4x72xf32, #tpu.memory_space<vmem>>, vector<2x8xf32>,
    %c0_31 = arith.constant 0 : index
    %c5_32 = arith.constant 5 : index
    %c0_33 = arith.constant 0 : index
    %24 = vector.load %arg1[%c0_31, %c5_32, %c0_33] : memref<1x16x8xf32, #tpu.memory_space<vmem>>, vector<1x2x8xf32>
    %25 = vector.shape_cast %24 : vector<1x2x8xf32> to vector<2x8xf32>
    %c0_34 = arith.constant 0 : index
    %c32 = arith.constant 32 : index
    %26 = vector.load %arg9[%c0_34, %c32] : memref<4x72xf32, #tpu.memory_space<vmem>>, vector<2x8xf32>
    tpu.vector_store %arg9[%c0_34, %c32], %25 {strides = array<i32>} : memref<4x72xf32, #tpu.memory_space<vmem>>, vector<2x8xf32>,
    %c0_35 = arith.constant 0 : index
    %c9 = arith.constant 9 : index
    %c0_36 = arith.constant 0 : index
    %27 = vector.load %arg1[%c0_35, %c9, %c0_36] : memref<1x16x8xf32, #tpu.memory_space<vmem>>, vector<1x2x8xf32>
    %28 = vector.shape_cast %27 : vector<1x2x8xf32> to vector<2x8xf32>
    %c2_37 = arith.constant 2 : index
    %c32_38 = arith.constant 32 : index
    %29 = vector.load %arg9[%c2_37, %c32_38] : memref<4x72xf32, #tpu.memory_space<vmem>>, vector<2x8xf32>
    tpu.vector_store %arg9[%c2_37, %c32_38], %28 {strides = array<i32>} : memref<4x72xf32, #tpu.memory_space<vmem>>, vector<2x8xf32>,
    %c0_39 = arith.constant 0 : index
    %c6_40 = arith.constant 6 : index
    %c0_41 = arith.constant 0 : index
    %30 = vector.load %arg1[%c0_39, %c6_40, %c0_41] : memref<1x16x8xf32, #tpu.memory_space<vmem>>, vector<1x2x8xf32>
    %31 = vector.shape_cast %30 : vector<1x2x8xf32> to vector<2x8xf32>
    %c0_42 = arith.constant 0 : index
    %c40 = arith.constant 40 : index
    %32 = vector.load %arg9[%c0_42, %c40] : memref<4x72xf32, #tpu.memory_space<vmem>>, vector<2x8xf32>
    tpu.vector_store %arg9[%c0_42, %c40], %31 {strides = array<i32>} : memref<4x72xf32, #tpu.memory_space<vmem>>, vector<2x8xf32>,
    %c0_43 = arith.constant 0 : index
    %c10 = arith.constant 10 : index
    %c0_44 = arith.constant 0 : index
    %33 = vector.load %arg1[%c0_43, %c10, %c0_44] : memref<1x16x8xf32, #tpu.memory_space<vmem>>, vector<1x2x8xf32>
    %34 = vector.shape_cast %33 : vector<1x2x8xf32> to vector<2x8xf32>
    %c2_45 = arith.constant 2 : index
    %c40_46 = arith.constant 40 : index
    %35 = vector.load %arg9[%c2_45, %c40_46] : memref<4x72xf32, #tpu.memory_space<vmem>>, vector<2x8xf32>
    tpu.vector_store %arg9[%c2_45, %c40_46], %34 {strides = array<i32>} : memref<4x72xf32, #tpu.memory_space<vmem>>, vector<2x8xf32>,
    %c0_47 = arith.constant 0 : index
    %c8_48 = arith.constant 8 : index
    %c0_49 = arith.constant 0 : index
    %36 = vector.load %arg1[%c0_47, %c8_48, %c0_49] : memref<1x16x8xf32, #tpu.memory_space<vmem>>, vector<1x2x8xf32>
    %37 = vector.shape_cast %36 : vector<1x2x8xf32> to vector<2x8xf32>
    %c0_50 = arith.constant 0 : index
    %c48 = arith.constant 48 : index
    %38 = vector.load %arg9[%c0_50, %c48] : memref<4x72xf32, #tpu.memory_space<vmem>>, vector<2x8xf32>
    tpu.vector_store %arg9[%c0_50, %c48], %37 {strides = array<i32>} : memref<4x72xf32, #tpu.memory_space<vmem>>, vector<2x8xf32>,
    %c0_51 = arith.constant 0 : index
    %c12 = arith.constant 12 : index
    %c0_52 = arith.constant 0 : index
    %39 = vector.load %arg1[%c0_51, %c12, %c0_52] : memref<1x16x8xf32, #tpu.memory_space<vmem>>, vector<1x2x8xf32>
    %40 = vector.shape_cast %39 : vector<1x2x8xf32> to vector<2x8xf32>
    %c2_53 = arith.constant 2 : index
    %c48_54 = arith.constant 48 : index
    %41 = vector.load %arg9[%c2_53, %c48_54] : memref<4x72xf32, #tpu.memory_space<vmem>>, vector<2x8xf32>
    tpu.vector_store %arg9[%c2_53, %c48_54], %40 {strides = array<i32>} : memref<4x72xf32, #tpu.memory_space<vmem>>, vector<2x8xf32>,
    %c0_55 = arith.constant 0 : index
    %c9_56 = arith.constant 9 : index
    %c0_57 = arith.constant 0 : index
    %42 = vector.load %arg1[%c0_55, %c9_56, %c0_57] : memref<1x16x8xf32, #tpu.memory_space<vmem>>, vector<1x2x8xf32>
    %43 = vector.shape_cast %42 : vector<1x2x8xf32> to vector<2x8xf32>
    %c0_58 = arith.constant 0 : index
    %c56 = arith.constant 56 : index
    %44 = vector.load %arg9[%c0_58, %c56] : memref<4x72xf32, #tpu.memory_space<vmem>>, vector<2x8xf32>
    tpu.vector_store %arg9[%c0_58, %c56], %43 {strides = array<i32>} : memref<4x72xf32, #tpu.memory_space<vmem>>, vector<2x8xf32>,
    %c0_59 = arith.constant 0 : index
    %c13 = arith.constant 13 : index
    %c0_60 = arith.constant 0 : index
    %45 = vector.load %arg1[%c0_59, %c13, %c0_60] : memref<1x16x8xf32, #tpu.memory_space<vmem>>, vector<1x2x8xf32>
    %46 = vector.shape_cast %45 : vector<1x2x8xf32> to vector<2x8xf32>
    %c2_61 = arith.constant 2 : index
    %c56_62 = arith.constant 56 : index
    %47 = vector.load %arg9[%c2_61, %c56_62] : memref<4x72xf32, #tpu.memory_space<vmem>>, vector<2x8xf32>
    tpu.vector_store %arg9[%c2_61, %c56_62], %46 {strides = array<i32>} : memref<4x72xf32, #tpu.memory_space<vmem>>, vector<2x8xf32>,
    %c0_63 = arith.constant 0 : index
    %c10_64 = arith.constant 10 : index
    %c0_65 = arith.constant 0 : index
    %48 = vector.load %arg1[%c0_63, %c10_64, %c0_65] : memref<1x16x8xf32, #tpu.memory_space<vmem>>, vector<1x2x8xf32>
    %49 = vector.shape_cast %48 : vector<1x2x8xf32> to vector<2x8xf32>
    %c0_66 = arith.constant 0 : index
    %c64 = arith.constant 64 : index
    %50 = vector.load %arg9[%c0_66, %c64] : memref<4x72xf32, #tpu.memory_space<vmem>>, vector<2x8xf32>
    tpu.vector_store %arg9[%c0_66, %c64], %49 {strides = array<i32>} : memref<4x72xf32, #tpu.memory_space<vmem>>, vector<2x8xf32>,
    %c0_67 = arith.constant 0 : index
    %c14 = arith.constant 14 : index
    %c0_68 = arith.constant 0 : index
    %51 = vector.load %arg1[%c0_67, %c14, %c0_68] : memref<1x16x8xf32, #tpu.memory_space<vmem>>, vector<1x2x8xf32>
    %52 = vector.shape_cast %51 : vector<1x2x8xf32> to vector<2x8xf32>
    %c2_69 = arith.constant 2 : index
    %c64_70 = arith.constant 64 : index
    %53 = vector.load %arg9[%c2_69, %c64_70] : memref<4x72xf32, #tpu.memory_space<vmem>>, vector<2x8xf32>
    tpu.vector_store %arg9[%c2_69, %c64_70], %52 {strides = array<i32>} : memref<4x72xf32, #tpu.memory_space<vmem>>, vector<2x8xf32>,
    %c0_71 = arith.constant 0 : index
    %c0_72 = arith.constant 0 : index
    %54 = vector.load %arg9[%c0_71, %c0_72] : memref<4x72xf32, #tpu.memory_space<vmem>>, vector<4x72xf32>
    %c0_73 = arith.constant 0 : index
    %c0_74 = arith.constant 0 : index
    %55 = vector.load %arg2[%c0_73, %c0_74] : memref<72x8xf32, #tpu.memory_space<vmem>>, vector<72x8xf32>
    %cst = arith.constant dense<0.000000e+00> : vector<4x8xf32>
    %56 = tpu.matmul %54, %55, %cst {dimension_numbers = #tpu.dot_dimension_numbers<[1], [0], [0], [1], [0, 0, 1, 1], [], []>} : vector<4x72xf32>, vector<72x8xf32>, vector<4x8xf32> -> vector<4x8xf32>
    %c0_75 = arith.constant 0 : index
    %c0_76 = arith.constant 0 : index
    %57 = vector.load %arg3[%c0_75, %c0_76] : memref<1x8xf32, #tpu.memory_space<vmem>>, vector<1x8xf32>
    %58 = vector.broadcast %57 : vector<1x8xf32> to vector<4x8xf32>
    %59 = arith.mulf %56, %58 : vector<4x8xf32>
    %c0_77 = arith.constant 0 : index
    %c0_78 = arith.constant 0 : index
    %60 = vector.load %arg4[%c0_77, %c0_78] : memref<1x8xf32, #tpu.memory_space<vmem>>, vector<1x8xf32>
    %61 = vector.broadcast %60 : vector<1x8xf32> to vector<4x8xf32>
    %62 = arith.addf %59, %61 : vector<4x8xf32>
    %cst_79 = arith.constant 0.000000e+00 : f32
    %63 = vector.broadcast %cst_79 : f32 to vector<4x8xf32>
    %64 = arith.maximumf %62, %63 : vector<4x8xf32>
    %cst_80 = arith.constant 0.000000e+00 : f32
    %65 = vector.broadcast %cst_80 : f32 to vector<16x8xf32>
    %c0_81 = arith.constant 0 : index
    %c0_82 = arith.constant 0 : index
    %66 = vector.load %arg11[%c0_81, %c0_82] : memref<16x8xf32, #tpu.memory_space<vmem>>, vector<16x8xf32>
    tpu.vector_store %arg11[%c0_81, %c0_82], %65 {strides = array<i32>} : memref<16x8xf32, #tpu.memory_space<vmem>>, vector<16x8xf32>,
    %67 = vector.extract_strided_slice %64 {offsets = [0, 0], sizes = [2, 8], strides = [1, 1]} : vector<4x8xf32> to vector<2x8xf32>
    %c5_83 = arith.constant 5 : index
    %c0_84 = arith.constant 0 : index
    %68 = vector.load %arg11[%c5_83, %c0_84] : memref<16x8xf32, #tpu.memory_space<vmem>>, vector<2x8xf32>
    tpu.vector_store %arg11[%c5_83, %c0_84], %67 {strides = array<i32>} : memref<16x8xf32, #tpu.memory_space<vmem>>, vector<2x8xf32>,
    %69 = vector.extract_strided_slice %64 {offsets = [2, 0], sizes = [2, 8], strides = [1, 1]} : vector<4x8xf32> to vector<2x8xf32>
    %c9_85 = arith.constant 9 : index
    %c0_86 = arith.constant 0 : index
    %70 = vector.load %arg11[%c9_85, %c0_86] : memref<16x8xf32, #tpu.memory_space<vmem>>, vector<2x8xf32>
    tpu.vector_store %arg11[%c9_85, %c0_86], %69 {strides = array<i32>} : memref<16x8xf32, #tpu.memory_space<vmem>>, vector<2x8xf32>,
    %c0_87 = arith.constant 0 : index
    %c0_88 = arith.constant 0 : index
    %71 = vector.load %arg11[%c0_87, %c0_88] : memref<16x8xf32, #tpu.memory_space<vmem>>, vector<2x8xf32>
    %c0_89 = arith.constant 0 : index
    %c0_90 = arith.constant 0 : index
    %72 = vector.load %arg10[%c0_89, %c0_90] : memref<4x72xf32, #tpu.memory_space<vmem>>, vector<2x8xf32>
    tpu.vector_store %arg10[%c0_89, %c0_90], %71 {strides = array<i32>} : memref<4x72xf32, #tpu.memory_space<vmem>>, vector<2x8xf32>,
    %c4_91 = arith.constant 4 : index
    %c0_92 = arith.constant 0 : index
    %73 = vector.load %arg11[%c4_91, %c0_92] : memref<16x8xf32, #tpu.memory_space<vmem>>, vector<2x8xf32>
    %c2_93 = arith.constant 2 : index
    %c0_94 = arith.constant 0 : index
    %74 = vector.load %arg10[%c2_93, %c0_94] : memref<4x72xf32, #tpu.memory_space<vmem>>, vector<2x8xf32>
    tpu.vector_store %arg10[%c2_93, %c0_94], %73 {strides = array<i32>} : memref<4x72xf32, #tpu.memory_space<vmem>>, vector<2x8xf32>,
    %c1_95 = arith.constant 1 : index
    %c0_96 = arith.constant 0 : index
    %75 = vector.load %arg11[%c1_95, %c0_96] : memref<16x8xf32, #tpu.memory_space<vmem>>, vector<2x8xf32>
    %c0_97 = arith.constant 0 : index
    %c8_98 = arith.constant 8 : index
    %76 = vector.load %arg10[%c0_97, %c8_98] : memref<4x72xf32, #tpu.memory_space<vmem>>, vector<2x8xf32>
    tpu.vector_store %arg10[%c0_97, %c8_98], %75 {strides = array<i32>} : memref<4x72xf32, #tpu.memory_space<vmem>>, vector<2x8xf32>,
    %c5_99 = arith.constant 5 : index
    %c0_100 = arith.constant 0 : index
    %77 = vector.load %arg11[%c5_99, %c0_100] : memref<16x8xf32, #tpu.memory_space<vmem>>, vector<2x8xf32>
    %c2_101 = arith.constant 2 : index
    %c8_102 = arith.constant 8 : index
    %78 = vector.load %arg10[%c2_101, %c8_102] : memref<4x72xf32, #tpu.memory_space<vmem>>, vector<2x8xf32>
    tpu.vector_store %arg10[%c2_101, %c8_102], %77 {strides = array<i32>} : memref<4x72xf32, #tpu.memory_space<vmem>>, vector<2x8xf32>,
    %c2_103 = arith.constant 2 : index
    %c0_104 = arith.constant 0 : index
    %79 = vector.load %arg11[%c2_103, %c0_104] : memref<16x8xf32, #tpu.memory_space<vmem>>, vector<2x8xf32>
    %c0_105 = arith.constant 0 : index
    %c16_106 = arith.constant 16 : index
    %80 = vector.load %arg10[%c0_105, %c16_106] : memref<4x72xf32, #tpu.memory_space<vmem>>, vector<2x8xf32>
    tpu.vector_store %arg10[%c0_105, %c16_106], %79 {strides = array<i32>} : memref<4x72xf32, #tpu.memory_space<vmem>>, vector<2x8xf32>,
    %c6_107 = arith.constant 6 : index
    %c0_108 = arith.constant 0 : index
    %81 = vector.load %arg11[%c6_107, %c0_108] : memref<16x8xf32, #tpu.memory_space<vmem>>, vector<2x8xf32>
    %c2_109 = arith.constant 2 : index
    %c16_110 = arith.constant 16 : index
    %82 = vector.load %arg10[%c2_109, %c16_110] : memref<4x72xf32, #tpu.memory_space<vmem>>, vector<2x8xf32>
    tpu.vector_store %arg10[%c2_109, %c16_110], %81 {strides = array<i32>} : memref<4x72xf32, #tpu.memory_space<vmem>>, vector<2x8xf32>,
    %c4_111 = arith.constant 4 : index
    %c0_112 = arith.constant 0 : index
    %83 = vector.load %arg11[%c4_111, %c0_112] : memref<16x8xf32, #tpu.memory_space<vmem>>, vector<2x8xf32>
    %c0_113 = arith.constant 0 : index
    %c24_114 = arith.constant 24 : index
    %84 = vector.load %arg10[%c0_113, %c24_114] : memref<4x72xf32, #tpu.memory_space<vmem>>, vector<2x8xf32>
    tpu.vector_store %arg10[%c0_113, %c24_114], %83 {strides = array<i32>} : memref<4x72xf32, #tpu.memory_space<vmem>>, vector<2x8xf32>,
    %c8_115 = arith.constant 8 : index
    %c0_116 = arith.constant 0 : index
    %85 = vector.load %arg11[%c8_115, %c0_116] : memref<16x8xf32, #tpu.memory_space<vmem>>, vector<2x8xf32>
    %c2_117 = arith.constant 2 : index
    %c24_118 = arith.constant 24 : index
    %86 = vector.load %arg10[%c2_117, %c24_118] : memref<4x72xf32, #tpu.memory_space<vmem>>, vector<2x8xf32>
    tpu.vector_store %arg10[%c2_117, %c24_118], %85 {strides = array<i32>} : memref<4x72xf32, #tpu.memory_space<vmem>>, vector<2x8xf32>,
    %c5_119 = arith.constant 5 : index
    %c0_120 = arith.constant 0 : index
    %87 = vector.load %arg11[%c5_119, %c0_120] : memref<16x8xf32, #tpu.memory_space<vmem>>, vector<2x8xf32>
    %c0_121 = arith.constant 0 : index
    %c32_122 = arith.constant 32 : index
    %88 = vector.load %arg10[%c0_121, %c32_122] : memref<4x72xf32, #tpu.memory_space<vmem>>, vector<2x8xf32>
    tpu.vector_store %arg10[%c0_121, %c32_122], %87 {strides = array<i32>} : memref<4x72xf32, #tpu.memory_space<vmem>>, vector<2x8xf32>,
    %c9_123 = arith.constant 9 : index
    %c0_124 = arith.constant 0 : index
    %89 = vector.load %arg11[%c9_123, %c0_124] : memref<16x8xf32, #tpu.memory_space<vmem>>, vector<2x8xf32>
    %c2_125 = arith.constant 2 : index
    %c32_126 = arith.constant 32 : index
    %90 = vector.load %arg10[%c2_125, %c32_126] : memref<4x72xf32, #tpu.memory_space<vmem>>, vector<2x8xf32>
    tpu.vector_store %arg10[%c2_125, %c32_126], %89 {strides = array<i32>} : memref<4x72xf32, #tpu.memory_space<vmem>>, vector<2x8xf32>,
    %c6_127 = arith.constant 6 : index
    %c0_128 = arith.constant 0 : index
    %91 = vector.load %arg11[%c6_127, %c0_128] : memref<16x8xf32, #tpu.memory_space<vmem>>, vector<2x8xf32>
    %c0_129 = arith.constant 0 : index
    %c40_130 = arith.constant 40 : index
    %92 = vector.load %arg10[%c0_129, %c40_130] : memref<4x72xf32, #tpu.memory_space<vmem>>, vector<2x8xf32>
    tpu.vector_store %arg10[%c0_129, %c40_130], %91 {strides = array<i32>} : memref<4x72xf32, #tpu.memory_space<vmem>>, vector<2x8xf32>,
    %c10_131 = arith.constant 10 : index
    %c0_132 = arith.constant 0 : index
    %93 = vector.load %arg11[%c10_131, %c0_132] : memref<16x8xf32, #tpu.memory_space<vmem>>, vector<2x8xf32>
    %c2_133 = arith.constant 2 : index
    %c40_134 = arith.constant 40 : index
    %94 = vector.load %arg10[%c2_133, %c40_134] : memref<4x72xf32, #tpu.memory_space<vmem>>, vector<2x8xf32>
    tpu.vector_store %arg10[%c2_133, %c40_134], %93 {strides = array<i32>} : memref<4x72xf32, #tpu.memory_space<vmem>>, vector<2x8xf32>,
    %c8_135 = arith.constant 8 : index
    %c0_136 = arith.constant 0 : index
    %95 = vector.load %arg11[%c8_135, %c0_136] : memref<16x8xf32, #tpu.memory_space<vmem>>, vector<2x8xf32>
    %c0_137 = arith.constant 0 : index
    %c48_138 = arith.constant 48 : index
    %96 = vector.load %arg10[%c0_137, %c48_138] : memref<4x72xf32, #tpu.memory_space<vmem>>, vector<2x8xf32>
    tpu.vector_store %arg10[%c0_137, %c48_138], %95 {strides = array<i32>} : memref<4x72xf32, #tpu.memory_space<vmem>>, vector<2x8xf32>,
    %c12_139 = arith.constant 12 : index
    %c0_140 = arith.constant 0 : index
    %97 = vector.load %arg11[%c12_139, %c0_140] : memref<16x8xf32, #tpu.memory_space<vmem>>, vector<2x8xf32>
    %c2_141 = arith.constant 2 : index
    %c48_142 = arith.constant 48 : index
    %98 = vector.load %arg10[%c2_141, %c48_142] : memref<4x72xf32, #tpu.memory_space<vmem>>, vector<2x8xf32>
    tpu.vector_store %arg10[%c2_141, %c48_142], %97 {strides = array<i32>} : memref<4x72xf32, #tpu.memory_space<vmem>>, vector<2x8xf32>,
    %c9_143 = arith.constant 9 : index
    %c0_144 = arith.constant 0 : index
    %99 = vector.load %arg11[%c9_143, %c0_144] : memref<16x8xf32, #tpu.memory_space<vmem>>, vector<2x8xf32>
    %c0_145 = arith.constant 0 : index
    %c56_146 = arith.constant 56 : index
    %100 = vector.load %arg10[%c0_145, %c56_146] : memref<4x72xf32, #tpu.memory_space<vmem>>, vector<2x8xf32>
    tpu.vector_store %arg10[%c0_145, %c56_146], %99 {strides = array<i32>} : memref<4x72xf32, #tpu.memory_space<vmem>>, vector<2x8xf32>,
    %c13_147 = arith.constant 13 : index
    %c0_148 = arith.constant 0 : index
    %101 = vector.load %arg11[%c13_147, %c0_148] : memref<16x8xf32, #tpu.memory_space<vmem>>, vector<2x8xf32>
    %c2_149 = arith.constant 2 : index
    %c56_150 = arith.constant 56 : index
    %102 = vector.load %arg10[%c2_149, %c56_150] : memref<4x72xf32, #tpu.memory_space<vmem>>, vector<2x8xf32>
    tpu.vector_store %arg10[%c2_149, %c56_150], %101 {strides = array<i32>} : memref<4x72xf32, #tpu.memory_space<vmem>>, vector<2x8xf32>,
    %c10_151 = arith.constant 10 : index
    %c0_152 = arith.constant 0 : index
    %103 = vector.load %arg11[%c10_151, %c0_152] : memref<16x8xf32, #tpu.memory_space<vmem>>, vector<2x8xf32>
    %c0_153 = arith.constant 0 : index
    %c64_154 = arith.constant 64 : index
    %104 = vector.load %arg10[%c0_153, %c64_154] : memref<4x72xf32, #tpu.memory_space<vmem>>, vector<2x8xf32>
    tpu.vector_store %arg10[%c0_153, %c64_154], %103 {strides = array<i32>} : memref<4x72xf32, #tpu.memory_space<vmem>>, vector<2x8xf32>,
    %c14_155 = arith.constant 14 : index
    %c0_156 = arith.constant 0 : index
    %105 = vector.load %arg11[%c14_155, %c0_156] : memref<16x8xf32, #tpu.memory_space<vmem>>, vector<2x8xf32>
    %c2_157 = arith.constant 2 : index
    %c64_158 = arith.constant 64 : index
    %106 = vector.load %arg10[%c2_157, %c64_158] : memref<4x72xf32, #tpu.memory_space<vmem>>, vector<2x8xf32>
    tpu.vector_store %arg10[%c2_157, %c64_158], %105 {strides = array<i32>} : memref<4x72xf32, #tpu.memory_space<vmem>>, vector<2x8xf32>,
    %c0_159 = arith.constant 0 : index
    %c32_160 = arith.constant 32 : index
    %107 = vector.load %arg9[%c0_159, %c32_160] : memref<4x72xf32, #tpu.memory_space<vmem>>, vector<4x8xf32>
    %c0_161 = arith.constant 0 : index
    %c0_162 = arith.constant 0 : index
    %108 = vector.load %arg10[%c0_161, %c0_162] : memref<4x72xf32, #tpu.memory_space<vmem>>, vector<4x72xf32>
    %c0_163 = arith.constant 0 : index
    %c0_164 = arith.constant 0 : index
    %109 = vector.load %arg5[%c0_163, %c0_164] : memref<72x8xf32, #tpu.memory_space<vmem>>, vector<72x8xf32>
    %cst_165 = arith.constant dense<0.000000e+00> : vector<4x8xf32>
    %110 = tpu.matmul %108, %109, %cst_165 {dimension_numbers = #tpu.dot_dimension_numbers<[1], [0], [0], [1], [0, 0, 1, 1], [], []>} : vector<4x72xf32>, vector<72x8xf32>, vector<4x8xf32> -> vector<4x8xf32>
    %c0_166 = arith.constant 0 : index
    %c0_167 = arith.constant 0 : index
    %111 = vector.load %arg6[%c0_166, %c0_167] : memref<1x8xf32, #tpu.memory_space<vmem>>, vector<1x8xf32>
    %112 = vector.broadcast %111 : vector<1x8xf32> to vector<4x8xf32>
    %113 = arith.mulf %110, %112 : vector<4x8xf32>
    %c0_168 = arith.constant 0 : index
    %c0_169 = arith.constant 0 : index
    %114 = vector.load %arg7[%c0_168, %c0_169] : memref<1x8xf32, #tpu.memory_space<vmem>>, vector<1x8xf32>
    %115 = vector.broadcast %114 : vector<1x8xf32> to vector<4x8xf32>
    %116 = arith.addf %113, %115 : vector<4x8xf32>
    %117 = arith.addf %116, %107 : vector<4x8xf32>
    %cst_170 = arith.constant 0.000000e+00 : f32
    %118 = vector.broadcast %cst_170 : f32 to vector<4x8xf32>
    %119 = arith.maximumf %117, %118 : vector<4x8xf32>
    %c0_171 = arith.constant 0 : index
    %c0_172 = arith.constant 0 : index
    %c0_173 = arith.constant 0 : index
    %120 = vector.load %arg8[%c0_171, %c0_172, %c0_173] : memref<1x4x8xf32, #tpu.memory_space<vmem>>, vector<1x4x8xf32>
    %121 = vector.shape_cast %120 : vector<1x4x8xf32> to vector<4x8xf32>
    %122 = vector.shape_cast %119 : vector<4x8xf32> to vector<1x4x8xf32>
    tpu.vector_store %arg8[%c0_171, %c0_172, %c0_173], %122 {strides = array<i32>} : memref<1x4x8xf32, #tpu.memory_space<vmem>>, vector<1x4x8xf32>,
    return
  }
  func.func @transform_0(%arg0: i32) -> (i32, i32, i32) {
    %c0_i32 = arith.constant 0 : i32
    %c0_i32_0 = arith.constant 0 : i32
    %c0_i32_1 = arith.constant 0 : i32
    return %arg0, %c0_i32, %c0_i32_0 : i32, i32, i32
  }
  func.func @transform_1(%arg0: i32) -> (i32, i32) {
    %c0_i32 = arith.constant 0 : i32
    %c0_i32_0 = arith.constant 0 : i32
    %c0_i32_1 = arith.constant 0 : i32
    return %c0_i32, %c0_i32_0 : i32, i32
  }
  func.func @transform_2(%arg0: i32) -> (i32, i32) {
    %c0_i32 = arith.constant 0 : i32
    %c0_i32_0 = arith.constant 0 : i32
    %c0_i32_1 = arith.constant 0 : i32
    return %c0_i32, %c0_i32_0 : i32, i32
  }
  func.func @transform_3(%arg0: i32) -> (i32, i32) {
    %c0_i32 = arith.constant 0 : i32
    %c0_i32_0 = arith.constant 0 : i32
    %c0_i32_1 = arith.constant 0 : i32
    return %c0_i32, %c0_i32_0 : i32, i32
  }
  func.func @transform_4(%arg0: i32) -> (i32, i32) {
    %c0_i32 = arith.constant 0 : i32
    %c0_i32_0 = arith.constant 0 : i32
    %c0_i32_1 = arith.constant 0 : i32
    return %c0_i32, %c0_i32_0 : i32, i32
  }
  func.func @transform_5(%arg0: i32) -> (i32, i32) {
    %c0_i32 = arith.constant 0 : i32
    %c0_i32_0 = arith.constant 0 : i32
    %c0_i32_1 = arith.constant 0 : i32
    return %c0_i32, %c0_i32_0 : i32, i32
  }
  func.func @transform_6(%arg0: i32) -> (i32, i32) {
    %c0_i32 = arith.constant 0 : i32
    %c0_i32_0 = arith.constant 0 : i32
    %c0_i32_1 = arith.constant 0 : i32
    return %c0_i32, %c0_i32_0 : i32, i32
  }
  func.func @transform_7(%arg0: i32) -> (i32, i32, i32) {
    %c0_i32 = arith.constant 0 : i32
    %c0_i32_0 = arith.constant 0 : i32
    %c0_i32_1 = arith.constant 0 : i32
    return %arg0, %c0_i32, %c0_i32_0 : i32, i32, i32
  }
}

module attributes {stable_mosaic.version = 11 : i64} {
  func.func @_matmul_kernel(%arg0: i32, %arg1: i32, %arg2: memref<1x8x72xf32, #tpu.memory_space<vmem>>, %arg3: memref<72x8xf32, #tpu.memory_space<vmem>>, %arg4: memref<1x8x8xf32, #tpu.memory_space<vmem>>) attributes {dimension_semantics = [#tpu.dimension_semantics<parallel>, #tpu.dimension_semantics<parallel>], iteration_bounds = array<i64: 2, 1>, scalar_prefetch = 0 : i64, scratch_operands = 0 : i64, tpu.core_type = #tpu.core_type<tc>, window_params = [{transform_indices = @transform_0, window_bounds = array<i64: 1, 8, 72>}, {pipeline_mode = #tpu.pipeline_mode<synchronous>, transform_indices = @transform_1, window_bounds = array<i64: 72, 8>}, {transform_indices = @transform_2, window_bounds = array<i64: 1, 8, 8>}]} {
    %c0 = arith.constant 0 : index
    %c0_0 = arith.constant 0 : index
    %c0_1 = arith.constant 0 : index
    %0 = vector.load %arg2[%c0, %c0_0, %c0_1] : memref<1x8x72xf32, #tpu.memory_space<vmem>>, vector<1x8x72xf32>
    %1 = vector.shape_cast %0 : vector<1x8x72xf32> to vector<8x72xf32>
    %c0_2 = arith.constant 0 : index
    %c0_3 = arith.constant 0 : index
    %2 = vector.load %arg3[%c0_2, %c0_3] : memref<72x8xf32, #tpu.memory_space<vmem>>, vector<72x8xf32>
    %cst = arith.constant dense<0.000000e+00> : vector<8x8xf32>
    %3 = tpu.matmul %1, %2, %cst {dimension_numbers = #tpu.dot_dimension_numbers<[1], [0], [0], [1], [0, 0, 1, 1], [], []>} : vector<8x72xf32>, vector<72x8xf32>, vector<8x8xf32> -> vector<8x8xf32>
    %c0_4 = arith.constant 0 : index
    %c0_5 = arith.constant 0 : index
    %c0_6 = arith.constant 0 : index
    %4 = vector.load %arg4[%c0_4, %c0_5, %c0_6] : memref<1x8x8xf32, #tpu.memory_space<vmem>>, vector<1x8x8xf32>
    %5 = vector.shape_cast %4 : vector<1x8x8xf32> to vector<8x8xf32>
    %6 = vector.shape_cast %3 : vector<8x8xf32> to vector<1x8x8xf32>
    tpu.vector_store %arg4[%c0_4, %c0_5, %c0_6], %6 {strides = array<i32>} : memref<1x8x8xf32, #tpu.memory_space<vmem>>, vector<1x8x8xf32>,
    return
  }
  func.func @transform_0(%arg0: i32, %arg1: i32) -> (i32, i32, i32) {
    %c0_i32 = arith.constant 0 : i32
    %c0_i32_0 = arith.constant 0 : i32
    return %arg0, %arg1, %c0_i32 : i32, i32, i32
  }
  func.func @transform_1(%arg0: i32, %arg1: i32) -> (i32, i32) {
    %c0_i32 = arith.constant 0 : i32
    %c0_i32_0 = arith.constant 0 : i32
    %c0_i32_1 = arith.constant 0 : i32
    return %c0_i32, %c0_i32_0 : i32, i32
  }
  func.func @transform_2(%arg0: i32, %arg1: i32) -> (i32, i32, i32) {
    %c0_i32 = arith.constant 0 : i32
    %c0_i32_0 = arith.constant 0 : i32
    return %arg0, %arg1, %c0_i32 : i32, i32, i32
  }
}

</mosaic_0001>

<llo_original>
// kernel: downsample_forward.12
$region0: #{downsample_forward.12}
  #allocation0 [shape = 'u32[]', space=smem, size = 0x4, offset = 0x4, fixed_abs, tag = 'smem constant byte address 0x4 - core index']
  #allocation1 [shape = 'u32[144,128]{1,0:T(1,128)}', space=vmem, size = 0x12000, scoped, tag = 'internal scratch']
  %s0 = inlined_call_operand.vmem [shape: f32[2,64,36], index: 0, kind: input, shape index: {}]
  %s1 = inlined_call_operand.vmem [shape: f32[36,4], index: 1, kind: input, shape index: {}]
  %s2 = inlined_call_operand.vmem [shape: f32[2,64,4], index: 2, kind: output, shape index: {}]
  %s3 = sld [smem:[#allocation0]]
  $region41: #{downsample_forward.12} parent=0
    _
  %s5 = ssub.s32 1, %s3
  %s6 = scalar_select 0, %s5, %s3
  loop: start=0, step=1, limit=4
  $region2: #{downsample_forward.12} parent=0 // loop_pre_header
    _
  $region3: #{downsample_forward.12} parent=0 // loop_header
    %s8 = sphi 0, %s12
    %p9 = scmp.ge.s32.totalorder %s8, 4
    %s15 = sphi 0, %s27
    %s16 = sphi 0, %s23
    %s17 = sphi 0, %s15
    %s18 = sphi 0, %s16
    %s19 = sphi 0, %s17
    %s20 = sphi 0, %s18
    %s32 = sphi 0, %s34
    %s35 = sphi 0, %s32
    %s36 = sphi 0, %s35
    %s52 = sphi 0, %s36
    %s56 = sphi 0, %s56
    %s58 = sphi 0, %s56
    %s59 = sphi 0, %s58
    %s73 = sphi 0, %s59
    %s81 = sphi 0, %s83
    %s84 = sphi 0, %s81
    %s85 = sphi 0, %s84
    %s101 = sphi 0, %s85
  $region4: #{downsample_forward.12} parent=0 // loop_header_branch
    %11 = sbr.rel (%p9) target = $region8
  $region5: #{downsample_forward.12} parent=0 // loop_body
    %s13 = ssub.s32 %s8, 1
    %s14 = ssub.s32 %s8, 2
    %s21 = sadd.s32 1, %s16
    %p22 = scmp.ge.s32.totalorder %s21, 1
    %s23 = scalar_select %p22, 0, %s21
    %s24 = sadd.s32 1, %s15
    %s25 = scalar_select %p22, %s24, %s15
    %p26 = scmp.ge.s32.totalorder %s25, 2
    %s27 = scalar_select %p26, 0, %s25
    %s28 = ssub.s32 %s15, %s27
    %s29 = ssub.s32 %s16, %s23
    %s30 = sor.u32 %s28, %s29
    %p31 = scmp.eq.s32.totalorder %s30, 0
    %s33 = sadd.s32 %s32, 1
    %s34 = scalar_select %p31, %s32, %s33
    %p37 = pneg %p31
    %p38 = scmp.eq.s32.totalorder %s8, 1
    %p39 = por %p37, %p38
    %p40 = scmp.ne.s32.totalorder %s32, %s35
    %p41 = scmp.eq.s32.totalorder %s8, 0
    %p42 = por %p40, %p41
    %p43 = scmp.ne.s32.totalorder %s32, %s35
    %p44 = scmp.eq.s32.totalorder %s13, 1
    %p45 = por %p43, %p44
    %p46 = scmp.ne.s32.totalorder %s35, %s36
    %p47 = scmp.eq.s32.totalorder %s13, 0
    %p48 = por %p46, %p47
    %p49 = scmp.ne.s32.totalorder %s35, %s36
    %p50 = scmp.eq.s32.totalorder %s14, 1
    %p51 = por %p49, %p50
    %p53 = scmp.ne.s32.totalorder %s36, %s52
    %p54 = scmp.eq.s32.totalorder %s14, 0
    %p55 = por %p53, %p54
    %s57 = sadd.s32 %s56, 1
    %p60 = scmp.eq.s32.totalorder %s8, 1
    %p61 = scmp.ne.s32.totalorder %s56, %s58
    %p62 = scmp.eq.s32.totalorder %s8, 0
    %p63 = por %p61, %p62
    %p64 = scmp.ne.s32.totalorder %s56, %s58
    %p65 = scmp.eq.s32.totalorder %s13, 1
    %p66 = por %p64, %p65
    %p67 = scmp.ne.s32.totalorder %s58, %s59
    %p68 = scmp.eq.s32.totalorder %s13, 0
    %p69 = por %p67, %p68
    %p70 = scmp.ne.s32.totalorder %s58, %s59
    %p71 = scmp.eq.s32.totalorder %s14, 1
    %p72 = por %p70, %p71
    %p74 = scmp.ne.s32.totalorder %s59, %s73
    %p75 = scmp.eq.s32.totalorder %s14, 0
    %p76 = por %p74, %p75
    %s77 = ssub.s32 %s15, %s27
    %s78 = ssub.s32 %s16, %s23
    %s79 = sor.u32 %s77, %s78
    %p80 = scmp.eq.s32.totalorder %s79, 0
    %s82 = sadd.s32 %s81, 1
    %s83 = scalar_select %p80, %s81, %s82
    %p86 = pneg %p80
    %p87 = scmp.eq.s32.totalorder %s8, 1
    %p88 = por %p86, %p87
    %p89 = scmp.ne.s32.totalorder %s81, %s84
    %p90 = scmp.eq.s32.totalorder %s8, 0
    %p91 = por %p89, %p90
    %p92 = scmp.ne.s32.totalorder %s81, %s84
    %p93 = scmp.eq.s32.totalorder %s13, 1
    %p94 = por %p92, %p93
    %p95 = scmp.ne.s32.totalorder %s84, %s85
    %p96 = scmp.eq.s32.totalorder %s13, 0
    %p97 = por %p95, %p96
    %p98 = scmp.ne.s32.totalorder %s84, %s85
    %p99 = scmp.eq.s32.totalorder %s14, 1
    %p100 = por %p98, %p99
    %p102 = scmp.ne.s32.totalorder %s85, %s101
    %p103 = scmp.eq.s32.totalorder %s14, 0
    %p104 = por %p102, %p103
    %p105 = scmp.le.s32.totalorder 1, %s8
    %p106 = scmp.lt.s32.totalorder %s8, 3
    %p107 = pnand %p105, %p106
    %p108 = pneg %p107
    // Predicated region
    $region9: #{downsample_forward.12} parent=5 // pred_check
      _
    $region10: #{downsample_forward.12} parent=5 // pred_check_branch
      %110 = sbr.rel (%p107) target = $region12
    $region11: #{downsample_forward.12} parent=5 // pred_region
      %s111 = ssub.s32 %s8, 1
      // Predicated region
      $region13: #{downsample_forward.12} parent=11 // pred_check
        %p112 = pneg %p69
      $region14: #{downsample_forward.12} parent=11 // pred_check_branch
        %114 = sbr.rel (%p112) target = $region16
      $region15: #{downsample_forward.12} parent=11 // pred_region
        _
      $region16: #{downsample_forward.12} parent=11 // pred_fallthru
        _
    $region12: #{downsample_forward.12} parent=5 // pred_fallthru
      _
    %p115 = scmp.lt.s32.totalorder %s8, 2
    // Predicated region
    $region17: #{downsample_forward.12} parent=5 // pred_check
      %p116 = pneg %p115
    $region18: #{downsample_forward.12} parent=5 // pred_check_branch
      %118 = sbr.rel (%p116) target = $region20
    $region19: #{downsample_forward.12} parent=5 // pred_region
      // Predicated region
      $region21: #{downsample_forward.12} parent=19 // pred_check
        %p119 = pneg %p42
      $region22: #{downsample_forward.12} parent=19 // pred_check_branch
        %121 = sbr.rel (%p119) target = $region24
      $region23: #{downsample_forward.12} parent=19 // pred_region
        %s122 = smul.u32 8, %s16
        %p123 = scmp.lt.s32.totalorder %s15, 1
        %s124 = scalar_select %p123, %s15, 1
        %p125 = scmp.lt.s32.totalorder %s122, 7
        %s126 = scalar_select %p125, %s122, 7
        %s127 = smul.addr %s124, 8
        %s128 = sadd.s32 %s126, %s127
        %s129 = smul.addr %s128, 8
        %s130 = scalar_lea.vmem %s0, %s129
        %s131 = smul.u32 8, %s16
      $region24: #{downsample_forward.12} parent=19 // pred_fallthru
        _
    $region20: #{downsample_forward.12} parent=5 // pred_fallthru
      _
    %p132 = scmp.le.s32.totalorder 1, %s8
    %p133 = scmp.lt.s32.totalorder %s8, 3
    %p134 = pnand %p132, %p133
    %p135 = pneg %p134
    // Predicated region
    $region25: #{downsample_forward.12} parent=5 // pred_check
      _
    $region26: #{downsample_forward.12} parent=5 // pred_check_branch
      %137 = sbr.rel (%p134) target = $region28
    $region27: #{downsample_forward.12} parent=5 // pred_region
      %s138 = ssub.s32 %s8, 1
      %s139 = smul.u32 8, %s18
      %p140 = scmp.lt.s32.totalorder %s17, 1
      %s141 = scalar_select %p140, %s17, 1
      %p142 = scmp.lt.s32.totalorder %s139, 7
      %s143 = scalar_select %p142, %s139, 7
      %s144 = smul.addr %s141, 8
      %s145 = sadd.s32 %s143, %s144
      %s146 = smul.addr %s145, 8
      %s147 = scalar_lea.vmem %s0, %s146
      %p148 = pneg %p48
      %p149 = pneg %p45
      %p150 = pneg %p69
      %p151 = pneg %p66
      %p152 = pneg %p97
      %p153 = pneg %p94
      %s154 = smul.u32 8, %s18
      %p155 = scmp.lt.s32.totalorder %s17, 1
      %s156 = scalar_select %p155, %s17, 1
      %p157 = scmp.lt.s32.totalorder %s154, 7
      %s158 = scalar_select %p157, %s154, 7
      %s159 = smul.addr %s156, 8
      %s160 = sadd.s32 %s158, %s159
      %s161 = smul.addr %s160, 8
      %s162 = scalar_lea.vmem %s2, %s161
      %s163 = smul.u32 8, %s18
      %p164 = scmp.lt.s32.totalorder %s17, 1
      %s165 = scalar_select %p164, %s17, 1
      %p166 = scmp.lt.s32.totalorder %s163, 7
      %s167 = scalar_select %p166, %s163, 7
      %s168 = smul.addr %s165, 8
      %s169 = sadd.s32 %s167, %s168
      %s170 = smul.addr %s169, 8
      %s171 = scalar_lea.vmem %s0, %s170
      %s172 = smul.u32 8, %s18
      %s173 = smul.u32 8, %s18
      %p174 = scmp.lt.s32.totalorder %s17, 1
      %s175 = scalar_select %p174, %s17, 1
      %p176 = scmp.lt.s32.totalorder %s173, 7
      %s177 = scalar_select %p176, %s173, 7
      %s178 = smul.addr %s175, 8
      %s179 = sadd.s32 %s177, %s178
      %s180 = smul.addr %s179, 8
      %s181 = scalar_lea.vmem %s2, %s180
      %s182 = smul.u32 8, %s18
      %v183 = vld [vmem:[%s171] sm:$0xff]
      %v184 = vld [vmem:[%s171 + $0x8] sm:$0xff]
      %v185 = vld [vmem:[%s171 + $0x10] sm:$0xff]
      %v186 = vld [vmem:[%s171 + $0x18] sm:$0xff]
      %v187 = vld [vmem:[%s171 + $0x20] sm:$0xff]
      %v188 = vld [vmem:[%s171 + $0x28] sm:$0xff]
      %v189 = vld [vmem:[%s171 + $0x30] sm:$0xff]
      %v190 = vld [vmem:[%s171 + $0x38] sm:$0xff]
      %v191 = vld [vmem:[%s1] sm:$0xff]
      %v192 = vld [vmem:[%s1 + $0x8] sm:$0xff]
      %v193 = vld [vmem:[%s1 + $0x10] sm:$0xff]
      %v194 = vld [vmem:[%s1 + $0x18] sm:$0xff]
      %v195 = vld [vmem:[%s1 + $0x20] sm:$0xf]
      %vm196 = vcmask 293888
      %v198 = vsel %vm196, %v183, 0
      %v201 = vsel %vm196, %v184, 0
      %v204 = vsel %vm196, %v185, 0
      %v207 = vsel %vm196, %v186, 0
      %v210 = vsel %vm196, %v187, 0
      %v213 = vsel %vm196, %v188, 0
      %v216 = vsel %vm196, %v189, 0
      %v219 = vsel %vm196, %v190, 0
      %vm221 = vcmask 1043456
      %v223 = vsel %vm221, %v195, 0
      %225 = vmatprep.subr.mxu0 0.0
      %226 = vmatpush1.msra.mxu0 %v191
      %227 = vmatprep.subr.mxu0 0.0
      %228 = vmatpush1.msra.mxu0 %v192
      %229 = vmatprep.subr.mxu0 0.0
      %230 = vmatpush1.msra.mxu0 %v193
      %231 = vmatprep.subr.mxu0 0.0
      %232 = vmatpush1.msra.mxu0 %v194
      %233 = vmatprep.subr.mxu0 0.0
      %234 = vmatpush1.msra.mxu0 %v223
      %235 = vmatprep.subr.mxu0 0.0
      %236 = vmatpush1.msra.mxu0 0.0
      %237 = vmatprep.subr.mxu0 0.0
      %238 = vmatpush1.msra.mxu0 0.0
      %239 = vmatprep.subr.mxu0 0.0
      %240 = vmatpush1.msra.mxu0 0.0
      %241 = vmatprep.subr.mxu0 0.0
      %242 = vmatpush1.msra.mxu0 0.0
      %243 = vmatprep.subr.mxu0 0.0
      %244 = vmatpush1.msra.mxu0 0.0
      %245 = vmatprep.subr.mxu0 0.0
      %246 = vmatpush1.msra.mxu0 0.0
      %247 = vmatprep.subr.mxu0 0.0
      %248 = vmatpush1.msra.mxu0 0.0
      %249 = vmatprep.subr.mxu0 0.0
      %250 = vmatpush1.msra.mxu0 0.0
      %251 = vmatprep.subr.mxu0 0.0
      %252 = vmatpush1.msra.mxu0 0.0
      %253 = vmatprep.subr.mxu0 0.0
      %254 = vmatpush1.msra.mxu0 0.0
      %255 = vmatprep.subr.mxu0 0.0
      %256 = vmatpush1.msra.mxu0 0.0
      %257 = vmatprep.subr.mxu0 0.0
      %258 = vmatpush1.msra.mxu0 0.0
      %259 = vmatprep.subr.mxu0 0.0
      %260 = vmatpush1.msra.mxu0 0.0
      %261 = vmatprep.subr.mxu0 0.0
      %262 = vmatpush1.msra.mxu0 0.0
      %263 = vmatprep.subr.mxu0 0.0
      %264 = vmatpush1.msra.mxu0 0.0
      %265 = vmatprep.subr.mxu0 0.0
      %266 = vmatpush1.msra.mxu0 0.0
      %267 = vmatprep.subr.mxu0 0.0
      %268 = vmatpush1.msra.mxu0 0.0
      %269 = vmatprep.subr.mxu0 0.0
      %270 = vmatpush1.msra.mxu0 0.0
      %271 = vmatprep.subr.mxu0 0.0
      %272 = vmatpush1.msra.mxu0 0.0
      %273 = vmatprep.subr.mxu0 0.0
      %274 = vmatpush1.msra.mxu0 0.0
      %275 = vmatprep.subr.mxu0 0.0
      %276 = vmatpush1.msra.mxu0 0.0
      %277 = vmatprep.subr.mxu0 0.0
      %278 = vmatpush1.msra.mxu0 0.0
      %279 = vmatprep.subr.mxu0 0.0
      %280 = vmatpush1.msra.mxu0 0.0
      %281 = vmatprep.subr.mxu0 0.0
      %282 = vmatpush1.msra.mxu0 0.0
      %283 = vmatprep.subr.mxu0 0.0
      %284 = vmatpush1.msra.mxu0 0.0
      %285 = vmatprep.subr.mxu0 0.0
      %286 = vmatpush1.msra.mxu0 0.0
      %287 = vmatprep.subr.mxu0 0.0
      %288 = vmatpush1.msra.mxu0 0.0
      %289 = vmatprep.mubr.f32.mxu0 0.0
      %290 = vmatmul.mubr.f32.gmra.mrb[0].mxu0 %v198
      %v291 = vpop.f32.mrb[0].mxu0
      %v292 = vadd.f32 0.0, %v291
      %v293 = vpop.f32.mrb[0].mxu0
      %294 = vmatprep.mubr.f32.mxu0 0.0
      %295 = vmatmul.mubr.f32.gmra.mrb[0].mxu0 %v201
      %v296 = vpop.f32.mrb[0].mxu0
      %v297 = vadd.f32 0.0, %v296
      %v298 = vpop.f32.mrb[0].mxu0
      %299 = vmatprep.mubr.f32.mxu0 0.0
      %300 = vmatmul.mubr.f32.gmra.mrb[0].mxu0 %v204
      %v301 = vpop.f32.mrb[0].mxu0
      %v302 = vadd.f32 0.0, %v301
      %v303 = vpop.f32.mrb[0].mxu0
      %304 = vmatprep.mubr.f32.mxu0 0.0
      %305 = vmatmul.mubr.f32.gmra.mrb[0].mxu0 %v207
      %v306 = vpop.f32.mrb[0].mxu0
      %v307 = vadd.f32 0.0, %v306
      %v308 = vpop.f32.mrb[0].mxu0
      %309 = vmatprep.mubr.f32.mxu0 0.0
      %310 = vmatmul.mubr.f32.gmra.mrb[0].mxu0 %v210
      %v311 = vpop.f32.mrb[0].mxu0
      %v312 = vadd.f32 0.0, %v311
      %v313 = vpop.f32.mrb[0].mxu0
      %314 = vmatprep.mubr.f32.mxu0 0.0
      %315 = vmatmul.mubr.f32.gmra.mrb[0].mxu0 %v213
      %v316 = vpop.f32.mrb[0].mxu0
      %v317 = vadd.f32 0.0, %v316
      %v318 = vpop.f32.mrb[0].mxu0
      %319 = vmatprep.mubr.f32.mxu0 0.0
      %320 = vmatmul.mubr.f32.gmra.mrb[0].mxu0 %v216
      %v321 = vpop.f32.mrb[0].mxu0
      %v322 = vadd.f32 0.0, %v321
      %v323 = vpop.f32.mrb[0].mxu0
      %324 = vmatprep.mubr.f32.mxu0 0.0
      %325 = vmatmul.mubr.f32.gmra.mrb[0].mxu0 %v219
      %v326 = vpop.f32.mrb[0].mxu0
      %v327 = vadd.f32 0.0, %v326
      %v328 = vpop.f32.mrb[0].mxu0
      %329 = vdwg.mxu0
      %vm330 = vcmask 31744
      %331 = vst.msk [vmem:[%s181] sm:$0xff] %vm330, %v292
      %332 = vst.msk [vmem:[%s181 + $0x8] sm:$0xff] %vm330, %v297
      %333 = vst.msk [vmem:[%s181 + $0x10] sm:$0xff] %vm330, %v302
      %334 = vst.msk [vmem:[%s181 + $0x18] sm:$0xff] %vm330, %v307
      %335 = vst.msk [vmem:[%s181 + $0x20] sm:$0xff] %vm330, %v312
      %336 = vst.msk [vmem:[%s181 + $0x28] sm:$0xff] %vm330, %v317
      %337 = vst.msk [vmem:[%s181 + $0x30] sm:$0xff] %vm330, %v322
      %338 = vst.msk [vmem:[%s181 + $0x38] sm:$0xff] %vm330, %v327
      %s339 = smul.u32 8, %s18
      %p340 = scmp.lt.s32.totalorder %s17, 1
      %s341 = scalar_select %p340, %s17, 1
      %p342 = scmp.lt.s32.totalorder %s339, 7
      %s343 = scalar_select %p342, %s339, 7
      %s344 = smul.addr %s341, 8
      %s345 = sadd.s32 %s343, %s344
      %s346 = smul.addr %s345, 8
      %s347 = scalar_lea.vmem %s2, %s346
      // Predicated region
      $region29: #{downsample_forward.12} parent=27 // pred_check
        %p348 = pneg %p94
      $region30: #{downsample_forward.12} parent=27 // pred_check_branch
        %350 = sbr.rel (%p348) target = $region32
      $region31: #{downsample_forward.12} parent=27 // pred_region
        %s351 = smul.u32 8, %s18
      $region32: #{downsample_forward.12} parent=27 // pred_fallthru
        _
    $region28: #{downsample_forward.12} parent=5 // pred_fallthru
      _
    %p352 = scmp.le.s32.totalorder 2, %s8
    // Predicated region
    $region33: #{downsample_forward.12} parent=5 // pred_check
      %p353 = pneg %p352
    $region34: #{downsample_forward.12} parent=5 // pred_check_branch
      %355 = sbr.rel (%p353) target = $region36
    $region35: #{downsample_forward.12} parent=5 // pred_region
      %s356 = ssub.s32 %s8, 2
      // Predicated region
      $region37: #{downsample_forward.12} parent=35 // pred_check
        %p357 = pneg %p100
      $region38: #{downsample_forward.12} parent=35 // pred_check_branch
        %359 = sbr.rel (%p357) target = $region40
      $region39: #{downsample_forward.12} parent=35 // pred_region
        %s360 = smul.u32 8, %s20
        %p361 = scmp.lt.s32.totalorder %s19, 1
        %s362 = scalar_select %p361, %s19, 1
        %p363 = scmp.lt.s32.totalorder %s360, 7
        %s364 = scalar_select %p363, %s360, 7
        %s365 = smul.addr %s362, 8
        %s366 = sadd.s32 %s364, %s365
        %s367 = smul.addr %s366, 8
        %s368 = scalar_lea.vmem %s2, %s367
      $region40: #{downsample_forward.12} parent=35 // pred_fallthru
        _
    $region36: #{downsample_forward.12} parent=5 // pred_fallthru
      _
  $region6: #{downsample_forward.12} parent=0 // loop_footer
    %s12 = sadd.s32 1, %s8
  $region7: #{downsample_forward.12} parent=0 // loop_footer_branch
    %7 = sbr.rel target = $region3
  $region8: #{downsample_forward.12} parent=0 // loop_exit
    _

// kernel: downsample_forward.15
$region0: #{downsample_forward.15}
  #allocation0 [shape = 'u32[]', space=smem, size = 0x4, offset = 0x4, fixed_abs, tag = 'smem constant byte address 0x4 - core index']
  #allocation1 [shape = 'u32[144,128]{1,0:T(1,128)}', space=vmem, size = 0x12000, scoped, tag = 'internal scratch']
  %s0 = inlined_call_operand.vmem [shape: f32[2,16,36], index: 0, kind: input, shape index: {}]
  %s1 = inlined_call_operand.vmem [shape: f32[36,8], index: 1, kind: input, shape index: {}]
  %s2 = inlined_call_operand.vmem [shape: f32[2,16,8], index: 2, kind: output, shape index: {}]
  %s3 = sld [smem:[#allocation0]]
  $region41: #{downsample_forward.15} parent=0
    _
  %s5 = ssub.s32 1, %s3
  %s6 = scalar_select 0, %s5, %s3
  loop: start=0, step=1, limit=4
  $region2: #{downsample_forward.15} parent=0 // loop_pre_header
    _
  $region3: #{downsample_forward.15} parent=0 // loop_header
    %s8 = sphi 0, %s12
    %p9 = scmp.ge.s32.totalorder %s8, 4
    %s15 = sphi 0, %s27
    %s16 = sphi 0, %s23
    %s17 = sphi 0, %s15
    %s18 = sphi 0, %s16
    %s19 = sphi 0, %s17
    %s20 = sphi 0, %s18
    %s32 = sphi 0, %s34
    %s35 = sphi 0, %s32
    %s36 = sphi 0, %s35
    %s52 = sphi 0, %s36
    %s56 = sphi 0, %s56
    %s58 = sphi 0, %s56
    %s59 = sphi 0, %s58
    %s73 = sphi 0, %s59
    %s81 = sphi 0, %s83
    %s84 = sphi 0, %s81
    %s85 = sphi 0, %s84
    %s101 = sphi 0, %s85
  $region4: #{downsample_forward.15} parent=0 // loop_header_branch
    %11 = sbr.rel (%p9) target = $region8
  $region5: #{downsample_forward.15} parent=0 // loop_body
    %s13 = ssub.s32 %s8, 1
    %s14 = ssub.s32 %s8, 2
    %s21 = sadd.s32 1, %s16
    %p22 = scmp.ge.s32.totalorder %s21, 1
    %s23 = scalar_select %p22, 0, %s21
    %s24 = sadd.s32 1, %s15
    %s25 = scalar_select %p22, %s24, %s15
    %p26 = scmp.ge.s32.totalorder %s25, 2
    %s27 = scalar_select %p26, 0, %s25
    %s28 = ssub.s32 %s15, %s27
    %s29 = ssub.s32 %s16, %s23
    %s30 = sor.u32 %s28, %s29
    %p31 = scmp.eq.s32.totalorder %s30, 0
    %s33 = sadd.s32 %s32, 1
    %s34 = scalar_select %p31, %s32, %s33
    %p37 = pneg %p31
    %p38 = scmp.eq.s32.totalorder %s8, 1
    %p39 = por %p37, %p38
    %p40 = scmp.ne.s32.totalorder %s32, %s35
    %p41 = scmp.eq.s32.totalorder %s8, 0
    %p42 = por %p40, %p41
    %p43 = scmp.ne.s32.totalorder %s32, %s35
    %p44 = scmp.eq.s32.totalorder %s13, 1
    %p45 = por %p43, %p44
    %p46 = scmp.ne.s32.totalorder %s35, %s36
    %p47 = scmp.eq.s32.totalorder %s13, 0
    %p48 = por %p46, %p47
    %p49 = scmp.ne.s32.totalorder %s35, %s36
    %p50 = scmp.eq.s32.totalorder %s14, 1
    %p51 = por %p49, %p50
    %p53 = scmp.ne.s32.totalorder %s36, %s52
    %p54 = scmp.eq.s32.totalorder %s14, 0
    %p55 = por %p53, %p54
    %s57 = sadd.s32 %s56, 1
    %p60 = scmp.eq.s32.totalorder %s8, 1
    %p61 = scmp.ne.s32.totalorder %s56, %s58
    %p62 = scmp.eq.s32.totalorder %s8, 0
    %p63 = por %p61, %p62
    %p64 = scmp.ne.s32.totalorder %s56, %s58
    %p65 = scmp.eq.s32.totalorder %s13, 1
    %p66 = por %p64, %p65
    %p67 = scmp.ne.s32.totalorder %s58, %s59
    %p68 = scmp.eq.s32.totalorder %s13, 0
    %p69 = por %p67, %p68
    %p70 = scmp.ne.s32.totalorder %s58, %s59
    %p71 = scmp.eq.s32.totalorder %s14, 1
    %p72 = por %p70, %p71
    %p74 = scmp.ne.s32.totalorder %s59, %s73
    %p75 = scmp.eq.s32.totalorder %s14, 0
    %p76 = por %p74, %p75
    %s77 = ssub.s32 %s15, %s27
    %s78 = ssub.s32 %s16, %s23
    %s79 = sor.u32 %s77, %s78
    %p80 = scmp.eq.s32.totalorder %s79, 0
    %s82 = sadd.s32 %s81, 1
    %s83 = scalar_select %p80, %s81, %s82
    %p86 = pneg %p80
    %p87 = scmp.eq.s32.totalorder %s8, 1
    %p88 = por %p86, %p87
    %p89 = scmp.ne.s32.totalorder %s81, %s84
    %p90 = scmp.eq.s32.totalorder %s8, 0
    %p91 = por %p89, %p90
    %p92 = scmp.ne.s32.totalorder %s81, %s84
    %p93 = scmp.eq.s32.totalorder %s13, 1
    %p94 = por %p92, %p93
    %p95 = scmp.ne.s32.totalorder %s84, %s85
    %p96 = scmp.eq.s32.totalorder %s13, 0
    %p97 = por %p95, %p96
    %p98 = scmp.ne.s32.totalorder %s84, %s85
    %p99 = scmp.eq.s32.totalorder %s14, 1
    %p100 = por %p98, %p99
    %p102 = scmp.ne.s32.totalorder %s85, %s101
    %p103 = scmp.eq.s32.totalorder %s14, 0
    %p104 = por %p102, %p103
    %p105 = scmp.le.s32.totalorder 1, %s8
    %p106 = scmp.lt.s32.totalorder %s8, 3
    %p107 = pnand %p105, %p106
    %p108 = pneg %p107
    // Predicated region
    $region9: #{downsample_forward.15} parent=5 // pred_check
      _
    $region10: #{downsample_forward.15} parent=5 // pred_check_branch
      %110 = sbr.rel (%p107) target = $region12
    $region11: #{downsample_forward.15} parent=5 // pred_region
      %s111 = ssub.s32 %s8, 1
      // Predicated region
      $region13: #{downsample_forward.15} parent=11 // pred_check
        %p112 = pneg %p69
      $region14: #{downsample_forward.15} parent=11 // pred_check_branch
        %114 = sbr.rel (%p112) target = $region16
      $region15: #{downsample_forward.15} parent=11 // pred_region
        _
      $region16: #{downsample_forward.15} parent=11 // pred_fallthru
        _
    $region12: #{downsample_forward.15} parent=5 // pred_fallthru
      _
    %p115 = scmp.lt.s32.totalorder %s8, 2
    // Predicated region
    $region17: #{downsample_forward.15} parent=5 // pred_check
      %p116 = pneg %p115
    $region18: #{downsample_forward.15} parent=5 // pred_check_branch
      %118 = sbr.rel (%p116) target = $region20
    $region19: #{downsample_forward.15} parent=5 // pred_region
      // Predicated region
      $region21: #{downsample_forward.15} parent=19 // pred_check
        %p119 = pneg %p42
      $region22: #{downsample_forward.15} parent=19 // pred_check_branch
        %121 = sbr.rel (%p119) target = $region24
      $region23: #{downsample_forward.15} parent=19 // pred_region
        %s122 = smul.u32 2, %s16
        %p123 = scmp.lt.s32.totalorder %s15, 1
        %s124 = scalar_select %p123, %s15, 1
        %p125 = scmp.lt.s32.totalorder %s122, 1
        %s126 = scalar_select %p125, %s122, 1
        %s127 = smul.addr %s124, 2
        %s128 = sadd.s32 %s126, %s127
        %s129 = smul.addr %s128, 8
        %s130 = scalar_lea.vmem %s0, %s129
        %s131 = smul.u32 2, %s16
      $region24: #{downsample_forward.15} parent=19 // pred_fallthru
        _
    $region20: #{downsample_forward.15} parent=5 // pred_fallthru
      _
    %p132 = scmp.le.s32.totalorder 1, %s8
    %p133 = scmp.lt.s32.totalorder %s8, 3
    %p134 = pnand %p132, %p133
    %p135 = pneg %p134
    // Predicated region
    $region25: #{downsample_forward.15} parent=5 // pred_check
      _
    $region26: #{downsample_forward.15} parent=5 // pred_check_branch
      %137 = sbr.rel (%p134) target = $region28
    $region27: #{downsample_forward.15} parent=5 // pred_region
      %s138 = ssub.s32 %s8, 1
      %s139 = smul.u32 2, %s18
      %p140 = scmp.lt.s32.totalorder %s17, 1
      %s141 = scalar_select %p140, %s17, 1
      %p142 = scmp.lt.s32.totalorder %s139, 1
      %s143 = scalar_select %p142, %s139, 1
      %s144 = smul.addr %s141, 2
      %s145 = sadd.s32 %s143, %s144
      %s146 = smul.addr %s145, 8
      %s147 = scalar_lea.vmem %s0, %s146
      %p148 = pneg %p48
      %p149 = pneg %p45
      %p150 = pneg %p69
      %p151 = pneg %p66
      %p152 = pneg %p97
      %p153 = pneg %p94
      %s154 = smul.u32 2, %s18
      %p155 = scmp.lt.s32.totalorder %s17, 1
      %s156 = scalar_select %p155, %s17, 1
      %p157 = scmp.lt.s32.totalorder %s154, 1
      %s158 = scalar_select %p157, %s154, 1
      %s159 = smul.addr %s156, 2
      %s160 = sadd.s32 %s158, %s159
      %s161 = smul.addr %s160, 8
      %s162 = scalar_lea.vmem %s2, %s161
      %s163 = smul.u32 2, %s18
      %p164 = scmp.lt.s32.totalorder %s17, 1
      %s165 = scalar_select %p164, %s17, 1
      %p166 = scmp.lt.s32.totalorder %s163, 1
      %s167 = scalar_select %p166, %s163, 1
      %s168 = smul.addr %s165, 2
      %s169 = sadd.s32 %s167, %s168
      %s170 = smul.addr %s169, 8
      %s171 = scalar_lea.vmem %s0, %s170
      %s172 = smul.u32 2, %s18
      %s173 = smul.u32 2, %s18
      %p174 = scmp.lt.s32.totalorder %s17, 1
      %s175 = scalar_select %p174, %s17, 1
      %p176 = scmp.lt.s32.totalorder %s173, 1
      %s177 = scalar_select %p176, %s173, 1
      %s178 = smul.addr %s175, 2
      %s179 = sadd.s32 %s177, %s178
      %s180 = smul.addr %s179, 8
      %s181 = scalar_lea.vmem %s2, %s180
      %s182 = smul.u32 2, %s18
      %v183 = vld [vmem:[%s171] sm:$0xff]
      %v184 = vld [vmem:[%s171 + $0x8] sm:$0xff]
      %v185 = vld [vmem:[%s1] sm:$0xff]
      %v186 = vld [vmem:[%s1 + $0x8] sm:$0xff]
      %v187 = vld [vmem:[%s1 + $0x10] sm:$0xff]
      %v188 = vld [vmem:[%s1 + $0x18] sm:$0xff]
      %v189 = vld [vmem:[%s1 + $0x20] sm:$0xf]
      %vm190 = vcmask 293888
      %v192 = vsel %vm190, %v183, 0
      %v195 = vsel %vm190, %v184, 0
      %vm197 = vcmask 1043456
      %v199 = vsel %vm197, %v189, 0
      %201 = vmatprep.subr.mxu0 0.0
      %202 = vmatpush1.msra.mxu0 %v185
      %203 = vmatprep.subr.mxu0 0.0
      %204 = vmatpush1.msra.mxu0 %v186
      %205 = vmatprep.subr.mxu0 0.0
      %206 = vmatpush1.msra.mxu0 %v187
      %207 = vmatprep.subr.mxu0 0.0
      %208 = vmatpush1.msra.mxu0 %v188
      %209 = vmatprep.subr.mxu0 0.0
      %210 = vmatpush1.msra.mxu0 %v199
      %211 = vmatprep.subr.mxu0 0.0
      %212 = vmatpush1.msra.mxu0 0.0
      %213 = vmatprep.subr.mxu0 0.0
      %214 = vmatpush1.msra.mxu0 0.0
      %215 = vmatprep.subr.mxu0 0.0
      %216 = vmatpush1.msra.mxu0 0.0
      %217 = vmatprep.subr.mxu0 0.0
      %218 = vmatpush1.msra.mxu0 0.0
      %219 = vmatprep.subr.mxu0 0.0
      %220 = vmatpush1.msra.mxu0 0.0
      %221 = vmatprep.subr.mxu0 0.0
      %222 = vmatpush1.msra.mxu0 0.0
      %223 = vmatprep.subr.mxu0 0.0
      %224 = vmatpush1.msra.mxu0 0.0
      %225 = vmatprep.subr.mxu0 0.0
      %226 = vmatpush1.msra.mxu0 0.0
      %227 = vmatprep.subr.mxu0 0.0
      %228 = vmatpush1.msra.mxu0 0.0
      %229 = vmatprep.subr.mxu0 0.0
      %230 = vmatpush1.msra.mxu0 0.0
      %231 = vmatprep.subr.mxu0 0.0
      %232 = vmatpush1.msra.mxu0 0.0
      %233 = vmatprep.subr.mxu0 0.0
      %234 = vmatpush1.msra.mxu0 0.0
      %235 = vmatprep.subr.mxu0 0.0
      %236 = vmatpush1.msra.mxu0 0.0
      %237 = vmatprep.subr.mxu0 0.0
      %238 = vmatpush1.msra.mxu0 0.0
      %239 = vmatprep.subr.mxu0 0.0
      %240 = vmatpush1.msra.mxu0 0.0
      %241 = vmatprep.subr.mxu0 0.0
      %242 = vmatpush1.msra.mxu0 0.0
      %243 = vmatprep.subr.mxu0 0.0
      %244 = vmatpush1.msra.mxu0 0.0
      %245 = vmatprep.subr.mxu0 0.0
      %246 = vmatpush1.msra.mxu0 0.0
      %247 = vmatprep.subr.mxu0 0.0
      %248 = vmatpush1.msra.mxu0 0.0
      %249 = vmatprep.subr.mxu0 0.0
      %250 = vmatpush1.msra.mxu0 0.0
      %251 = vmatprep.subr.mxu0 0.0
      %252 = vmatpush1.msra.mxu0 0.0
      %253 = vmatprep.subr.mxu0 0.0
      %254 = vmatpush1.msra.mxu0 0.0
      %255 = vmatprep.subr.mxu0 0.0
      %256 = vmatpush1.msra.mxu0 0.0
      %257 = vmatprep.subr.mxu0 0.0
      %258 = vmatpush1.msra.mxu0 0.0
      %259 = vmatprep.subr.mxu0 0.0
      %260 = vmatpush1.msra.mxu0 0.0
      %261 = vmatprep.subr.mxu0 0.0
      %262 = vmatpush1.msra.mxu0 0.0
      %263 = vmatprep.subr.mxu0 0.0
      %264 = vmatpush1.msra.mxu0 0.0
      %265 = vmatprep.mubr.f32.mxu0 0.0
      %266 = vmatmul.mubr.f32.gmra.mrb[0].mxu0 %v192
      %v267 = vpop.f32.mrb[0].mxu0
      %v268 = vadd.f32 0.0, %v267
      %v269 = vpop.f32.mrb[0].mxu0
      %270 = vmatprep.mubr.f32.mxu0 0.0
      %271 = vmatmul.mubr.f32.gmra.mrb[0].mxu0 %v195
      %v272 = vpop.f32.mrb[0].mxu0
      %v273 = vadd.f32 0.0, %v272
      %v274 = vpop.f32.mrb[0].mxu0
      %275 = vdwg.mxu0
      %vm276 = vcmask 64512
      %277 = vst.msk [vmem:[%s181] sm:$0xff] %vm276, %v268
      %278 = vst.msk [vmem:[%s181 + $0x8] sm:$0xff] %vm276, %v273
      %s279 = smul.u32 2, %s18
      %p280 = scmp.lt.s32.totalorder %s17, 1
      %s281 = scalar_select %p280, %s17, 1
      %p282 = scmp.lt.s32.totalorder %s279, 1
      %s283 = scalar_select %p282, %s279, 1
      %s284 = smul.addr %s281, 2
      %s285 = sadd.s32 %s283, %s284
      %s286 = smul.addr %s285, 8
      %s287 = scalar_lea.vmem %s2, %s286
      // Predicated region
      $region29: #{downsample_forward.15} parent=27 // pred_check
        %p288 = pneg %p94
      $region30: #{downsample_forward.15} parent=27 // pred_check_branch
        %290 = sbr.rel (%p288) target = $region32
      $region31: #{downsample_forward.15} parent=27 // pred_region
        %s291 = smul.u32 2, %s18
      $region32: #{downsample_forward.15} parent=27 // pred_fallthru
        _
    $region28: #{downsample_forward.15} parent=5 // pred_fallthru
      _
    %p292 = scmp.le.s32.totalorder 2, %s8
    // Predicated region
    $region33: #{downsample_forward.15} parent=5 // pred_check
      %p293 = pneg %p292
    $region34: #{downsample_forward.15} parent=5 // pred_check_branch
      %295 = sbr.rel (%p293) target = $region36
    $region35: #{downsample_forward.15} parent=5 // pred_region
      %s296 = ssub.s32 %s8, 2
      // Predicated region
      $region37: #{downsample_forward.15} parent=35 // pred_check
        %p297 = pneg %p100
      $region38: #{downsample_forward.15} parent=35 // pred_check_branch
        %299 = sbr.rel (%p297) target = $region40
      $region39: #{downsample_forward.15} parent=35 // pred_region
        %s300 = smul.u32 2, %s20
        %p301 = scmp.lt.s32.totalorder %s19, 1
        %s302 = scalar_select %p301, %s19, 1
        %p303 = scmp.lt.s32.totalorder %s300, 1
        %s304 = scalar_select %p303, %s300, 1
        %s305 = smul.addr %s302, 2
        %s306 = sadd.s32 %s304, %s305
        %s307 = smul.addr %s306, 8
        %s308 = scalar_lea.vmem %s2, %s307
      $region40: #{downsample_forward.15} parent=35 // pred_fallthru
        _
    $region36: #{downsample_forward.15} parent=5 // pred_fallthru
      _
  $region6: #{downsample_forward.15} parent=0 // loop_footer
    %s12 = sadd.s32 1, %s8
  $region7: #{downsample_forward.15} parent=0 // loop_footer_branch
    %7 = sbr.rel target = $region3
  $region8: #{downsample_forward.15} parent=0 // loop_exit
    _

// kernel: downsample_forward.13
$region0: #{downsample_forward.13}
  #allocation0 [shape = 'u32[]', space=smem, size = 0x4, offset = 0x4, fixed_abs, tag = 'smem constant byte address 0x4 - core index']
  #allocation1 [shape = 'u32[144,128]{1,0:T(1,128)}', space=vmem, size = 0x12000, scoped, tag = 'internal scratch']
  #allocation2 [shape = 'f32[64,36]{1,0:T(8,128)}', space=vmem, size = 0x8000, scoped, tag = 'scratch operand']
  #allocation3 [shape = 'f32[64,36]{1,0:T(8,128)}', space=vmem, size = 0x8000, scoped, tag = 'scratch operand']
  #allocation4 [shape = 'f32[100,4]{1,0:T(8,128)}', space=vmem, size = 0xd000, scoped, tag = 'scratch operand']
  %s0 = inlined_call_operand.vmem [shape: f32[2,100,4], index: 0, kind: input, shape index: {}]
  %s1 = inlined_call_operand.vmem [shape: f32[36,4], index: 1, kind: input, shape index: {}]
  %s2 = inlined_call_operand.vmem [shape: f32[1,4], index: 2, kind: input, shape index: {}]
  %s3 = inlined_call_operand.vmem [shape: f32[1,4], index: 3, kind: input, shape index: {}]
  %s4 = inlined_call_operand.vmem [shape: f32[36,4], index: 4, kind: input, shape index: {}]
  %s5 = inlined_call_operand.vmem [shape: f32[1,4], index: 5, kind: input, shape index: {}]
  %s6 = inlined_call_operand.vmem [shape: f32[1,4], index: 6, kind: input, shape index: {}]
  %s7 = inlined_call_operand.vmem [shape: f32[2,64,4], index: 7, kind: output, shape index: {}]
  %s8 = sld [smem:[#allocation0]]
  $region61: #{downsample_forward.13} parent=0
    _
  %s10 = ssub.s32 1, %s8
  %s11 = scalar_select 0, %s10, %s8
  loop: start=0, step=1, limit=4
  $region2: #{downsample_forward.13} parent=0 // loop_pre_header
    _
  $region3: #{downsample_forward.13} parent=0 // loop_header
    %s13 = sphi 0, %s17
    %p14 = scmp.ge.s32.totalorder %s13, 4
    %s23 = sphi 0, %s25
    %s26 = sphi 0, %s23
    %s27 = sphi 0, %s26
    %s43 = sphi 0, %s27
    %s47 = sphi 0, %s47
    %s49 = sphi 0, %s47
    %s50 = sphi 0, %s49
    %s64 = sphi 0, %s50
    %s68 = sphi 0, %s68
    %s70 = sphi 0, %s68
    %s71 = sphi 0, %s70
    %s85 = sphi 0, %s71
    %s89 = sphi 0, %s89
    %s91 = sphi 0, %s89
    %s92 = sphi 0, %s91
    %s106 = sphi 0, %s92
    %s110 = sphi 0, %s110
    %s112 = sphi 0, %s110
    %s113 = sphi 0, %s112
    %s127 = sphi 0, %s113
    %s131 = sphi 0, %s131
    %s133 = sphi 0, %s131
    %s134 = sphi 0, %s133
    %s148 = sphi 0, %s134
    %s152 = sphi 0, %s152
    %s154 = sphi 0, %s152
    %s155 = sphi 0, %s154
    %s169 = sphi 0, %s155
    %s175 = sphi 0, %s177
    %s178 = sphi 0, %s175
    %s179 = sphi 0, %s178
    %s195 = sphi 0, %s179
  $region4: #{downsample_forward.13} parent=0 // loop_header_branch
    %16 = sbr.rel (%p14) target = $region8
  $region5: #{downsample_forward.13} parent=0 // loop_body
    %s18 = ssub.s32 %s13, 1
    %s19 = ssub.s32 %s13, 2
    %s20 = sadd.s32 %s13, 1
    %s21 = ssub.s32 %s13, %s20
    %p22 = scmp.eq.s32.totalorder %s21, 0
    %s24 = sadd.s32 %s23, 1
    %s25 = scalar_select %p22, %s23, %s24
    %p28 = pneg %p22
    %p29 = scmp.eq.s32.totalorder %s13, 1
    %p30 = por %p28, %p29
    %p31 = scmp.ne.s32.totalorder %s23, %s26
    %p32 = scmp.eq.s32.totalorder %s13, 0
    %p33 = por %p31, %p32
    %p34 = scmp.ne.s32.totalorder %s23, %s26
    %p35 = scmp.eq.s32.totalorder %s18, 1
    %p36 = por %p34, %p35
    %p37 = scmp.ne.s32.totalorder %s26, %s27
    %p38 = scmp.eq.s32.totalorder %s18, 0
    %p39 = por %p37, %p38
    %p40 = scmp.ne.s32.totalorder %s26, %s27
    %p41 = scmp.eq.s32.totalorder %s19, 1
    %p42 = por %p40, %p41
    %p44 = scmp.ne.s32.totalorder %s27, %s43
    %p45 = scmp.eq.s32.totalorder %s19, 0
    %p46 = por %p44, %p45
    %s48 = sadd.s32 %s47, 1
    %p51 = scmp.eq.s32.totalorder %s13, 1
    %p52 = scmp.ne.s32.totalorder %s47, %s49
    %p53 = scmp.eq.s32.totalorder %s13, 0
    %p54 = por %p52, %p53
    %p55 = scmp.ne.s32.totalorder %s47, %s49
    %p56 = scmp.eq.s32.totalorder %s18, 1
    %p57 = por %p55, %p56
    %p58 = scmp.ne.s32.totalorder %s49, %s50
    %p59 = scmp.eq.s32.totalorder %s18, 0
    %p60 = por %p58, %p59
    %p61 = scmp.ne.s32.totalorder %s49, %s50
    %p62 = scmp.eq.s32.totalorder %s19, 1
    %p63 = por %p61, %p62
    %p65 = scmp.ne.s32.totalorder %s50, %s64
    %p66 = scmp.eq.s32.totalorder %s19, 0
    %p67 = por %p65, %p66
    %s69 = sadd.s32 %s68, 1
    %p72 = scmp.eq.s32.totalorder %s13, 1
    %p73 = scmp.ne.s32.totalorder %s68, %s70
    %p74 = scmp.eq.s32.totalorder %s13, 0
    %p75 = por %p73, %p74
    %p76 = scmp.ne.s32.totalorder %s68, %s70
    %p77 = scmp.eq.s32.totalorder %s18, 1
    %p78 = por %p76, %p77
    %p79 = scmp.ne.s32.totalorder %s70, %s71
    %p80 = scmp.eq.s32.totalorder %s18, 0
    %p81 = por %p79, %p80
    %p82 = scmp.ne.s32.totalorder %s70, %s71
    %p83 = scmp.eq.s32.totalorder %s19, 1
    %p84 = por %p82, %p83
    %p86 = scmp.ne.s32.totalorder %s71, %s85
    %p87 = scmp.eq.s32.totalorder %s19, 0
    %p88 = por %p86, %p87
    %s90 = sadd.s32 %s89, 1
    %p93 = scmp.eq.s32.totalorder %s13, 1
    %p94 = scmp.ne.s32.totalorder %s89, %s91
    %p95 = scmp.eq.s32.totalorder %s13, 0
    %p96 = por %p94, %p95
    %p97 = scmp.ne.s32.totalorder %s89, %s91
    %p98 = scmp.eq.s32.totalorder %s18, 1
    %p99 = por %p97, %p98
    %p100 = scmp.ne.s32.totalorder %s91, %s92
    %p101 = scmp.eq.s32.totalorder %s18, 0
    %p102 = por %p100, %p101
    %p103 = scmp.ne.s32.totalorder %s91, %s92
    %p104 = scmp.eq.s32.totalorder %s19, 1
    %p105 = por %p103, %p104
    %p107 = scmp.ne.s32.totalorder %s92, %s106
    %p108 = scmp.eq.s32.totalorder %s19, 0
    %p109 = por %p107, %p108
    %s111 = sadd.s32 %s110, 1
    %p114 = scmp.eq.s32.totalorder %s13, 1
    %p115 = scmp.ne.s32.totalorder %s110, %s112
    %p116 = scmp.eq.s32.totalorder %s13, 0
    %p117 = por %p115, %p116
    %p118 = scmp.ne.s32.totalorder %s110, %s112
    %p119 = scmp.eq.s32.totalorder %s18, 1
    %p120 = por %p118, %p119
    %p121 = scmp.ne.s32.totalorder %s112, %s113
    %p122 = scmp.eq.s32.totalorder %s18, 0
    %p123 = por %p121, %p122
    %p124 = scmp.ne.s32.totalorder %s112, %s113
    %p125 = scmp.eq.s32.totalorder %s19, 1
    %p126 = por %p124, %p125
    %p128 = scmp.ne.s32.totalorder %s113, %s127
    %p129 = scmp.eq.s32.totalorder %s19, 0
    %p130 = por %p128, %p129
    %s132 = sadd.s32 %s131, 1
    %p135 = scmp.eq.s32.totalorder %s13, 1
    %p136 = scmp.ne.s32.totalorder %s131, %s133
    %p137 = scmp.eq.s32.totalorder %s13, 0
    %p138 = por %p136, %p137
    %p139 = scmp.ne.s32.totalorder %s131, %s133
    %p140 = scmp.eq.s32.totalorder %s18, 1
    %p141 = por %p139, %p140
    %p142 = scmp.ne.s32.totalorder %s133, %s134
    %p143 = scmp.eq.s32.totalorder %s18, 0
    %p144 = por %p142, %p143
    %p145 = scmp.ne.s32.totalorder %s133, %s134
    %p146 = scmp.eq.s32.totalorder %s19, 1
    %p147 = por %p145, %p146
    %p149 = scmp.ne.s32.totalorder %s134, %s148
    %p150 = scmp.eq.s32.totalorder %s19, 0
    %p151 = por %p149, %p150
    %s153 = sadd.s32 %s152, 1
    %p156 = scmp.eq.s32.totalorder %s13, 1
    %p157 = scmp.ne.s32.totalorder %s152, %s154
    %p158 = scmp.eq.s32.totalorder %s13, 0
    %p159 = por %p157, %p158
    %p160 = scmp.ne.s32.totalorder %s152, %s154
    %p161 = scmp.eq.s32.totalorder %s18, 1
    %p162 = por %p160, %p161
    %p163 = scmp.ne.s32.totalorder %s154, %s155
    %p164 = scmp.eq.s32.totalorder %s18, 0
    %p165 = por %p163, %p164
    %p166 = scmp.ne.s32.totalorder %s154, %s155
    %p167 = scmp.eq.s32.totalorder %s19, 1
    %p168 = por %p166, %p167
    %p170 = scmp.ne.s32.totalorder %s155, %s169
    %p171 = scmp.eq.s32.totalorder %s19, 0
    %p172 = por %p170, %p171
    %s173 = ssub.s32 %s13, %s20
    %p174 = scmp.eq.s32.totalorder %s173, 0
    %s176 = sadd.s32 %s175, 1
    %s177 = scalar_select %p174, %s175, %s176
    %p180 = pneg %p174
    %p181 = scmp.eq.s32.totalorder %s13, 1
    %p182 = por %p180, %p181
    %p183 = scmp.ne.s32.totalorder %s175, %s178
    %p184 = scmp.eq.s32.totalorder %s13, 0
    %p185 = por %p183, %p184
    %p186 = scmp.ne.s32.totalorder %s175, %s178
    %p187 = scmp.eq.s32.totalorder %s18, 1
    %p188 = por %p186, %p187
    %p189 = scmp.ne.s32.totalorder %s178, %s179
    %p190 = scmp.eq.s32.totalorder %s18, 0
    %p191 = por %p189, %p190
    %p192 = scmp.ne.s32.totalorder %s178, %s179
    %p193 = scmp.eq.s32.totalorder %s19, 1
    %p194 = por %p192, %p193
    %p196 = scmp.ne.s32.totalorder %s179, %s195
    %p197 = scmp.eq.s32.totalorder %s19, 0
    %p198 = por %p196, %p197
    %p199 = scmp.le.s32.totalorder 1, %s13
    %p200 = scmp.lt.s32.totalorder %s13, 3
    %p201 = pnand %p199, %p200
    %p202 = pneg %p201
    // Predicated region
    $region9: #{downsample_forward.13} parent=5 // pred_check
      _
    $region10: #{downsample_forward.13} parent=5 // pred_check_branch
      %204 = sbr.rel (%p201) target = $region12
    $region11: #{downsample_forward.13} parent=5 // pred_region
      %s205 = ssub.s32 %s13, 1
      // Predicated region
      $region13: #{downsample_forward.13} parent=11 // pred_check
        %p206 = pneg %p60
      $region14: #{downsample_forward.13} parent=11 // pred_check_branch
        %208 = sbr.rel (%p206) target = $region16
      $region15: #{downsample_forward.13} parent=11 // pred_region
        _
      $region16: #{downsample_forward.13} parent=11 // pred_fallthru
        _
      // Predicated region
      $region17: #{downsample_forward.13} parent=11 // pred_check
        %p209 = pneg %p81
      $region18: #{downsample_forward.13} parent=11 // pred_check_branch
        %211 = sbr.rel (%p209) target = $region20
      $region19: #{downsample_forward.13} parent=11 // pred_region
        _
      $region20: #{downsample_forward.13} parent=11 // pred_fallthru
        _
      // Predicated region
      $region21: #{downsample_forward.13} parent=11 // pred_check
        %p212 = pneg %p102
      $region22: #{downsample_forward.13} parent=11 // pred_check_branch
        %214 = sbr.rel (%p212) target = $region24
      $region23: #{downsample_forward.13} parent=11 // pred_region
        _
      $region24: #{downsample_forward.13} parent=11 // pred_fallthru
        _
      // Predicated region
      $region25: #{downsample_forward.13} parent=11 // pred_check
        %p215 = pneg %p123
      $region26: #{downsample_forward.13} parent=11 // pred_check_branch
        %217 = sbr.rel (%p215) target = $region28
      $region27: #{downsample_forward.13} parent=11 // pred_region
        _
      $region28: #{downsample_forward.13} parent=11 // pred_fallthru
        _
      // Predicated region
      $region29: #{downsample_forward.13} parent=11 // pred_check
        %p218 = pneg %p144
      $region30: #{downsample_forward.13} parent=11 // pred_check_branch
        %220 = sbr.rel (%p218) target = $region32
      $region31: #{downsample_forward.13} parent=11 // pred_region
        _
      $region32: #{downsample_forward.13} parent=11 // pred_fallthru
        _
      // Predicated region
      $region33: #{downsample_forward.13} parent=11 // pred_check
        %p221 = pneg %p165
      $region34: #{downsample_forward.13} parent=11 // pred_check_branch
        %223 = sbr.rel (%p221) target = $region36
      $region35: #{downsample_forward.13} parent=11 // pred_region
        _
      $region36: #{downsample_forward.13} parent=11 // pred_fallthru
        _
    $region12: #{downsample_forward.13} parent=5 // pred_fallthru
      _
    %p224 = scmp.lt.s32.totalorder %s13, 2
    // Predicated region
    $region37: #{downsample_forward.13} parent=5 // pred_check
      %p225 = pneg %p224
    $region38: #{downsample_forward.13} parent=5 // pred_check_branch
      %227 = sbr.rel (%p225) target = $region40
    $region39: #{downsample_forward.13} parent=5 // pred_region
      // Predicated region
      $region41: #{downsample_forward.13} parent=39 // pred_check
        %p228 = pneg %p33
      $region42: #{downsample_forward.13} parent=39 // pred_check_branch
        %230 = sbr.rel (%p228) target = $region44
      $region43: #{downsample_forward.13} parent=39 // pred_region
        %p231 = scmp.lt.s32.totalorder %s13, 1
        %s232 = scalar_select %p231, %s13, 1
        %s233 = smul.addr %s232, 13
        %s234 = smul.addr %s233, 8
        %s235 = scalar_lea.vmem %s0, %s234
      $region44: #{downsample_forward.13} parent=39 // pred_fallthru
        _
    $region40: #{downsample_forward.13} parent=5 // pred_fallthru
      _
    %p236 = scmp.le.s32.totalorder 1, %s13
    %p237 = scmp.lt.s32.totalorder %s13, 3
    %p238 = pnand %p236, %p237
    %p239 = pneg %p238
    // Predicated region
    $region45: #{downsample_forward.13} parent=5 // pred_check
      _
    $region46: #{downsample_forward.13} parent=5 // pred_check_branch
      %241 = sbr.rel (%p238) target = $region48
    $region47: #{downsample_forward.13} parent=5 // pred_region
      %s242 = ssub.s32 %s13, 1
      %p243 = scmp.lt.s32.totalorder %s18, 1
      %s244 = scalar_select %p243, %s18, 1
      %s245 = smul.addr %s244, 13
      %s246 = smul.addr %s245, 8
      %s247 = scalar_lea.vmem %s0, %s246
      %p248 = pneg %p39
      %p249 = pneg %p36
      %p250 = pneg %p60
      %p251 = pneg %p57
      %p252 = pneg %p81
      %p253 = pneg %p78
      %p254 = pneg %p102
      %p255 = pneg %p99
      %p256 = pneg %p123
      %p257 = pneg %p120
      %p258 = pneg %p144
      %p259 = pneg %p141
      %p260 = pneg %p165
      %p261 = pneg %p162
      %p262 = pneg %p191
      %p263 = pneg %p188
      %p264 = scmp.lt.s32.totalorder %s18, 1
      %s265 = scalar_select %p264, %s18, 1
      %s266 = smul.addr %s265, 8
      %s267 = smul.addr %s266, 8
      %s268 = scalar_lea.vmem %s7, %s267
      %p269 = scmp.lt.s32.totalorder %s18, 1
      %s270 = scalar_select %p269, %s18, 1
      %s271 = smul.addr %s270, 13
      %s272 = smul.addr %s271, 8
      %s273 = scalar_lea.vmem %s0, %s272
      %p274 = scmp.lt.s32.totalorder %s18, 1
      %s275 = scalar_select %p274, %s18, 1
      %s276 = smul.addr %s275, 8
      %s277 = smul.addr %s276, 8
      %s278 = scalar_lea.vmem %s7, %s277
      %v279 = vld [vmem:[%s273] sm:$0xff]
      %vm280 = vcmask 31744
      %281 = vst.msk [vmem:[#allocation2] sm:$0xff] %vm280, %v279
      %v282 = vld [vmem:[%s273 + $0xa] sm:$0xff]
      %283 = vst.msk [vmem:[#allocation2 + $0x8] sm:$0xff] %vm280, %v282
      %v284 = vld [vmem:[%s273 + $0x14] sm:$0xff]
      %285 = vst.msk [vmem:[#allocation2 + $0x10] sm:$0xff] %vm280, %v284
      %v286 = vld [vmem:[%s273 + $0x1e] sm:$0xff]
      %287 = vst.msk [vmem:[#allocation2 + $0x18] sm:$0xff] %vm280, %v286
      %v288 = vld [vmem:[%s273 + $0x28] sm:$0xff]
      %289 = vst.msk [vmem:[#allocation2 + $0x20] sm:$0xff] %vm280, %v288
      %v290 = vld [vmem:[%s273 + $0x32] sm:$0xff]
      %291 = vst.msk [vmem:[#allocation2 + $0x28] sm:$0xff] %vm280, %v290
      %v292 = vld [vmem:[%s273 + $0x3c] sm:$0xff]
      %293 = vst.msk [vmem:[#allocation2 + $0x30] sm:$0xff] %vm280, %v292
      %v294 = vld [vmem:[%s273 + $0x46] sm:$0xff]
      %295 = vst.msk [vmem:[#allocation2 + $0x38] sm:$0xff] %vm280, %v294
      %v296 = vld [vmem:[%s273 + $0x1] sm:$0xff]
      %298 = vrot.lane.b32.xlu0 %v296, 4
      %v299 = vpop.permute.xlu0 %298
      %vm301 = vcmask 64544
      %302 = vst.msk [vmem:[#allocation2] sm:$0xff] %vm301, %v299
      %v303 = vld [vmem:[%s273 + $0xb] sm:$0xff]
      %305 = vrot.lane.b32.xlu0 %v303, 4
      %v306 = vpop.permute.xlu0 %305
      %308 = vst.msk [vmem:[#allocation2 + $0x8] sm:$0xff] %vm301, %v306
      %v309 = vld [vmem:[%s273 + $0x15] sm:$0xff]
      %311 = vrot.lane.b32.xlu0 %v309, 4
      %v312 = vpop.permute.xlu0 %311
      %314 = vst.msk [vmem:[#allocation2 + $0x10] sm:$0xff] %vm301, %v312
      %v315 = vld [vmem:[%s273 + $0x1f] sm:$0xff]
      %317 = vrot.lane.b32.xlu0 %v315, 4
      %v318 = vpop.permute.xlu0 %317
      %320 = vst.msk [vmem:[#allocation2 + $0x18] sm:$0xff] %vm301, %v318
      %v321 = vld [vmem:[%s273 + $0x29] sm:$0xff]
      %323 = vrot.lane.b32.xlu0 %v321, 4
      %v324 = vpop.permute.xlu0 %323
      %326 = vst.msk [vmem:[#allocation2 + $0x20] sm:$0xff] %vm301, %v324
      %v327 = vld [vmem:[%s273 + $0x33] sm:$0xff]
      %329 = vrot.lane.b32.xlu0 %v327, 4
      %v330 = vpop.permute.xlu0 %329
      %332 = vst.msk [vmem:[#allocation2 + $0x28] sm:$0xff] %vm301, %v330
      %v333 = vld [vmem:[%s273 + $0x3d] sm:$0xff]
      %335 = vrot.lane.b32.xlu0 %v333, 4
      %v336 = vpop.permute.xlu0 %335
      %338 = vst.msk [vmem:[#allocation2 + $0x30] sm:$0xff] %vm301, %v336
      %v339 = vld [vmem:[%s273 + $0x47] sm:$0xff]
      %341 = vrot.lane.b32.xlu0 %v339, 4
      %v342 = vpop.permute.xlu0 %341
      %344 = vst.msk [vmem:[#allocation2 + $0x38] sm:$0xff] %vm301, %v342
      %v345 = vld [vmem:[%s273 + $0x2] sm:$0xff]
      %347 = vrot.lane.b32.xlu0 %v345, 8
      %v348 = vpop.permute.xlu0 %347
      %vm350 = vcmask 97344
      %351 = vst.msk [vmem:[#allocation2] sm:$0xff] %vm350, %v348
      %v352 = vld [vmem:[%s273 + $0xc] sm:$0xff]
      %354 = vrot.lane.b32.xlu0 %v352, 8
      %v355 = vpop.permute.xlu0 %354
      %357 = vst.msk [vmem:[#allocation2 + $0x8] sm:$0xff] %vm350, %v355
      %v358 = vld [vmem:[%s273 + $0x16] sm:$0xff]
      %360 = vrot.lane.b32.xlu0 %v358, 8
      %v361 = vpop.permute.xlu0 %360
      %363 = vst.msk [vmem:[#allocation2 + $0x10] sm:$0xff] %vm350, %v361
      %v364 = vld [vmem:[%s273 + $0x20] sm:$0xff]
      %366 = vrot.lane.b32.xlu0 %v364, 8
      %v367 = vpop.permute.xlu0 %366
      %369 = vst.msk [vmem:[#allocation2 + $0x18] sm:$0xff] %vm350, %v367
      %v370 = vld [vmem:[%s273 + $0x2a] sm:$0xff]
      %372 = vrot.lane.b32.xlu0 %v370, 8
      %v373 = vpop.permute.xlu0 %372
      %375 = vst.msk [vmem:[#allocation2 + $0x20] sm:$0xff] %vm350, %v373
      %v376 = vld [vmem:[%s273 + $0x34] sm:$0xff]
      %378 = vrot.lane.b32.xlu0 %v376, 8
      %v379 = vpop.permute.xlu0 %378
      %381 = vst.msk [vmem:[#allocation2 + $0x28] sm:$0xff] %vm350, %v379
      %v382 = vld [vmem:[%s273 + $0x3e] sm:$0xff]
      %384 = vrot.lane.b32.xlu0 %v382, 8
      %v385 = vpop.permute.xlu0 %384
      %387 = vst.msk [vmem:[#allocation2 + $0x30] sm:$0xff] %vm350, %v385
      %v388 = vld [vmem:[%s273 + $0x48] sm:$0xff]
      %390 = vrot.lane.b32.xlu0 %v388, 8
      %v391 = vpop.permute.xlu0 %390
      %393 = vst.msk [vmem:[#allocation2 + $0x38] sm:$0xff] %vm350, %v391
      %v394 = vld [vmem:[%s273 + $0xa] sm:$0xff]
      %396 = vrot.lane.b32.xlu0 %v394, 12
      %v397 = vpop.permute.xlu0 %396
      %vm399 = vcmask 130144
      %400 = vst.msk [vmem:[#allocation2] sm:$0xff] %vm399, %v397
      %v401 = vld [vmem:[%s273 + $0x14] sm:$0xff]
      %403 = vrot.lane.b32.xlu0 %v401, 12
      %v404 = vpop.permute.xlu0 %403
      %406 = vst.msk [vmem:[#allocation2 + $0x8] sm:$0xff] %vm399, %v404
      %v407 = vld [vmem:[%s273 + $0x1e] sm:$0xff]
      %409 = vrot.lane.b32.xlu0 %v407, 12
      %v410 = vpop.permute.xlu0 %409
      %412 = vst.msk [vmem:[#allocation2 + $0x10] sm:$0xff] %vm399, %v410
      %v413 = vld [vmem:[%s273 + $0x28] sm:$0xff]
      %415 = vrot.lane.b32.xlu0 %v413, 12
      %v416 = vpop.permute.xlu0 %415
      %418 = vst.msk [vmem:[#allocation2 + $0x18] sm:$0xff] %vm399, %v416
      %v419 = vld [vmem:[%s273 + $0x32] sm:$0xff]
      %421 = vrot.lane.b32.xlu0 %v419, 12
      %v422 = vpop.permute.xlu0 %421
      %424 = vst.msk [vmem:[#allocation2 + $0x20] sm:$0xff] %vm399, %v422
      %v425 = vld [vmem:[%s273 + $0x3c] sm:$0xff]
      %427 = vrot.lane.b32.xlu0 %v425, 12
      %v428 = vpop.permute.xlu0 %427
      %430 = vst.msk [vmem:[#allocation2 + $0x28] sm:$0xff] %vm399, %v428
      %v431 = vld [vmem:[%s273 + $0x46] sm:$0xff]
      %433 = vrot.lane.b32.xlu0 %v431, 12
      %v434 = vpop.permute.xlu0 %433
      %436 = vst.msk [vmem:[#allocation2 + $0x30] sm:$0xff] %vm399, %v434
      %v437 = vld [vmem:[%s273 + $0x50] sm:$0xff]
      %439 = vrot.lane.b32.xlu0 %v437, 12
      %v440 = vpop.permute.xlu0 %439
      %442 = vst.msk [vmem:[#allocation2 + $0x38] sm:$0xff] %vm399, %v440
      %v443 = vld [vmem:[%s273 + $0xb] sm:$0xff]
      %445 = vrot.lane.b32.xlu0 %v443, 16
      %v446 = vpop.permute.xlu0 %445
      %vm448 = vcmask 162944
      %449 = vst.msk [vmem:[#allocation2] sm:$0xff] %vm448, %v446
      %v450 = vld [vmem:[%s273 + $0x15] sm:$0xff]
      %452 = vrot.lane.b32.xlu0 %v450, 16
      %v453 = vpop.permute.xlu0 %452
      %455 = vst.msk [vmem:[#allocation2 + $0x8] sm:$0xff] %vm448, %v453
      %v456 = vld [vmem:[%s273 + $0x1f] sm:$0xff]
      %458 = vrot.lane.b32.xlu0 %v456, 16
      %v459 = vpop.permute.xlu0 %458
      %461 = vst.msk [vmem:[#allocation2 + $0x10] sm:$0xff] %vm448, %v459
      %v462 = vld [vmem:[%s273 + $0x29] sm:$0xff]
      %464 = vrot.lane.b32.xlu0 %v462, 16
      %v465 = vpop.permute.xlu0 %464
      %467 = vst.msk [vmem:[#allocation2 + $0x18] sm:$0xff] %vm448, %v465
      %v468 = vld [vmem:[%s273 + $0x33] sm:$0xff]
      %470 = vrot.lane.b32.xlu0 %v468, 16
      %v471 = vpop.permute.xlu0 %470
      %473 = vst.msk [vmem:[#allocation2 + $0x20] sm:$0xff] %vm448, %v471
      %v474 = vld [vmem:[%s273 + $0x3d] sm:$0xff]
      %476 = vrot.lane.b32.xlu0 %v474, 16
      %v477 = vpop.permute.xlu0 %476
      %479 = vst.msk [vmem:[#allocation2 + $0x28] sm:$0xff] %vm448, %v477
      %v480 = vld [vmem:[%s273 + $0x47] sm:$0xff]
      %482 = vrot.lane.b32.xlu0 %v480, 16
      %v483 = vpop.permute.xlu0 %482
      %485 = vst.msk [vmem:[#allocation2 + $0x30] sm:$0xff] %vm448, %v483
      %v486 = vld [vmem:[%s273 + $0x51] sm:$0xff]
      %488 = vrot.lane.b32.xlu0 %v486, 16
      %v489 = vpop.permute.xlu0 %488
      %491 = vst.msk [vmem:[#allocation2 + $0x38] sm:$0xff] %vm448, %v489
      %v492 = vld [vmem:[%s273 + $0xc] sm:$0xff]
      %494 = vrot.lane.b32.xlu0 %v492, 20
      %v495 = vpop.permute.xlu0 %494
      %vm497 = vcmask 195744
      %498 = vst.msk [vmem:[#allocation2] sm:$0xff] %vm497, %v495
      %v499 = vld [vmem:[%s273 + $0x16] sm:$0xff]
      %501 = vrot.lane.b32.xlu0 %v499, 20
      %v502 = vpop.permute.xlu0 %501
      %504 = vst.msk [vmem:[#allocation2 + $0x8] sm:$0xff] %vm497, %v502
      %v505 = vld [vmem:[%s273 + $0x20] sm:$0xff]
      %507 = vrot.lane.b32.xlu0 %v505, 20
      %v508 = vpop.permute.xlu0 %507
      %510 = vst.msk [vmem:[#allocation2 + $0x10] sm:$0xff] %vm497, %v508
      %v511 = vld [vmem:[%s273 + $0x2a] sm:$0xff]
      %513 = vrot.lane.b32.xlu0 %v511, 20
      %v514 = vpop.permute.xlu0 %513
      %516 = vst.msk [vmem:[#allocation2 + $0x18] sm:$0xff] %vm497, %v514
      %v517 = vld [vmem:[%s273 + $0x34] sm:$0xff]
      %519 = vrot.lane.b32.xlu0 %v517, 20
      %v520 = vpop.permute.xlu0 %519
      %522 = vst.msk [vmem:[#allocation2 + $0x20] sm:$0xff] %vm497, %v520
      %v523 = vld [vmem:[%s273 + $0x3e] sm:$0xff]
      %525 = vrot.lane.b32.xlu0 %v523, 20
      %v526 = vpop.permute.xlu0 %525
      %528 = vst.msk [vmem:[#allocation2 + $0x28] sm:$0xff] %vm497, %v526
      %v529 = vld [vmem:[%s273 + $0x48] sm:$0xff]
      %531 = vrot.lane.b32.xlu0 %v529, 20
      %v532 = vpop.permute.xlu0 %531
      %534 = vst.msk [vmem:[#allocation2 + $0x30] sm:$0xff] %vm497, %v532
      %v535 = vld [vmem:[%s273 + $0x52] sm:$0xff]
      %537 = vrot.lane.b32.xlu0 %v535, 20
      %v538 = vpop.permute.xlu0 %537
      %540 = vst.msk [vmem:[#allocation2 + $0x38] sm:$0xff] %vm497, %v538
      %v541 = vld [vmem:[%s273 + $0x14] sm:$0xff]
      %543 = vrot.lane.b32.xlu0 %v541, 24
      %v544 = vpop.permute.xlu0 %543
      %vm546 = vcmask 228544
      %547 = vst.msk [vmem:[#allocation2] sm:$0xff] %vm546, %v544
      %v548 = vld [vmem:[%s273 + $0x1e] sm:$0xff]
      %550 = vrot.lane.b32.xlu0 %v548, 24
      %v551 = vpop.permute.xlu0 %550
      %553 = vst.msk [vmem:[#allocation2 + $0x8] sm:$0xff] %vm546, %v551
      %v554 = vld [vmem:[%s273 + $0x28] sm:$0xff]
      %556 = vrot.lane.b32.xlu0 %v554, 24
      %v557 = vpop.permute.xlu0 %556
      %559 = vst.msk [vmem:[#allocation2 + $0x10] sm:$0xff] %vm546, %v557
      %v560 = vld [vmem:[%s273 + $0x32] sm:$0xff]
      %562 = vrot.lane.b32.xlu0 %v560, 24
      %v563 = vpop.permute.xlu0 %562
      %565 = vst.msk [vmem:[#allocation2 + $0x18] sm:$0xff] %vm546, %v563
      %v566 = vld [vmem:[%s273 + $0x3c] sm:$0xff]
      %568 = vrot.lane.b32.xlu0 %v566, 24
      %v569 = vpop.permute.xlu0 %568
      %571 = vst.msk [vmem:[#allocation2 + $0x20] sm:$0xff] %vm546, %v569
      %v572 = vld [vmem:[%s273 + $0x46] sm:$0xff]
      %574 = vrot.lane.b32.xlu0 %v572, 24
      %v575 = vpop.permute.xlu0 %574
      %577 = vst.msk [vmem:[#allocation2 + $0x28] sm:$0xff] %vm546, %v575
      %v578 = vld [vmem:[%s273 + $0x50] sm:$0xff]
      %580 = vrot.lane.b32.xlu0 %v578, 24
      %v581 = vpop.permute.xlu0 %580
      %583 = vst.msk [vmem:[#allocation2 + $0x30] sm:$0xff] %vm546, %v581
      %v584 = vld [vmem:[%s273 + $0x5a] sm:$0xff]
      %586 = vrot.lane.b32.xlu0 %v584, 24
      %v587 = vpop.permute.xlu0 %586
      %589 = vst.msk [vmem:[#allocation2 + $0x38] sm:$0xff] %vm546, %v587
      %v590 = vld [vmem:[%s273 + $0x15] sm:$0xff]
      %592 = vrot.lane.b32.xlu0 %v590, 28
      %v593 = vpop.permute.xlu0 %592
      %vm595 = vcmask 261344
      %596 = vst.msk [vmem:[#allocation2] sm:$0xff] %vm595, %v593
      %v597 = vld [vmem:[%s273 + $0x1f] sm:$0xff]
      %599 = vrot.lane.b32.xlu0 %v597, 28
      %v600 = vpop.permute.xlu0 %599
      %602 = vst.msk [vmem:[#allocation2 + $0x8] sm:$0xff] %vm595, %v600
      %v603 = vld [vmem:[%s273 + $0x29] sm:$0xff]
      %605 = vrot.lane.b32.xlu0 %v603, 28
      %v606 = vpop.permute.xlu0 %605
      %608 = vst.msk [vmem:[#allocation2 + $0x10] sm:$0xff] %vm595, %v606
      %v609 = vld [vmem:[%s273 + $0x33] sm:$0xff]
      %611 = vrot.lane.b32.xlu0 %v609, 28
      %v612 = vpop.permute.xlu0 %611
      %614 = vst.msk [vmem:[#allocation2 + $0x18] sm:$0xff] %vm595, %v612
      %v615 = vld [vmem:[%s273 + $0x3d] sm:$0xff]
      %617 = vrot.lane.b32.xlu0 %v615, 28
      %v618 = vpop.permute.xlu0 %617
      %620 = vst.msk [vmem:[#allocation2 + $0x20] sm:$0xff] %vm595, %v618
      %v621 = vld [vmem:[%s273 + $0x47] sm:$0xff]
      %623 = vrot.lane.b32.xlu0 %v621, 28
      %v624 = vpop.permute.xlu0 %623
      %626 = vst.msk [vmem:[#allocation2 + $0x28] sm:$0xff] %vm595, %v624
      %v627 = vld [vmem:[%s273 + $0x51] sm:$0xff]
      %629 = vrot.lane.b32.xlu0 %v627, 28
      %v630 = vpop.permute.xlu0 %629
      %632 = vst.msk [vmem:[#allocation2 + $0x30] sm:$0xff] %vm595, %v630
      %v633 = vld [vmem:[%s273 + $0x5b] sm:$0xff]
      %635 = vrot.lane.b32.xlu0 %v633, 28
      %v636 = vpop.permute.xlu0 %635
      %638 = vst.msk [vmem:[#allocation2 + $0x38] sm:$0xff] %vm595, %v636
      %v639 = vld [vmem:[%s273 + $0x16] sm:$0xff]
      %641 = vrot.lane.b32.xlu0 %v639, 32
      %v642 = vpop.permute.xlu0 %641
      %vm644 = vcmask 294144
      %645 = vst.msk [vmem:[#allocation2] sm:$0xff] %vm644, %v642
      %v646 = vld [vmem:[%s273 + $0x20] sm:$0xff]
      %648 = vrot.lane.b32.xlu0 %v646, 32
      %v649 = vpop.permute.xlu0 %648
      %651 = vst.msk [vmem:[#allocation2 + $0x8] sm:$0xff] %vm644, %v649
      %v652 = vld [vmem:[%s273 + $0x2a] sm:$0xff]
      %654 = vrot.lane.b32.xlu0 %v652, 32
      %v655 = vpop.permute.xlu0 %654
      %657 = vst.msk [vmem:[#allocation2 + $0x10] sm:$0xff] %vm644, %v655
      %v658 = vld [vmem:[%s273 + $0x34] sm:$0xff]
      %660 = vrot.lane.b32.xlu0 %v658, 32
      %v661 = vpop.permute.xlu0 %660
      %663 = vst.msk [vmem:[#allocation2 + $0x18] sm:$0xff] %vm644, %v661
      %v664 = vld [vmem:[%s273 + $0x3e] sm:$0xff]
      %666 = vrot.lane.b32.xlu0 %v664, 32
      %v667 = vpop.permute.xlu0 %666
      %669 = vst.msk [vmem:[#allocation2 + $0x20] sm:$0xff] %vm644, %v667
      %v670 = vld [vmem:[%s273 + $0x48] sm:$0xff]
      %672 = vrot.lane.b32.xlu0 %v670, 32
      %v673 = vpop.permute.xlu0 %672
      %675 = vst.msk [vmem:[#allocation2 + $0x28] sm:$0xff] %vm644, %v673
      %v676 = vld [vmem:[%s273 + $0x52] sm:$0xff]
      %678 = vrot.lane.b32.xlu0 %v676, 32
      %v679 = vpop.permute.xlu0 %678
      %681 = vst.msk [vmem:[#allocation2 + $0x30] sm:$0xff] %vm644, %v679
      %v682 = vld [vmem:[%s273 + $0x5c] sm:$0xff]
      %684 = vrot.lane.b32.xlu0 %v682, 32
      %v685 = vpop.permute.xlu0 %684
      %687 = vst.msk [vmem:[#allocation2 + $0x38] sm:$0xff] %vm644, %v685
      %v688 = vld [vmem:[#allocation2] sm:$0xff]
      %v689 = vld [vmem:[#allocation2 + $0x8] sm:$0xff]
      %v690 = vld [vmem:[#allocation2 + $0x10] sm:$0xff]
      %v691 = vld [vmem:[#allocation2 + $0x18] sm:$0xff]
      %v692 = vld [vmem:[#allocation2 + $0x20] sm:$0xff]
      %v693 = vld [vmem:[#allocation2 + $0x28] sm:$0xff]
      %v694 = vld [vmem:[#allocation2 + $0x30] sm:$0xff]
      %v695 = vld [vmem:[#allocation2 + $0x38] sm:$0xff]
      %v696 = vld [vmem:[%s1] sm:$0xff]
      %v697 = vld [vmem:[%s1 + $0x8] sm:$0xff]
      %v698 = vld [vmem:[%s1 + $0x10] sm:$0xff]
      %v699 = vld [vmem:[%s1 + $0x18] sm:$0xff]
      %v700 = vld [vmem:[%s1 + $0x20] sm:$0xf]
      %vm701 = vcmask 293888
      %v703 = vsel %vm701, %v688, 0
      %v706 = vsel %vm701, %v689, 0
      %v709 = vsel %vm701, %v690, 0
      %v712 = vsel %vm701, %v691, 0
      %v715 = vsel %vm701, %v692, 0
      %v718 = vsel %vm701, %v693, 0
      %v721 = vsel %vm701, %v694, 0
      %v724 = vsel %vm701, %v695, 0
      %vm726 = vcmask 1043456
      %v728 = vsel %vm726, %v700, 0
      %730 = vmatprep.subr.mxu0 0.0
      %731 = vmatpush1.msra.mxu0 %v696
      %732 = vmatprep.subr.mxu0 0.0
      %733 = vmatpush1.msra.mxu0 %v697
      %734 = vmatprep.subr.mxu0 0.0
      %735 = vmatpush1.msra.mxu0 %v698
      %736 = vmatprep.subr.mxu0 0.0
      %737 = vmatpush1.msra.mxu0 %v699
      %738 = vmatprep.subr.mxu0 0.0
      %739 = vmatpush1.msra.mxu0 %v728
      %740 = vmatprep.subr.mxu0 0.0
      %741 = vmatpush1.msra.mxu0 0.0
      %742 = vmatprep.subr.mxu0 0.0
      %743 = vmatpush1.msra.mxu0 0.0
      %744 = vmatprep.subr.mxu0 0.0
      %745 = vmatpush1.msra.mxu0 0.0
      %746 = vmatprep.subr.mxu0 0.0
      %747 = vmatpush1.msra.mxu0 0.0
      %748 = vmatprep.subr.mxu0 0.0
      %749 = vmatpush1.msra.mxu0 0.0
      %750 = vmatprep.subr.mxu0 0.0
      %751 = vmatpush1.msra.mxu0 0.0
      %752 = vmatprep.subr.mxu0 0.0
      %753 = vmatpush1.msra.mxu0 0.0
      %754 = vmatprep.subr.mxu0 0.0
      %755 = vmatpush1.msra.mxu0 0.0
      %756 = vmatprep.subr.mxu0 0.0
      %757 = vmatpush1.msra.mxu0 0.0
      %758 = vmatprep.subr.mxu0 0.0
      %759 = vmatpush1.msra.mxu0 0.0
      %760 = vmatprep.subr.mxu0 0.0
      %761 = vmatpush1.msra.mxu0 0.0
      %762 = vmatprep.subr.mxu0 0.0
      %763 = vmatpush1.msra.mxu0 0.0
      %764 = vmatprep.subr.mxu0 0.0
      %765 = vmatpush1.msra.mxu0 0.0
      %766 = vmatprep.subr.mxu0 0.0
      %767 = vmatpush1.msra.mxu0 0.0
      %768 = vmatprep.subr.mxu0 0.0
      %769 = vmatpush1.msra.mxu0 0.0
      %770 = vmatprep.subr.mxu0 0.0
      %771 = vmatpush1.msra.mxu0 0.0
      %772 = vmatprep.subr.mxu0 0.0
      %773 = vmatpush1.msra.mxu0 0.0
      %774 = vmatprep.subr.mxu0 0.0
      %775 = vmatpush1.msra.mxu0 0.0
      %776 = vmatprep.subr.mxu0 0.0
      %777 = vmatpush1.msra.mxu0 0.0
      %778 = vmatprep.subr.mxu0 0.0
      %779 = vmatpush1.msra.mxu0 0.0
      %780 = vmatprep.subr.mxu0 0.0
      %781 = vmatpush1.msra.mxu0 0.0
      %782 = vmatprep.subr.mxu0 0.0
      %783 = vmatpush1.msra.mxu0 0.0
      %784 = vmatprep.subr.mxu0 0.0
      %785 = vmatpush1.msra.mxu0 0.0
      %786 = vmatprep.subr.mxu0 0.0
      %787 = vmatpush1.msra.mxu0 0.0
      %788 = vmatprep.subr.mxu0 0.0
      %789 = vmatpush1.msra.mxu0 0.0
      %790 = vmatprep.subr.mxu0 0.0
      %791 = vmatpush1.msra.mxu0 0.0
      %792 = vmatprep.subr.mxu0 0.0
      %793 = vmatpush1.msra.mxu0 0.0
      %794 = vmatprep.mubr.f32.mxu0 0.0
      %795 = vmatmul.mubr.f32.gmra.mrb[0].mxu0 %v703
      %v796 = vpop.f32.mrb[0].mxu0
      %v797 = vadd.f32 0.0, %v796
      %v798 = vpop.f32.mrb[0].mxu0
      %799 = vmatprep.mubr.f32.mxu0 0.0
      %800 = vmatmul.mubr.f32.gmra.mrb[0].mxu0 %v706
      %v801 = vpop.f32.mrb[0].mxu0
      %v802 = vadd.f32 0.0, %v801
      %v803 = vpop.f32.mrb[0].mxu0
      %804 = vmatprep.mubr.f32.mxu0 0.0
      %805 = vmatmul.mubr.f32.gmra.mrb[0].mxu0 %v709
      %v806 = vpop.f32.mrb[0].mxu0
      %v807 = vadd.f32 0.0, %v806
      %v808 = vpop.f32.mrb[0].mxu0
      %809 = vmatprep.mubr.f32.mxu0 0.0
      %810 = vmatmul.mubr.f32.gmra.mrb[0].mxu0 %v712
      %v811 = vpop.f32.mrb[0].mxu0
      %v812 = vadd.f32 0.0, %v811
      %v813 = vpop.f32.mrb[0].mxu0
      %814 = vmatprep.mubr.f32.mxu0 0.0
      %815 = vmatmul.mubr.f32.gmra.mrb[0].mxu0 %v715
      %v816 = vpop.f32.mrb[0].mxu0
      %v817 = vadd.f32 0.0, %v816
      %v818 = vpop.f32.mrb[0].mxu0
      %819 = vmatprep.mubr.f32.mxu0 0.0
      %820 = vmatmul.mubr.f32.gmra.mrb[0].mxu0 %v718
      %v821 = vpop.f32.mrb[0].mxu0
      %v822 = vadd.f32 0.0, %v821
      %v823 = vpop.f32.mrb[0].mxu0
      %824 = vmatprep.mubr.f32.mxu0 0.0
      %825 = vmatmul.mubr.f32.gmra.mrb[0].mxu0 %v721
      %v826 = vpop.f32.mrb[0].mxu0
      %v827 = vadd.f32 0.0, %v826
      %v828 = vpop.f32.mrb[0].mxu0
      %829 = vmatprep.mubr.f32.mxu0 0.0
      %830 = vmatmul.mubr.f32.gmra.mrb[0].mxu0 %v724
      %v831 = vpop.f32.mrb[0].mxu0
      %v832 = vadd.f32 0.0, %v831
      %v833 = vpop.f32.mrb[0].mxu0
      %834 = vdwg.mxu0
      %v835 = vld [vmem:[%s2] sm:$0x1]
      %v837 = vlaneseq
      %v838 = vshrl.u32 %v837, 7
      %v839 = vsub.s32 0, %v838
      %v840 = vrot.slane %v835, %v839
      %v842 = vmul.f32 %v797, %v840
      %v843 = vmul.f32 %v802, %v840
      %v844 = vmul.f32 %v807, %v840
      %v845 = vmul.f32 %v812, %v840
      %v846 = vmul.f32 %v817, %v840
      %v847 = vmul.f32 %v822, %v840
      %v848 = vmul.f32 %v827, %v840
      %v849 = vmul.f32 %v832, %v840
      %v850 = vld [vmem:[%s3] sm:$0x1]
      %v852 = vlaneseq
      %v853 = vshrl.u32 %v852, 7
      %v854 = vsub.s32 0, %v853
      %v855 = vrot.slane %v850, %v854
      %v857 = vadd.f32 %v842, %v855
      %v858 = vadd.f32 %v843, %v855
      %v859 = vadd.f32 %v844, %v855
      %v860 = vadd.f32 %v845, %v855
      %v861 = vadd.f32 %v846, %v855
      %v862 = vadd.f32 %v847, %v855
      %v863 = vadd.f32 %v848, %v855
      %v864 = vadd.f32 %v849, %v855
      %v865 = vmax.f32 %v857, 0.0
      %v866 = vmax.f32 %v858, 0.0
      %v867 = vmax.f32 %v859, 0.0
      %v868 = vmax.f32 %v860, 0.0
      %v869 = vmax.f32 %v861, 0.0
      %v870 = vmax.f32 %v862, 0.0
      %v871 = vmax.f32 %v863, 0.0
      %v872 = vmax.f32 %v864, 0.0
      %873 = vst.msk [vmem:[#allocation4] sm:$0xff] %vm280, 0.0
      %874 = vst.msk [vmem:[#allocation4 + $0x8] sm:$0xff] %vm280, 0.0
      %875 = vst.msk [vmem:[#allocation4 + $0x10] sm:$0xff] %vm280, 0.0
      %876 = vst.msk [vmem:[#allocation4 + $0x18] sm:$0xff] %vm280, 0.0
      %877 = vst.msk [vmem:[#allocation4 + $0x20] sm:$0xff] %vm280, 0.0
      %878 = vst.msk [vmem:[#allocation4 + $0x28] sm:$0xff] %vm280, 0.0
      %879 = vst.msk [vmem:[#allocation4 + $0x30] sm:$0xff] %vm280, 0.0
      %880 = vst.msk [vmem:[#allocation4 + $0x38] sm:$0xff] %vm280, 0.0
      %881 = vst.msk [vmem:[#allocation4 + $0x40] sm:$0xff] %vm280, 0.0
      %882 = vst.msk [vmem:[#allocation4 + $0x48] sm:$0xff] %vm280, 0.0
      %883 = vst.msk [vmem:[#allocation4 + $0x50] sm:$0xff] %vm280, 0.0
      %884 = vst.msk [vmem:[#allocation4 + $0x58] sm:$0xff] %vm280, 0.0
      %vm885 = vcmask 27648
      %886 = vst.msk [vmem:[#allocation4 + $0x60] sm:$0xf] %vm885, 0.0
      %887 = vst.msk [vmem:[#allocation4 + $0xb] sm:$0xff] %vm280, %v865
      %888 = vst.msk [vmem:[#allocation4 + $0x15] sm:$0xff] %vm280, %v866
      %889 = vst.msk [vmem:[#allocation4 + $0x1f] sm:$0xff] %vm280, %v867
      %890 = vst.msk [vmem:[#allocation4 + $0x29] sm:$0xff] %vm280, %v868
      %891 = vst.msk [vmem:[#allocation4 + $0x33] sm:$0xff] %vm280, %v869
      %892 = vst.msk [vmem:[#allocation4 + $0x3d] sm:$0xff] %vm280, %v870
      %893 = vst.msk [vmem:[#allocation4 + $0x47] sm:$0xff] %vm280, %v871
      %894 = vst.msk [vmem:[#allocation4 + $0x51] sm:$0xff] %vm280, %v872
      %v895 = vld [vmem:[#allocation4] sm:$0xff]
      %896 = vst.msk [vmem:[#allocation3] sm:$0xff] %vm280, %v895
      %v897 = vld [vmem:[#allocation4 + $0xa] sm:$0xff]
      %898 = vst.msk [vmem:[#allocation3 + $0x8] sm:$0xff] %vm280, %v897
      %v899 = vld [vmem:[#allocation4 + $0x14] sm:$0xff]
      %900 = vst.msk [vmem:[#allocation3 + $0x10] sm:$0xff] %vm280, %v899
      %v901 = vld [vmem:[#allocation4 + $0x1e] sm:$0xff]
      %902 = vst.msk [vmem:[#allocation3 + $0x18] sm:$0xff] %vm280, %v901
      %v903 = vld [vmem:[#allocation4 + $0x28] sm:$0xff]
      %904 = vst.msk [vmem:[#allocation3 + $0x20] sm:$0xff] %vm280, %v903
      %v905 = vld [vmem:[#allocation4 + $0x32] sm:$0xff]
      %906 = vst.msk [vmem:[#allocation3 + $0x28] sm:$0xff] %vm280, %v905
      %v907 = vld [vmem:[#allocation4 + $0x3c] sm:$0xff]
      %908 = vst.msk [vmem:[#allocation3 + $0x30] sm:$0xff] %vm280, %v907
      %v909 = vld [vmem:[#allocation4 + $0x46] sm:$0xff]
      %910 = vst.msk [vmem:[#allocation3 + $0x38] sm:$0xff] %vm280, %v909
      %v911 = vld [vmem:[#allocation4 + $0x1] sm:$0xff]
      %913 = vrot.lane.b32.xlu0 %v911, 4
      %v914 = vpop.permute.xlu0 %913
      %916 = vst.msk [vmem:[#allocation3] sm:$0xff] %vm301, %v914
      %v917 = vld [vmem:[#allocation4 + $0xb] sm:$0xff]
      %919 = vrot.lane.b32.xlu0 %v917, 4
      %v920 = vpop.permute.xlu0 %919
      %922 = vst.msk [vmem:[#allocation3 + $0x8] sm:$0xff] %vm301, %v920
      %v923 = vld [vmem:[#allocation4 + $0x15] sm:$0xff]
      %925 = vrot.lane.b32.xlu0 %v923, 4
      %v926 = vpop.permute.xlu0 %925
      %928 = vst.msk [vmem:[#allocation3 + $0x10] sm:$0xff] %vm301, %v926
      %v929 = vld [vmem:[#allocation4 + $0x1f] sm:$0xff]
      %931 = vrot.lane.b32.xlu0 %v929, 4
      %v932 = vpop.permute.xlu0 %931
      %934 = vst.msk [vmem:[#allocation3 + $0x18] sm:$0xff] %vm301, %v932
      %v935 = vld [vmem:[#allocation4 + $0x29] sm:$0xff]
      %937 = vrot.lane.b32.xlu0 %v935, 4
      %v938 = vpop.permute.xlu0 %937
      %940 = vst.msk [vmem:[#allocation3 + $0x20] sm:$0xff] %vm301, %v938
      %v941 = vld [vmem:[#allocation4 + $0x33] sm:$0xff]
      %943 = vrot.lane.b32.xlu0 %v941, 4
      %v944 = vpop.permute.xlu0 %943
      %946 = vst.msk [vmem:[#allocation3 + $0x28] sm:$0xff] %vm301, %v944
      %v947 = vld [vmem:[#allocation4 + $0x3d] sm:$0xff]
      %949 = vrot.lane.b32.xlu0 %v947, 4
      %v950 = vpop.permute.xlu0 %949
      %952 = vst.msk [vmem:[#allocation3 + $0x30] sm:$0xff] %vm301, %v950
      %v953 = vld [vmem:[#allocation4 + $0x47] sm:$0xff]
      %955 = vrot.lane.b32.xlu0 %v953, 4
      %v956 = vpop.permute.xlu0 %955
      %958 = vst.msk [vmem:[#allocation3 + $0x38] sm:$0xff] %vm301, %v956
      %v959 = vld [vmem:[#allocation4 + $0x2] sm:$0xff]
      %961 = vrot.lane.b32.xlu0 %v959, 8
      %v962 = vpop.permute.xlu0 %961
      %964 = vst.msk [vmem:[#allocation3] sm:$0xff] %vm350, %v962
      %v965 = vld [vmem:[#allocation4 + $0xc] sm:$0xff]
      %967 = vrot.lane.b32.xlu0 %v965, 8
      %v968 = vpop.permute.xlu0 %967
      %970 = vst.msk [vmem:[#allocation3 + $0x8] sm:$0xff] %vm350, %v968
      %v971 = vld [vmem:[#allocation4 + $0x16] sm:$0xff]
      %973 = vrot.lane.b32.xlu0 %v971, 8
      %v974 = vpop.permute.xlu0 %973
      %976 = vst.msk [vmem:[#allocation3 + $0x10] sm:$0xff] %vm350, %v974
      %v977 = vld [vmem:[#allocation4 + $0x20] sm:$0xff]
      %979 = vrot.lane.b32.xlu0 %v977, 8
      %v980 = vpop.permute.xlu0 %979
      %982 = vst.msk [vmem:[#allocation3 + $0x18] sm:$0xff] %vm350, %v980
      %v983 = vld [vmem:[#allocation4 + $0x2a] sm:$0xff]
      %985 = vrot.lane.b32.xlu0 %v983, 8
      %v986 = vpop.permute.xlu0 %985
      %988 = vst.msk [vmem:[#allocation3 + $0x20] sm:$0xff] %vm350, %v986
      %v989 = vld [vmem:[#allocation4 + $0x34] sm:$0xff]
      %991 = vrot.lane.b32.xlu0 %v989, 8
      %v992 = vpop.permute.xlu0 %991
      %994 = vst.msk [vmem:[#allocation3 + $0x28] sm:$0xff] %vm350, %v992
      %v995 = vld [vmem:[#allocation4 + $0x3e] sm:$0xff]
      %997 = vrot.lane.b32.xlu0 %v995, 8
      %v998 = vpop.permute.xlu0 %997
      %1000 = vst.msk [vmem:[#allocation3 + $0x30] sm:$0xff] %vm350, %v998
      %v1001 = vld [vmem:[#allocation4 + $0x48] sm:$0xff]
      %1003 = vrot.lane.b32.xlu0 %v1001, 8
      %v1004 = vpop.permute.xlu0 %1003
      %1006 = vst.msk [vmem:[#allocation3 + $0x38] sm:$0xff] %vm350, %v1004
      %v1007 = vld [vmem:[#allocation4 + $0xa] sm:$0xff]
      %1009 = vrot.lane.b32.xlu0 %v1007, 12
      %v1010 = vpop.permute.xlu0 %1009
      %1012 = vst.msk [vmem:[#allocation3] sm:$0xff] %vm399, %v1010
      %v1013 = vld [vmem:[#allocation4 + $0x14] sm:$0xff]
      %1015 = vrot.lane.b32.xlu0 %v1013, 12
      %v1016 = vpop.permute.xlu0 %1015
      %1018 = vst.msk [vmem:[#allocation3 + $0x8] sm:$0xff] %vm399, %v1016
      %v1019 = vld [vmem:[#allocation4 + $0x1e] sm:$0xff]
      %1021 = vrot.lane.b32.xlu0 %v1019, 12
      %v1022 = vpop.permute.xlu0 %1021
      %1024 = vst.msk [vmem:[#allocation3 + $0x10] sm:$0xff] %vm399, %v1022
      %v1025 = vld [vmem:[#allocation4 + $0x28] sm:$0xff]
      %1027 = vrot.lane.b32.xlu0 %v1025, 12
      %v1028 = vpop.permute.xlu0 %1027
      %1030 = vst.msk [vmem:[#allocation3 + $0x18] sm:$0xff] %vm399, %v1028
      %v1031 = vld [vmem:[#allocation4 + $0x32] sm:$0xff]
      %1033 = vrot.lane.b32.xlu0 %v1031, 12
      %v1034 = vpop.permute.xlu0 %1033
      %1036 = vst.msk [vmem:[#allocation3 + $0x20] sm:$0xff] %vm399, %v1034
      %v1037 = vld [vmem:[#allocation4 + $0x3c] sm:$0xff]
      %1039 = vrot.lane.b32.xlu0 %v1037, 12
      %v1040 = vpop.permute.xlu0 %1039
      %1042 = vst.msk [vmem:[#allocation3 + $0x28] sm:$0xff] %vm399, %v1040
      %v1043 = vld [vmem:[#allocation4 + $0x46] sm:$0xff]
      %1045 = vrot.lane.b32.xlu0 %v1043, 12
      %v1046 = vpop.permute.xlu0 %1045
      %1048 = vst.msk [vmem:[#allocation3 + $0x30] sm:$0xff] %vm399, %v1046
      %v1049 = vld [vmem:[#allocation4 + $0x50] sm:$0xff]
      %1051 = vrot.lane.b32.xlu0 %v1049, 12
      %v1052 = vpop.permute.xlu0 %1051
      %1054 = vst.msk [vmem:[#allocation3 + $0x38] sm:$0xff] %vm399, %v1052
      %v1055 = vld [vmem:[#allocation4 + $0xb] sm:$0xff]
      %1057 = vrot.lane.b32.xlu0 %v1055, 16
      %v1058 = vpop.permute.xlu0 %1057
      %1060 = vst.msk [vmem:[#allocation3] sm:$0xff] %vm448, %v1058
      %v1061 = vld [vmem:[#allocation4 + $0x15] sm:$0xff]
      %1063 = vrot.lane.b32.xlu0 %v1061, 16
      %v1064 = vpop.permute.xlu0 %1063
      %1066 = vst.msk [vmem:[#allocation3 + $0x8] sm:$0xff] %vm448, %v1064
      %v1067 = vld [vmem:[#allocation4 + $0x1f] sm:$0xff]
      %1069 = vrot.lane.b32.xlu0 %v1067, 16
      %v1070 = vpop.permute.xlu0 %1069
      %1072 = vst.msk [vmem:[#allocation3 + $0x10] sm:$0xff] %vm448, %v1070
      %v1073 = vld [vmem:[#allocation4 + $0x29] sm:$0xff]
      %1075 = vrot.lane.b32.xlu0 %v1073, 16
      %v1076 = vpop.permute.xlu0 %1075
      %1078 = vst.msk [vmem:[#allocation3 + $0x18] sm:$0xff] %vm448, %v1076
      %v1079 = vld [vmem:[#allocation4 + $0x33] sm:$0xff]
      %1081 = vrot.lane.b32.xlu0 %v1079, 16
      %v1082 = vpop.permute.xlu0 %1081
      %1084 = vst.msk [vmem:[#allocation3 + $0x20] sm:$0xff] %vm448, %v1082
      %v1085 = vld [vmem:[#allocation4 + $0x3d] sm:$0xff]
      %1087 = vrot.lane.b32.xlu0 %v1085, 16
      %v1088 = vpop.permute.xlu0 %1087
      %1090 = vst.msk [vmem:[#allocation3 + $0x28] sm:$0xff] %vm448, %v1088
      %v1091 = vld [vmem:[#allocation4 + $0x47] sm:$0xff]
      %1093 = vrot.lane.b32.xlu0 %v1091, 16
      %v1094 = vpop.permute.xlu0 %1093
      %1096 = vst.msk [vmem:[#allocation3 + $0x30] sm:$0xff] %vm448, %v1094
      %v1097 = vld [vmem:[#allocation4 + $0x51] sm:$0xff]
      %1099 = vrot.lane.b32.xlu0 %v1097, 16
      %v1100 = vpop.permute.xlu0 %1099
      %1102 = vst.msk [vmem:[#allocation3 + $0x38] sm:$0xff] %vm448, %v1100
      %v1103 = vld [vmem:[#allocation4 + $0xc] sm:$0xff]
      %1105 = vrot.lane.b32.xlu0 %v1103, 20
      %v1106 = vpop.permute.xlu0 %1105
      %1108 = vst.msk [vmem:[#allocation3] sm:$0xff] %vm497, %v1106
      %v1109 = vld [vmem:[#allocation4 + $0x16] sm:$0xff]
      %1111 = vrot.lane.b32.xlu0 %v1109, 20
      %v1112 = vpop.permute.xlu0 %1111
      %1114 = vst.msk [vmem:[#allocation3 + $0x8] sm:$0xff] %vm497, %v1112
      %v1115 = vld [vmem:[#allocation4 + $0x20] sm:$0xff]
      %1117 = vrot.lane.b32.xlu0 %v1115, 20
      %v1118 = vpop.permute.xlu0 %1117
      %1120 = vst.msk [vmem:[#allocation3 + $0x10] sm:$0xff] %vm497, %v1118
      %v1121 = vld [vmem:[#allocation4 + $0x2a] sm:$0xff]
      %1123 = vrot.lane.b32.xlu0 %v1121, 20
      %v1124 = vpop.permute.xlu0 %1123
      %1126 = vst.msk [vmem:[#allocation3 + $0x18] sm:$0xff] %vm497, %v1124
      %v1127 = vld [vmem:[#allocation4 + $0x34] sm:$0xff]
      %1129 = vrot.lane.b32.xlu0 %v1127, 20
      %v1130 = vpop.permute.xlu0 %1129
      %1132 = vst.msk [vmem:[#allocation3 + $0x20] sm:$0xff] %vm497, %v1130
      %v1133 = vld [vmem:[#allocation4 + $0x3e] sm:$0xff]
      %1135 = vrot.lane.b32.xlu0 %v1133, 20
      %v1136 = vpop.permute.xlu0 %1135
      %1138 = vst.msk [vmem:[#allocation3 + $0x28] sm:$0xff] %vm497, %v1136
      %v1139 = vld [vmem:[#allocation4 + $0x48] sm:$0xff]
      %1141 = vrot.lane.b32.xlu0 %v1139, 20
      %v1142 = vpop.permute.xlu0 %1141
      %1144 = vst.msk [vmem:[#allocation3 + $0x30] sm:$0xff] %vm497, %v1142
      %v1145 = vld [vmem:[#allocation4 + $0x52] sm:$0xff]
      %1147 = vrot.lane.b32.xlu0 %v1145, 20
      %v1148 = vpop.permute.xlu0 %1147
      %1150 = vst.msk [vmem:[#allocation3 + $0x38] sm:$0xff] %vm497, %v1148
      %v1151 = vld [vmem:[#allocation4 + $0x14] sm:$0xff]
      %1153 = vrot.lane.b32.xlu0 %v1151, 24
      %v1154 = vpop.permute.xlu0 %1153
      %1156 = vst.msk [vmem:[#allocation3] sm:$0xff] %vm546, %v1154
      %v1157 = vld [vmem:[#allocation4 + $0x1e] sm:$0xff]
      %1159 = vrot.lane.b32.xlu0 %v1157, 24
      %v1160 = vpop.permute.xlu0 %1159
      %1162 = vst.msk [vmem:[#allocation3 + $0x8] sm:$0xff] %vm546, %v1160
      %v1163 = vld [vmem:[#allocation4 + $0x28] sm:$0xff]
      %1165 = vrot.lane.b32.xlu0 %v1163, 24
      %v1166 = vpop.permute.xlu0 %1165
      %1168 = vst.msk [vmem:[#allocation3 + $0x10] sm:$0xff] %vm546, %v1166
      %v1169 = vld [vmem:[#allocation4 + $0x32] sm:$0xff]
      %1171 = vrot.lane.b32.xlu0 %v1169, 24
      %v1172 = vpop.permute.xlu0 %1171
      %1174 = vst.msk [vmem:[#allocation3 + $0x18] sm:$0xff] %vm546, %v1172
      %v1175 = vld [vmem:[#allocation4 + $0x3c] sm:$0xff]
      %1177 = vrot.lane.b32.xlu0 %v1175, 24
      %v1178 = vpop.permute.xlu0 %1177
      %1180 = vst.msk [vmem:[#allocation3 + $0x20] sm:$0xff] %vm546, %v1178
      %v1181 = vld [vmem:[#allocation4 + $0x46] sm:$0xff]
      %1183 = vrot.lane.b32.xlu0 %v1181, 24
      %v1184 = vpop.permute.xlu0 %1183
      %1186 = vst.msk [vmem:[#allocation3 + $0x28] sm:$0xff] %vm546, %v1184
      %v1187 = vld [vmem:[#allocation4 + $0x50] sm:$0xff]
      %1189 = vrot.lane.b32.xlu0 %v1187, 24
      %v1190 = vpop.permute.xlu0 %1189
      %1192 = vst.msk [vmem:[#allocation3 + $0x30] sm:$0xff] %vm546, %v1190
      %v1193 = vld [vmem:[#allocation4 + $0x5a] sm:$0xff]
      %1195 = vrot.lane.b32.xlu0 %v1193, 24
      %v1196 = vpop.permute.xlu0 %1195
      %1198 = vst.msk [vmem:[#allocation3 + $0x38] sm:$0xff] %vm546, %v1196
      %v1199 = vld [vmem:[#allocation4 + $0x15] sm:$0xff]
      %1201 = vrot.lane.b32.xlu0 %v1199, 28
      %v1202 = vpop.permute.xlu0 %1201
      %1204 = vst.msk [vmem:[#allocation3] sm:$0xff] %vm595, %v1202
      %v1205 = vld [vmem:[#allocation4 + $0x1f] sm:$0xff]
      %1207 = vrot.lane.b32.xlu0 %v1205, 28
      %v1208 = vpop.permute.xlu0 %1207
      %1210 = vst.msk [vmem:[#allocation3 + $0x8] sm:$0xff] %vm595, %v1208
      %v1211 = vld [vmem:[#allocation4 + $0x29] sm:$0xff]
      %1213 = vrot.lane.b32.xlu0 %v1211, 28
      %v1214 = vpop.permute.xlu0 %1213
      %1216 = vst.msk [vmem:[#allocation3 + $0x10] sm:$0xff] %vm595, %v1214
      %v1217 = vld [vmem:[#allocation4 + $0x33] sm:$0xff]
      %1219 = vrot.lane.b32.xlu0 %v1217, 28
      %v1220 = vpop.permute.xlu0 %1219
      %1222 = vst.msk [vmem:[#allocation3 + $0x18] sm:$0xff] %vm595, %v1220
      %v1223 = vld [vmem:[#allocation4 + $0x3d] sm:$0xff]
      %1225 = vrot.lane.b32.xlu0 %v1223, 28
      %v1226 = vpop.permute.xlu0 %1225
      %1228 = vst.msk [vmem:[#allocation3 + $0x20] sm:$0xff] %vm595, %v1226
      %v1229 = vld [vmem:[#allocation4 + $0x47] sm:$0xff]
      %1231 = vrot.lane.b32.xlu0 %v1229, 28
      %v1232 = vpop.permute.xlu0 %1231
      %1234 = vst.msk [vmem:[#allocation3 + $0x28] sm:$0xff] %vm595, %v1232
      %v1235 = vld [vmem:[#allocation4 + $0x51] sm:$0xff]
      %1237 = vrot.lane.b32.xlu0 %v1235, 28
      %v1238 = vpop.permute.xlu0 %1237
      %1240 = vst.msk [vmem:[#allocation3 + $0x30] sm:$0xff] %vm595, %v1238
      %v1241 = vld [vmem:[#allocation4 + $0x5b] sm:$0xff]
      %1243 = vrot.lane.b32.xlu0 %v1241, 28
      %v1244 = vpop.permute.xlu0 %1243
      %1246 = vst.msk [vmem:[#allocation3 + $0x38] sm:$0xff] %vm595, %v1244
      %v1247 = vld [vmem:[#allocation4 + $0x16] sm:$0xff]
      %1249 = vrot.lane.b32.xlu0 %v1247, 32
      %v1250 = vpop.permute.xlu0 %1249
      %1252 = vst.msk [vmem:[#allocation3] sm:$0xff] %vm644, %v1250
      %v1253 = vld [vmem:[#allocation4 + $0x20] sm:$0xff]
      %1255 = vrot.lane.b32.xlu0 %v1253, 32
      %v1256 = vpop.permute.xlu0 %1255
      %1258 = vst.msk [vmem:[#allocation3 + $0x8] sm:$0xff] %vm644, %v1256
      %v1259 = vld [vmem:[#allocation4 + $0x2a] sm:$0xff]
      %1261 = vrot.lane.b32.xlu0 %v1259, 32
      %v1262 = vpop.permute.xlu0 %1261
      %1264 = vst.msk [vmem:[#allocation3 + $0x10] sm:$0xff] %vm644, %v1262
      %v1265 = vld [vmem:[#allocation4 + $0x34] sm:$0xff]
      %1267 = vrot.lane.b32.xlu0 %v1265, 32
      %v1268 = vpop.permute.xlu0 %1267
      %1270 = vst.msk [vmem:[#allocation3 + $0x18] sm:$0xff] %vm644, %v1268
      %v1271 = vld [vmem:[#allocation4 + $0x3e] sm:$0xff]
      %1273 = vrot.lane.b32.xlu0 %v1271, 32
      %v1274 = vpop.permute.xlu0 %1273
      %1276 = vst.msk [vmem:[#allocation3 + $0x20] sm:$0xff] %vm644, %v1274
      %v1277 = vld [vmem:[#allocation4 + $0x48] sm:$0xff]
      %1279 = vrot.lane.b32.xlu0 %v1277, 32
      %v1280 = vpop.permute.xlu0 %1279
      %1282 = vst.msk [vmem:[#allocation3 + $0x28] sm:$0xff] %vm644, %v1280
      %v1283 = vld [vmem:[#allocation4 + $0x52] sm:$0xff]
      %1285 = vrot.lane.b32.xlu0 %v1283, 32
      %v1286 = vpop.permute.xlu0 %1285
      %1288 = vst.msk [vmem:[#allocation3 + $0x30] sm:$0xff] %vm644, %v1286
      %v1289 = vld [vmem:[#allocation4 + $0x5c] sm:$0xff]
      %1291 = vrot.lane.b32.xlu0 %v1289, 32
      %v1292 = vpop.permute.xlu0 %1291
      %1294 = vst.msk [vmem:[#allocation3 + $0x38] sm:$0xff] %vm644, %v1292
      %v1295 = vld [vmem:[#allocation2] sm:$0xff]
      %v1296 = vld [vmem:[#allocation2 + $0x8] sm:$0xff]
      %v1297 = vld [vmem:[#allocation2 + $0x10] sm:$0xff]
      %v1298 = vld [vmem:[#allocation2 + $0x18] sm:$0xff]
      %v1299 = vld [vmem:[#allocation2 + $0x20] sm:$0xff]
      %v1300 = vld [vmem:[#allocation2 + $0x28] sm:$0xff]
      %v1301 = vld [vmem:[#allocation2 + $0x30] sm:$0xff]
      %v1302 = vld [vmem:[#allocation2 + $0x38] sm:$0xff]
      %v1303 = vld [vmem:[#allocation3] sm:$0xff]
      %v1304 = vld [vmem:[#allocation3 + $0x8] sm:$0xff]
      %v1305 = vld [vmem:[#allocation3 + $0x10] sm:$0xff]
      %v1306 = vld [vmem:[#allocation3 + $0x18] sm:$0xff]
      %v1307 = vld [vmem:[#allocation3 + $0x20] sm:$0xff]
      %v1308 = vld [vmem:[#allocation3 + $0x28] sm:$0xff]
      %v1309 = vld [vmem:[#allocation3 + $0x30] sm:$0xff]
      %v1310 = vld [vmem:[#allocation3 + $0x38] sm:$0xff]
      %v1311 = vld [vmem:[%s4] sm:$0xff]
      %v1312 = vld [vmem:[%s4 + $0x8] sm:$0xff]
      %v1313 = vld [vmem:[%s4 + $0x10] sm:$0xff]
      %v1314 = vld [vmem:[%s4 + $0x18] sm:$0xff]
      %v1315 = vld [vmem:[%s4 + $0x20] sm:$0xf]
      %v1317 = vsel %vm701, %v1303, 0
      %v1320 = vsel %vm701, %v1304, 0
      %v1323 = vsel %vm701, %v1305, 0
      %v1326 = vsel %vm701, %v1306, 0
      %v1329 = vsel %vm701, %v1307, 0
      %v1332 = vsel %vm701, %v1308, 0
      %v1335 = vsel %vm701, %v1309, 0
      %v1338 = vsel %vm701, %v1310, 0
      %v1341 = vsel %vm726, %v1315, 0
      %1343 = vmatprep.subr.mxu0 0.0
      %1344 = vmatpush1.msra.mxu0 %v1311
      %1345 = vmatprep.subr.mxu0 0.0
      %1346 = vmatpush1.msra.mxu0 %v1312
      %1347 = vmatprep.subr.mxu0 0.0
      %1348 = vmatpush1.msra.mxu0 %v1313
      %1349 = vmatprep.subr.mxu0 0.0
      %1350 = vmatpush1.msra.mxu0 %v1314
      %1351 = vmatprep.subr.mxu0 0.0
      %1352 = vmatpush1.msra.mxu0 %v1341
      %1353 = vmatprep.subr.mxu0 0.0
      %1354 = vmatpush1.msra.mxu0 0.0
      %1355 = vmatprep.subr.mxu0 0.0
      %1356 = vmatpush1.msra.mxu0 0.0
      %1357 = vmatprep.subr.mxu0 0.0
      %1358 = vmatpush1.msra.mxu0 0.0
      %1359 = vmatprep.subr.mxu0 0.0
      %1360 = vmatpush1.msra.mxu0 0.0
      %1361 = vmatprep.subr.mxu0 0.0
      %1362 = vmatpush1.msra.mxu0 0.0
      %1363 = vmatprep.subr.mxu0 0.0
      %1364 = vmatpush1.msra.mxu0 0.0
      %1365 = vmatprep.subr.mxu0 0.0
      %1366 = vmatpush1.msra.mxu0 0.0
      %1367 = vmatprep.subr.mxu0 0.0
      %1368 = vmatpush1.msra.mxu0 0.0
      %1369 = vmatprep.subr.mxu0 0.0
      %1370 = vmatpush1.msra.mxu0 0.0
      %1371 = vmatprep.subr.mxu0 0.0
      %1372 = vmatpush1.msra.mxu0 0.0
      %1373 = vmatprep.subr.mxu0 0.0
      %1374 = vmatpush1.msra.mxu0 0.0
      %1375 = vmatprep.subr.mxu0 0.0
      %1376 = vmatpush1.msra.mxu0 0.0
      %1377 = vmatprep.subr.mxu0 0.0
      %1378 = vmatpush1.msra.mxu0 0.0
      %1379 = vmatprep.subr.mxu0 0.0
      %1380 = vmatpush1.msra.mxu0 0.0
      %1381 = vmatprep.subr.mxu0 0.0
      %1382 = vmatpush1.msra.mxu0 0.0
      %1383 = vmatprep.subr.mxu0 0.0
      %1384 = vmatpush1.msra.mxu0 0.0
      %1385 = vmatprep.subr.mxu0 0.0
      %1386 = vmatpush1.msra.mxu0 0.0
      %1387 = vmatprep.subr.mxu0 0.0
      %1388 = vmatpush1.msra.mxu0 0.0
      %1389 = vmatprep.subr.mxu0 0.0
      %1390 = vmatpush1.msra.mxu0 0.0
      %1391 = vmatprep.subr.mxu0 0.0
      %1392 = vmatpush1.msra.mxu0 0.0
      %1393 = vmatprep.subr.mxu0 0.0
      %1394 = vmatpush1.msra.mxu0 0.0
      %1395 = vmatprep.subr.mxu0 0.0
      %1396 = vmatpush1.msra.mxu0 0.0
      %1397 = vmatprep.subr.mxu0 0.0
      %1398 = vmatpush1.msra.mxu0 0.0
      %1399 = vmatprep.subr.mxu0 0.0
      %1400 = vmatpush1.msra.mxu0 0.0
      %1401 = vmatprep.subr.mxu0 0.0
      %1402 = vmatpush1.msra.mxu0 0.0
      %1403 = vmatprep.subr.mxu0 0.0
      %1404 = vmatpush1.msra.mxu0 0.0
      %1405 = vmatprep.subr.mxu0 0.0
      %1406 = vmatpush1.msra.mxu0 0.0
      %1407 = vmatprep.mubr.f32.mxu0 0.0
      %1408 = vmatmul.mubr.f32.gmra.mrb[0].mxu0 %v1317
      %v1409 = vpop.f32.mrb[0].mxu0
      %v1410 = vadd.f32 0.0, %v1409
      %v1411 = vpop.f32.mrb[0].mxu0
      %1412 = vmatprep.mubr.f32.mxu0 0.0
      %1413 = vmatmul.mubr.f32.gmra.mrb[0].mxu0 %v1320
      %v1414 = vpop.f32.mrb[0].mxu0
      %v1415 = vadd.f32 0.0, %v1414
      %v1416 = vpop.f32.mrb[0].mxu0
      %1417 = vmatprep.mubr.f32.mxu0 0.0
      %1418 = vmatmul.mubr.f32.gmra.mrb[0].mxu0 %v1323
      %v1419 = vpop.f32.mrb[0].mxu0
      %v1420 = vadd.f32 0.0, %v1419
      %v1421 = vpop.f32.mrb[0].mxu0
      %1422 = vmatprep.mubr.f32.mxu0 0.0
      %1423 = vmatmul.mubr.f32.gmra.mrb[0].mxu0 %v1326
      %v1424 = vpop.f32.mrb[0].mxu0
      %v1425 = vadd.f32 0.0, %v1424
      %v1426 = vpop.f32.mrb[0].mxu0
      %1427 = vmatprep.mubr.f32.mxu0 0.0
      %1428 = vmatmul.mubr.f32.gmra.mrb[0].mxu0 %v1329
      %v1429 = vpop.f32.mrb[0].mxu0
      %v1430 = vadd.f32 0.0, %v1429
      %v1431 = vpop.f32.mrb[0].mxu0
      %1432 = vmatprep.mubr.f32.mxu0 0.0
      %1433 = vmatmul.mubr.f32.gmra.mrb[0].mxu0 %v1332
      %v1434 = vpop.f32.mrb[0].mxu0
      %v1435 = vadd.f32 0.0, %v1434
      %v1436 = vpop.f32.mrb[0].mxu0
      %1437 = vmatprep.mubr.f32.mxu0 0.0
      %1438 = vmatmul.mubr.f32.gmra.mrb[0].mxu0 %v1335
      %v1439 = vpop.f32.mrb[0].mxu0
      %v1440 = vadd.f32 0.0, %v1439
      %v1441 = vpop.f32.mrb[0].mxu0
      %1442 = vmatprep.mubr.f32.mxu0 0.0
      %1443 = vmatmul.mubr.f32.gmra.mrb[0].mxu0 %v1338
      %v1444 = vpop.f32.mrb[0].mxu0
      %v1445 = vadd.f32 0.0, %v1444
      %v1446 = vpop.f32.mrb[0].mxu0
      %1447 = vdwg.mxu0
      %v1448 = vld [vmem:[%s5] sm:$0x1]
      %v1450 = vlaneseq
      %v1451 = vshrl.u32 %v1450, 7
      %v1452 = vsub.s32 0, %v1451
      %v1453 = vrot.slane %v1448, %v1452
      %v1455 = vmul.f32 %v1410, %v1453
      %v1456 = vmul.f32 %v1415, %v1453
      %v1457 = vmul.f32 %v1420, %v1453
      %v1458 = vmul.f32 %v1425, %v1453
      %v1459 = vmul.f32 %v1430, %v1453
      %v1460 = vmul.f32 %v1435, %v1453
      %v1461 = vmul.f32 %v1440, %v1453
      %v1462 = vmul.f32 %v1445, %v1453
      %v1463 = vld [vmem:[%s6] sm:$0x1]
      %v1465 = vlaneseq
      %v1466 = vshrl.u32 %v1465, 7
      %v1467 = vsub.s32 0, %v1466
      %v1468 = vrot.slane %v1463, %v1467
      %v1470 = vadd.f32 %v1455, %v1468
      %v1471 = vadd.f32 %v1456, %v1468
      %v1472 = vadd.f32 %v1457, %v1468
      %v1473 = vadd.f32 %v1458, %v1468
      %v1474 = vadd.f32 %v1459, %v1468
      %v1475 = vadd.f32 %v1460, %v1468
      %v1476 = vadd.f32 %v1461, %v1468
      %v1477 = vadd.f32 %v1462, %v1468
      %1486 = vrot.lane.b32.xlu0 %v1295, 112
      %v1487 = vpop.permute.xlu0 %1486
      %1488 = vrot.lane.b32.xlu0 %v1296, 112
      %v1489 = vpop.permute.xlu0 %1488
      %1490 = vrot.lane.b32.xlu0 %v1297, 112
      %v1491 = vpop.permute.xlu0 %1490
      %1492 = vrot.lane.b32.xlu0 %v1298, 112
      %v1493 = vpop.permute.xlu0 %1492
      %1494 = vrot.lane.b32.xlu0 %v1299, 112
      %v1495 = vpop.permute.xlu0 %1494
      %1496 = vrot.lane.b32.xlu0 %v1300, 112
      %v1497 = vpop.permute.xlu0 %1496
      %1498 = vrot.lane.b32.xlu0 %v1301, 112
      %v1499 = vpop.permute.xlu0 %1498
      %1500 = vrot.lane.b32.xlu0 %v1302, 112
      %v1501 = vpop.permute.xlu0 %1500
      %v1510 = vadd.f32 %v1470, %v1487
      %v1511 = vadd.f32 %v1471, %v1489
      %v1512 = vadd.f32 %v1472, %v1491
      %v1513 = vadd.f32 %v1473, %v1493
      %v1514 = vadd.f32 %v1474, %v1495
      %v1515 = vadd.f32 %v1475, %v1497
      %v1516 = vadd.f32 %v1476, %v1499
      %v1517 = vadd.f32 %v1477, %v1501
      %v1518 = vmax.f32 %v1510, 0.0
      %v1519 = vmax.f32 %v1511, 0.0
      %v1520 = vmax.f32 %v1512, 0.0
      %v1521 = vmax.f32 %v1513, 0.0
      %v1522 = vmax.f32 %v1514, 0.0
      %v1523 = vmax.f32 %v1515, 0.0
      %v1524 = vmax.f32 %v1516, 0.0
      %v1525 = vmax.f32 %v1517, 0.0
      %1526 = vst.msk [vmem:[%s278] sm:$0xff] %vm280, %v1518
      %1527 = vst.msk [vmem:[%s278 + $0x8] sm:$0xff] %vm280, %v1519
      %1528 = vst.msk [vmem:[%s278 + $0x10] sm:$0xff] %vm280, %v1520
      %1529 = vst.msk [vmem:[%s278 + $0x18] sm:$0xff] %vm280, %v1521
      %1530 = vst.msk [vmem:[%s278 + $0x20] sm:$0xff] %vm280, %v1522
      %1531 = vst.msk [vmem:[%s278 + $0x28] sm:$0xff] %vm280, %v1523
      %1532 = vst.msk [vmem:[%s278 + $0x30] sm:$0xff] %vm280, %v1524
      %1533 = vst.msk [vmem:[%s278 + $0x38] sm:$0xff] %vm280, %v1525
      %p1534 = scmp.lt.s32.totalorder %s18, 1
      %s1535 = scalar_select %p1534, %s18, 1
      %s1536 = smul.addr %s1535, 8
      %s1537 = smul.addr %s1536, 8
      %s1538 = scalar_lea.vmem %s7, %s1537
      // Predicated region
      $region49: #{downsample_forward.13} parent=47 // pred_check
        %p1539 = pneg %p188
      $region50: #{downsample_forward.13} parent=47 // pred_check_branch
        %1541 = sbr.rel (%p1539) target = $region52
      $region51: #{downsample_forward.13} parent=47 // pred_region
        _
      $region52: #{downsample_forward.13} parent=47 // pred_fallthru
        _
    $region48: #{downsample_forward.13} parent=5 // pred_fallthru
      _
    %p1542 = scmp.le.s32.totalorder 2, %s13
    // Predicated region
    $region53: #{downsample_forward.13} parent=5 // pred_check
      %p1543 = pneg %p1542
    $region54: #{downsample_forward.13} parent=5 // pred_check_branch
      %1545 = sbr.rel (%p1543) target = $region56
    $region55: #{downsample_forward.13} parent=5 // pred_region
      %s1546 = ssub.s32 %s13, 2
      // Predicated region
      $region57: #{downsample_forward.13} parent=55 // pred_check
        %p1547 = pneg %p194
      $region58: #{downsample_forward.13} parent=55 // pred_check_branch
        %1549 = sbr.rel (%p1547) target = $region60
      $region59: #{downsample_forward.13} parent=55 // pred_region
        %p1550 = scmp.lt.s32.totalorder %s19, 1
        %s1551 = scalar_select %p1550, %s19, 1
        %s1552 = smul.addr %s1551, 8
        %s1553 = smul.addr %s1552, 8
        %s1554 = scalar_lea.vmem %s7, %s1553
      $region60: #{downsample_forward.13} parent=55 // pred_fallthru
        _
    $region56: #{downsample_forward.13} parent=5 // pred_fallthru
      _
  $region6: #{downsample_forward.13} parent=0 // loop_footer
    %s17 = sadd.s32 1, %s13
  $region7: #{downsample_forward.13} parent=0 // loop_footer_branch
    %12 = sbr.rel target = $region3
  $region8: #{downsample_forward.13} parent=0 // loop_exit
    _

// kernel: downsample_forward.16
$region0: #{downsample_forward.16}
  #allocation0 [shape = 'u32[]', space=smem, size = 0x4, offset = 0x4, fixed_abs, tag = 'smem constant byte address 0x4 - core index']
  #allocation1 [shape = 'u32[144,128]{1,0:T(1,128)}', space=vmem, size = 0x12000, scoped, tag = 'internal scratch']
  #allocation2 [shape = 'f32[16,72]{1,0:T(8,128)}', space=vmem, size = 0x2000, scoped, tag = 'scratch operand']
  #allocation3 [shape = 'f32[16,72]{1,0:T(8,128)}', space=vmem, size = 0x2000, scoped, tag = 'scratch operand']
  #allocation4 [shape = 'f32[36,8]{1,0:T(8,128)}', space=vmem, size = 0x5000, scoped, tag = 'scratch operand']
  %s0 = inlined_call_operand.vmem [shape: f32[2,36,8], index: 0, kind: input, shape index: {}]
  %s1 = inlined_call_operand.vmem [shape: f32[72,8], index: 1, kind: input, shape index: {}]
  %s2 = inlined_call_operand.vmem [shape: f32[1,8], index: 2, kind: input, shape index: {}]
  %s3 = inlined_call_operand.vmem [shape: f32[1,8], index: 3, kind: input, shape index: {}]
  %s4 = inlined_call_operand.vmem [shape: f32[72,8], index: 4, kind: input, shape index: {}]
  %s5 = inlined_call_operand.vmem [shape: f32[1,8], index: 5, kind: input, shape index: {}]
  %s6 = inlined_call_operand.vmem [shape: f32[1,8], index: 6, kind: input, shape index: {}]
  %s7 = inlined_call_operand.vmem [shape: f32[2,16,8], index: 7, kind: output, shape index: {}]
  %s8 = sld [smem:[#allocation0]]
  $region61: #{downsample_forward.16} parent=0
    _
  %s10 = ssub.s32 1, %s8
  %s11 = scalar_select 0, %s10, %s8
  loop: start=0, step=1, limit=4
  $region2: #{downsample_forward.16} parent=0 // loop_pre_header
    _
  $region3: #{downsample_forward.16} parent=0 // loop_header
    %s13 = sphi 0, %s17
    %p14 = scmp.ge.s32.totalorder %s13, 4
    %s23 = sphi 0, %s25
    %s26 = sphi 0, %s23
    %s27 = sphi 0, %s26
    %s43 = sphi 0, %s27
    %s47 = sphi 0, %s47
    %s49 = sphi 0, %s47
    %s50 = sphi 0, %s49
    %s64 = sphi 0, %s50
    %s68 = sphi 0, %s68
    %s70 = sphi 0, %s68
    %s71 = sphi 0, %s70
    %s85 = sphi 0, %s71
    %s89 = sphi 0, %s89
    %s91 = sphi 0, %s89
    %s92 = sphi 0, %s91
    %s106 = sphi 0, %s92
    %s110 = sphi 0, %s110
    %s112 = sphi 0, %s110
    %s113 = sphi 0, %s112
    %s127 = sphi 0, %s113
    %s131 = sphi 0, %s131
    %s133 = sphi 0, %s131
    %s134 = sphi 0, %s133
    %s148 = sphi 0, %s134
    %s152 = sphi 0, %s152
    %s154 = sphi 0, %s152
    %s155 = sphi 0, %s154
    %s169 = sphi 0, %s155
    %s175 = sphi 0, %s177
    %s178 = sphi 0, %s175
    %s179 = sphi 0, %s178
    %s195 = sphi 0, %s179
  $region4: #{downsample_forward.16} parent=0 // loop_header_branch
    %16 = sbr.rel (%p14) target = $region8
  $region5: #{downsample_forward.16} parent=0 // loop_body
    %s18 = ssub.s32 %s13, 1
    %s19 = ssub.s32 %s13, 2
    %s20 = sadd.s32 %s13, 1
    %s21 = ssub.s32 %s13, %s20
    %p22 = scmp.eq.s32.totalorder %s21, 0
    %s24 = sadd.s32 %s23, 1
    %s25 = scalar_select %p22, %s23, %s24
    %p28 = pneg %p22
    %p29 = scmp.eq.s32.totalorder %s13, 1
    %p30 = por %p28, %p29
    %p31 = scmp.ne.s32.totalorder %s23, %s26
    %p32 = scmp.eq.s32.totalorder %s13, 0
    %p33 = por %p31, %p32
    %p34 = scmp.ne.s32.totalorder %s23, %s26
    %p35 = scmp.eq.s32.totalorder %s18, 1
    %p36 = por %p34, %p35
    %p37 = scmp.ne.s32.totalorder %s26, %s27
    %p38 = scmp.eq.s32.totalorder %s18, 0
    %p39 = por %p37, %p38
    %p40 = scmp.ne.s32.totalorder %s26, %s27
    %p41 = scmp.eq.s32.totalorder %s19, 1
    %p42 = por %p40, %p41
    %p44 = scmp.ne.s32.totalorder %s27, %s43
    %p45 = scmp.eq.s32.totalorder %s19, 0
    %p46 = por %p44, %p45
    %s48 = sadd.s32 %s47, 1
    %p51 = scmp.eq.s32.totalorder %s13, 1
    %p52 = scmp.ne.s32.totalorder %s47, %s49
    %p53 = scmp.eq.s32.totalorder %s13, 0
    %p54 = por %p52, %p53
    %p55 = scmp.ne.s32.totalorder %s47, %s49
    %p56 = scmp.eq.s32.totalorder %s18, 1
    %p57 = por %p55, %p56
    %p58 = scmp.ne.s32.totalorder %s49, %s50
    %p59 = scmp.eq.s32.totalorder %s18, 0
    %p60 = por %p58, %p59
    %p61 = scmp.ne.s32.totalorder %s49, %s50
    %p62 = scmp.eq.s32.totalorder %s19, 1
    %p63 = por %p61, %p62
    %p65 = scmp.ne.s32.totalorder %s50, %s64
    %p66 = scmp.eq.s32.totalorder %s19, 0
    %p67 = por %p65, %p66
    %s69 = sadd.s32 %s68, 1
    %p72 = scmp.eq.s32.totalorder %s13, 1
    %p73 = scmp.ne.s32.totalorder %s68, %s70
    %p74 = scmp.eq.s32.totalorder %s13, 0
    %p75 = por %p73, %p74
    %p76 = scmp.ne.s32.totalorder %s68, %s70
    %p77 = scmp.eq.s32.totalorder %s18, 1
    %p78 = por %p76, %p77
    %p79 = scmp.ne.s32.totalorder %s70, %s71
    %p80 = scmp.eq.s32.totalorder %s18, 0
    %p81 = por %p79, %p80
    %p82 = scmp.ne.s32.totalorder %s70, %s71
    %p83 = scmp.eq.s32.totalorder %s19, 1
    %p84 = por %p82, %p83
    %p86 = scmp.ne.s32.totalorder %s71, %s85
    %p87 = scmp.eq.s32.totalorder %s19, 0
    %p88 = por %p86, %p87
    %s90 = sadd.s32 %s89, 1
    %p93 = scmp.eq.s32.totalorder %s13, 1
    %p94 = scmp.ne.s32.totalorder %s89, %s91
    %p95 = scmp.eq.s32.totalorder %s13, 0
    %p96 = por %p94, %p95
    %p97 = scmp.ne.s32.totalorder %s89, %s91
    %p98 = scmp.eq.s32.totalorder %s18, 1
    %p99 = por %p97, %p98
    %p100 = scmp.ne.s32.totalorder %s91, %s92
    %p101 = scmp.eq.s32.totalorder %s18, 0
    %p102 = por %p100, %p101
    %p103 = scmp.ne.s32.totalorder %s91, %s92
    %p104 = scmp.eq.s32.totalorder %s19, 1
    %p105 = por %p103, %p104
    %p107 = scmp.ne.s32.totalorder %s92, %s106
    %p108 = scmp.eq.s32.totalorder %s19, 0
    %p109 = por %p107, %p108
    %s111 = sadd.s32 %s110, 1
    %p114 = scmp.eq.s32.totalorder %s13, 1
    %p115 = scmp.ne.s32.totalorder %s110, %s112
    %p116 = scmp.eq.s32.totalorder %s13, 0
    %p117 = por %p115, %p116
    %p118 = scmp.ne.s32.totalorder %s110, %s112
    %p119 = scmp.eq.s32.totalorder %s18, 1
    %p120 = por %p118, %p119
    %p121 = scmp.ne.s32.totalorder %s112, %s113
    %p122 = scmp.eq.s32.totalorder %s18, 0
    %p123 = por %p121, %p122
    %p124 = scmp.ne.s32.totalorder %s112, %s113
    %p125 = scmp.eq.s32.totalorder %s19, 1
    %p126 = por %p124, %p125
    %p128 = scmp.ne.s32.totalorder %s113, %s127
    %p129 = scmp.eq.s32.totalorder %s19, 0
    %p130 = por %p128, %p129
    %s132 = sadd.s32 %s131, 1
    %p135 = scmp.eq.s32.totalorder %s13, 1
    %p136 = scmp.ne.s32.totalorder %s131, %s133
    %p137 = scmp.eq.s32.totalorder %s13, 0
    %p138 = por %p136, %p137
    %p139 = scmp.ne.s32.totalorder %s131, %s133
    %p140 = scmp.eq.s32.totalorder %s18, 1
    %p141 = por %p139, %p140
    %p142 = scmp.ne.s32.totalorder %s133, %s134
    %p143 = scmp.eq.s32.totalorder %s18, 0
    %p144 = por %p142, %p143
    %p145 = scmp.ne.s32.totalorder %s133, %s134
    %p146 = scmp.eq.s32.totalorder %s19, 1
    %p147 = por %p145, %p146
    %p149 = scmp.ne.s32.totalorder %s134, %s148
    %p150 = scmp.eq.s32.totalorder %s19, 0
    %p151 = por %p149, %p150
    %s153 = sadd.s32 %s152, 1
    %p156 = scmp.eq.s32.totalorder %s13, 1
    %p157 = scmp.ne.s32.totalorder %s152, %s154
    %p158 = scmp.eq.s32.totalorder %s13, 0
    %p159 = por %p157, %p158
    %p160 = scmp.ne.s32.totalorder %s152, %s154
    %p161 = scmp.eq.s32.totalorder %s18, 1
    %p162 = por %p160, %p161
    %p163 = scmp.ne.s32.totalorder %s154, %s155
    %p164 = scmp.eq.s32.totalorder %s18, 0
    %p165 = por %p163, %p164
    %p166 = scmp.ne.s32.totalorder %s154, %s155
    %p167 = scmp.eq.s32.totalorder %s19, 1
    %p168 = por %p166, %p167
    %p170 = scmp.ne.s32.totalorder %s155, %s169
    %p171 = scmp.eq.s32.totalorder %s19, 0
    %p172 = por %p170, %p171
    %s173 = ssub.s32 %s13, %s20
    %p174 = scmp.eq.s32.totalorder %s173, 0
    %s176 = sadd.s32 %s175, 1
    %s177 = scalar_select %p174, %s175, %s176
    %p180 = pneg %p174
    %p181 = scmp.eq.s32.totalorder %s13, 1
    %p182 = por %p180, %p181
    %p183 = scmp.ne.s32.totalorder %s175, %s178
    %p184 = scmp.eq.s32.totalorder %s13, 0
    %p185 = por %p183, %p184
    %p186 = scmp.ne.s32.totalorder %s175, %s178
    %p187 = scmp.eq.s32.totalorder %s18, 1
    %p188 = por %p186, %p187
    %p189 = scmp.ne.s32.totalorder %s178, %s179
    %p190 = scmp.eq.s32.totalorder %s18, 0
    %p191 = por %p189, %p190
    %p192 = scmp.ne.s32.totalorder %s178, %s179
    %p193 = scmp.eq.s32.totalorder %s19, 1
    %p194 = por %p192, %p193
    %p196 = scmp.ne.s32.totalorder %s179, %s195
    %p197 = scmp.eq.s32.totalorder %s19, 0
    %p198 = por %p196, %p197
    %p199 = scmp.le.s32.totalorder 1, %s13
    %p200 = scmp.lt.s32.totalorder %s13, 3
    %p201 = pnand %p199, %p200
    %p202 = pneg %p201
    // Predicated region
    $region9: #{downsample_forward.16} parent=5 // pred_check
      _
    $region10: #{downsample_forward.16} parent=5 // pred_check_branch
      %204 = sbr.rel (%p201) target = $region12
    $region11: #{downsample_forward.16} parent=5 // pred_region
      %s205 = ssub.s32 %s13, 1
      // Predicated region
      $region13: #{downsample_forward.16} parent=11 // pred_check
        %p206 = pneg %p60
      $region14: #{downsample_forward.16} parent=11 // pred_check_branch
        %208 = sbr.rel (%p206) target = $region16
      $region15: #{downsample_forward.16} parent=11 // pred_region
        _
      $region16: #{downsample_forward.16} parent=11 // pred_fallthru
        _
      // Predicated region
      $region17: #{downsample_forward.16} parent=11 // pred_check
        %p209 = pneg %p81
      $region18: #{downsample_forward.16} parent=11 // pred_check_branch
        %211 = sbr.rel (%p209) target = $region20
      $region19: #{downsample_forward.16} parent=11 // pred_region
        _
      $region20: #{downsample_forward.16} parent=11 // pred_fallthru
        _
      // Predicated region
      $region21: #{downsample_forward.16} parent=11 // pred_check
        %p212 = pneg %p102
      $region22: #{downsample_forward.16} parent=11 // pred_check_branch
        %214 = sbr.rel (%p212) target = $region24
      $region23: #{downsample_forward.16} parent=11 // pred_region
        _
      $region24: #{downsample_forward.16} parent=11 // pred_fallthru
        _
      // Predicated region
      $region25: #{downsample_forward.16} parent=11 // pred_check
        %p215 = pneg %p123
      $region26: #{downsample_forward.16} parent=11 // pred_check_branch
        %217 = sbr.rel (%p215) target = $region28
      $region27: #{downsample_forward.16} parent=11 // pred_region
        _
      $region28: #{downsample_forward.16} parent=11 // pred_fallthru
        _
      // Predicated region
      $region29: #{downsample_forward.16} parent=11 // pred_check
        %p218 = pneg %p144
      $region30: #{downsample_forward.16} parent=11 // pred_check_branch
        %220 = sbr.rel (%p218) target = $region32
      $region31: #{downsample_forward.16} parent=11 // pred_region
        _
      $region32: #{downsample_forward.16} parent=11 // pred_fallthru
        _
      // Predicated region
      $region33: #{downsample_forward.16} parent=11 // pred_check
        %p221 = pneg %p165
      $region34: #{downsample_forward.16} parent=11 // pred_check_branch
        %223 = sbr.rel (%p221) target = $region36
      $region35: #{downsample_forward.16} parent=11 // pred_region
        _
      $region36: #{downsample_forward.16} parent=11 // pred_fallthru
        _
    $region12: #{downsample_forward.16} parent=5 // pred_fallthru
      _
    %p224 = scmp.lt.s32.totalorder %s13, 2
    // Predicated region
    $region37: #{downsample_forward.16} parent=5 // pred_check
      %p225 = pneg %p224
    $region38: #{downsample_forward.16} parent=5 // pred_check_branch
      %227 = sbr.rel (%p225) target = $region40
    $region39: #{downsample_forward.16} parent=5 // pred_region
      // Predicated region
      $region41: #{downsample_forward.16} parent=39 // pred_check
        %p228 = pneg %p33
      $region42: #{downsample_forward.16} parent=39 // pred_check_branch
        %230 = sbr.rel (%p228) target = $region44
      $region43: #{downsample_forward.16} parent=39 // pred_region
        %p231 = scmp.lt.s32.totalorder %s13, 1
        %s232 = scalar_select %p231, %s13, 1
        %s233 = smul.addr %s232, 5
        %s234 = smul.addr %s233, 8
        %s235 = scalar_lea.vmem %s0, %s234
      $region44: #{downsample_forward.16} parent=39 // pred_fallthru
        _
    $region40: #{downsample_forward.16} parent=5 // pred_fallthru
      _
    %p236 = scmp.le.s32.totalorder 1, %s13
    %p237 = scmp.lt.s32.totalorder %s13, 3
    %p238 = pnand %p236, %p237
    %p239 = pneg %p238
    // Predicated region
    $region45: #{downsample_forward.16} parent=5 // pred_check
      _
    $region46: #{downsample_forward.16} parent=5 // pred_check_branch
      %241 = sbr.rel (%p238) target = $region48
    $region47: #{downsample_forward.16} parent=5 // pred_region
      %s242 = ssub.s32 %s13, 1
      %p243 = scmp.lt.s32.totalorder %s18, 1
      %s244 = scalar_select %p243, %s18, 1
      %s245 = smul.addr %s244, 5
      %s246 = smul.addr %s245, 8
      %s247 = scalar_lea.vmem %s0, %s246
      %p248 = pneg %p39
      %p249 = pneg %p36
      %p250 = pneg %p60
      %p251 = pneg %p57
      %p252 = pneg %p81
      %p253 = pneg %p78
      %p254 = pneg %p102
      %p255 = pneg %p99
      %p256 = pneg %p123
      %p257 = pneg %p120
      %p258 = pneg %p144
      %p259 = pneg %p141
      %p260 = pneg %p165
      %p261 = pneg %p162
      %p262 = pneg %p191
      %p263 = pneg %p188
      %p264 = scmp.lt.s32.totalorder %s18, 1
      %s265 = scalar_select %p264, %s18, 1
      %s266 = smul.addr %s265, 2
      %s267 = smul.addr %s266, 8
      %s268 = scalar_lea.vmem %s7, %s267
      %p269 = scmp.lt.s32.totalorder %s18, 1
      %s270 = scalar_select %p269, %s18, 1
      %s271 = smul.addr %s270, 5
      %s272 = smul.addr %s271, 8
      %s273 = scalar_lea.vmem %s0, %s272
      %p274 = scmp.lt.s32.totalorder %s18, 1
      %s275 = scalar_select %p274, %s18, 1
      %s276 = smul.addr %s275, 2
      %s277 = smul.addr %s276, 8
      %s278 = scalar_lea.vmem %s7, %s277
      %v279 = vld [vmem:[%s273] sm:$0xf]
      %vm280 = vcmask 60416
      %281 = vst.msk [vmem:[#allocation2] sm:$0xf] %vm280, %v279
      %v282 = vld [vmem:[%s273 + $0x6] sm:$0xf]
      %283 = vst.msk [vmem:[#allocation2 + $0x4] sm:$0xf] %vm280, %v282
      %v284 = vld [vmem:[%s273 + $0xc] sm:$0xf]
      %285 = vst.msk [vmem:[#allocation2 + $0x8] sm:$0xf] %vm280, %v284
      %v286 = vld [vmem:[%s273 + $0x12] sm:$0xf]
      %287 = vst.msk [vmem:[#allocation2 + $0xc] sm:$0xf] %vm280, %v286
      %v288 = vld [vmem:[%s273 + $0x1] sm:$0xf]
      %290 = vrot.lane.b32.xlu0 %v288, 8
      %v291 = vpop.permute.xlu0 %290
      %vm293 = vcmask 126016
      %294 = vst.msk [vmem:[#allocation2] sm:$0xf] %vm293, %v291
      %v295 = vld [vmem:[%s273 + $0x7] sm:$0xf]
      %297 = vrot.lane.b32.xlu0 %v295, 8
      %v298 = vpop.permute.xlu0 %297
      %300 = vst.msk [vmem:[#allocation2 + $0x4] sm:$0xf] %vm293, %v298
      %v301 = vld [vmem:[%s273 + $0xd] sm:$0xf]
      %303 = vrot.lane.b32.xlu0 %v301, 8
      %v304 = vpop.permute.xlu0 %303
      %306 = vst.msk [vmem:[#allocation2 + $0x8] sm:$0xf] %vm293, %v304
      %v307 = vld [vmem:[%s273 + $0x13] sm:$0xf]
      %309 = vrot.lane.b32.xlu0 %v307, 8
      %v310 = vpop.permute.xlu0 %309
      %312 = vst.msk [vmem:[#allocation2 + $0xc] sm:$0xf] %vm293, %v310
      %v313 = vld [vmem:[%s273 + $0x2] sm:$0xf]
      %315 = vrot.lane.b32.xlu0 %v313, 16
      %v316 = vpop.permute.xlu0 %315
      %vm318 = vcmask 191616
      %319 = vst.msk [vmem:[#allocation2] sm:$0xf] %vm318, %v316
      %v320 = vld [vmem:[%s273 + $0x8] sm:$0xf]
      %322 = vrot.lane.b32.xlu0 %v320, 16
      %v323 = vpop.permute.xlu0 %322
      %325 = vst.msk [vmem:[#allocation2 + $0x4] sm:$0xf] %vm318, %v323
      %v326 = vld [vmem:[%s273 + $0xe] sm:$0xf]
      %328 = vrot.lane.b32.xlu0 %v326, 16
      %v329 = vpop.permute.xlu0 %328
      %331 = vst.msk [vmem:[#allocation2 + $0x8] sm:$0xf] %vm318, %v329
      %v332 = vld [vmem:[%s273 + $0x14] sm:$0xf]
      %334 = vrot.lane.b32.xlu0 %v332, 16
      %v335 = vpop.permute.xlu0 %334
      %337 = vst.msk [vmem:[#allocation2 + $0xc] sm:$0xf] %vm318, %v335
      %v338 = vld [vmem:[%s273 + $0x6] sm:$0xf]
      %340 = vrot.lane.b32.xlu0 %v338, 24
      %v341 = vpop.permute.xlu0 %340
      %vm343 = vcmask 257216
      %344 = vst.msk [vmem:[#allocation2] sm:$0xf] %vm343, %v341
      %v345 = vld [vmem:[%s273 + $0xc] sm:$0xf]
      %347 = vrot.lane.b32.xlu0 %v345, 24
      %v348 = vpop.permute.xlu0 %347
      %350 = vst.msk [vmem:[#allocation2 + $0x4] sm:$0xf] %vm343, %v348
      %v351 = vld [vmem:[%s273 + $0x12] sm:$0xf]
      %353 = vrot.lane.b32.xlu0 %v351, 24
      %v354 = vpop.permute.xlu0 %353
      %356 = vst.msk [vmem:[#allocation2 + $0x8] sm:$0xf] %vm343, %v354
      %v357 = vld [vmem:[%s273 + $0x18] sm:$0xf]
      %359 = vrot.lane.b32.xlu0 %v357, 24
      %v360 = vpop.permute.xlu0 %359
      %362 = vst.msk [vmem:[#allocation2 + $0xc] sm:$0xf] %vm343, %v360
      %v363 = vld [vmem:[%s273 + $0x7] sm:$0xf]
      %365 = vrot.lane.b32.xlu0 %v363, 32
      %v366 = vpop.permute.xlu0 %365
      %vm368 = vcmask 322816
      %369 = vst.msk [vmem:[#allocation2] sm:$0xf] %vm368, %v366
      %v370 = vld [vmem:[%s273 + $0xd] sm:$0xf]
      %372 = vrot.lane.b32.xlu0 %v370, 32
      %v373 = vpop.permute.xlu0 %372
      %375 = vst.msk [vmem:[#allocation2 + $0x4] sm:$0xf] %vm368, %v373
      %v376 = vld [vmem:[%s273 + $0x13] sm:$0xf]
      %378 = vrot.lane.b32.xlu0 %v376, 32
      %v379 = vpop.permute.xlu0 %378
      %381 = vst.msk [vmem:[#allocation2 + $0x8] sm:$0xf] %vm368, %v379
      %v382 = vld [vmem:[%s273 + $0x19] sm:$0xf]
      %384 = vrot.lane.b32.xlu0 %v382, 32
      %v385 = vpop.permute.xlu0 %384
      %387 = vst.msk [vmem:[#allocation2 + $0xc] sm:$0xf] %vm368, %v385
      %v388 = vld [vmem:[%s273 + $0x8] sm:$0xf]
      %390 = vrot.lane.b32.xlu0 %v388, 40
      %v391 = vpop.permute.xlu0 %390
      %vm393 = vcmask 388416
      %394 = vst.msk [vmem:[#allocation2] sm:$0xf] %vm393, %v391
      %v395 = vld [vmem:[%s273 + $0xe] sm:$0xf]
      %397 = vrot.lane.b32.xlu0 %v395, 40
      %v398 = vpop.permute.xlu0 %397
      %400 = vst.msk [vmem:[#allocation2 + $0x4] sm:$0xf] %vm393, %v398
      %v401 = vld [vmem:[%s273 + $0x14] sm:$0xf]
      %403 = vrot.lane.b32.xlu0 %v401, 40
      %v404 = vpop.permute.xlu0 %403
      %406 = vst.msk [vmem:[#allocation2 + $0x8] sm:$0xf] %vm393, %v404
      %v407 = vld [vmem:[%s273 + $0x1a] sm:$0xf]
      %409 = vrot.lane.b32.xlu0 %v407, 40
      %v410 = vpop.permute.xlu0 %409
      %412 = vst.msk [vmem:[#allocation2 + $0xc] sm:$0xf] %vm393, %v410
      %v413 = vld [vmem:[%s273 + $0xc] sm:$0xf]
      %415 = vrot.lane.b32.xlu0 %v413, 48
      %v416 = vpop.permute.xlu0 %415
      %vm418 = vcmask 454016
      %419 = vst.msk [vmem:[#allocation2] sm:$0xf] %vm418, %v416
      %v420 = vld [vmem:[%s273 + $0x12] sm:$0xf]
      %422 = vrot.lane.b32.xlu0 %v420, 48
      %v423 = vpop.permute.xlu0 %422
      %425 = vst.msk [vmem:[#allocation2 + $0x4] sm:$0xf] %vm418, %v423
      %v426 = vld [vmem:[%s273 + $0x18] sm:$0xf]
      %428 = vrot.lane.b32.xlu0 %v426, 48
      %v429 = vpop.permute.xlu0 %428
      %431 = vst.msk [vmem:[#allocation2 + $0x8] sm:$0xf] %vm418, %v429
      %v432 = vld [vmem:[%s273 + $0x1e] sm:$0xf]
      %434 = vrot.lane.b32.xlu0 %v432, 48
      %v435 = vpop.permute.xlu0 %434
      %437 = vst.msk [vmem:[#allocation2 + $0xc] sm:$0xf] %vm418, %v435
      %v438 = vld [vmem:[%s273 + $0xd] sm:$0xf]
      %440 = vrot.lane.b32.xlu0 %v438, 56
      %v441 = vpop.permute.xlu0 %440
      %vm443 = vcmask 519616
      %444 = vst.msk [vmem:[#allocation2] sm:$0xf] %vm443, %v441
      %v445 = vld [vmem:[%s273 + $0x13] sm:$0xf]
      %447 = vrot.lane.b32.xlu0 %v445, 56
      %v448 = vpop.permute.xlu0 %447
      %450 = vst.msk [vmem:[#allocation2 + $0x4] sm:$0xf] %vm443, %v448
      %v451 = vld [vmem:[%s273 + $0x19] sm:$0xf]
      %453 = vrot.lane.b32.xlu0 %v451, 56
      %v454 = vpop.permute.xlu0 %453
      %456 = vst.msk [vmem:[#allocation2 + $0x8] sm:$0xf] %vm443, %v454
      %v457 = vld [vmem:[%s273 + $0x1f] sm:$0xf]
      %459 = vrot.lane.b32.xlu0 %v457, 56
      %v460 = vpop.permute.xlu0 %459
      %462 = vst.msk [vmem:[#allocation2 + $0xc] sm:$0xf] %vm443, %v460
      %v463 = vld [vmem:[%s273 + $0xe] sm:$0xf]
      %465 = vrot.lane.b32.xlu0 %v463, 64
      %v466 = vpop.permute.xlu0 %465
      %vm468 = vcmask 585216
      %469 = vst.msk [vmem:[#allocation2] sm:$0xf] %vm468, %v466
      %v470 = vld [vmem:[%s273 + $0x14] sm:$0xf]
      %472 = vrot.lane.b32.xlu0 %v470, 64
      %v473 = vpop.permute.xlu0 %472
      %475 = vst.msk [vmem:[#allocation2 + $0x4] sm:$0xf] %vm468, %v473
      %v476 = vld [vmem:[%s273 + $0x1a] sm:$0xf]
      %478 = vrot.lane.b32.xlu0 %v476, 64
      %v479 = vpop.permute.xlu0 %478
      %481 = vst.msk [vmem:[#allocation2 + $0x8] sm:$0xf] %vm468, %v479
      %v482 = vld [vmem:[%s273 + $0x20] sm:$0xf]
      %484 = vrot.lane.b32.xlu0 %v482, 64
      %v485 = vpop.permute.xlu0 %484
      %487 = vst.msk [vmem:[#allocation2 + $0xc] sm:$0xf] %vm468, %v485
      %v488 = vld [vmem:[#allocation2] sm:$0xff]
      %v489 = vld [vmem:[#allocation2 + $0x8] sm:$0xff]
      %v490 = vld [vmem:[%s1] sm:$0xff]
      %v491 = vld [vmem:[%s1 + $0x8] sm:$0xff]
      %v492 = vld [vmem:[%s1 + $0x10] sm:$0xff]
      %v493 = vld [vmem:[%s1 + $0x18] sm:$0xff]
      %v494 = vld [vmem:[%s1 + $0x20] sm:$0xff]
      %v495 = vld [vmem:[%s1 + $0x28] sm:$0xff]
      %v496 = vld [vmem:[%s1 + $0x30] sm:$0xff]
      %v497 = vld [vmem:[%s1 + $0x38] sm:$0xff]
      %v498 = vld [vmem:[%s1 + $0x40] sm:$0xff]
      %vm499 = vcmask 588800
      %v501 = vsel %vm499, %v488, 0
      %v504 = vsel %vm499, %v489, 0
      %506 = vmatprep.subr.mxu0 0.0
      %507 = vmatpush1.msra.mxu0 %v490
      %508 = vmatprep.subr.mxu0 0.0
      %509 = vmatpush1.msra.mxu0 %v491
      %510 = vmatprep.subr.mxu0 0.0
      %511 = vmatpush1.msra.mxu0 %v492
      %512 = vmatprep.subr.mxu0 0.0
      %513 = vmatpush1.msra.mxu0 %v493
      %514 = vmatprep.subr.mxu0 0.0
      %515 = vmatpush1.msra.mxu0 %v494
      %516 = vmatprep.subr.mxu0 0.0
      %517 = vmatpush1.msra.mxu0 %v495
      %518 = vmatprep.subr.mxu0 0.0
      %519 = vmatpush1.msra.mxu0 %v496
      %520 = vmatprep.subr.mxu0 0.0
      %521 = vmatpush1.msra.mxu0 %v497
      %522 = vmatprep.subr.mxu0 0.0
      %523 = vmatpush1.msra.mxu0 %v498
      %524 = vmatprep.subr.mxu0 0.0
      %525 = vmatpush1.msra.mxu0 0.0
      %526 = vmatprep.subr.mxu0 0.0
      %527 = vmatpush1.msra.mxu0 0.0
      %528 = vmatprep.subr.mxu0 0.0
      %529 = vmatpush1.msra.mxu0 0.0
      %530 = vmatprep.subr.mxu0 0.0
      %531 = vmatpush1.msra.mxu0 0.0
      %532 = vmatprep.subr.mxu0 0.0
      %533 = vmatpush1.msra.mxu0 0.0
      %534 = vmatprep.subr.mxu0 0.0
      %535 = vmatpush1.msra.mxu0 0.0
      %536 = vmatprep.subr.mxu0 0.0
      %537 = vmatpush1.msra.mxu0 0.0
      %538 = vmatprep.subr.mxu0 0.0
      %539 = vmatpush1.msra.mxu0 0.0
      %540 = vmatprep.subr.mxu0 0.0
      %541 = vmatpush1.msra.mxu0 0.0
      %542 = vmatprep.subr.mxu0 0.0
      %543 = vmatpush1.msra.mxu0 0.0
      %544 = vmatprep.subr.mxu0 0.0
      %545 = vmatpush1.msra.mxu0 0.0
      %546 = vmatprep.subr.mxu0 0.0
      %547 = vmatpush1.msra.mxu0 0.0
      %548 = vmatprep.subr.mxu0 0.0
      %549 = vmatpush1.msra.mxu0 0.0
      %550 = vmatprep.subr.mxu0 0.0
      %551 = vmatpush1.msra.mxu0 0.0
      %552 = vmatprep.subr.mxu0 0.0
      %553 = vmatpush1.msra.mxu0 0.0
      %554 = vmatprep.subr.mxu0 0.0
      %555 = vmatpush1.msra.mxu0 0.0
      %556 = vmatprep.subr.mxu0 0.0
      %557 = vmatpush1.msra.mxu0 0.0
      %558 = vmatprep.subr.mxu0 0.0
      %559 = vmatpush1.msra.mxu0 0.0
      %560 = vmatprep.subr.mxu0 0.0
      %561 = vmatpush1.msra.mxu0 0.0
      %562 = vmatprep.subr.mxu0 0.0
      %563 = vmatpush1.msra.mxu0 0.0
      %564 = vmatprep.subr.mxu0 0.0
      %565 = vmatpush1.msra.mxu0 0.0
      %566 = vmatprep.subr.mxu0 0.0
      %567 = vmatpush1.msra.mxu0 0.0
      %568 = vmatprep.subr.mxu0 0.0
      %569 = vmatpush1.msra.mxu0 0.0
      %570 = vmatprep.mubr.f32.mxu0 0.0
      %571 = vmatmul.mubr.f32.gmra.mrb[0].mxu0 %v501
      %v572 = vpop.f32.mrb[0].mxu0
      %v573 = vadd.f32 0.0, %v572
      %v574 = vpop.f32.mrb[0].mxu0
      %575 = vmatprep.mubr.f32.mxu0 0.0
      %576 = vmatmul.mubr.f32.gmra.mrb[0].mxu0 %v504
      %v577 = vpop.f32.mrb[0].mxu0
      %v578 = vadd.f32 0.0, %v577
      %v579 = vpop.f32.mrb[0].mxu0
      %580 = vdwg.mxu0
      %v581 = vld [vmem:[%s2] sm:$0x1]
      %v583 = vlaneseq
      %v584 = vshrl.u32 %v583, 7
      %v585 = vsub.s32 0, %v584
      %v586 = vrot.slane %v581, %v585
      %v588 = vmul.f32 %v573, %v586
      %v589 = vmul.f32 %v578, %v586
      %v590 = vld [vmem:[%s3] sm:$0x1]
      %v592 = vlaneseq
      %v593 = vshrl.u32 %v592, 7
      %v594 = vsub.s32 0, %v593
      %v595 = vrot.slane %v590, %v594
      %v597 = vadd.f32 %v588, %v595
      %v598 = vadd.f32 %v589, %v595
      %v599 = vmax.f32 %v597, 0.0
      %v600 = vmax.f32 %v598, 0.0
      %vm601 = vcmask 64512
      %602 = vst.msk [vmem:[#allocation4] sm:$0xff] %vm601, 0.0
      %603 = vst.msk [vmem:[#allocation4 + $0x8] sm:$0xff] %vm601, 0.0
      %604 = vst.msk [vmem:[#allocation4 + $0x10] sm:$0xff] %vm601, 0.0
      %605 = vst.msk [vmem:[#allocation4 + $0x18] sm:$0xff] %vm601, 0.0
      %606 = vst.msk [vmem:[#allocation4 + $0x20] sm:$0xf] %vm280, 0.0
      %607 = vst.msk [vmem:[#allocation4 + $0x7] sm:$0xf] %vm280, %v599
      %vm608 = vcmask 64516
      %609 = vst.msk [vmem:[#allocation4 + $0x9] sm:$0xf0] %vm608, %v599
      %610 = vst.msk [vmem:[#allocation4 + $0x13] sm:$0xf] %vm280, %v600
      %611 = vst.msk [vmem:[#allocation4 + $0x15] sm:$0xf0] %vm608, %v600
      %v612 = vld [vmem:[#allocation4] sm:$0xf]
      %613 = vst.msk [vmem:[#allocation3] sm:$0xf] %vm280, %v612
      %v614 = vld [vmem:[#allocation4 + $0x6] sm:$0xf]
      %615 = vst.msk [vmem:[#allocation3 + $0x4] sm:$0xf] %vm280, %v614
      %v616 = vld [vmem:[#allocation4 + $0xc] sm:$0xf]
      %617 = vst.msk [vmem:[#allocation3 + $0x8] sm:$0xf] %vm280, %v616
      %v618 = vld [vmem:[#allocation4 + $0x12] sm:$0xf]
      %619 = vst.msk [vmem:[#allocation3 + $0xc] sm:$0xf] %vm280, %v618
      %v620 = vld [vmem:[#allocation4 + $0x1] sm:$0xf]
      %622 = vrot.lane.b32.xlu0 %v620, 8
      %v623 = vpop.permute.xlu0 %622
      %625 = vst.msk [vmem:[#allocation3] sm:$0xf] %vm293, %v623
      %v626 = vld [vmem:[#allocation4 + $0x7] sm:$0xf]
      %628 = vrot.lane.b32.xlu0 %v626, 8
      %v629 = vpop.permute.xlu0 %628
      %631 = vst.msk [vmem:[#allocation3 + $0x4] sm:$0xf] %vm293, %v629
      %v632 = vld [vmem:[#allocation4 + $0xd] sm:$0xf]
      %634 = vrot.lane.b32.xlu0 %v632, 8
      %v635 = vpop.permute.xlu0 %634
      %637 = vst.msk [vmem:[#allocation3 + $0x8] sm:$0xf] %vm293, %v635
      %v638 = vld [vmem:[#allocation4 + $0x13] sm:$0xf]
      %640 = vrot.lane.b32.xlu0 %v638, 8
      %v641 = vpop.permute.xlu0 %640
      %643 = vst.msk [vmem:[#allocation3 + $0xc] sm:$0xf] %vm293, %v641
      %v644 = vld [vmem:[#allocation4 + $0x2] sm:$0xf]
      %646 = vrot.lane.b32.xlu0 %v644, 16
      %v647 = vpop.permute.xlu0 %646
      %649 = vst.msk [vmem:[#allocation3] sm:$0xf] %vm318, %v647
      %v650 = vld [vmem:[#allocation4 + $0x8] sm:$0xf]
      %652 = vrot.lane.b32.xlu0 %v650, 16
      %v653 = vpop.permute.xlu0 %652
      %655 = vst.msk [vmem:[#allocation3 + $0x4] sm:$0xf] %vm318, %v653
      %v656 = vld [vmem:[#allocation4 + $0xe] sm:$0xf]
      %658 = vrot.lane.b32.xlu0 %v656, 16
      %v659 = vpop.permute.xlu0 %658
      %661 = vst.msk [vmem:[#allocation3 + $0x8] sm:$0xf] %vm318, %v659
      %v662 = vld [vmem:[#allocation4 + $0x14] sm:$0xf]
      %664 = vrot.lane.b32.xlu0 %v662, 16
      %v665 = vpop.permute.xlu0 %664
      %667 = vst.msk [vmem:[#allocation3 + $0xc] sm:$0xf] %vm318, %v665
      %v668 = vld [vmem:[#allocation4 + $0x6] sm:$0xf]
      %670 = vrot.lane.b32.xlu0 %v668, 24
      %v671 = vpop.permute.xlu0 %670
      %673 = vst.msk [vmem:[#allocation3] sm:$0xf] %vm343, %v671
      %v674 = vld [vmem:[#allocation4 + $0xc] sm:$0xf]
      %676 = vrot.lane.b32.xlu0 %v674, 24
      %v677 = vpop.permute.xlu0 %676
      %679 = vst.msk [vmem:[#allocation3 + $0x4] sm:$0xf] %vm343, %v677
      %v680 = vld [vmem:[#allocation4 + $0x12] sm:$0xf]
      %682 = vrot.lane.b32.xlu0 %v680, 24
      %v683 = vpop.permute.xlu0 %682
      %685 = vst.msk [vmem:[#allocation3 + $0x8] sm:$0xf] %vm343, %v683
      %v686 = vld [vmem:[#allocation4 + $0x18] sm:$0xf]
      %688 = vrot.lane.b32.xlu0 %v686, 24
      %v689 = vpop.permute.xlu0 %688
      %691 = vst.msk [vmem:[#allocation3 + $0xc] sm:$0xf] %vm343, %v689
      %v692 = vld [vmem:[#allocation4 + $0x7] sm:$0xf]
      %694 = vrot.lane.b32.xlu0 %v692, 32
      %v695 = vpop.permute.xlu0 %694
      %697 = vst.msk [vmem:[#allocation3] sm:$0xf] %vm368, %v695
      %v698 = vld [vmem:[#allocation4 + $0xd] sm:$0xf]
      %700 = vrot.lane.b32.xlu0 %v698, 32
      %v701 = vpop.permute.xlu0 %700
      %703 = vst.msk [vmem:[#allocation3 + $0x4] sm:$0xf] %vm368, %v701
      %v704 = vld [vmem:[#allocation4 + $0x13] sm:$0xf]
      %706 = vrot.lane.b32.xlu0 %v704, 32
      %v707 = vpop.permute.xlu0 %706
      %709 = vst.msk [vmem:[#allocation3 + $0x8] sm:$0xf] %vm368, %v707
      %v710 = vld [vmem:[#allocation4 + $0x19] sm:$0xf]
      %712 = vrot.lane.b32.xlu0 %v710, 32
      %v713 = vpop.permute.xlu0 %712
      %715 = vst.msk [vmem:[#allocation3 + $0xc] sm:$0xf] %vm368, %v713
      %v716 = vld [vmem:[#allocation4 + $0x8] sm:$0xf]
      %718 = vrot.lane.b32.xlu0 %v716, 40
      %v719 = vpop.permute.xlu0 %718
      %721 = vst.msk [vmem:[#allocation3] sm:$0xf] %vm393, %v719
      %v722 = vld [vmem:[#allocation4 + $0xe] sm:$0xf]
      %724 = vrot.lane.b32.xlu0 %v722, 40
      %v725 = vpop.permute.xlu0 %724
      %727 = vst.msk [vmem:[#allocation3 + $0x4] sm:$0xf] %vm393, %v725
      %v728 = vld [vmem:[#allocation4 + $0x14] sm:$0xf]
      %730 = vrot.lane.b32.xlu0 %v728, 40
      %v731 = vpop.permute.xlu0 %730
      %733 = vst.msk [vmem:[#allocation3 + $0x8] sm:$0xf] %vm393, %v731
      %v734 = vld [vmem:[#allocation4 + $0x1a] sm:$0xf]
      %736 = vrot.lane.b32.xlu0 %v734, 40
      %v737 = vpop.permute.xlu0 %736
      %739 = vst.msk [vmem:[#allocation3 + $0xc] sm:$0xf] %vm393, %v737
      %v740 = vld [vmem:[#allocation4 + $0xc] sm:$0xf]
      %742 = vrot.lane.b32.xlu0 %v740, 48
      %v743 = vpop.permute.xlu0 %742
      %745 = vst.msk [vmem:[#allocation3] sm:$0xf] %vm418, %v743
      %v746 = vld [vmem:[#allocation4 + $0x12] sm:$0xf]
      %748 = vrot.lane.b32.xlu0 %v746, 48
      %v749 = vpop.permute.xlu0 %748
      %751 = vst.msk [vmem:[#allocation3 + $0x4] sm:$0xf] %vm418, %v749
      %v752 = vld [vmem:[#allocation4 + $0x18] sm:$0xf]
      %754 = vrot.lane.b32.xlu0 %v752, 48
      %v755 = vpop.permute.xlu0 %754
      %757 = vst.msk [vmem:[#allocation3 + $0x8] sm:$0xf] %vm418, %v755
      %v758 = vld [vmem:[#allocation4 + $0x1e] sm:$0xf]
      %760 = vrot.lane.b32.xlu0 %v758, 48
      %v761 = vpop.permute.xlu0 %760
      %763 = vst.msk [vmem:[#allocation3 + $0xc] sm:$0xf] %vm418, %v761
      %v764 = vld [vmem:[#allocation4 + $0xd] sm:$0xf]
      %766 = vrot.lane.b32.xlu0 %v764, 56
      %v767 = vpop.permute.xlu0 %766
      %769 = vst.msk [vmem:[#allocation3] sm:$0xf] %vm443, %v767
      %v770 = vld [vmem:[#allocation4 + $0x13] sm:$0xf]
      %772 = vrot.lane.b32.xlu0 %v770, 56
      %v773 = vpop.permute.xlu0 %772
      %775 = vst.msk [vmem:[#allocation3 + $0x4] sm:$0xf] %vm443, %v773
      %v776 = vld [vmem:[#allocation4 + $0x19] sm:$0xf]
      %778 = vrot.lane.b32.xlu0 %v776, 56
      %v779 = vpop.permute.xlu0 %778
      %781 = vst.msk [vmem:[#allocation3 + $0x8] sm:$0xf] %vm443, %v779
      %v782 = vld [vmem:[#allocation4 + $0x1f] sm:$0xf]
      %784 = vrot.lane.b32.xlu0 %v782, 56
      %v785 = vpop.permute.xlu0 %784
      %787 = vst.msk [vmem:[#allocation3 + $0xc] sm:$0xf] %vm443, %v785
      %v788 = vld [vmem:[#allocation4 + $0xe] sm:$0xf]
      %790 = vrot.lane.b32.xlu0 %v788, 64
      %v791 = vpop.permute.xlu0 %790
      %793 = vst.msk [vmem:[#allocation3] sm:$0xf] %vm468, %v791
      %v794 = vld [vmem:[#allocation4 + $0x14] sm:$0xf]
      %796 = vrot.lane.b32.xlu0 %v794, 64
      %v797 = vpop.permute.xlu0 %796
      %799 = vst.msk [vmem:[#allocation3 + $0x4] sm:$0xf] %vm468, %v797
      %v800 = vld [vmem:[#allocation4 + $0x1a] sm:$0xf]
      %802 = vrot.lane.b32.xlu0 %v800, 64
      %v803 = vpop.permute.xlu0 %802
      %805 = vst.msk [vmem:[#allocation3 + $0x8] sm:$0xf] %vm468, %v803
      %v806 = vld [vmem:[#allocation4 + $0x20] sm:$0xf]
      %808 = vrot.lane.b32.xlu0 %v806, 64
      %v809 = vpop.permute.xlu0 %808
      %811 = vst.msk [vmem:[#allocation3 + $0xc] sm:$0xf] %vm468, %v809
      %v812 = vld [vmem:[#allocation2] sm:$0xff]
      %v813 = vld [vmem:[#allocation2 + $0x8] sm:$0xff]
      %v814 = vld [vmem:[#allocation3] sm:$0xff]
      %v815 = vld [vmem:[#allocation3 + $0x8] sm:$0xff]
      %v816 = vld [vmem:[%s4] sm:$0xff]
      %v817 = vld [vmem:[%s4 + $0x8] sm:$0xff]
      %v818 = vld [vmem:[%s4 + $0x10] sm:$0xff]
      %v819 = vld [vmem:[%s4 + $0x18] sm:$0xff]
      %v820 = vld [vmem:[%s4 + $0x20] sm:$0xff]
      %v821 = vld [vmem:[%s4 + $0x28] sm:$0xff]
      %v822 = vld [vmem:[%s4 + $0x30] sm:$0xff]
      %v823 = vld [vmem:[%s4 + $0x38] sm:$0xff]
      %v824 = vld [vmem:[%s4 + $0x40] sm:$0xff]
      %v826 = vsel %vm499, %v814, 0
      %v829 = vsel %vm499, %v815, 0
      %831 = vmatprep.subr.mxu0 0.0
      %832 = vmatpush1.msra.mxu0 %v816
      %833 = vmatprep.subr.mxu0 0.0
      %834 = vmatpush1.msra.mxu0 %v817
      %835 = vmatprep.subr.mxu0 0.0
      %836 = vmatpush1.msra.mxu0 %v818
      %837 = vmatprep.subr.mxu0 0.0
      %838 = vmatpush1.msra.mxu0 %v819
      %839 = vmatprep.subr.mxu0 0.0
      %840 = vmatpush1.msra.mxu0 %v820
      %841 = vmatprep.subr.mxu0 0.0
      %842 = vmatpush1.msra.mxu0 %v821
      %843 = vmatprep.subr.mxu0 0.0
      %844 = vmatpush1.msra.mxu0 %v822
      %845 = vmatprep.subr.mxu0 0.0
      %846 = vmatpush1.msra.mxu0 %v823
      %847 = vmatprep.subr.mxu0 0.0
      %848 = vmatpush1.msra.mxu0 %v824
      %849 = vmatprep.subr.mxu0 0.0
      %850 = vmatpush1.msra.mxu0 0.0
      %851 = vmatprep.subr.mxu0 0.0
      %852 = vmatpush1.msra.mxu0 0.0
      %853 = vmatprep.subr.mxu0 0.0
      %854 = vmatpush1.msra.mxu0 0.0
      %855 = vmatprep.subr.mxu0 0.0
      %856 = vmatpush1.msra.mxu0 0.0
      %857 = vmatprep.subr.mxu0 0.0
      %858 = vmatpush1.msra.mxu0 0.0
      %859 = vmatprep.subr.mxu0 0.0
      %860 = vmatpush1.msra.mxu0 0.0
      %861 = vmatprep.subr.mxu0 0.0
      %862 = vmatpush1.msra.mxu0 0.0
      %863 = vmatprep.subr.mxu0 0.0
      %864 = vmatpush1.msra.mxu0 0.0
      %865 = vmatprep.subr.mxu0 0.0
      %866 = vmatpush1.msra.mxu0 0.0
      %867 = vmatprep.subr.mxu0 0.0
      %868 = vmatpush1.msra.mxu0 0.0
      %869 = vmatprep.subr.mxu0 0.0
      %870 = vmatpush1.msra.mxu0 0.0
      %871 = vmatprep.subr.mxu0 0.0
      %872 = vmatpush1.msra.mxu0 0.0
      %873 = vmatprep.subr.mxu0 0.0
      %874 = vmatpush1.msra.mxu0 0.0
      %875 = vmatprep.subr.mxu0 0.0
      %876 = vmatpush1.msra.mxu0 0.0
      %877 = vmatprep.subr.mxu0 0.0
      %878 = vmatpush1.msra.mxu0 0.0
      %879 = vmatprep.subr.mxu0 0.0
      %880 = vmatpush1.msra.mxu0 0.0
      %881 = vmatprep.subr.mxu0 0.0
      %882 = vmatpush1.msra.mxu0 0.0
      %883 = vmatprep.subr.mxu0 0.0
      %884 = vmatpush1.msra.mxu0 0.0
      %885 = vmatprep.subr.mxu0 0.0
      %886 = vmatpush1.msra.mxu0 0.0
      %887 = vmatprep.subr.mxu0 0.0
      %888 = vmatpush1.msra.mxu0 0.0
      %889 = vmatprep.subr.mxu0 0.0
      %890 = vmatpush1.msra.mxu0 0.0
      %891 = vmatprep.subr.mxu0 0.0
      %892 = vmatpush1.msra.mxu0 0.0
      %893 = vmatprep.subr.mxu0 0.0
      %894 = vmatpush1.msra.mxu0 0.0
      %895 = vmatprep.mubr.f32.mxu0 0.0
      %896 = vmatmul.mubr.f32.gmra.mrb[0].mxu0 %v826
      %v897 = vpop.f32.mrb[0].mxu0
      %v898 = vadd.f32 0.0, %v897
      %v899 = vpop.f32.mrb[0].mxu0
      %900 = vmatprep.mubr.f32.mxu0 0.0
      %901 = vmatmul.mubr.f32.gmra.mrb[0].mxu0 %v829
      %v902 = vpop.f32.mrb[0].mxu0
      %v903 = vadd.f32 0.0, %v902
      %v904 = vpop.f32.mrb[0].mxu0
      %905 = vdwg.mxu0
      %v906 = vld [vmem:[%s5] sm:$0x1]
      %v908 = vlaneseq
      %v909 = vshrl.u32 %v908, 7
      %v910 = vsub.s32 0, %v909
      %v911 = vrot.slane %v906, %v910
      %v913 = vmul.f32 %v898, %v911
      %v914 = vmul.f32 %v903, %v911
      %v915 = vld [vmem:[%s6] sm:$0x1]
      %v917 = vlaneseq
      %v918 = vshrl.u32 %v917, 7
      %v919 = vsub.s32 0, %v918
      %v920 = vrot.slane %v915, %v919
      %v922 = vadd.f32 %v913, %v920
      %v923 = vadd.f32 %v914, %v920
      %926 = vrot.lane.b32.xlu0 %v812, 96
      %v927 = vpop.permute.xlu0 %926
      %928 = vrot.lane.b32.xlu0 %v813, 96
      %v929 = vpop.permute.xlu0 %928
      %v932 = vadd.f32 %v922, %v927
      %v933 = vadd.f32 %v923, %v929
      %v934 = vmax.f32 %v932, 0.0
      %v935 = vmax.f32 %v933, 0.0
      %936 = vst.msk [vmem:[%s278] sm:$0xff] %vm601, %v934
      %937 = vst.msk [vmem:[%s278 + $0x8] sm:$0xff] %vm601, %v935
      %p938 = scmp.lt.s32.totalorder %s18, 1
      %s939 = scalar_select %p938, %s18, 1
      %s940 = smul.addr %s939, 2
      %s941 = smul.addr %s940, 8
      %s942 = scalar_lea.vmem %s7, %s941
      // Predicated region
      $region49: #{downsample_forward.16} parent=47 // pred_check
        %p943 = pneg %p188
      $region50: #{downsample_forward.16} parent=47 // pred_check_branch
        %945 = sbr.rel (%p943) target = $region52
      $region51: #{downsample_forward.16} parent=47 // pred_region
        _
      $region52: #{downsample_forward.16} parent=47 // pred_fallthru
        _
    $region48: #{downsample_forward.16} parent=5 // pred_fallthru
      _
    %p946 = scmp.le.s32.totalorder 2, %s13
    // Predicated region
    $region53: #{downsample_forward.16} parent=5 // pred_check
      %p947 = pneg %p946
    $region54: #{downsample_forward.16} parent=5 // pred_check_branch
      %949 = sbr.rel (%p947) target = $region56
    $region55: #{downsample_forward.16} parent=5 // pred_region
      %s950 = ssub.s32 %s13, 2
      // Predicated region
      $region57: #{downsample_forward.16} parent=55 // pred_check
        %p951 = pneg %p194
      $region58: #{downsample_forward.16} parent=55 // pred_check_branch
        %953 = sbr.rel (%p951) target = $region60
      $region59: #{downsample_forward.16} parent=55 // pred_region
        %p954 = scmp.lt.s32.totalorder %s19, 1
        %s955 = scalar_select %p954, %s19, 1
        %s956 = smul.addr %s955, 2
        %s957 = smul.addr %s956, 8
        %s958 = scalar_lea.vmem %s7, %s957
      $region60: #{downsample_forward.16} parent=55 // pred_fallthru
        _
    $region56: #{downsample_forward.16} parent=5 // pred_fallthru
      _
  $region6: #{downsample_forward.16} parent=0 // loop_footer
    %s17 = sadd.s32 1, %s13
  $region7: #{downsample_forward.16} parent=0 // loop_footer_branch
    %12 = sbr.rel target = $region3
  $region8: #{downsample_forward.16} parent=0 // loop_exit
    _

// kernel: downsample_forward.19
$region0: #{downsample_forward.19}
  #allocation0 [shape = 'u32[]', space=smem, size = 0x4, offset = 0x4, fixed_abs, tag = 'smem constant byte address 0x4 - core index']
  #allocation1 [shape = 'u32[144,128]{1,0:T(1,128)}', space=vmem, size = 0x12000, scoped, tag = 'internal scratch']
  %s0 = inlined_call_operand.vmem [shape: f32[2,8,72], index: 0, kind: input, shape index: {}]
  %s1 = inlined_call_operand.vmem [shape: f32[72,8], index: 1, kind: input, shape index: {}]
  %s2 = inlined_call_operand.vmem [shape: f32[2,8,8], index: 2, kind: output, shape index: {}]
  %s3 = sld [smem:[#allocation0]]
  $region41: #{downsample_forward.19} parent=0
    _
  %s5 = ssub.s32 1, %s3
  %s6 = scalar_select 0, %s5, %s3
  loop: start=0, step=1, limit=4
  $region2: #{downsample_forward.19} parent=0 // loop_pre_header
    _
  $region3: #{downsample_forward.19} parent=0 // loop_header
    %s8 = sphi 0, %s12
    %p9 = scmp.ge.s32.totalorder %s8, 4
    %s15 = sphi 0, %s27
    %s16 = sphi 0, %s23
    %s17 = sphi 0, %s15
    %s18 = sphi 0, %s16
    %s19 = sphi 0, %s17
    %s20 = sphi 0, %s18
    %s32 = sphi 0, %s34
    %s35 = sphi 0, %s32
    %s36 = sphi 0, %s35
    %s52 = sphi 0, %s36
    %s56 = sphi 0, %s56
    %s58 = sphi 0, %s56
    %s59 = sphi 0, %s58
    %s73 = sphi 0, %s59
    %s81 = sphi 0, %s83
    %s84 = sphi 0, %s81
    %s85 = sphi 0, %s84
    %s101 = sphi 0, %s85
  $region4: #{downsample_forward.19} parent=0 // loop_header_branch
    %11 = sbr.rel (%p9) target = $region8
  $region5: #{downsample_forward.19} parent=0 // loop_body
    %s13 = ssub.s32 %s8, 1
    %s14 = ssub.s32 %s8, 2
    %s21 = sadd.s32 1, %s16
    %p22 = scmp.ge.s32.totalorder %s21, 1
    %s23 = scalar_select %p22, 0, %s21
    %s24 = sadd.s32 1, %s15
    %s25 = scalar_select %p22, %s24, %s15
    %p26 = scmp.ge.s32.totalorder %s25, 2
    %s27 = scalar_select %p26, 0, %s25
    %s28 = ssub.s32 %s15, %s27
    %s29 = ssub.s32 %s16, %s23
    %s30 = sor.u32 %s28, %s29
    %p31 = scmp.eq.s32.totalorder %s30, 0
    %s33 = sadd.s32 %s32, 1
    %s34 = scalar_select %p31, %s32, %s33
    %p37 = pneg %p31
    %p38 = scmp.eq.s32.totalorder %s8, 1
    %p39 = por %p37, %p38
    %p40 = scmp.ne.s32.totalorder %s32, %s35
    %p41 = scmp.eq.s32.totalorder %s8, 0
    %p42 = por %p40, %p41
    %p43 = scmp.ne.s32.totalorder %s32, %s35
    %p44 = scmp.eq.s32.totalorder %s13, 1
    %p45 = por %p43, %p44
    %p46 = scmp.ne.s32.totalorder %s35, %s36
    %p47 = scmp.eq.s32.totalorder %s13, 0
    %p48 = por %p46, %p47
    %p49 = scmp.ne.s32.totalorder %s35, %s36
    %p50 = scmp.eq.s32.totalorder %s14, 1
    %p51 = por %p49, %p50
    %p53 = scmp.ne.s32.totalorder %s36, %s52
    %p54 = scmp.eq.s32.totalorder %s14, 0
    %p55 = por %p53, %p54
    %s57 = sadd.s32 %s56, 1
    %p60 = scmp.eq.s32.totalorder %s8, 1
    %p61 = scmp.ne.s32.totalorder %s56, %s58
    %p62 = scmp.eq.s32.totalorder %s8, 0
    %p63 = por %p61, %p62
    %p64 = scmp.ne.s32.totalorder %s56, %s58
    %p65 = scmp.eq.s32.totalorder %s13, 1
    %p66 = por %p64, %p65
    %p67 = scmp.ne.s32.totalorder %s58, %s59
    %p68 = scmp.eq.s32.totalorder %s13, 0
    %p69 = por %p67, %p68
    %p70 = scmp.ne.s32.totalorder %s58, %s59
    %p71 = scmp.eq.s32.totalorder %s14, 1
    %p72 = por %p70, %p71
    %p74 = scmp.ne.s32.totalorder %s59, %s73
    %p75 = scmp.eq.s32.totalorder %s14, 0
    %p76 = por %p74, %p75
    %s77 = ssub.s32 %s15, %s27
    %s78 = ssub.s32 %s16, %s23
    %s79 = sor.u32 %s77, %s78
    %p80 = scmp.eq.s32.totalorder %s79, 0
    %s82 = sadd.s32 %s81, 1
    %s83 = scalar_select %p80, %s81, %s82
    %p86 = pneg %p80
    %p87 = scmp.eq.s32.totalorder %s8, 1
    %p88 = por %p86, %p87
    %p89 = scmp.ne.s32.totalorder %s81, %s84
    %p90 = scmp.eq.s32.totalorder %s8, 0
    %p91 = por %p89, %p90
    %p92 = scmp.ne.s32.totalorder %s81, %s84
    %p93 = scmp.eq.s32.totalorder %s13, 1
    %p94 = por %p92, %p93
    %p95 = scmp.ne.s32.totalorder %s84, %s85
    %p96 = scmp.eq.s32.totalorder %s13, 0
    %p97 = por %p95, %p96
    %p98 = scmp.ne.s32.totalorder %s84, %s85
    %p99 = scmp.eq.s32.totalorder %s14, 1
    %p100 = por %p98, %p99
    %p102 = scmp.ne.s32.totalorder %s85, %s101
    %p103 = scmp.eq.s32.totalorder %s14, 0
    %p104 = por %p102, %p103
    %p105 = scmp.le.s32.totalorder 1, %s8
    %p106 = scmp.lt.s32.totalorder %s8, 3
    %p107 = pnand %p105, %p106
    %p108 = pneg %p107
    // Predicated region
    $region9: #{downsample_forward.19} parent=5 // pred_check
      _
    $region10: #{downsample_forward.19} parent=5 // pred_check_branch
      %110 = sbr.rel (%p107) target = $region12
    $region11: #{downsample_forward.19} parent=5 // pred_region
      %s111 = ssub.s32 %s8, 1
      // Predicated region
      $region13: #{downsample_forward.19} parent=11 // pred_check
        %p112 = pneg %p69
      $region14: #{downsample_forward.19} parent=11 // pred_check_branch
        %114 = sbr.rel (%p112) target = $region16
      $region15: #{downsample_forward.19} parent=11 // pred_region
        _
      $region16: #{downsample_forward.19} parent=11 // pred_fallthru
        _
    $region12: #{downsample_forward.19} parent=5 // pred_fallthru
      _
    %p115 = scmp.lt.s32.totalorder %s8, 2
    // Predicated region
    $region17: #{downsample_forward.19} parent=5 // pred_check
      %p116 = pneg %p115
    $region18: #{downsample_forward.19} parent=5 // pred_check_branch
      %118 = sbr.rel (%p116) target = $region20
    $region19: #{downsample_forward.19} parent=5 // pred_region
      // Predicated region
      $region21: #{downsample_forward.19} parent=19 // pred_check
        %p119 = pneg %p42
      $region22: #{downsample_forward.19} parent=19 // pred_check_branch
        %121 = sbr.rel (%p119) target = $region24
      $region23: #{downsample_forward.19} parent=19 // pred_region
        %p122 = scmp.lt.s32.totalorder %s15, 1
        %s123 = scalar_select %p122, %s15, 1
        %p124 = scmp.lt.s32.totalorder %s16, 0
        %s125 = scalar_select %p124, %s16, 0
        %s126 = sadd.s32 %s125, %s123
        %s127 = smul.addr %s126, 8
        %s128 = scalar_lea.vmem %s0, %s127
      $region24: #{downsample_forward.19} parent=19 // pred_fallthru
        _
    $region20: #{downsample_forward.19} parent=5 // pred_fallthru
      _
    %p129 = scmp.le.s32.totalorder 1, %s8
    %p130 = scmp.lt.s32.totalorder %s8, 3
    %p131 = pnand %p129, %p130
    %p132 = pneg %p131
    // Predicated region
    $region25: #{downsample_forward.19} parent=5 // pred_check
      _
    $region26: #{downsample_forward.19} parent=5 // pred_check_branch
      %134 = sbr.rel (%p131) target = $region28
    $region27: #{downsample_forward.19} parent=5 // pred_region
      %s135 = ssub.s32 %s8, 1
      %p136 = scmp.lt.s32.totalorder %s17, 1
      %s137 = scalar_select %p136, %s17, 1
      %p138 = scmp.lt.s32.totalorder %s18, 0
      %s139 = scalar_select %p138, %s18, 0
      %s140 = sadd.s32 %s139, %s137
      %s141 = smul.addr %s140, 8
      %s142 = scalar_lea.vmem %s0, %s141
      %p143 = pneg %p48
      %p144 = pneg %p45
      %p145 = pneg %p69
      %p146 = pneg %p66
      %p147 = pneg %p97
      %p148 = pneg %p94
      %p149 = scmp.lt.s32.totalorder %s17, 1
      %s150 = scalar_select %p149, %s17, 1
      %p151 = scmp.lt.s32.totalorder %s18, 0
      %s152 = scalar_select %p151, %s18, 0
      %s153 = sadd.s32 %s152, %s150
      %s154 = smul.addr %s153, 8
      %s155 = scalar_lea.vmem %s2, %s154
      %p156 = scmp.lt.s32.totalorder %s17, 1
      %s157 = scalar_select %p156, %s17, 1
      %p158 = scmp.lt.s32.totalorder %s18, 0
      %s159 = scalar_select %p158, %s18, 0
      %s160 = sadd.s32 %s159, %s157
      %s161 = smul.addr %s160, 8
      %s162 = scalar_lea.vmem %s0, %s161
      %p163 = scmp.lt.s32.totalorder %s17, 1
      %s164 = scalar_select %p163, %s17, 1
      %p165 = scmp.lt.s32.totalorder %s18, 0
      %s166 = scalar_select %p165, %s18, 0
      %s167 = sadd.s32 %s166, %s164
      %s168 = smul.addr %s167, 8
      %s169 = scalar_lea.vmem %s2, %s168
      %v170 = vld [vmem:[%s162] sm:$0xff]
      %v171 = vld [vmem:[%s1] sm:$0xff]
      %v172 = vld [vmem:[%s1 + $0x8] sm:$0xff]
      %v173 = vld [vmem:[%s1 + $0x10] sm:$0xff]
      %v174 = vld [vmem:[%s1 + $0x18] sm:$0xff]
      %v175 = vld [vmem:[%s1 + $0x20] sm:$0xff]
      %v176 = vld [vmem:[%s1 + $0x28] sm:$0xff]
      %v177 = vld [vmem:[%s1 + $0x30] sm:$0xff]
      %v178 = vld [vmem:[%s1 + $0x38] sm:$0xff]
      %v179 = vld [vmem:[%s1 + $0x40] sm:$0xff]
      %vm180 = vcmask 588800
      %v182 = vsel %vm180, %v170, 0
      %184 = vmatprep.subr.mxu0 0.0
      %185 = vmatpush1.msra.mxu0 %v171
      %186 = vmatprep.subr.mxu0 0.0
      %187 = vmatpush1.msra.mxu0 %v172
      %188 = vmatprep.subr.mxu0 0.0
      %189 = vmatpush1.msra.mxu0 %v173
      %190 = vmatprep.subr.mxu0 0.0
      %191 = vmatpush1.msra.mxu0 %v174
      %192 = vmatprep.subr.mxu0 0.0
      %193 = vmatpush1.msra.mxu0 %v175
      %194 = vmatprep.subr.mxu0 0.0
      %195 = vmatpush1.msra.mxu0 %v176
      %196 = vmatprep.subr.mxu0 0.0
      %197 = vmatpush1.msra.mxu0 %v177
      %198 = vmatprep.subr.mxu0 0.0
      %199 = vmatpush1.msra.mxu0 %v178
      %200 = vmatprep.subr.mxu0 0.0
      %201 = vmatpush1.msra.mxu0 %v179
      %202 = vmatprep.subr.mxu0 0.0
      %203 = vmatpush1.msra.mxu0 0.0
      %204 = vmatprep.subr.mxu0 0.0
      %205 = vmatpush1.msra.mxu0 0.0
      %206 = vmatprep.subr.mxu0 0.0
      %207 = vmatpush1.msra.mxu0 0.0
      %208 = vmatprep.subr.mxu0 0.0
      %209 = vmatpush1.msra.mxu0 0.0
      %210 = vmatprep.subr.mxu0 0.0
      %211 = vmatpush1.msra.mxu0 0.0
      %212 = vmatprep.subr.mxu0 0.0
      %213 = vmatpush1.msra.mxu0 0.0
      %214 = vmatprep.subr.mxu0 0.0
      %215 = vmatpush1.msra.mxu0 0.0
      %216 = vmatprep.subr.mxu0 0.0
      %217 = vmatpush1.msra.mxu0 0.0
      %218 = vmatprep.subr.mxu0 0.0
      %219 = vmatpush1.msra.mxu0 0.0
      %220 = vmatprep.subr.mxu0 0.0
      %221 = vmatpush1.msra.mxu0 0.0
      %222 = vmatprep.subr.mxu0 0.0
      %223 = vmatpush1.msra.mxu0 0.0
      %224 = vmatprep.subr.mxu0 0.0
      %225 = vmatpush1.msra.mxu0 0.0
      %226 = vmatprep.subr.mxu0 0.0
      %227 = vmatpush1.msra.mxu0 0.0
      %228 = vmatprep.subr.mxu0 0.0
      %229 = vmatpush1.msra.mxu0 0.0
      %230 = vmatprep.subr.mxu0 0.0
      %231 = vmatpush1.msra.mxu0 0.0
      %232 = vmatprep.subr.mxu0 0.0
      %233 = vmatpush1.msra.mxu0 0.0
      %234 = vmatprep.subr.mxu0 0.0
      %235 = vmatpush1.msra.mxu0 0.0
      %236 = vmatprep.subr.mxu0 0.0
      %237 = vmatpush1.msra.mxu0 0.0
      %238 = vmatprep.subr.mxu0 0.0
      %239 = vmatpush1.msra.mxu0 0.0
      %240 = vmatprep.subr.mxu0 0.0
      %241 = vmatpush1.msra.mxu0 0.0
      %242 = vmatprep.subr.mxu0 0.0
      %243 = vmatpush1.msra.mxu0 0.0
      %244 = vmatprep.subr.mxu0 0.0
      %245 = vmatpush1.msra.mxu0 0.0
      %246 = vmatprep.subr.mxu0 0.0
      %247 = vmatpush1.msra.mxu0 0.0
      %248 = vmatprep.mubr.f32.mxu0 0.0
      %249 = vmatmul.mubr.f32.gmra.mrb[0].mxu0 %v182
      %v250 = vpop.f32.mrb[0].mxu0
      %v251 = vadd.f32 0.0, %v250
      %v252 = vpop.f32.mrb[0].mxu0
      %253 = vdwg.mxu0
      %vm254 = vcmask 64512
      %255 = vst.msk [vmem:[%s169] sm:$0xff] %vm254, %v251
      %p256 = scmp.lt.s32.totalorder %s17, 1
      %s257 = scalar_select %p256, %s17, 1
      %p258 = scmp.lt.s32.totalorder %s18, 0
      %s259 = scalar_select %p258, %s18, 0
      %s260 = sadd.s32 %s259, %s257
      %s261 = smul.addr %s260, 8
      %s262 = scalar_lea.vmem %s2, %s261
      // Predicated region
      $region29: #{downsample_forward.19} parent=27 // pred_check
        %p263 = pneg %p94
      $region30: #{downsample_forward.19} parent=27 // pred_check_branch
        %265 = sbr.rel (%p263) target = $region32
      $region31: #{downsample_forward.19} parent=27 // pred_region
        _
      $region32: #{downsample_forward.19} parent=27 // pred_fallthru
        _
    $region28: #{downsample_forward.19} parent=5 // pred_fallthru
      _
    %p266 = scmp.le.s32.totalorder 2, %s8
    // Predicated region
    $region33: #{downsample_forward.19} parent=5 // pred_check
      %p267 = pneg %p266
    $region34: #{downsample_forward.19} parent=5 // pred_check_branch
      %269 = sbr.rel (%p267) target = $region36
    $region35: #{downsample_forward.19} parent=5 // pred_region
      %s270 = ssub.s32 %s8, 2
      // Predicated region
      $region37: #{downsample_forward.19} parent=35 // pred_check
        %p271 = pneg %p100
      $region38: #{downsample_forward.19} parent=35 // pred_check_branch
        %273 = sbr.rel (%p271) target = $region40
      $region39: #{downsample_forward.19} parent=35 // pred_region
        %p274 = scmp.lt.s32.totalorder %s19, 1
        %s275 = scalar_select %p274, %s19, 1
        %p276 = scmp.lt.s32.totalorder %s20, 0
        %s277 = scalar_select %p276, %s20, 0
        %s278 = sadd.s32 %s277, %s275
        %s279 = smul.addr %s278, 8
        %s280 = scalar_lea.vmem %s2, %s279
      $region40: #{downsample_forward.19} parent=35 // pred_fallthru
        _
    $region36: #{downsample_forward.19} parent=5 // pred_fallthru
      _
  $region6: #{downsample_forward.19} parent=0 // loop_footer
    %s12 = sadd.s32 1, %s8
  $region7: #{downsample_forward.19} parent=0 // loop_footer_branch
    %7 = sbr.rel target = $region3
  $region8: #{downsample_forward.19} parent=0 // loop_exit
    _

// kernel: downsample_forward.20
$region0: #{downsample_forward.20}
  #allocation0 [shape = 'u32[]', space=smem, size = 0x4, offset = 0x4, fixed_abs, tag = 'smem constant byte address 0x4 - core index']
  #allocation1 [shape = 'u32[144,128]{1,0:T(1,128)}', space=vmem, size = 0x12000, scoped, tag = 'internal scratch']
  #allocation2 [shape = 'f32[4,72]{1,0:T(4,128)}', space=vmem, size = 0x800, scoped, tag = 'scratch operand']
  #allocation3 [shape = 'f32[4,72]{1,0:T(4,128)}', space=vmem, size = 0x800, scoped, tag = 'scratch operand']
  #allocation4 [shape = 'f32[16,8]{1,0:T(8,128)}', space=vmem, size = 0x2000, scoped, tag = 'scratch operand']
  %s0 = inlined_call_operand.vmem [shape: f32[2,16,8], index: 0, kind: input, shape index: {}]
  %s1 = inlined_call_operand.vmem [shape: f32[72,8], index: 1, kind: input, shape index: {}]
  %s2 = inlined_call_operand.vmem [shape: f32[1,8], index: 2, kind: input, shape index: {}]
  %s3 = inlined_call_operand.vmem [shape: f32[1,8], index: 3, kind: input, shape index: {}]
  %s4 = inlined_call_operand.vmem [shape: f32[72,8], index: 4, kind: input, shape index: {}]
  %s5 = inlined_call_operand.vmem [shape: f32[1,8], index: 5, kind: input, shape index: {}]
  %s6 = inlined_call_operand.vmem [shape: f32[1,8], index: 6, kind: input, shape index: {}]
  %s7 = inlined_call_operand.vmem [shape: f32[2,4,8], index: 7, kind: output, shape index: {}]
  %s8 = sld [smem:[#allocation0]]
  $region61: #{downsample_forward.20} parent=0
    _
  %s10 = ssub.s32 1, %s8
  %s11 = scalar_select 0, %s10, %s8
  loop: start=0, step=1, limit=4
  $region2: #{downsample_forward.20} parent=0 // loop_pre_header
    _
  $region3: #{downsample_forward.20} parent=0 // loop_header
    %s13 = sphi 0, %s17
    %p14 = scmp.ge.s32.totalorder %s13, 4
    %s23 = sphi 0, %s25
    %s26 = sphi 0, %s23
    %s27 = sphi 0, %s26
    %s43 = sphi 0, %s27
    %s47 = sphi 0, %s47
    %s49 = sphi 0, %s47
    %s50 = sphi 0, %s49
    %s64 = sphi 0, %s50
    %s68 = sphi 0, %s68
    %s70 = sphi 0, %s68
    %s71 = sphi 0, %s70
    %s85 = sphi 0, %s71
    %s89 = sphi 0, %s89
    %s91 = sphi 0, %s89
    %s92 = sphi 0, %s91
    %s106 = sphi 0, %s92
    %s110 = sphi 0, %s110
    %s112 = sphi 0, %s110
    %s113 = sphi 0, %s112
    %s127 = sphi 0, %s113
    %s131 = sphi 0, %s131
    %s133 = sphi 0, %s131
    %s134 = sphi 0, %s133
    %s148 = sphi 0, %s134
    %s152 = sphi 0, %s152
    %s154 = sphi 0, %s152
    %s155 = sphi 0, %s154
    %s169 = sphi 0, %s155
    %s175 = sphi 0, %s177
    %s178 = sphi 0, %s175
    %s179 = sphi 0, %s178
    %s195 = sphi 0, %s179
  $region4: #{downsample_forward.20} parent=0 // loop_header_branch
    %16 = sbr.rel (%p14) target = $region8
  $region5: #{downsample_forward.20} parent=0 // loop_body
    %s18 = ssub.s32 %s13, 1
    %s19 = ssub.s32 %s13, 2
    %s20 = sadd.s32 %s13, 1
    %s21 = ssub.s32 %s13, %s20
    %p22 = scmp.eq.s32.totalorder %s21, 0
    %s24 = sadd.s32 %s23, 1
    %s25 = scalar_select %p22, %s23, %s24
    %p28 = pneg %p22
    %p29 = scmp.eq.s32.totalorder %s13, 1
    %p30 = por %p28, %p29
    %p31 = scmp.ne.s32.totalorder %s23, %s26
    %p32 = scmp.eq.s32.totalorder %s13, 0
    %p33 = por %p31, %p32
    %p34 = scmp.ne.s32.totalorder %s23, %s26
    %p35 = scmp.eq.s32.totalorder %s18, 1
    %p36 = por %p34, %p35
    %p37 = scmp.ne.s32.totalorder %s26, %s27
    %p38 = scmp.eq.s32.totalorder %s18, 0
    %p39 = por %p37, %p38
    %p40 = scmp.ne.s32.totalorder %s26, %s27
    %p41 = scmp.eq.s32.totalorder %s19, 1
    %p42 = por %p40, %p41
    %p44 = scmp.ne.s32.totalorder %s27, %s43
    %p45 = scmp.eq.s32.totalorder %s19, 0
    %p46 = por %p44, %p45
    %s48 = sadd.s32 %s47, 1
    %p51 = scmp.eq.s32.totalorder %s13, 1
    %p52 = scmp.ne.s32.totalorder %s47, %s49
    %p53 = scmp.eq.s32.totalorder %s13, 0
    %p54 = por %p52, %p53
    %p55 = scmp.ne.s32.totalorder %s47, %s49
    %p56 = scmp.eq.s32.totalorder %s18, 1
    %p57 = por %p55, %p56
    %p58 = scmp.ne.s32.totalorder %s49, %s50
    %p59 = scmp.eq.s32.totalorder %s18, 0
    %p60 = por %p58, %p59
    %p61 = scmp.ne.s32.totalorder %s49, %s50
    %p62 = scmp.eq.s32.totalorder %s19, 1
    %p63 = por %p61, %p62
    %p65 = scmp.ne.s32.totalorder %s50, %s64
    %p66 = scmp.eq.s32.totalorder %s19, 0
    %p67 = por %p65, %p66
    %s69 = sadd.s32 %s68, 1
    %p72 = scmp.eq.s32.totalorder %s13, 1
    %p73 = scmp.ne.s32.totalorder %s68, %s70
    %p74 = scmp.eq.s32.totalorder %s13, 0
    %p75 = por %p73, %p74
    %p76 = scmp.ne.s32.totalorder %s68, %s70
    %p77 = scmp.eq.s32.totalorder %s18, 1
    %p78 = por %p76, %p77
    %p79 = scmp.ne.s32.totalorder %s70, %s71
    %p80 = scmp.eq.s32.totalorder %s18, 0
    %p81 = por %p79, %p80
    %p82 = scmp.ne.s32.totalorder %s70, %s71
    %p83 = scmp.eq.s32.totalorder %s19, 1
    %p84 = por %p82, %p83
    %p86 = scmp.ne.s32.totalorder %s71, %s85
    %p87 = scmp.eq.s32.totalorder %s19, 0
    %p88 = por %p86, %p87
    %s90 = sadd.s32 %s89, 1
    %p93 = scmp.eq.s32.totalorder %s13, 1
    %p94 = scmp.ne.s32.totalorder %s89, %s91
    %p95 = scmp.eq.s32.totalorder %s13, 0
    %p96 = por %p94, %p95
    %p97 = scmp.ne.s32.totalorder %s89, %s91
    %p98 = scmp.eq.s32.totalorder %s18, 1
    %p99 = por %p97, %p98
    %p100 = scmp.ne.s32.totalorder %s91, %s92
    %p101 = scmp.eq.s32.totalorder %s18, 0
    %p102 = por %p100, %p101
    %p103 = scmp.ne.s32.totalorder %s91, %s92
    %p104 = scmp.eq.s32.totalorder %s19, 1
    %p105 = por %p103, %p104
    %p107 = scmp.ne.s32.totalorder %s92, %s106
    %p108 = scmp.eq.s32.totalorder %s19, 0
    %p109 = por %p107, %p108
    %s111 = sadd.s32 %s110, 1
    %p114 = scmp.eq.s32.totalorder %s13, 1
    %p115 = scmp.ne.s32.totalorder %s110, %s112
    %p116 = scmp.eq.s32.totalorder %s13, 0
    %p117 = por %p115, %p116
    %p118 = scmp.ne.s32.totalorder %s110, %s112
    %p119 = scmp.eq.s32.totalorder %s18, 1
    %p120 = por %p118, %p119
    %p121 = scmp.ne.s32.totalorder %s112, %s113
    %p122 = scmp.eq.s32.totalorder %s18, 0
    %p123 = por %p121, %p122
    %p124 = scmp.ne.s32.totalorder %s112, %s113
    %p125 = scmp.eq.s32.totalorder %s19, 1
    %p126 = por %p124, %p125
    %p128 = scmp.ne.s32.totalorder %s113, %s127
    %p129 = scmp.eq.s32.totalorder %s19, 0
    %p130 = por %p128, %p129
    %s132 = sadd.s32 %s131, 1
    %p135 = scmp.eq.s32.totalorder %s13, 1
    %p136 = scmp.ne.s32.totalorder %s131, %s133
    %p137 = scmp.eq.s32.totalorder %s13, 0
    %p138 = por %p136, %p137
    %p139 = scmp.ne.s32.totalorder %s131, %s133
    %p140 = scmp.eq.s32.totalorder %s18, 1
    %p141 = por %p139, %p140
    %p142 = scmp.ne.s32.totalorder %s133, %s134
    %p143 = scmp.eq.s32.totalorder %s18, 0
    %p144 = por %p142, %p143
    %p145 = scmp.ne.s32.totalorder %s133, %s134
    %p146 = scmp.eq.s32.totalorder %s19, 1
    %p147 = por %p145, %p146
    %p149 = scmp.ne.s32.totalorder %s134, %s148
    %p150 = scmp.eq.s32.totalorder %s19, 0
    %p151 = por %p149, %p150
    %s153 = sadd.s32 %s152, 1
    %p156 = scmp.eq.s32.totalorder %s13, 1
    %p157 = scmp.ne.s32.totalorder %s152, %s154
    %p158 = scmp.eq.s32.totalorder %s13, 0
    %p159 = por %p157, %p158
    %p160 = scmp.ne.s32.totalorder %s152, %s154
    %p161 = scmp.eq.s32.totalorder %s18, 1
    %p162 = por %p160, %p161
    %p163 = scmp.ne.s32.totalorder %s154, %s155
    %p164 = scmp.eq.s32.totalorder %s18, 0
    %p165 = por %p163, %p164
    %p166 = scmp.ne.s32.totalorder %s154, %s155
    %p167 = scmp.eq.s32.totalorder %s19, 1
    %p168 = por %p166, %p167
    %p170 = scmp.ne.s32.totalorder %s155, %s169
    %p171 = scmp.eq.s32.totalorder %s19, 0
    %p172 = por %p170, %p171
    %s173 = ssub.s32 %s13, %s20
    %p174 = scmp.eq.s32.totalorder %s173, 0
    %s176 = sadd.s32 %s175, 1
    %s177 = scalar_select %p174, %s175, %s176
    %p180 = pneg %p174
    %p181 = scmp.eq.s32.totalorder %s13, 1
    %p182 = por %p180, %p181
    %p183 = scmp.ne.s32.totalorder %s175, %s178
    %p184 = scmp.eq.s32.totalorder %s13, 0
    %p185 = por %p183, %p184
    %p186 = scmp.ne.s32.totalorder %s175, %s178
    %p187 = scmp.eq.s32.totalorder %s18, 1
    %p188 = por %p186, %p187
    %p189 = scmp.ne.s32.totalorder %s178, %s179
    %p190 = scmp.eq.s32.totalorder %s18, 0
    %p191 = por %p189, %p190
    %p192 = scmp.ne.s32.totalorder %s178, %s179
    %p193 = scmp.eq.s32.totalorder %s19, 1
    %p194 = por %p192, %p193
    %p196 = scmp.ne.s32.totalorder %s179, %s195
    %p197 = scmp.eq.s32.totalorder %s19, 0
    %p198 = por %p196, %p197
    %p199 = scmp.le.s32.totalorder 1, %s13
    %p200 = scmp.lt.s32.totalorder %s13, 3
    %p201 = pnand %p199, %p200
    %p202 = pneg %p201
    // Predicated region
    $region9: #{downsample_forward.20} parent=5 // pred_check
      _
    $region10: #{downsample_forward.20} parent=5 // pred_check_branch
      %204 = sbr.rel (%p201) target = $region12
    $region11: #{downsample_forward.20} parent=5 // pred_region
      %s205 = ssub.s32 %s13, 1
      // Predicated region
      $region13: #{downsample_forward.20} parent=11 // pred_check
        %p206 = pneg %p60
      $region14: #{downsample_forward.20} parent=11 // pred_check_branch
        %208 = sbr.rel (%p206) target = $region16
      $region15: #{downsample_forward.20} parent=11 // pred_region
        _
      $region16: #{downsample_forward.20} parent=11 // pred_fallthru
        _
      // Predicated region
      $region17: #{downsample_forward.20} parent=11 // pred_check
        %p209 = pneg %p81
      $region18: #{downsample_forward.20} parent=11 // pred_check_branch
        %211 = sbr.rel (%p209) target = $region20
      $region19: #{downsample_forward.20} parent=11 // pred_region
        _
      $region20: #{downsample_forward.20} parent=11 // pred_fallthru
        _
      // Predicated region
      $region21: #{downsample_forward.20} parent=11 // pred_check
        %p212 = pneg %p102
      $region22: #{downsample_forward.20} parent=11 // pred_check_branch
        %214 = sbr.rel (%p212) target = $region24
      $region23: #{downsample_forward.20} parent=11 // pred_region
        _
      $region24: #{downsample_forward.20} parent=11 // pred_fallthru
        _
      // Predicated region
      $region25: #{downsample_forward.20} parent=11 // pred_check
        %p215 = pneg %p123
      $region26: #{downsample_forward.20} parent=11 // pred_check_branch
        %217 = sbr.rel (%p215) target = $region28
      $region27: #{downsample_forward.20} parent=11 // pred_region
        _
      $region28: #{downsample_forward.20} parent=11 // pred_fallthru
        _
      // Predicated region
      $region29: #{downsample_forward.20} parent=11 // pred_check
        %p218 = pneg %p144
      $region30: #{downsample_forward.20} parent=11 // pred_check_branch
        %220 = sbr.rel (%p218) target = $region32
      $region31: #{downsample_forward.20} parent=11 // pred_region
        _
      $region32: #{downsample_forward.20} parent=11 // pred_fallthru
        _
      // Predicated region
      $region33: #{downsample_forward.20} parent=11 // pred_check
        %p221 = pneg %p165
      $region34: #{downsample_forward.20} parent=11 // pred_check_branch
        %223 = sbr.rel (%p221) target = $region36
      $region35: #{downsample_forward.20} parent=11 // pred_region
        _
      $region36: #{downsample_forward.20} parent=11 // pred_fallthru
        _
    $region12: #{downsample_forward.20} parent=5 // pred_fallthru
      _
    %p224 = scmp.lt.s32.totalorder %s13, 2
    // Predicated region
    $region37: #{downsample_forward.20} parent=5 // pred_check
      %p225 = pneg %p224
    $region38: #{downsample_forward.20} parent=5 // pred_check_branch
      %227 = sbr.rel (%p225) target = $region40
    $region39: #{downsample_forward.20} parent=5 // pred_region
      // Predicated region
      $region41: #{downsample_forward.20} parent=39 // pred_check
        %p228 = pneg %p33
      $region42: #{downsample_forward.20} parent=39 // pred_check_branch
        %230 = sbr.rel (%p228) target = $region44
      $region43: #{downsample_forward.20} parent=39 // pred_region
        %p231 = scmp.lt.s32.totalorder %s13, 1
        %s232 = scalar_select %p231, %s13, 1
        %s233 = smul.addr %s232, 2
        %s234 = smul.addr %s233, 8
        %s235 = scalar_lea.vmem %s0, %s234
      $region44: #{downsample_forward.20} parent=39 // pred_fallthru
        _
    $region40: #{downsample_forward.20} parent=5 // pred_fallthru
      _
    %p236 = scmp.le.s32.totalorder 1, %s13
    %p237 = scmp.lt.s32.totalorder %s13, 3
    %p238 = pnand %p236, %p237
    %p239 = pneg %p238
    // Predicated region
    $region45: #{downsample_forward.20} parent=5 // pred_check
      _
    $region46: #{downsample_forward.20} parent=5 // pred_check_branch
      %241 = sbr.rel (%p238) target = $region48
    $region47: #{downsample_forward.20} parent=5 // pred_region
      %s242 = ssub.s32 %s13, 1
      %p243 = scmp.lt.s32.totalorder %s18, 1
      %s244 = scalar_select %p243, %s18, 1
      %s245 = smul.addr %s244, 2
      %s246 = smul.addr %s245, 8
      %s247 = scalar_lea.vmem %s0, %s246
      %p248 = pneg %p39
      %p249 = pneg %p36
      %p250 = pneg %p60
      %p251 = pneg %p57
      %p252 = pneg %p81
      %p253 = pneg %p78
      %p254 = pneg %p102
      %p255 = pneg %p99
      %p256 = pneg %p123
      %p257 = pneg %p120
      %p258 = pneg %p144
      %p259 = pneg %p141
      %p260 = pneg %p165
      %p261 = pneg %p162
      %p262 = pneg %p191
      %p263 = pneg %p188
      %p264 = scmp.lt.s32.totalorder %s18, 1
      %s265 = scalar_select %p264, %s18, 1
      %s266 = smul.addr %s265, 4
      %s267 = scalar_lea.vmem %s7, %s266
      %p268 = scmp.lt.s32.totalorder %s18, 1
      %s269 = scalar_select %p268, %s18, 1
      %s270 = smul.addr %s269, 2
      %s271 = smul.addr %s270, 8
      %s272 = scalar_lea.vmem %s0, %s271
      %p273 = scmp.lt.s32.totalorder %s18, 1
      %s274 = scalar_select %p273, %s18, 1
      %s275 = smul.addr %s274, 4
      %s276 = scalar_lea.vmem %s7, %s275
      %v277 = vld [vmem:[%s272] sm:$0x3]
      %vm278 = vcmask 58368
      %279 = vst.msk [vmem:[#allocation2] sm:$0x3] %vm278, %v277
      %v280 = vld [vmem:[%s272 + $0x4] sm:$0x3]
      %281 = vst.msk [vmem:[#allocation2 + $0x2] sm:$0x3] %vm278, %v280
      %v282 = vld [vmem:[%s272 + $0x1] sm:$0x3]
      %284 = vrot.lane.b32.xlu0 %v282, 8
      %v285 = vpop.permute.xlu0 %284
      %vm287 = vcmask 123968
      %288 = vst.msk [vmem:[#allocation2] sm:$0x3] %vm287, %v285
      %v289 = vld [vmem:[%s272 + $0x5] sm:$0x3]
      %291 = vrot.lane.b32.xlu0 %v289, 8
      %v292 = vpop.permute.xlu0 %291
      %294 = vst.msk [vmem:[#allocation2 + $0x2] sm:$0x3] %vm287, %v292
      %v295 = vld [vmem:[%s272 + $0x2] sm:$0x3]
      %297 = vrot.lane.b32.xlu0 %v295, 16
      %v298 = vpop.permute.xlu0 %297
      %vm300 = vcmask 189568
      %301 = vst.msk [vmem:[#allocation2] sm:$0x3] %vm300, %v298
      %v302 = vld [vmem:[%s272 + $0x6] sm:$0x3]
      %304 = vrot.lane.b32.xlu0 %v302, 16
      %v305 = vpop.permute.xlu0 %304
      %307 = vst.msk [vmem:[#allocation2 + $0x2] sm:$0x3] %vm300, %v305
      %v308 = vld [vmem:[%s272 + $0x4] sm:$0x3]
      %310 = vrot.lane.b32.xlu0 %v308, 24
      %v311 = vpop.permute.xlu0 %310
      %vm313 = vcmask 255168
      %314 = vst.msk [vmem:[#allocation2] sm:$0x3] %vm313, %v311
      %v315 = vld [vmem:[%s272 + $0x8] sm:$0x3]
      %317 = vrot.lane.b32.xlu0 %v315, 24
      %v318 = vpop.permute.xlu0 %317
      %320 = vst.msk [vmem:[#allocation2 + $0x2] sm:$0x3] %vm313, %v318
      %v321 = vld [vmem:[%s272 + $0x5] sm:$0x3]
      %323 = vrot.lane.b32.xlu0 %v321, 32
      %v324 = vpop.permute.xlu0 %323
      %vm326 = vcmask 320768
      %327 = vst.msk [vmem:[#allocation2] sm:$0x3] %vm326, %v324
      %v328 = vld [vmem:[%s272 + $0x9] sm:$0x3]
      %330 = vrot.lane.b32.xlu0 %v328, 32
      %v331 = vpop.permute.xlu0 %330
      %333 = vst.msk [vmem:[#allocation2 + $0x2] sm:$0x3] %vm326, %v331
      %v334 = vld [vmem:[%s272 + $0x6] sm:$0x3]
      %336 = vrot.lane.b32.xlu0 %v334, 40
      %v337 = vpop.permute.xlu0 %336
      %vm339 = vcmask 386368
      %340 = vst.msk [vmem:[#allocation2] sm:$0x3] %vm339, %v337
      %v341 = vld [vmem:[%s272 + $0xa] sm:$0x3]
      %343 = vrot.lane.b32.xlu0 %v341, 40
      %v344 = vpop.permute.xlu0 %343
      %346 = vst.msk [vmem:[#allocation2 + $0x2] sm:$0x3] %vm339, %v344
      %v347 = vld [vmem:[%s272 + $0x8] sm:$0x3]
      %349 = vrot.lane.b32.xlu0 %v347, 48
      %v350 = vpop.permute.xlu0 %349
      %vm352 = vcmask 451968
      %353 = vst.msk [vmem:[#allocation2] sm:$0x3] %vm352, %v350
      %v354 = vld [vmem:[%s272 + $0xc] sm:$0x3]
      %356 = vrot.lane.b32.xlu0 %v354, 48
      %v357 = vpop.permute.xlu0 %356
      %359 = vst.msk [vmem:[#allocation2 + $0x2] sm:$0x3] %vm352, %v357
      %v360 = vld [vmem:[%s272 + $0x9] sm:$0x3]
      %362 = vrot.lane.b32.xlu0 %v360, 56
      %v363 = vpop.permute.xlu0 %362
      %vm365 = vcmask 517568
      %366 = vst.msk [vmem:[#allocation2] sm:$0x3] %vm365, %v363
      %v367 = vld [vmem:[%s272 + $0xd] sm:$0x3]
      %369 = vrot.lane.b32.xlu0 %v367, 56
      %v370 = vpop.permute.xlu0 %369
      %372 = vst.msk [vmem:[#allocation2 + $0x2] sm:$0x3] %vm365, %v370
      %v373 = vld [vmem:[%s272 + $0xa] sm:$0x3]
      %375 = vrot.lane.b32.xlu0 %v373, 64
      %v376 = vpop.permute.xlu0 %375
      %vm378 = vcmask 583168
      %379 = vst.msk [vmem:[#allocation2] sm:$0x3] %vm378, %v376
      %v380 = vld [vmem:[%s272 + $0xe] sm:$0x3]
      %382 = vrot.lane.b32.xlu0 %v380, 64
      %v383 = vpop.permute.xlu0 %382
      %385 = vst.msk [vmem:[#allocation2 + $0x2] sm:$0x3] %vm378, %v383
      %v386 = vld [vmem:[#allocation2] sm:$0xf]
      %v387 = vld [vmem:[%s1] sm:$0xff]
      %v388 = vld [vmem:[%s1 + $0x8] sm:$0xff]
      %v389 = vld [vmem:[%s1 + $0x10] sm:$0xff]
      %v390 = vld [vmem:[%s1 + $0x18] sm:$0xff]
      %v391 = vld [vmem:[%s1 + $0x20] sm:$0xff]
      %v392 = vld [vmem:[%s1 + $0x28] sm:$0xff]
      %v393 = vld [vmem:[%s1 + $0x30] sm:$0xff]
      %v394 = vld [vmem:[%s1 + $0x38] sm:$0xff]
      %v395 = vld [vmem:[%s1 + $0x40] sm:$0xff]
      %vm396 = vcmask 588800
      %v398 = vsel %vm396, %v386, 0
      %400 = vmatprep.subr.mxu0 0.0
      %401 = vmatpush1.msra.mxu0 %v387
      %402 = vmatprep.subr.mxu0 0.0
      %403 = vmatpush1.msra.mxu0 %v388
      %404 = vmatprep.subr.mxu0 0.0
      %405 = vmatpush1.msra.mxu0 %v389
      %406 = vmatprep.subr.mxu0 0.0
      %407 = vmatpush1.msra.mxu0 %v390
      %408 = vmatprep.subr.mxu0 0.0
      %409 = vmatpush1.msra.mxu0 %v391
      %410 = vmatprep.subr.mxu0 0.0
      %411 = vmatpush1.msra.mxu0 %v392
      %412 = vmatprep.subr.mxu0 0.0
      %413 = vmatpush1.msra.mxu0 %v393
      %414 = vmatprep.subr.mxu0 0.0
      %415 = vmatpush1.msra.mxu0 %v394
      %416 = vmatprep.subr.mxu0 0.0
      %417 = vmatpush1.msra.mxu0 %v395
      %418 = vmatprep.subr.mxu0 0.0
      %419 = vmatpush1.msra.mxu0 0.0
      %420 = vmatprep.subr.mxu0 0.0
      %421 = vmatpush1.msra.mxu0 0.0
      %422 = vmatprep.subr.mxu0 0.0
      %423 = vmatpush1.msra.mxu0 0.0
      %424 = vmatprep.subr.mxu0 0.0
      %425 = vmatpush1.msra.mxu0 0.0
      %426 = vmatprep.subr.mxu0 0.0
      %427 = vmatpush1.msra.mxu0 0.0
      %428 = vmatprep.subr.mxu0 0.0
      %429 = vmatpush1.msra.mxu0 0.0
      %430 = vmatprep.subr.mxu0 0.0
      %431 = vmatpush1.msra.mxu0 0.0
      %432 = vmatprep.subr.mxu0 0.0
      %433 = vmatpush1.msra.mxu0 0.0
      %434 = vmatprep.subr.mxu0 0.0
      %435 = vmatpush1.msra.mxu0 0.0
      %436 = vmatprep.subr.mxu0 0.0
      %437 = vmatpush1.msra.mxu0 0.0
      %438 = vmatprep.subr.mxu0 0.0
      %439 = vmatpush1.msra.mxu0 0.0
      %440 = vmatprep.subr.mxu0 0.0
      %441 = vmatpush1.msra.mxu0 0.0
      %442 = vmatprep.subr.mxu0 0.0
      %443 = vmatpush1.msra.mxu0 0.0
      %444 = vmatprep.subr.mxu0 0.0
      %445 = vmatpush1.msra.mxu0 0.0
      %446 = vmatprep.subr.mxu0 0.0
      %447 = vmatpush1.msra.mxu0 0.0
      %448 = vmatprep.subr.mxu0 0.0
      %449 = vmatpush1.msra.mxu0 0.0
      %450 = vmatprep.subr.mxu0 0.0
      %451 = vmatpush1.msra.mxu0 0.0
      %452 = vmatprep.subr.mxu0 0.0
      %453 = vmatpush1.msra.mxu0 0.0
      %454 = vmatprep.subr.mxu0 0.0
      %455 = vmatpush1.msra.mxu0 0.0
      %456 = vmatprep.subr.mxu0 0.0
      %457 = vmatpush1.msra.mxu0 0.0
      %458 = vmatprep.subr.mxu0 0.0
      %459 = vmatpush1.msra.mxu0 0.0
      %460 = vmatprep.subr.mxu0 0.0
      %461 = vmatpush1.msra.mxu0 0.0
      %462 = vmatprep.subr.mxu0 0.0
      %463 = vmatpush1.msra.mxu0 0.0
      %464 = vmatprep.mubr.f32.mxu0 0.0
      %465 = vmatmul.mubr.f32.gmra.mrb[0].mxu0 %v398
      %v466 = vpop.f32.mrb[0].mxu0
      %v467 = vadd.f32 0.0, %v466
      %v468 = vpop.f32.mrb[0].mxu0
      %469 = vdwg.mxu0
      %v470 = vld [vmem:[%s2] sm:$0x1]
      %v472 = vlaneseq
      %v473 = vshrl.u32 %v472, 7
      %v474 = vsub.s32 0, %v473
      %v475 = vrot.slane %v470, %v474
      %v477 = vmul.f32 %v467, %v475
      %v478 = vld [vmem:[%s3] sm:$0x1]
      %v480 = vlaneseq
      %v481 = vshrl.u32 %v480, 7
      %v482 = vsub.s32 0, %v481
      %v483 = vrot.slane %v478, %v482
      %v485 = vadd.f32 %v477, %v483
      %v486 = vmax.f32 %v485, 0.0
      %vm487 = vcmask 64512
      %488 = vst.msk [vmem:[#allocation4] sm:$0xff] %vm487, 0.0
      %489 = vst.msk [vmem:[#allocation4 + $0x8] sm:$0xff] %vm487, 0.0
      %490 = vst.msk [vmem:[#allocation4 + $0x5] sm:$0x3] %vm278, %v486
      %vm491 = vcmask 60418
      %492 = vst.msk [vmem:[#allocation4 + $0x7] sm:$0xc] %vm491, %v486
      %v493 = vld [vmem:[#allocation4] sm:$0x3]
      %494 = vst.msk [vmem:[#allocation3] sm:$0x3] %vm278, %v493
      %v495 = vld [vmem:[#allocation4 + $0x4] sm:$0x3]
      %496 = vst.msk [vmem:[#allocation3 + $0x2] sm:$0x3] %vm278, %v495
      %v497 = vld [vmem:[#allocation4 + $0x1] sm:$0x3]
      %499 = vrot.lane.b32.xlu0 %v497, 8
      %v500 = vpop.permute.xlu0 %499
      %502 = vst.msk [vmem:[#allocation3] sm:$0x3] %vm287, %v500
      %v503 = vld [vmem:[#allocation4 + $0x5] sm:$0x3]
      %505 = vrot.lane.b32.xlu0 %v503, 8
      %v506 = vpop.permute.xlu0 %505
      %508 = vst.msk [vmem:[#allocation3 + $0x2] sm:$0x3] %vm287, %v506
      %v509 = vld [vmem:[#allocation4 + $0x2] sm:$0x3]
      %511 = vrot.lane.b32.xlu0 %v509, 16
      %v512 = vpop.permute.xlu0 %511
      %514 = vst.msk [vmem:[#allocation3] sm:$0x3] %vm300, %v512
      %v515 = vld [vmem:[#allocation4 + $0x6] sm:$0x3]
      %517 = vrot.lane.b32.xlu0 %v515, 16
      %v518 = vpop.permute.xlu0 %517
      %520 = vst.msk [vmem:[#allocation3 + $0x2] sm:$0x3] %vm300, %v518
      %v521 = vld [vmem:[#allocation4 + $0x4] sm:$0x3]
      %523 = vrot.lane.b32.xlu0 %v521, 24
      %v524 = vpop.permute.xlu0 %523
      %526 = vst.msk [vmem:[#allocation3] sm:$0x3] %vm313, %v524
      %v527 = vld [vmem:[#allocation4 + $0x8] sm:$0x3]
      %529 = vrot.lane.b32.xlu0 %v527, 24
      %v530 = vpop.permute.xlu0 %529
      %532 = vst.msk [vmem:[#allocation3 + $0x2] sm:$0x3] %vm313, %v530
      %v533 = vld [vmem:[#allocation4 + $0x5] sm:$0x3]
      %535 = vrot.lane.b32.xlu0 %v533, 32
      %v536 = vpop.permute.xlu0 %535
      %538 = vst.msk [vmem:[#allocation3] sm:$0x3] %vm326, %v536
      %v539 = vld [vmem:[#allocation4 + $0x9] sm:$0x3]
      %541 = vrot.lane.b32.xlu0 %v539, 32
      %v542 = vpop.permute.xlu0 %541
      %544 = vst.msk [vmem:[#allocation3 + $0x2] sm:$0x3] %vm326, %v542
      %v545 = vld [vmem:[#allocation4 + $0x6] sm:$0x3]
      %547 = vrot.lane.b32.xlu0 %v545, 40
      %v548 = vpop.permute.xlu0 %547
      %550 = vst.msk [vmem:[#allocation3] sm:$0x3] %vm339, %v548
      %v551 = vld [vmem:[#allocation4 + $0xa] sm:$0x3]
      %553 = vrot.lane.b32.xlu0 %v551, 40
      %v554 = vpop.permute.xlu0 %553
      %556 = vst.msk [vmem:[#allocation3 + $0x2] sm:$0x3] %vm339, %v554
      %v557 = vld [vmem:[#allocation4 + $0x8] sm:$0x3]
      %559 = vrot.lane.b32.xlu0 %v557, 48
      %v560 = vpop.permute.xlu0 %559
      %562 = vst.msk [vmem:[#allocation3] sm:$0x3] %vm352, %v560
      %v563 = vld [vmem:[#allocation4 + $0xc] sm:$0x3]
      %565 = vrot.lane.b32.xlu0 %v563, 48
      %v566 = vpop.permute.xlu0 %565
      %568 = vst.msk [vmem:[#allocation3 + $0x2] sm:$0x3] %vm352, %v566
      %v569 = vld [vmem:[#allocation4 + $0x9] sm:$0x3]
      %571 = vrot.lane.b32.xlu0 %v569, 56
      %v572 = vpop.permute.xlu0 %571
      %574 = vst.msk [vmem:[#allocation3] sm:$0x3] %vm365, %v572
      %v575 = vld [vmem:[#allocation4 + $0xd] sm:$0x3]
      %577 = vrot.lane.b32.xlu0 %v575, 56
      %v578 = vpop.permute.xlu0 %577
      %580 = vst.msk [vmem:[#allocation3 + $0x2] sm:$0x3] %vm365, %v578
      %v581 = vld [vmem:[#allocation4 + $0xa] sm:$0x3]
      %583 = vrot.lane.b32.xlu0 %v581, 64
      %v584 = vpop.permute.xlu0 %583
      %586 = vst.msk [vmem:[#allocation3] sm:$0x3] %vm378, %v584
      %v587 = vld [vmem:[#allocation4 + $0xe] sm:$0x3]
      %589 = vrot.lane.b32.xlu0 %v587, 64
      %v590 = vpop.permute.xlu0 %589
      %592 = vst.msk [vmem:[#allocation3 + $0x2] sm:$0x3] %vm378, %v590
      %v593 = vld [vmem:[#allocation2] sm:$0xf]
      %v594 = vld [vmem:[#allocation3] sm:$0xf]
      %v595 = vld [vmem:[%s4] sm:$0xff]
      %v596 = vld [vmem:[%s4 + $0x8] sm:$0xff]
      %v597 = vld [vmem:[%s4 + $0x10] sm:$0xff]
      %v598 = vld [vmem:[%s4 + $0x18] sm:$0xff]
      %v599 = vld [vmem:[%s4 + $0x20] sm:$0xff]
      %v600 = vld [vmem:[%s4 + $0x28] sm:$0xff]
      %v601 = vld [vmem:[%s4 + $0x30] sm:$0xff]
      %v602 = vld [vmem:[%s4 + $0x38] sm:$0xff]
      %v603 = vld [vmem:[%s4 + $0x40] sm:$0xff]
      %v605 = vsel %vm396, %v594, 0
      %607 = vmatprep.subr.mxu0 0.0
      %608 = vmatpush1.msra.mxu0 %v595
      %609 = vmatprep.subr.mxu0 0.0
      %610 = vmatpush1.msra.mxu0 %v596
      %611 = vmatprep.subr.mxu0 0.0
      %612 = vmatpush1.msra.mxu0 %v597
      %613 = vmatprep.subr.mxu0 0.0
      %614 = vmatpush1.msra.mxu0 %v598
      %615 = vmatprep.subr.mxu0 0.0
      %616 = vmatpush1.msra.mxu0 %v599
      %617 = vmatprep.subr.mxu0 0.0
      %618 = vmatpush1.msra.mxu0 %v600
      %619 = vmatprep.subr.mxu0 0.0
      %620 = vmatpush1.msra.mxu0 %v601
      %621 = vmatprep.subr.mxu0 0.0
      %622 = vmatpush1.msra.mxu0 %v602
      %623 = vmatprep.subr.mxu0 0.0
      %624 = vmatpush1.msra.mxu0 %v603
      %625 = vmatprep.subr.mxu0 0.0
      %626 = vmatpush1.msra.mxu0 0.0
      %627 = vmatprep.subr.mxu0 0.0
      %628 = vmatpush1.msra.mxu0 0.0
      %629 = vmatprep.subr.mxu0 0.0
      %630 = vmatpush1.msra.mxu0 0.0
      %631 = vmatprep.subr.mxu0 0.0
      %632 = vmatpush1.msra.mxu0 0.0
      %633 = vmatprep.subr.mxu0 0.0
      %634 = vmatpush1.msra.mxu0 0.0
      %635 = vmatprep.subr.mxu0 0.0
      %636 = vmatpush1.msra.mxu0 0.0
      %637 = vmatprep.subr.mxu0 0.0
      %638 = vmatpush1.msra.mxu0 0.0
      %639 = vmatprep.subr.mxu0 0.0
      %640 = vmatpush1.msra.mxu0 0.0
      %641 = vmatprep.subr.mxu0 0.0
      %642 = vmatpush1.msra.mxu0 0.0
      %643 = vmatprep.subr.mxu0 0.0
      %644 = vmatpush1.msra.mxu0 0.0
      %645 = vmatprep.subr.mxu0 0.0
      %646 = vmatpush1.msra.mxu0 0.0
      %647 = vmatprep.subr.mxu0 0.0
      %648 = vmatpush1.msra.mxu0 0.0
      %649 = vmatprep.subr.mxu0 0.0
      %650 = vmatpush1.msra.mxu0 0.0
      %651 = vmatprep.subr.mxu0 0.0
      %652 = vmatpush1.msra.mxu0 0.0
      %653 = vmatprep.subr.mxu0 0.0
      %654 = vmatpush1.msra.mxu0 0.0
      %655 = vmatprep.subr.mxu0 0.0
      %656 = vmatpush1.msra.mxu0 0.0
      %657 = vmatprep.subr.mxu0 0.0
      %658 = vmatpush1.msra.mxu0 0.0
      %659 = vmatprep.subr.mxu0 0.0
      %660 = vmatpush1.msra.mxu0 0.0
      %661 = vmatprep.subr.mxu0 0.0
      %662 = vmatpush1.msra.mxu0 0.0
      %663 = vmatprep.subr.mxu0 0.0
      %664 = vmatpush1.msra.mxu0 0.0
      %665 = vmatprep.subr.mxu0 0.0
      %666 = vmatpush1.msra.mxu0 0.0
      %667 = vmatprep.subr.mxu0 0.0
      %668 = vmatpush1.msra.mxu0 0.0
      %669 = vmatprep.subr.mxu0 0.0
      %670 = vmatpush1.msra.mxu0 0.0
      %671 = vmatprep.mubr.f32.mxu0 0.0
      %672 = vmatmul.mubr.f32.gmra.mrb[0].mxu0 %v605
      %v673 = vpop.f32.mrb[0].mxu0
      %v674 = vadd.f32 0.0, %v673
      %v675 = vpop.f32.mrb[0].mxu0
      %676 = vdwg.mxu0
      %v677 = vld [vmem:[%s5] sm:$0x1]
      %v679 = vlaneseq
      %v680 = vshrl.u32 %v679, 7
      %v681 = vsub.s32 0, %v680
      %v682 = vrot.slane %v677, %v681
      %v684 = vmul.f32 %v674, %v682
      %v685 = vld [vmem:[%s6] sm:$0x1]
      %v687 = vlaneseq
      %v688 = vshrl.u32 %v687, 7
      %v689 = vsub.s32 0, %v688
      %v690 = vrot.slane %v685, %v689
      %v692 = vadd.f32 %v684, %v690
      %694 = vrot.lane.b32.xlu0 %v593, 96
      %v695 = vpop.permute.xlu0 %694
      %v697 = vadd.f32 %v692, %v695
      %v698 = vmax.f32 %v697, 0.0
      %vm699 = vcmask 60416
      %700 = vst.msk [vmem:[%s276] sm:$0xf] %vm699, %v698
      %p701 = scmp.lt.s32.totalorder %s18, 1
      %s702 = scalar_select %p701, %s18, 1
      %s703 = smul.addr %s702, 4
      %s704 = scalar_lea.vmem %s7, %s703
      // Predicated region
      $region49: #{downsample_forward.20} parent=47 // pred_check
        %p705 = pneg %p188
      $region50: #{downsample_forward.20} parent=47 // pred_check_branch
        %707 = sbr.rel (%p705) target = $region52
      $region51: #{downsample_forward.20} parent=47 // pred_region
        _
      $region52: #{downsample_forward.20} parent=47 // pred_fallthru
        _
    $region48: #{downsample_forward.20} parent=5 // pred_fallthru
      _
    %p708 = scmp.le.s32.totalorder 2, %s13
    // Predicated region
    $region53: #{downsample_forward.20} parent=5 // pred_check
      %p709 = pneg %p708
    $region54: #{downsample_forward.20} parent=5 // pred_check_branch
      %711 = sbr.rel (%p709) target = $region56
    $region55: #{downsample_forward.20} parent=5 // pred_region
      %s712 = ssub.s32 %s13, 2
      // Predicated region
      $region57: #{downsample_forward.20} parent=55 // pred_check
        %p713 = pneg %p194
      $region58: #{downsample_forward.20} parent=55 // pred_check_branch
        %715 = sbr.rel (%p713) target = $region60
      $region59: #{downsample_forward.20} parent=55 // pred_region
        %p716 = scmp.lt.s32.totalorder %s19, 1
        %s717 = scalar_select %p716, %s19, 1
        %s718 = smul.addr %s717, 4
        %s719 = scalar_lea.vmem %s7, %s718
      $region60: #{downsample_forward.20} parent=55 // pred_fallthru
        _
    $region56: #{downsample_forward.20} parent=5 // pred_fallthru
      _
  $region6: #{downsample_forward.20} parent=0 // loop_footer
    %s17 = sadd.s32 1, %s13
  $region7: #{downsample_forward.20} parent=0 // loop_footer_branch
    %12 = sbr.rel target = $region3
  $region8: #{downsample_forward.20} parent=0 // loop_exit
    _

</llo_original>
